<compile_context>
chip_gen: v6e
topology: v6e:2x2x1
jax: 0.10.0
libtpu: 0.0.40
codegen_flags: <defaults>
</compile_context>

<pallas_src>
import functools

import jax
import jax.numpy as jnp
from jax.experimental import pallas as pl
from jax.experimental.pallas import tpu as pltpu

EPS = 1e-5  # F.layer_norm default eps


def _layer_norm(v):
    """F.layer_norm over (H, W), no affine, per lane (= per image). v: (H, W, TB) f32.

    Single pass: sum and sum-of-squares computed together (var = E[x^2]-mean^2),
    reductions over the cheap leading axis first, then one sublane (XLU) reduce.
    """
    n = v.shape[0] * v.shape[1]
    inv_n = 1.0 / n
    s1 = jnp.sum(jnp.sum(v, axis=0, keepdims=True), axis=1, keepdims=True)       # (1,1,TB)
    s2 = jnp.sum(jnp.sum(v * v, axis=0, keepdims=True), axis=1, keepdims=True)   # (1,1,TB)
    mean = s1 * inv_n
    var = s2 * inv_n - mean * mean
    return (v - mean) * jax.lax.rsqrt(var + EPS)


def mnist_fused_kernel(x_ref, wc_ref, bc_ref, w1e_ref, b1_ref, w2_ref, b2_ref,
                       out_ref):
    # x_ref:   (28, 28, TB) bf16 VMEM    wc_ref: (3, 9) f32 SMEM   bc_ref: (3,) f32 SMEM
    # w1e_ref: (576, 264) bf16 VMEM  (fc1 weight expanded over 24-wide pool row slabs)
    # b1_ref:  (576, 1) f32   w2_ref: (10, 576) bf16   b2_ref: (10, 1) f32
    # out_ref: (10, TB) f32
    tb = x_ref.shape[-1]
    h = x_ref[...].astype(jnp.float32)                          # (28, 28, TB)

    # Three (3x3 valid conv -> ReLU -> layer_norm) stages: 28 -> 26 -> 24 -> 22.
    for k in range(3):
        ho = h.shape[0] - 2
        acc = None
        # Hoist the sublane-axis (dj) shift: materialize each shifted operand
        # once and reuse it across the 3 leading-axis (di) taps (di is free).
        for dj in range(3):
            h_dj = h[:, dj:dj + ho, :]                          # (S, ho, TB), one sublane shift
            for di in range(3):
                t = h_dj[di:di + ho] * wc_ref[k, di * 3 + dj]
                acc = t if acc is None else acc + t
        acc = jnp.maximum(acc + bc_ref[k], 0.0)                 # bias + ReLU
        h = _layer_norm(acc)                                    # (ho, ho, TB)

    # 2x2 max-pool, stride 2 (vectorized): pooled[r, w] == pm[r, 2*w].
    hr = h.reshape(11, 2, 22, tb)                               # splits the leading dim only
    rm = jnp.maximum(hr[:, 0], hr[:, 1])                        # row pairs     (11, 22, TB)
    pm = jnp.maximum(rm[:, 0:21, :], rm[:, 1:22, :])            # column pairs  (11, 21, TB)

    # Pad each pooled row slab to 24 columns (24 % 8 == 0 -> layout-preserving
    # reshape), flatten to (264, TB) and do ONE fused fc1 matmul on the MXU.
    # Even-column selection / flatten / padding are folded into w1e (all other
    # w1e columns are zero, so the pad values are don't-care).
    pm_pad = jnp.concatenate(
        [pm, jnp.zeros((11, 3, tb), jnp.float32)], axis=1)      # (11, 24, TB)
    pm_flat = pm_pad.reshape(264, tb).astype(jnp.bfloat16)      # (264, TB)
    h1 = jnp.dot(w1e_ref[...], pm_flat,
                 preferred_element_type=jnp.float32)            # (576, TB) f32 acc
    h1 = jnp.maximum(h1 + b1_ref[...], 0.0)                     # ReLU

    # fc2 + softmax over classes (sublane axis = class, lane axis = image).
    logits = jnp.dot(w2_ref[...], h1.astype(jnp.bfloat16),
                     preferred_element_type=jnp.float32)        # (10, TB)
    logits = logits + b2_ref[...]
    m = jnp.max(logits, axis=0, keepdims=True)
    e = jnp.exp(logits - m)
    s = jnp.sum(e, axis=0, keepdims=True)
    out_ref[...] = (e / s).astype(out_ref.dtype)                # exact normalization


@functools.partial(jax.jit, static_argnames=("tb",))
def mnist_forward(x, wc, bc, w1, b1, w2, b2, *, tb=128):
    """Params in PyTorch layout:
       wc: (3, 9) three flattened 3x3 conv kernels, bc: (3,) conv biases
       w1: (576, 121) fc1.weight, b1: (576,) fc1.bias
       w2: (10, 576)  fc2.weight, b2: (10,)  fc2.bias
       Returns softmax probabilities (B, 10).

       TB notes: raise tb to 256-512 on v5e/v6e for large batches to amortize
       the ~0.35us per-grid-step overhead; on v7x keep tb small enough that the
       grid has >= 2 steps so both TensorCores are used ("parallel" axis)."""
    # bf16 input: halves the wrapper-side NCHW->(28,28,B) relayout pass and the
    # per-step input DMA; converted back to f32 once inside the kernel.
    x = x.reshape(-1, 28, 28).astype(jnp.bfloat16)              # x.view(-1, 1, 28, 28), C squeezed
    batch = x.shape[0]
    bp = max(tb, ((batch + tb - 1) // tb) * tb)                 # pad batch to a multiple of TB
    if bp != batch:
        x = jnp.pad(x, ((0, bp - batch), (0, 0), (0, 0)))
    xl = jnp.transpose(x, (1, 2, 0))                            # (28, 28, Bp) batch-on-lanes

    # Expand fc1 weight over padded pooled column pairs: pooled[r, w] == pm[r, 2*w],
    # so w1e[:, r*24 + 2*w] = w1[:, r*11 + w]; all other columns stay zero.
    w1_3d = w1.astype(jnp.float32).reshape(576, 11, 11)
    w1e = jnp.zeros((576, 11, 24), jnp.float32).at[:, :, 0:21:2].set(w1_3d)
    w1e = w1e.reshape(576, 264).astype(jnp.bfloat16)

    out = pl.pallas_call(
        mnist_fused_kernel,
        out_shape=jax.ShapeDtypeStruct((10, bp), jnp.float32),
        grid=(bp // tb,),
        in_specs=[
            pl.BlockSpec((28, 28, tb), lambda b: (0, 0, b)),
            pl.BlockSpec(memory_space=pltpu.MemorySpace.SMEM),
            pl.BlockSpec(memory_space=pltpu.MemorySpace.SMEM),
            pl.BlockSpec((576, 264), lambda b: (0, 0)),
            pl.BlockSpec((576, 1), lambda b: (0, 0)),
            pl.BlockSpec((10, 576), lambda b: (0, 0)),
            pl.BlockSpec((10, 1), lambda b: (0, 0)),
        ],
        out_specs=pl.BlockSpec((10, tb), lambda b: (0, b)),
        compiler_params=pltpu.CompilerParams(
            dimension_semantics=("parallel",)),
    )(xl,
      wc.astype(jnp.float32), bc.astype(jnp.float32),
      w1e, b1.astype(jnp.float32).reshape(576, 1),
      w2.astype(jnp.bfloat16), b2.astype(jnp.float32).reshape(10, 1))

    return out[:, :batch].T                                     # (B, 10)


def mnist_reference(x, wc, bc, w1, b1, w2, b2):
    """Pure-JAX f32 reference of the same forward pass (for the self-test)."""
    h = x.reshape(-1, 28, 28).astype(jnp.float32)
    for k in range(3):
        ker = wc[k].reshape(3, 3)
        ho = h.shape[-1] - 2
        acc = jnp.zeros((h.shape[0], ho, ho), jnp.float32)
        for di in range(3):
            for dj in range(3):
                acc = acc + h[:, di:di + ho, dj:dj + ho] * ker[di, dj]
        acc = jnp.maximum(acc + bc[k], 0.0)
        mean = jnp.mean(acc, axis=(1, 2), keepdims=True)
        var = jnp.var(acc, axis=(1, 2), keepdims=True)
        h = (acc - mean) * jax.lax.rsqrt(var + EPS)
    hp = h.reshape(-1, 11, 2, 11, 2).max(axis=(2, 4))           # 2x2 max-pool, stride 2
    flat = hp.reshape(-1, 121)
    h1 = jnp.maximum(flat @ w1.T + b1, 0.0)
    logits = h1 @ w2.T + b2
    return jax.nn.softmax(logits, axis=1)


def init_params(key):
    ks = jax.random.split(key, 6)
    wc = jax.random.normal(ks[0], (3, 9), jnp.float32) * 0.2            # 3 convs x 3x3 kernel (flat)
    bc = jax.random.normal(ks[1], (3,), jnp.float32) * 0.05             # conv biases
    w1 = jax.random.normal(ks[2], (576, 121), jnp.float32) / jnp.sqrt(121.0)
    b1 = jax.random.normal(ks[3], (576,), jnp.float32) * 0.05
    w2 = jax.random.normal(ks[4], (10, 576), jnp.float32) / jnp.sqrt(576.0)
    b2 = jax.random.normal(ks[5], (10,), jnp.float32) * 0.05
    return wc, bc, w1, b1, w2, b2


if __name__ == "__main__":
    key = jax.random.PRNGKey(0)
    kx, kp = jax.random.split(key)
    x = jax.random.normal(kx, (2, 1, 28, 28), jnp.float32)      # batch=2 MNIST-sized input
    params = init_params(kp)

    out = mnist_forward(x, *params)
    out = jax.block_until_ready(out)

    assert out.shape == (2, 10), out.shape
    assert bool(jnp.all(jnp.isfinite(out)))
    # exact softmax normalization now -> tight row-sum tolerance
    assert bool(jnp.all(jnp.abs(jnp.sum(out, axis=1) - 1.0) < 1e-3))

    # Compare against a pure-JAX f32 reference (kernel path uses bf16 input /
    # bf16 MXU weights, so use a loose absolute tolerance on probabilities).
    ref = mnist_reference(x, *params)
    max_err = float(jnp.max(jnp.abs(out - ref)))
    assert max_err < 5e-2, max_err

    print("KERNEL_OK")
</pallas_src>

<mosaic_0001>
module attributes {stable_mosaic.version = 11 : i64} {
  func.func @mnist_fused_kernel(%arg0: i32, %arg1: memref<28x28x128xbf16, #tpu.memory_space<vmem>>, %arg2: memref<3x9xf32, #tpu.memory_space<smem>>, %arg3: memref<3xf32, #tpu.memory_space<smem>>, %arg4: memref<576x264xbf16, #tpu.memory_space<vmem>>, %arg5: memref<576x1xf32, #tpu.memory_space<vmem>>, %arg6: memref<10x576xbf16, #tpu.memory_space<vmem>>, %arg7: memref<10x1xf32, #tpu.memory_space<vmem>>, %arg8: memref<10x128xf32, #tpu.memory_space<vmem>>) attributes {dimension_semantics = [#tpu.dimension_semantics<parallel>], iteration_bounds = array<i64: 1>, scalar_prefetch = 0 : i64, scratch_operands = 0 : i64, tpu.core_type = #tpu.core_type<tc>, window_params = [{transform_indices = @transform_0, window_bounds = array<i64: 28, 28, 128>}, {transform_indices = @transform_1, window_bounds = array<i64: 3, 9>}, {transform_indices = @transform_2, window_bounds = array<i64: 3>}, {pipeline_mode = #tpu.pipeline_mode<synchronous>, transform_indices = @transform_3, window_bounds = array<i64: 576, 264>}, {pipeline_mode = #tpu.pipeline_mode<synchronous>, transform_indices = @transform_4, window_bounds = array<i64: 576, 1>}, {pipeline_mode = #tpu.pipeline_mode<synchronous>, transform_indices = @transform_5, window_bounds = array<i64: 10, 576>}, {pipeline_mode = #tpu.pipeline_mode<synchronous>, transform_indices = @transform_6, window_bounds = array<i64: 10, 1>}, {transform_indices = @transform_7, window_bounds = array<i64: 10, 128>}]} {
    %c0 = arith.constant 0 : index
    %c0_0 = arith.constant 0 : index
    %c0_1 = arith.constant 0 : index
    %0 = vector.load %arg1[%c0, %c0_0, %c0_1] : memref<28x28x128xbf16, #tpu.memory_space<vmem>>, vector<28x28x128xbf16>
    %1 = arith.extf %0 : vector<28x28x128xbf16> to vector<28x28x128xf32>
    %2 = vector.extract_strided_slice %1 {offsets = [0, 0, 0], sizes = [28, 26, 128], strides = [1, 1, 1]} : vector<28x28x128xf32> to vector<28x26x128xf32>
    %3 = vector.extract_strided_slice %2 {offsets = [0, 0, 0], sizes = [26, 26, 128], strides = [1, 1, 1]} : vector<28x26x128xf32> to vector<26x26x128xf32>
    %c0_2 = arith.constant 0 : index
    %c0_3 = arith.constant 0 : index
    %4 = memref.load %arg2[%c0_2, %c0_3] : memref<3x9xf32, #tpu.memory_space<smem>>
    %5 = vector.broadcast %4 : f32 to vector<26x26x128xf32>
    %6 = arith.mulf %3, %5 : vector<26x26x128xf32>
    %7 = vector.extract_strided_slice %2 {offsets = [1, 0, 0], sizes = [26, 26, 128], strides = [1, 1, 1]} : vector<28x26x128xf32> to vector<26x26x128xf32>
    %c0_4 = arith.constant 0 : index
    %c3 = arith.constant 3 : index
    %8 = memref.load %arg2[%c0_4, %c3] : memref<3x9xf32, #tpu.memory_space<smem>>
    %9 = vector.broadcast %8 : f32 to vector<26x26x128xf32>
    %10 = arith.mulf %7, %9 : vector<26x26x128xf32>
    %11 = arith.addf %6, %10 : vector<26x26x128xf32>
    %12 = vector.extract_strided_slice %2 {offsets = [2, 0, 0], sizes = [26, 26, 128], strides = [1, 1, 1]} : vector<28x26x128xf32> to vector<26x26x128xf32>
    %c0_5 = arith.constant 0 : index
    %c6 = arith.constant 6 : index
    %13 = memref.load %arg2[%c0_5, %c6] : memref<3x9xf32, #tpu.memory_space<smem>>
    %14 = vector.broadcast %13 : f32 to vector<26x26x128xf32>
    %15 = arith.mulf %12, %14 : vector<26x26x128xf32>
    %16 = arith.addf %11, %15 : vector<26x26x128xf32>
    %17 = vector.extract_strided_slice %1 {offsets = [0, 1, 0], sizes = [28, 26, 128], strides = [1, 1, 1]} : vector<28x28x128xf32> to vector<28x26x128xf32>
    %18 = vector.extract_strided_slice %17 {offsets = [0, 0, 0], sizes = [26, 26, 128], strides = [1, 1, 1]} : vector<28x26x128xf32> to vector<26x26x128xf32>
    %c0_6 = arith.constant 0 : index
    %c1 = arith.constant 1 : index
    %19 = memref.load %arg2[%c0_6, %c1] : memref<3x9xf32, #tpu.memory_space<smem>>
    %20 = vector.broadcast %19 : f32 to vector<26x26x128xf32>
    %21 = arith.mulf %18, %20 : vector<26x26x128xf32>
    %22 = arith.addf %16, %21 : vector<26x26x128xf32>
    %23 = vector.extract_strided_slice %17 {offsets = [1, 0, 0], sizes = [26, 26, 128], strides = [1, 1, 1]} : vector<28x26x128xf32> to vector<26x26x128xf32>
    %c0_7 = arith.constant 0 : index
    %c4 = arith.constant 4 : index
    %24 = memref.load %arg2[%c0_7, %c4] : memref<3x9xf32, #tpu.memory_space<smem>>
    %25 = vector.broadcast %24 : f32 to vector<26x26x128xf32>
    %26 = arith.mulf %23, %25 : vector<26x26x128xf32>
    %27 = arith.addf %22, %26 : vector<26x26x128xf32>
    %28 = vector.extract_strided_slice %17 {offsets = [2, 0, 0], sizes = [26, 26, 128], strides = [1, 1, 1]} : vector<28x26x128xf32> to vector<26x26x128xf32>
    %c0_8 = arith.constant 0 : index
    %c7 = arith.constant 7 : index
    %29 = memref.load %arg2[%c0_8, %c7] : memref<3x9xf32, #tpu.memory_space<smem>>
    %30 = vector.broadcast %29 : f32 to vector<26x26x128xf32>
    %31 = arith.mulf %28, %30 : vector<26x26x128xf32>
    %32 = arith.addf %27, %31 : vector<26x26x128xf32>
    %33 = vector.extract_strided_slice %1 {offsets = [0, 2, 0], sizes = [28, 26, 128], strides = [1, 1, 1]} : vector<28x28x128xf32> to vector<28x26x128xf32>
    %34 = vector.extract_strided_slice %33 {offsets = [0, 0, 0], sizes = [26, 26, 128], strides = [1, 1, 1]} : vector<28x26x128xf32> to vector<26x26x128xf32>
    %c0_9 = arith.constant 0 : index
    %c2 = arith.constant 2 : index
    %35 = memref.load %arg2[%c0_9, %c2] : memref<3x9xf32, #tpu.memory_space<smem>>
    %36 = vector.broadcast %35 : f32 to vector<26x26x128xf32>
    %37 = arith.mulf %34, %36 : vector<26x26x128xf32>
    %38 = arith.addf %32, %37 : vector<26x26x128xf32>
    %39 = vector.extract_strided_slice %33 {offsets = [1, 0, 0], sizes = [26, 26, 128], strides = [1, 1, 1]} : vector<28x26x128xf32> to vector<26x26x128xf32>
    %c0_10 = arith.constant 0 : index
    %c5 = arith.constant 5 : index
    %40 = memref.load %arg2[%c0_10, %c5] : memref<3x9xf32, #tpu.memory_space<smem>>
    %41 = vector.broadcast %40 : f32 to vector<26x26x128xf32>
    %42 = arith.mulf %39, %41 : vector<26x26x128xf32>
    %43 = arith.addf %38, %42 : vector<26x26x128xf32>
    %44 = vector.extract_strided_slice %33 {offsets = [2, 0, 0], sizes = [26, 26, 128], strides = [1, 1, 1]} : vector<28x26x128xf32> to vector<26x26x128xf32>
    %c0_11 = arith.constant 0 : index
    %c8 = arith.constant 8 : index
    %45 = memref.load %arg2[%c0_11, %c8] : memref<3x9xf32, #tpu.memory_space<smem>>
    %46 = vector.broadcast %45 : f32 to vector<26x26x128xf32>
    %47 = arith.mulf %44, %46 : vector<26x26x128xf32>
    %48 = arith.addf %43, %47 : vector<26x26x128xf32>
    %c0_12 = arith.constant 0 : index
    %49 = memref.load %arg3[%c0_12] : memref<3xf32, #tpu.memory_space<smem>>
    %50 = vector.broadcast %49 : f32 to vector<26x26x128xf32>
    %51 = arith.addf %48, %50 : vector<26x26x128xf32>
    %cst = arith.constant 0.000000e+00 : f32
    %52 = vector.broadcast %cst : f32 to vector<26x26x128xf32>
    %53 = arith.maximumf %51, %52 : vector<26x26x128xf32>
    %cst_13 = arith.constant dense<0.000000e+00> : vector<26x128xf32>
    %54 = vector.multi_reduction <add>, %53, %cst_13 [0] : vector<26x26x128xf32> to vector<26x128xf32>
    %55 = vector.shape_cast %54 : vector<26x128xf32> to vector<1x26x128xf32>
    %cst_14 = arith.constant dense<0.000000e+00> : vector<1x128xf32>
    %56 = vector.multi_reduction <add>, %55, %cst_14 [1] : vector<1x26x128xf32> to vector<1x128xf32>
    %57 = vector.shape_cast %56 : vector<1x128xf32> to vector<1x1x128xf32>
    %58 = arith.mulf %53, %53 : vector<26x26x128xf32>
    %cst_15 = arith.constant dense<0.000000e+00> : vector<26x128xf32>
    %59 = vector.multi_reduction <add>, %58, %cst_15 [0] : vector<26x26x128xf32> to vector<26x128xf32>
    %60 = vector.shape_cast %59 : vector<26x128xf32> to vector<1x26x128xf32>
    %cst_16 = arith.constant dense<0.000000e+00> : vector<1x128xf32>
    %61 = vector.multi_reduction <add>, %60, %cst_16 [1] : vector<1x26x128xf32> to vector<1x128xf32>
    %62 = vector.shape_cast %61 : vector<1x128xf32> to vector<1x1x128xf32>
    %cst_17 = arith.constant 1.479290e-03 : f32
    %63 = vector.broadcast %cst_17 : f32 to vector<1x1x128xf32>
    %64 = arith.mulf %57, %63 : vector<1x1x128xf32>
    %cst_18 = arith.constant 1.479290e-03 : f32
    %65 = vector.broadcast %cst_18 : f32 to vector<1x1x128xf32>
    %66 = arith.mulf %62, %65 : vector<1x1x128xf32>
    %67 = arith.mulf %64, %64 : vector<1x1x128xf32>
    %68 = arith.subf %66, %67 : vector<1x1x128xf32>
    %69 = vector.broadcast %64 : vector<1x1x128xf32> to vector<26x26x128xf32>
    %70 = arith.subf %53, %69 : vector<26x26x128xf32>
    %cst_19 = arith.constant 9.99999974E-6 : f32
    %71 = vector.broadcast %cst_19 : f32 to vector<1x1x128xf32>
    %72 = arith.addf %68, %71 : vector<1x1x128xf32>
    %73 = math.rsqrt %72 : vector<1x1x128xf32>
    %74 = vector.broadcast %73 : vector<1x1x128xf32> to vector<26x26x128xf32>
    %75 = arith.mulf %70, %74 : vector<26x26x128xf32>
    %76 = vector.extract_strided_slice %75 {offsets = [0, 0, 0], sizes = [26, 24, 128], strides = [1, 1, 1]} : vector<26x26x128xf32> to vector<26x24x128xf32>
    %77 = vector.extract_strided_slice %76 {offsets = [0, 0, 0], sizes = [24, 24, 128], strides = [1, 1, 1]} : vector<26x24x128xf32> to vector<24x24x128xf32>
    %c1_20 = arith.constant 1 : index
    %c0_21 = arith.constant 0 : index
    %78 = memref.load %arg2[%c1_20, %c0_21] : memref<3x9xf32, #tpu.memory_space<smem>>
    %79 = vector.broadcast %78 : f32 to vector<24x24x128xf32>
    %80 = arith.mulf %77, %79 : vector<24x24x128xf32>
    %81 = vector.extract_strided_slice %76 {offsets = [1, 0, 0], sizes = [24, 24, 128], strides = [1, 1, 1]} : vector<26x24x128xf32> to vector<24x24x128xf32>
    %c1_22 = arith.constant 1 : index
    %c3_23 = arith.constant 3 : index
    %82 = memref.load %arg2[%c1_22, %c3_23] : memref<3x9xf32, #tpu.memory_space<smem>>
    %83 = vector.broadcast %82 : f32 to vector<24x24x128xf32>
    %84 = arith.mulf %81, %83 : vector<24x24x128xf32>
    %85 = arith.addf %80, %84 : vector<24x24x128xf32>
    %86 = vector.extract_strided_slice %76 {offsets = [2, 0, 0], sizes = [24, 24, 128], strides = [1, 1, 1]} : vector<26x24x128xf32> to vector<24x24x128xf32>
    %c1_24 = arith.constant 1 : index
    %c6_25 = arith.constant 6 : index
    %87 = memref.load %arg2[%c1_24, %c6_25] : memref<3x9xf32, #tpu.memory_space<smem>>
    %88 = vector.broadcast %87 : f32 to vector<24x24x128xf32>
    %89 = arith.mulf %86, %88 : vector<24x24x128xf32>
    %90 = arith.addf %85, %89 : vector<24x24x128xf32>
    %91 = vector.extract_strided_slice %75 {offsets = [0, 1, 0], sizes = [26, 24, 128], strides = [1, 1, 1]} : vector<26x26x128xf32> to vector<26x24x128xf32>
    %92 = vector.extract_strided_slice %91 {offsets = [0, 0, 0], sizes = [24, 24, 128], strides = [1, 1, 1]} : vector<26x24x128xf32> to vector<24x24x128xf32>
    %c1_26 = arith.constant 1 : index
    %c1_27 = arith.constant 1 : index
    %93 = memref.load %arg2[%c1_26, %c1_27] : memref<3x9xf32, #tpu.memory_space<smem>>
    %94 = vector.broadcast %93 : f32 to vector<24x24x128xf32>
    %95 = arith.mulf %92, %94 : vector<24x24x128xf32>
    %96 = arith.addf %90, %95 : vector<24x24x128xf32>
    %97 = vector.extract_strided_slice %91 {offsets = [1, 0, 0], sizes = [24, 24, 128], strides = [1, 1, 1]} : vector<26x24x128xf32> to vector<24x24x128xf32>
    %c1_28 = arith.constant 1 : index
    %c4_29 = arith.constant 4 : index
    %98 = memref.load %arg2[%c1_28, %c4_29] : memref<3x9xf32, #tpu.memory_space<smem>>
    %99 = vector.broadcast %98 : f32 to vector<24x24x128xf32>
    %100 = arith.mulf %97, %99 : vector<24x24x128xf32>
    %101 = arith.addf %96, %100 : vector<24x24x128xf32>
    %102 = vector.extract_strided_slice %91 {offsets = [2, 0, 0], sizes = [24, 24, 128], strides = [1, 1, 1]} : vector<26x24x128xf32> to vector<24x24x128xf32>
    %c1_30 = arith.constant 1 : index
    %c7_31 = arith.constant 7 : index
    %103 = memref.load %arg2[%c1_30, %c7_31] : memref<3x9xf32, #tpu.memory_space<smem>>
    %104 = vector.broadcast %103 : f32 to vector<24x24x128xf32>
    %105 = arith.mulf %102, %104 : vector<24x24x128xf32>
    %106 = arith.addf %101, %105 : vector<24x24x128xf32>
    %107 = vector.extract_strided_slice %75 {offsets = [0, 2, 0], sizes = [26, 24, 128], strides = [1, 1, 1]} : vector<26x26x128xf32> to vector<26x24x128xf32>
    %108 = vector.extract_strided_slice %107 {offsets = [0, 0, 0], sizes = [24, 24, 128], strides = [1, 1, 1]} : vector<26x24x128xf32> to vector<24x24x128xf32>
    %c1_32 = arith.constant 1 : index
    %c2_33 = arith.constant 2 : index
    %109 = memref.load %arg2[%c1_32, %c2_33] : memref<3x9xf32, #tpu.memory_space<smem>>
    %110 = vector.broadcast %109 : f32 to vector<24x24x128xf32>
    %111 = arith.mulf %108, %110 : vector<24x24x128xf32>
    %112 = arith.addf %106, %111 : vector<24x24x128xf32>
    %113 = vector.extract_strided_slice %107 {offsets = [1, 0, 0], sizes = [24, 24, 128], strides = [1, 1, 1]} : vector<26x24x128xf32> to vector<24x24x128xf32>
    %c1_34 = arith.constant 1 : index
    %c5_35 = arith.constant 5 : index
    %114 = memref.load %arg2[%c1_34, %c5_35] : memref<3x9xf32, #tpu.memory_space<smem>>
    %115 = vector.broadcast %114 : f32 to vector<24x24x128xf32>
    %116 = arith.mulf %113, %115 : vector<24x24x128xf32>
    %117 = arith.addf %112, %116 : vector<24x24x128xf32>
    %118 = vector.extract_strided_slice %107 {offsets = [2, 0, 0], sizes = [24, 24, 128], strides = [1, 1, 1]} : vector<26x24x128xf32> to vector<24x24x128xf32>
    %c1_36 = arith.constant 1 : index
    %c8_37 = arith.constant 8 : index
    %119 = memref.load %arg2[%c1_36, %c8_37] : memref<3x9xf32, #tpu.memory_space<smem>>
    %120 = vector.broadcast %119 : f32 to vector<24x24x128xf32>
    %121 = arith.mulf %118, %120 : vector<24x24x128xf32>
    %122 = arith.addf %117, %121 : vector<24x24x128xf32>
    %c1_38 = arith.constant 1 : index
    %123 = memref.load %arg3[%c1_38] : memref<3xf32, #tpu.memory_space<smem>>
    %124 = vector.broadcast %123 : f32 to vector<24x24x128xf32>
    %125 = arith.addf %122, %124 : vector<24x24x128xf32>
    %cst_39 = arith.constant 0.000000e+00 : f32
    %126 = vector.broadcast %cst_39 : f32 to vector<24x24x128xf32>
    %127 = arith.maximumf %125, %126 : vector<24x24x128xf32>
    %cst_40 = arith.constant dense<0.000000e+00> : vector<24x128xf32>
    %128 = vector.multi_reduction <add>, %127, %cst_40 [0] : vector<24x24x128xf32> to vector<24x128xf32>
    %129 = vector.shape_cast %128 : vector<24x128xf32> to vector<1x24x128xf32>
    %cst_41 = arith.constant dense<0.000000e+00> : vector<1x128xf32>
    %130 = vector.multi_reduction <add>, %129, %cst_41 [1] : vector<1x24x128xf32> to vector<1x128xf32>
    %131 = vector.shape_cast %130 : vector<1x128xf32> to vector<1x1x128xf32>
    %132 = arith.mulf %127, %127 : vector<24x24x128xf32>
    %cst_42 = arith.constant dense<0.000000e+00> : vector<24x128xf32>
    %133 = vector.multi_reduction <add>, %132, %cst_42 [0] : vector<24x24x128xf32> to vector<24x128xf32>
    %134 = vector.shape_cast %133 : vector<24x128xf32> to vector<1x24x128xf32>
    %cst_43 = arith.constant dense<0.000000e+00> : vector<1x128xf32>
    %135 = vector.multi_reduction <add>, %134, %cst_43 [1] : vector<1x24x128xf32> to vector<1x128xf32>
    %136 = vector.shape_cast %135 : vector<1x128xf32> to vector<1x1x128xf32>
    %cst_44 = arith.constant 0.00173611112 : f32
    %137 = vector.broadcast %cst_44 : f32 to vector<1x1x128xf32>
    %138 = arith.mulf %131, %137 : vector<1x1x128xf32>
    %cst_45 = arith.constant 0.00173611112 : f32
    %139 = vector.broadcast %cst_45 : f32 to vector<1x1x128xf32>
    %140 = arith.mulf %136, %139 : vector<1x1x128xf32>
    %141 = arith.mulf %138, %138 : vector<1x1x128xf32>
    %142 = arith.subf %140, %141 : vector<1x1x128xf32>
    %143 = vector.broadcast %138 : vector<1x1x128xf32> to vector<24x24x128xf32>
    %144 = arith.subf %127, %143 : vector<24x24x128xf32>
    %cst_46 = arith.constant 9.99999974E-6 : f32
    %145 = vector.broadcast %cst_46 : f32 to vector<1x1x128xf32>
    %146 = arith.addf %142, %145 : vector<1x1x128xf32>
    %147 = math.rsqrt %146 : vector<1x1x128xf32>
    %148 = vector.broadcast %147 : vector<1x1x128xf32> to vector<24x24x128xf32>
    %149 = arith.mulf %144, %148 : vector<24x24x128xf32>
    %150 = vector.extract_strided_slice %149 {offsets = [0, 0, 0], sizes = [24, 22, 128], strides = [1, 1, 1]} : vector<24x24x128xf32> to vector<24x22x128xf32>
    %151 = vector.extract_strided_slice %150 {offsets = [0, 0, 0], sizes = [22, 22, 128], strides = [1, 1, 1]} : vector<24x22x128xf32> to vector<22x22x128xf32>
    %c2_47 = arith.constant 2 : index
    %c0_48 = arith.constant 0 : index
    %152 = memref.load %arg2[%c2_47, %c0_48] : memref<3x9xf32, #tpu.memory_space<smem>>
    %153 = vector.broadcast %152 : f32 to vector<22x22x128xf32>
    %154 = arith.mulf %151, %153 : vector<22x22x128xf32>
    %155 = vector.extract_strided_slice %150 {offsets = [1, 0, 0], sizes = [22, 22, 128], strides = [1, 1, 1]} : vector<24x22x128xf32> to vector<22x22x128xf32>
    %c2_49 = arith.constant 2 : index
    %c3_50 = arith.constant 3 : index
    %156 = memref.load %arg2[%c2_49, %c3_50] : memref<3x9xf32, #tpu.memory_space<smem>>
    %157 = vector.broadcast %156 : f32 to vector<22x22x128xf32>
    %158 = arith.mulf %155, %157 : vector<22x22x128xf32>
    %159 = arith.addf %154, %158 : vector<22x22x128xf32>
    %160 = vector.extract_strided_slice %150 {offsets = [2, 0, 0], sizes = [22, 22, 128], strides = [1, 1, 1]} : vector<24x22x128xf32> to vector<22x22x128xf32>
    %c2_51 = arith.constant 2 : index
    %c6_52 = arith.constant 6 : index
    %161 = memref.load %arg2[%c2_51, %c6_52] : memref<3x9xf32, #tpu.memory_space<smem>>
    %162 = vector.broadcast %161 : f32 to vector<22x22x128xf32>
    %163 = arith.mulf %160, %162 : vector<22x22x128xf32>
    %164 = arith.addf %159, %163 : vector<22x22x128xf32>
    %165 = vector.extract_strided_slice %149 {offsets = [0, 1, 0], sizes = [24, 22, 128], strides = [1, 1, 1]} : vector<24x24x128xf32> to vector<24x22x128xf32>
    %166 = vector.extract_strided_slice %165 {offsets = [0, 0, 0], sizes = [22, 22, 128], strides = [1, 1, 1]} : vector<24x22x128xf32> to vector<22x22x128xf32>
    %c2_53 = arith.constant 2 : index
    %c1_54 = arith.constant 1 : index
    %167 = memref.load %arg2[%c2_53, %c1_54] : memref<3x9xf32, #tpu.memory_space<smem>>
    %168 = vector.broadcast %167 : f32 to vector<22x22x128xf32>
    %169 = arith.mulf %166, %168 : vector<22x22x128xf32>
    %170 = arith.addf %164, %169 : vector<22x22x128xf32>
    %171 = vector.extract_strided_slice %165 {offsets = [1, 0, 0], sizes = [22, 22, 128], strides = [1, 1, 1]} : vector<24x22x128xf32> to vector<22x22x128xf32>
    %c2_55 = arith.constant 2 : index
    %c4_56 = arith.constant 4 : index
    %172 = memref.load %arg2[%c2_55, %c4_56] : memref<3x9xf32, #tpu.memory_space<smem>>
    %173 = vector.broadcast %172 : f32 to vector<22x22x128xf32>
    %174 = arith.mulf %171, %173 : vector<22x22x128xf32>
    %175 = arith.addf %170, %174 : vector<22x22x128xf32>
    %176 = vector.extract_strided_slice %165 {offsets = [2, 0, 0], sizes = [22, 22, 128], strides = [1, 1, 1]} : vector<24x22x128xf32> to vector<22x22x128xf32>
    %c2_57 = arith.constant 2 : index
    %c7_58 = arith.constant 7 : index
    %177 = memref.load %arg2[%c2_57, %c7_58] : memref<3x9xf32, #tpu.memory_space<smem>>
    %178 = vector.broadcast %177 : f32 to vector<22x22x128xf32>
    %179 = arith.mulf %176, %178 : vector<22x22x128xf32>
    %180 = arith.addf %175, %179 : vector<22x22x128xf32>
    %181 = vector.extract_strided_slice %149 {offsets = [0, 2, 0], sizes = [24, 22, 128], strides = [1, 1, 1]} : vector<24x24x128xf32> to vector<24x22x128xf32>
    %182 = vector.extract_strided_slice %181 {offsets = [0, 0, 0], sizes = [22, 22, 128], strides = [1, 1, 1]} : vector<24x22x128xf32> to vector<22x22x128xf32>
    %c2_59 = arith.constant 2 : index
    %c2_60 = arith.constant 2 : index
    %183 = memref.load %arg2[%c2_59, %c2_60] : memref<3x9xf32, #tpu.memory_space<smem>>
    %184 = vector.broadcast %183 : f32 to vector<22x22x128xf32>
    %185 = arith.mulf %182, %184 : vector<22x22x128xf32>
    %186 = arith.addf %180, %185 : vector<22x22x128xf32>
    %187 = vector.extract_strided_slice %181 {offsets = [1, 0, 0], sizes = [22, 22, 128], strides = [1, 1, 1]} : vector<24x22x128xf32> to vector<22x22x128xf32>
    %c2_61 = arith.constant 2 : index
    %c5_62 = arith.constant 5 : index
    %188 = memref.load %arg2[%c2_61, %c5_62] : memref<3x9xf32, #tpu.memory_space<smem>>
    %189 = vector.broadcast %188 : f32 to vector<22x22x128xf32>
    %190 = arith.mulf %187, %189 : vector<22x22x128xf32>
    %191 = arith.addf %186, %190 : vector<22x22x128xf32>
    %192 = vector.extract_strided_slice %181 {offsets = [2, 0, 0], sizes = [22, 22, 128], strides = [1, 1, 1]} : vector<24x22x128xf32> to vector<22x22x128xf32>
    %c2_63 = arith.constant 2 : index
    %c8_64 = arith.constant 8 : index
    %193 = memref.load %arg2[%c2_63, %c8_64] : memref<3x9xf32, #tpu.memory_space<smem>>
    %194 = vector.broadcast %193 : f32 to vector<22x22x128xf32>
    %195 = arith.mulf %192, %194 : vector<22x22x128xf32>
    %196 = arith.addf %191, %195 : vector<22x22x128xf32>
    %c2_65 = arith.constant 2 : index
    %197 = memref.load %arg3[%c2_65] : memref<3xf32, #tpu.memory_space<smem>>
    %198 = vector.broadcast %197 : f32 to vector<22x22x128xf32>
    %199 = arith.addf %196, %198 : vector<22x22x128xf32>
    %cst_66 = arith.constant 0.000000e+00 : f32
    %200 = vector.broadcast %cst_66 : f32 to vector<22x22x128xf32>
    %201 = arith.maximumf %199, %200 : vector<22x22x128xf32>
    %cst_67 = arith.constant dense<0.000000e+00> : vector<22x128xf32>
    %202 = vector.multi_reduction <add>, %201, %cst_67 [0] : vector<22x22x128xf32> to vector<22x128xf32>
    %203 = vector.shape_cast %202 : vector<22x128xf32> to vector<1x22x128xf32>
    %cst_68 = arith.constant dense<0.000000e+00> : vector<1x128xf32>
    %204 = vector.multi_reduction <add>, %203, %cst_68 [1] : vector<1x22x128xf32> to vector<1x128xf32>
    %205 = vector.shape_cast %204 : vector<1x128xf32> to vector<1x1x128xf32>
    %206 = arith.mulf %201, %201 : vector<22x22x128xf32>
    %cst_69 = arith.constant dense<0.000000e+00> : vector<22x128xf32>
    %207 = vector.multi_reduction <add>, %206, %cst_69 [0] : vector<22x22x128xf32> to vector<22x128xf32>
    %208 = vector.shape_cast %207 : vector<22x128xf32> to vector<1x22x128xf32>
    %cst_70 = arith.constant dense<0.000000e+00> : vector<1x128xf32>
    %209 = vector.multi_reduction <add>, %208, %cst_70 [1] : vector<1x22x128xf32> to vector<1x128xf32>
    %210 = vector.shape_cast %209 : vector<1x128xf32> to vector<1x1x128xf32>
    %cst_71 = arith.constant 0.00206611562 : f32
    %211 = vector.broadcast %cst_71 : f32 to vector<1x1x128xf32>
    %212 = arith.mulf %205, %211 : vector<1x1x128xf32>
    %cst_72 = arith.constant 0.00206611562 : f32
    %213 = vector.broadcast %cst_72 : f32 to vector<1x1x128xf32>
    %214 = arith.mulf %210, %213 : vector<1x1x128xf32>
    %215 = arith.mulf %212, %212 : vector<1x1x128xf32>
    %216 = arith.subf %214, %215 : vector<1x1x128xf32>
    %217 = vector.broadcast %212 : vector<1x1x128xf32> to vector<22x22x128xf32>
    %218 = arith.subf %201, %217 : vector<22x22x128xf32>
    %cst_73 = arith.constant 9.99999974E-6 : f32
    %219 = vector.broadcast %cst_73 : f32 to vector<1x1x128xf32>
    %220 = arith.addf %216, %219 : vector<1x1x128xf32>
    %221 = math.rsqrt %220 : vector<1x1x128xf32>
    %222 = vector.broadcast %221 : vector<1x1x128xf32> to vector<22x22x128xf32>
    %223 = arith.mulf %218, %222 : vector<22x22x128xf32>
    %224 = vector.shape_cast %223 : vector<22x22x128xf32> to vector<11x2x22x128xf32>
    %225 = vector.extract_strided_slice %224 {offsets = [0, 0, 0, 0], sizes = [11, 1, 22, 128], strides = [1, 1, 1, 1]} : vector<11x2x22x128xf32> to vector<11x1x22x128xf32>
    %226 = vector.shape_cast %225 : vector<11x1x22x128xf32> to vector<11x22x128xf32>
    %227 = vector.extract_strided_slice %224 {offsets = [0, 1, 0, 0], sizes = [11, 1, 22, 128], strides = [1, 1, 1, 1]} : vector<11x2x22x128xf32> to vector<11x1x22x128xf32>
    %228 = vector.shape_cast %227 : vector<11x1x22x128xf32> to vector<11x22x128xf32>
    %229 = arith.maximumf %226, %228 : vector<11x22x128xf32>
    %230 = vector.extract_strided_slice %229 {offsets = [0, 0, 0], sizes = [11, 21, 128], strides = [1, 1, 1]} : vector<11x22x128xf32> to vector<11x21x128xf32>
    %231 = vector.extract_strided_slice %229 {offsets = [0, 1, 0], sizes = [11, 21, 128], strides = [1, 1, 1]} : vector<11x22x128xf32> to vector<11x21x128xf32>
    %232 = arith.maximumf %230, %231 : vector<11x21x128xf32>
    %cst_74 = arith.constant 0.000000e+00 : f32
    %233 = vector.broadcast %cst_74 : f32 to vector<11x3x128xf32>
    %234 = tpu.concatenate %232, %233 in 1 : vector<11x21x128xf32>, vector<11x3x128xf32> -> vector<11x24x128xf32>
    %235 = vector.shape_cast %234 : vector<11x24x128xf32> to vector<264x128xf32>
    %236 = arith.truncf %235 : vector<264x128xf32> to vector<264x128xbf16>
    %c0_75 = arith.constant 0 : index
    %c0_76 = arith.constant 0 : index
    %237 = vector.load %arg4[%c0_75, %c0_76] : memref<576x264xbf16, #tpu.memory_space<vmem>>, vector<576x264xbf16>
    %cst_77 = arith.constant dense<0.000000e+00> : vector<576x128xf32>
    %238 = tpu.matmul %237, %236, %cst_77 {dimension_numbers = #tpu.dot_dimension_numbers<[1], [0], [0], [1], [0, 0, 1, 1], [], []>} : vector<576x264xbf16>, vector<264x128xbf16>, vector<576x128xf32> -> vector<576x128xf32>
    %c0_78 = arith.constant 0 : index
    %c0_79 = arith.constant 0 : index
    %239 = vector.load %arg5[%c0_78, %c0_79] : memref<576x1xf32, #tpu.memory_space<vmem>>, vector<576x1xf32>
    %240 = vector.broadcast %239 : vector<576x1xf32> to vector<576x128xf32>
    %241 = arith.addf %238, %240 : vector<576x128xf32>
    %cst_80 = arith.constant 0.000000e+00 : f32
    %242 = vector.broadcast %cst_80 : f32 to vector<576x128xf32>
    %243 = arith.maximumf %241, %242 : vector<576x128xf32>
    %c0_81 = arith.constant 0 : index
    %c0_82 = arith.constant 0 : index
    %244 = vector.load %arg6[%c0_81, %c0_82] : memref<10x576xbf16, #tpu.memory_space<vmem>>, vector<10x576xbf16>
    %245 = arith.truncf %243 : vector<576x128xf32> to vector<576x128xbf16>
    %cst_83 = arith.constant dense<0.000000e+00> : vector<10x128xf32>
    %246 = tpu.matmul %244, %245, %cst_83 {dimension_numbers = #tpu.dot_dimension_numbers<[1], [0], [0], [1], [0, 0, 1, 1], [], []>} : vector<10x576xbf16>, vector<576x128xbf16>, vector<10x128xf32> -> vector<10x128xf32>
    %c0_84 = arith.constant 0 : index
    %c0_85 = arith.constant 0 : index
    %247 = vector.load %arg7[%c0_84, %c0_85] : memref<10x1xf32, #tpu.memory_space<vmem>>, vector<10x1xf32>
    %248 = vector.broadcast %247 : vector<10x1xf32> to vector<10x128xf32>
    %249 = arith.addf %246, %248 : vector<10x128xf32>
    %cst_86 = arith.constant dense<0xFF800000> : vector<128xf32>
    %250 = vector.multi_reduction <maximumf>, %249, %cst_86 [0] : vector<10x128xf32> to vector<128xf32>
    %251 = vector.shape_cast %250 : vector<128xf32> to vector<1x128xf32>
    %252 = vector.broadcast %251 : vector<1x128xf32> to vector<10x128xf32>
    %253 = arith.subf %249, %252 : vector<10x128xf32>
    %254 = math.exp %253 : vector<10x128xf32>
    %cst_87 = arith.constant dense<0.000000e+00> : vector<128xf32>
    %255 = vector.multi_reduction <add>, %254, %cst_87 [0] : vector<10x128xf32> to vector<128xf32>
    %256 = vector.shape_cast %255 : vector<128xf32> to vector<1x128xf32>
    %257 = vector.broadcast %256 : vector<1x128xf32> to vector<10x128xf32>
    %258 = arith.divf %254, %257 : vector<10x128xf32>
    %c0_88 = arith.constant 0 : index
    %c0_89 = arith.constant 0 : index
    %259 = vector.load %arg8[%c0_88, %c0_89] : memref<10x128xf32, #tpu.memory_space<vmem>>, vector<10x128xf32>
    tpu.vector_store %arg8[%c0_88, %c0_89], %258 {strides = array<i32>} : memref<10x128xf32, #tpu.memory_space<vmem>>, vector<10x128xf32>,
    return
  }
  func.func @transform_0(%arg0: i32) -> (i32, i32, i32) {
    %c0_i32 = arith.constant 0 : i32
    %c0_i32_0 = arith.constant 0 : i32
    %c0_i32_1 = arith.constant 0 : i32
    return %c0_i32, %c0_i32_0, %arg0 : i32, i32, i32
  }
  func.func @transform_1(%arg0: i32) -> (i32, i32) {
    %c0_i32 = arith.constant 0 : i32
    %c0_i32_0 = arith.constant 0 : i32
    %c0_i32_1 = arith.constant 0 : i32
    return %c0_i32, %c0_i32_0 : i32, i32
  }
  func.func @transform_2(%arg0: i32) -> i32 {
    %c0_i32 = arith.constant 0 : i32
    %c0_i32_0 = arith.constant 0 : i32
    return %c0_i32 : i32
  }
  func.func @transform_3(%arg0: i32) -> (i32, i32) {
    %c0_i32 = arith.constant 0 : i32
    %c0_i32_0 = arith.constant 0 : i32
    %c0_i32_1 = arith.constant 0 : i32
    return %c0_i32, %c0_i32_0 : i32, i32
  }
  func.func @transform_4(%arg0: i32) -> (i32, i32) {
    %c0_i32 = arith.constant 0 : i32
    %c0_i32_0 = arith.constant 0 : i32
    %c0_i32_1 = arith.constant 0 : i32
    return %c0_i32, %c0_i32_0 : i32, i32
  }
  func.func @transform_5(%arg0: i32) -> (i32, i32) {
    %c0_i32 = arith.constant 0 : i32
    %c0_i32_0 = arith.constant 0 : i32
    %c0_i32_1 = arith.constant 0 : i32
    return %c0_i32, %c0_i32_0 : i32, i32
  }
  func.func @transform_6(%arg0: i32) -> (i32, i32) {
    %c0_i32 = arith.constant 0 : i32
    %c0_i32_0 = arith.constant 0 : i32
    %c0_i32_1 = arith.constant 0 : i32
    return %c0_i32, %c0_i32_0 : i32, i32
  }
  func.func @transform_7(%arg0: i32) -> (i32, i32) {
    %c0_i32 = arith.constant 0 : i32
    %c0_i32_0 = arith.constant 0 : i32
    return %c0_i32, %arg0 : i32, i32
  }
}

</mosaic_0001>

<llo_original>
// kernel: mnist_forward.1
$region0: #{mnist_forward.1}
  #allocation0 [shape = 'u32[]', space=smem, size = 0x4, offset = 0x4, fixed_abs, tag = 'smem constant byte address 0x4 - core index']
  #allocation1 [shape = 'u32[144,128]{1,0:T(1,128)}', space=vmem, size = 0x12000, scoped, tag = 'internal scratch']
  %s0 = inlined_call_operand.vmem [shape: bf16[28,28,128], index: 0, kind: input, shape index: {}]
  %s1 = inlined_call_operand.vmem [shape: f32[3,9], index: 1, kind: input, shape index: {}]
  %s2 = inlined_call_operand.vmem [shape: f32[3], index: 2, kind: input, shape index: {}]
  %s3 = inlined_call_operand.vmem [shape: bf16[576,264], index: 3, kind: input, shape index: {}]
  %s4 = inlined_call_operand.vmem [shape: f32[576,1], index: 4, kind: input, shape index: {}]
  %s5 = inlined_call_operand.vmem [shape: bf16[10,576], index: 5, kind: input, shape index: {}]
  %s6 = inlined_call_operand.vmem [shape: f32[10,1], index: 6, kind: input, shape index: {}]
  %s7 = inlined_call_operand.vmem [shape: f32[10,128], index: 7, kind: output, shape index: {}]
  %s8 = sld [smem:[#allocation0]]
  $region46: #{mnist_forward.1} parent=0
    _
  %s10 = ssub.s32 1, %s8
  %s11 = scalar_select 0, %s10, %s8
  $region1: #{mnist_forward.1} parent=0
    #allocation2 [shape = 'u8[2048]{0}', space=smem, size = 0x800, scoped, tag = 'input window, operand 1, single buffered']
    #allocation3 [shape = 's32[1]{0}', space=sflag, size = 0x4, scoped, tag = 'scoped memory for mnist_forward.1']
    #allocation4 [shape = 'u8[512]{0}', space=smem, size = 0x200, scoped, tag = 'input window, operand 2, single buffered']
    #allocation5 [shape = 's32[1]{0}', space=sflag, size = 0x4, scoped, tag = 'scoped memory for mnist_forward.1']
    %12 = vsyncpa [#allocation3], 0
    %13 = vsyncpa [#allocation5], 0
    // Predicated region
    $region2: #{mnist_forward.1} parent=1 // pred_check
      _
    $region3: #{mnist_forward.1} parent=1 // pred_check_branch
      %15 = sbr.rel (0) target = $region5
    $region4: #{mnist_forward.1} parent=1 // pred_region
      _
    $region5: #{mnist_forward.1} parent=1 // pred_fallthru
      _
    // Predicated region
    $region6: #{mnist_forward.1} parent=1 // pred_check
      _
    $region7: #{mnist_forward.1} parent=1 // pred_check_branch
      %17 = sbr.rel (0) target = $region9
    $region8: #{mnist_forward.1} parent=1 // pred_region
      %s19 = ssub.s32 64, 64
      %20 = vsyncadd [#allocation3], %s19
      %s22 = sshll.u32 %s1, 4
      %s23 = int_to_ptr.vmem [resolvable:$true] %s22
      %25 = dma.vmem_to_smem %s23, 64, [#allocation2], [#allocation3]
    $region9: #{mnist_forward.1} parent=1 // pred_fallthru
      _
    // Predicated region
    $region10: #{mnist_forward.1} parent=1 // pred_check
      _
    $region11: #{mnist_forward.1} parent=1 // pred_check_branch
      %27 = sbr.rel (0) target = $region13
    $region12: #{mnist_forward.1} parent=1 // pred_region
      %s29 = ssub.s32 16, 16
      %30 = vsyncadd [#allocation5], %s29
      %s32 = sshll.u32 %s2, 4
      %s33 = int_to_ptr.vmem [resolvable:$true] %s32
      %35 = dma.vmem_to_smem %s33, 16, [#allocation4], [#allocation5]
    $region13: #{mnist_forward.1} parent=1 // pred_fallthru
      _
    // Predicated region
    $region14: #{mnist_forward.1} parent=1 // pred_check
      _
    $region15: #{mnist_forward.1} parent=1 // pred_check_branch
      %37 = sbr.rel (0) target = $region17
    $region16: #{mnist_forward.1} parent=1 // pred_region
      _
    $region17: #{mnist_forward.1} parent=1 // pred_fallthru
      _
    // Predicated region
    $region18: #{mnist_forward.1} parent=1 // pred_check
      _
    $region19: #{mnist_forward.1} parent=1 // pred_check_branch
      %39 = sbr.rel (0) target = $region21
    $region20: #{mnist_forward.1} parent=1 // pred_region
      _
    $region21: #{mnist_forward.1} parent=1 // pred_fallthru
      _
    // Predicated region
    $region22: #{mnist_forward.1} parent=1 // pred_check
      _
    $region23: #{mnist_forward.1} parent=1 // pred_check_branch
      %41 = sbr.rel (0) target = $region25
    $region24: #{mnist_forward.1} parent=1 // pred_region
      _
    $region25: #{mnist_forward.1} parent=1 // pred_fallthru
      _
    // Predicated region
    $region26: #{mnist_forward.1} parent=1 // pred_check
      _
    $region27: #{mnist_forward.1} parent=1 // pred_check_branch
      %43 = sbr.rel (0) target = $region29
    $region28: #{mnist_forward.1} parent=1 // pred_region
      _
    $region29: #{mnist_forward.1} parent=1 // pred_fallthru
      _
    // Predicated region
    $region30: #{mnist_forward.1} parent=1 // pred_check
      _
    $region31: #{mnist_forward.1} parent=1 // pred_check_branch
      %45 = sbr.rel (0) target = $region33
    $region32: #{mnist_forward.1} parent=1 // pred_region
      %46 = dma.done [#allocation3], 64
    $region33: #{mnist_forward.1} parent=1 // pred_fallthru
      _
    // Predicated region
    $region34: #{mnist_forward.1} parent=1 // pred_check
      _
    $region35: #{mnist_forward.1} parent=1 // pred_check_branch
      %48 = sbr.rel (0) target = $region37
    $region36: #{mnist_forward.1} parent=1 // pred_region
      %49 = dma.done [#allocation5], 16
    $region37: #{mnist_forward.1} parent=1 // pred_fallthru
      _
    %50 = sfence
    %v52 = vld [vmem:[%s0] sm:$0xf]
    %v53 = vld [vmem:[%s0 + $0x4] sm:$0xf]
    %v54 = vld [vmem:[%s0 + $0x8] sm:$0xf]
    %v55 = vld [vmem:[%s0 + $0xc] sm:$0x3]
    %v56 = vld [vmem:[%s0 + $0x10] sm:$0xf]
    %v57 = vld [vmem:[%s0 + $0x14] sm:$0xf]
    %v58 = vld [vmem:[%s0 + $0x18] sm:$0xf]
    %v59 = vld [vmem:[%s0 + $0x1c] sm:$0x3]
    %v60 = vld [vmem:[%s0 + $0x20] sm:$0xf]
    %v61 = vld [vmem:[%s0 + $0x24] sm:$0xf]
    %v62 = vld [vmem:[%s0 + $0x28] sm:$0xf]
    %v63 = vld [vmem:[%s0 + $0x2c] sm:$0x3]
    %v64 = vld [vmem:[%s0 + $0x30] sm:$0xf]
    %v65 = vld [vmem:[%s0 + $0x34] sm:$0xf]
    %v66 = vld [vmem:[%s0 + $0x38] sm:$0xf]
    %v67 = vld [vmem:[%s0 + $0x3c] sm:$0x3]
    %v68 = vld [vmem:[%s0 + $0x40] sm:$0xf]
    %v69 = vld [vmem:[%s0 + $0x44] sm:$0xf]
    %v70 = vld [vmem:[%s0 + $0x48] sm:$0xf]
    %v71 = vld [vmem:[%s0 + $0x4c] sm:$0x3]
    %v72 = vld [vmem:[%s0 + $0x50] sm:$0xf]
    %v73 = vld [vmem:[%s0 + $0x54] sm:$0xf]
    %v74 = vld [vmem:[%s0 + $0x58] sm:$0xf]
    %v75 = vld [vmem:[%s0 + $0x5c] sm:$0x3]
    %v76 = vld [vmem:[%s0 + $0x60] sm:$0xf]
    %v77 = vld [vmem:[%s0 + $0x64] sm:$0xf]
    %v78 = vld [vmem:[%s0 + $0x68] sm:$0xf]
    %v79 = vld [vmem:[%s0 + $0x6c] sm:$0x3]
    %v80 = vld [vmem:[%s0 + $0x70] sm:$0xf]
    %v81 = vld [vmem:[%s0 + $0x74] sm:$0xf]
    %v82 = vld [vmem:[%s0 + $0x78] sm:$0xf]
    %v83 = vld [vmem:[%s0 + $0x7c] sm:$0x3]
    %v84 = vld [vmem:[%s0 + $0x80] sm:$0xf]
    %v85 = vld [vmem:[%s0 + $0x84] sm:$0xf]
    %v86 = vld [vmem:[%s0 + $0x88] sm:$0xf]
    %v87 = vld [vmem:[%s0 + $0x8c] sm:$0x3]
    %v88 = vld [vmem:[%s0 + $0x90] sm:$0xf]
    %v89 = vld [vmem:[%s0 + $0x94] sm:$0xf]
    %v90 = vld [vmem:[%s0 + $0x98] sm:$0xf]
    %v91 = vld [vmem:[%s0 + $0x9c] sm:$0x3]
    %v92 = vld [vmem:[%s0 + $0xa0] sm:$0xf]
    %v93 = vld [vmem:[%s0 + $0xa4] sm:$0xf]
    %v94 = vld [vmem:[%s0 + $0xa8] sm:$0xf]
    %v95 = vld [vmem:[%s0 + $0xac] sm:$0x3]
    %v96 = vld [vmem:[%s0 + $0xb0] sm:$0xf]
    %v97 = vld [vmem:[%s0 + $0xb4] sm:$0xf]
    %v98 = vld [vmem:[%s0 + $0xb8] sm:$0xf]
    %v99 = vld [vmem:[%s0 + $0xbc] sm:$0x3]
    %v100 = vld [vmem:[%s0 + $0xc0] sm:$0xf]
    %v101 = vld [vmem:[%s0 + $0xc4] sm:$0xf]
    %v102 = vld [vmem:[%s0 + $0xc8] sm:$0xf]
    %v103 = vld [vmem:[%s0 + $0xcc] sm:$0x3]
    %v104 = vld [vmem:[%s0 + $0xd0] sm:$0xf]
    %v105 = vld [vmem:[%s0 + $0xd4] sm:$0xf]
    %v106 = vld [vmem:[%s0 + $0xd8] sm:$0xf]
    %v107 = vld [vmem:[%s0 + $0xdc] sm:$0x3]
    %v108 = vld [vmem:[%s0 + $0xe0] sm:$0xf]
    %v109 = vld [vmem:[%s0 + $0xe4] sm:$0xf]
    %v110 = vld [vmem:[%s0 + $0xe8] sm:$0xf]
    %v111 = vld [vmem:[%s0 + $0xec] sm:$0x3]
    %v112 = vld [vmem:[%s0 + $0xf0] sm:$0xf]
    %v113 = vld [vmem:[%s0 + $0xf4] sm:$0xf]
    %v114 = vld [vmem:[%s0 + $0xf8] sm:$0xf]
    %v115 = vld [vmem:[%s0 + $0xfc] sm:$0x3]
    %v116 = vld [vmem:[%s0 + $0x100] sm:$0xf]
    %v117 = vld [vmem:[%s0 + $0x104] sm:$0xf]
    %v118 = vld [vmem:[%s0 + $0x108] sm:$0xf]
    %v119 = vld [vmem:[%s0 + $0x10c] sm:$0x3]
    %v120 = vld [vmem:[%s0 + $0x110] sm:$0xf]
    %v121 = vld [vmem:[%s0 + $0x114] sm:$0xf]
    %v122 = vld [vmem:[%s0 + $0x118] sm:$0xf]
    %v123 = vld [vmem:[%s0 + $0x11c] sm:$0x3]
    %v124 = vld [vmem:[%s0 + $0x120] sm:$0xf]
    %v125 = vld [vmem:[%s0 + $0x124] sm:$0xf]
    %v126 = vld [vmem:[%s0 + $0x128] sm:$0xf]
    %v127 = vld [vmem:[%s0 + $0x12c] sm:$0x3]
    %v128 = vld [vmem:[%s0 + $0x130] sm:$0xf]
    %v129 = vld [vmem:[%s0 + $0x134] sm:$0xf]
    %v130 = vld [vmem:[%s0 + $0x138] sm:$0xf]
    %v131 = vld [vmem:[%s0 + $0x13c] sm:$0x3]
    %v132 = vld [vmem:[%s0 + $0x140] sm:$0xf]
    %v133 = vld [vmem:[%s0 + $0x144] sm:$0xf]
    %v134 = vld [vmem:[%s0 + $0x148] sm:$0xf]
    %v135 = vld [vmem:[%s0 + $0x14c] sm:$0x3]
    %v136 = vld [vmem:[%s0 + $0x150] sm:$0xf]
    %v137 = vld [vmem:[%s0 + $0x154] sm:$0xf]
    %v138 = vld [vmem:[%s0 + $0x158] sm:$0xf]
    %v139 = vld [vmem:[%s0 + $0x15c] sm:$0x3]
    %v140 = vld [vmem:[%s0 + $0x160] sm:$0xf]
    %v141 = vld [vmem:[%s0 + $0x164] sm:$0xf]
    %v142 = vld [vmem:[%s0 + $0x168] sm:$0xf]
    %v143 = vld [vmem:[%s0 + $0x16c] sm:$0x3]
    %v144 = vld [vmem:[%s0 + $0x170] sm:$0xf]
    %v145 = vld [vmem:[%s0 + $0x174] sm:$0xf]
    %v146 = vld [vmem:[%s0 + $0x178] sm:$0xf]
    %v147 = vld [vmem:[%s0 + $0x17c] sm:$0x3]
    %v148 = vld [vmem:[%s0 + $0x180] sm:$0xf]
    %v149 = vld [vmem:[%s0 + $0x184] sm:$0xf]
    %v150 = vld [vmem:[%s0 + $0x188] sm:$0xf]
    %v151 = vld [vmem:[%s0 + $0x18c] sm:$0x3]
    %v152 = vld [vmem:[%s0 + $0x190] sm:$0xf]
    %v153 = vld [vmem:[%s0 + $0x194] sm:$0xf]
    %v154 = vld [vmem:[%s0 + $0x198] sm:$0xf]
    %v155 = vld [vmem:[%s0 + $0x19c] sm:$0x3]
    %v156 = vld [vmem:[%s0 + $0x1a0] sm:$0xf]
    %v157 = vld [vmem:[%s0 + $0x1a4] sm:$0xf]
    %v158 = vld [vmem:[%s0 + $0x1a8] sm:$0xf]
    %v159 = vld [vmem:[%s0 + $0x1ac] sm:$0x3]
    %v160 = vld [vmem:[%s0 + $0x1b0] sm:$0xf]
    %v161 = vld [vmem:[%s0 + $0x1b4] sm:$0xf]
    %v162 = vld [vmem:[%s0 + $0x1b8] sm:$0xf]
    %v163 = vld [vmem:[%s0 + $0x1bc] sm:$0x3]
    %v164 = vunpack.c.l.bf16 %v52
    %v165 = vunpack.c.l.bf16 %v53
    %v166 = vunpack.c.l.bf16 %v54
    %v167 = vunpack.c.l.bf16 %v55
    %v168 = vunpack.c.l.bf16 %v56
    %v169 = vunpack.c.l.bf16 %v57
    %v170 = vunpack.c.l.bf16 %v58
    %v171 = vunpack.c.l.bf16 %v59
    %v172 = vunpack.c.l.bf16 %v60
    %v173 = vunpack.c.l.bf16 %v61
    %v174 = vunpack.c.l.bf16 %v62
    %v175 = vunpack.c.l.bf16 %v63
    %v176 = vunpack.c.l.bf16 %v64
    %v177 = vunpack.c.l.bf16 %v65
    %v178 = vunpack.c.l.bf16 %v66
    %v179 = vunpack.c.l.bf16 %v67
    %v180 = vunpack.c.l.bf16 %v68
    %v181 = vunpack.c.l.bf16 %v69
    %v182 = vunpack.c.l.bf16 %v70
    %v183 = vunpack.c.l.bf16 %v71
    %v184 = vunpack.c.l.bf16 %v72
    %v185 = vunpack.c.l.bf16 %v73
    %v186 = vunpack.c.l.bf16 %v74
    %v187 = vunpack.c.l.bf16 %v75
    %v188 = vunpack.c.l.bf16 %v76
    %v189 = vunpack.c.l.bf16 %v77
    %v190 = vunpack.c.l.bf16 %v78
    %v191 = vunpack.c.l.bf16 %v79
    %v192 = vunpack.c.l.bf16 %v80
    %v193 = vunpack.c.l.bf16 %v81
    %v194 = vunpack.c.l.bf16 %v82
    %v195 = vunpack.c.l.bf16 %v83
    %v196 = vunpack.c.l.bf16 %v84
    %v197 = vunpack.c.l.bf16 %v85
    %v198 = vunpack.c.l.bf16 %v86
    %v199 = vunpack.c.l.bf16 %v87
    %v200 = vunpack.c.l.bf16 %v88
    %v201 = vunpack.c.l.bf16 %v89
    %v202 = vunpack.c.l.bf16 %v90
    %v203 = vunpack.c.l.bf16 %v91
    %v204 = vunpack.c.l.bf16 %v92
    %v205 = vunpack.c.l.bf16 %v93
    %v206 = vunpack.c.l.bf16 %v94
    %v207 = vunpack.c.l.bf16 %v95
    %v208 = vunpack.c.l.bf16 %v96
    %v209 = vunpack.c.l.bf16 %v97
    %v210 = vunpack.c.l.bf16 %v98
    %v211 = vunpack.c.l.bf16 %v99
    %v212 = vunpack.c.l.bf16 %v100
    %v213 = vunpack.c.l.bf16 %v101
    %v214 = vunpack.c.l.bf16 %v102
    %v215 = vunpack.c.l.bf16 %v103
    %v216 = vunpack.c.l.bf16 %v104
    %v217 = vunpack.c.l.bf16 %v105
    %v218 = vunpack.c.l.bf16 %v106
    %v219 = vunpack.c.l.bf16 %v107
    %v220 = vunpack.c.l.bf16 %v108
    %v221 = vunpack.c.l.bf16 %v109
    %v222 = vunpack.c.l.bf16 %v110
    %v223 = vunpack.c.l.bf16 %v111
    %v224 = vunpack.c.l.bf16 %v112
    %v225 = vunpack.c.l.bf16 %v113
    %v226 = vunpack.c.l.bf16 %v114
    %v227 = vunpack.c.l.bf16 %v115
    %v228 = vunpack.c.l.bf16 %v116
    %v229 = vunpack.c.l.bf16 %v117
    %v230 = vunpack.c.l.bf16 %v118
    %v231 = vunpack.c.l.bf16 %v119
    %v232 = vunpack.c.l.bf16 %v120
    %v233 = vunpack.c.l.bf16 %v121
    %v234 = vunpack.c.l.bf16 %v122
    %v235 = vunpack.c.l.bf16 %v123
    %v236 = vunpack.c.l.bf16 %v124
    %v237 = vunpack.c.l.bf16 %v125
    %v238 = vunpack.c.l.bf16 %v126
    %v239 = vunpack.c.l.bf16 %v127
    %v240 = vunpack.c.l.bf16 %v128
    %v241 = vunpack.c.l.bf16 %v129
    %v242 = vunpack.c.l.bf16 %v130
    %v243 = vunpack.c.l.bf16 %v131
    %v244 = vunpack.c.l.bf16 %v132
    %v245 = vunpack.c.l.bf16 %v133
    %v246 = vunpack.c.l.bf16 %v134
    %v247 = vunpack.c.l.bf16 %v135
    %v248 = vunpack.c.l.bf16 %v136
    %v249 = vunpack.c.l.bf16 %v137
    %v250 = vunpack.c.l.bf16 %v138
    %v251 = vunpack.c.l.bf16 %v139
    %v252 = vunpack.c.l.bf16 %v140
    %v253 = vunpack.c.l.bf16 %v141
    %v254 = vunpack.c.l.bf16 %v142
    %v255 = vunpack.c.l.bf16 %v143
    %v256 = vunpack.c.l.bf16 %v144
    %v257 = vunpack.c.l.bf16 %v145
    %v258 = vunpack.c.l.bf16 %v146
    %v259 = vunpack.c.l.bf16 %v147
    %v260 = vunpack.c.l.bf16 %v148
    %v261 = vunpack.c.l.bf16 %v149
    %v262 = vunpack.c.l.bf16 %v150
    %v263 = vunpack.c.l.bf16 %v151
    %v264 = vunpack.c.l.bf16 %v152
    %v265 = vunpack.c.l.bf16 %v153
    %v266 = vunpack.c.l.bf16 %v154
    %v267 = vunpack.c.l.bf16 %v155
    %v268 = vunpack.c.l.bf16 %v156
    %v269 = vunpack.c.l.bf16 %v157
    %v270 = vunpack.c.l.bf16 %v158
    %v271 = vunpack.c.l.bf16 %v159
    %v272 = vunpack.c.l.bf16 %v160
    %v273 = vunpack.c.l.bf16 %v161
    %v274 = vunpack.c.l.bf16 %v162
    %v275 = vunpack.c.l.bf16 %v163
    %s276 = sld [smem:[#allocation2]]
    %v277 = vstv %s276
    %v278 = vmul.f32 %v164, %v277
    %v279 = vmul.f32 %v165, %v277
    %v280 = vmul.f32 %v166, %v277
    %v281 = vmul.f32 %v167, %v277
    %v282 = vmul.f32 %v168, %v277
    %v283 = vmul.f32 %v169, %v277
    %v284 = vmul.f32 %v170, %v277
    %v285 = vmul.f32 %v171, %v277
    %v286 = vmul.f32 %v172, %v277
    %v287 = vmul.f32 %v173, %v277
    %v288 = vmul.f32 %v174, %v277
    %v289 = vmul.f32 %v175, %v277
    %v290 = vmul.f32 %v176, %v277
    %v291 = vmul.f32 %v177, %v277
    %v292 = vmul.f32 %v178, %v277
    %v293 = vmul.f32 %v179, %v277
    %v294 = vmul.f32 %v180, %v277
    %v295 = vmul.f32 %v181, %v277
    %v296 = vmul.f32 %v182, %v277
    %v297 = vmul.f32 %v183, %v277
    %v298 = vmul.f32 %v184, %v277
    %v299 = vmul.f32 %v185, %v277
    %v300 = vmul.f32 %v186, %v277
    %v301 = vmul.f32 %v187, %v277
    %v302 = vmul.f32 %v188, %v277
    %v303 = vmul.f32 %v189, %v277
    %v304 = vmul.f32 %v190, %v277
    %v305 = vmul.f32 %v191, %v277
    %v306 = vmul.f32 %v192, %v277
    %v307 = vmul.f32 %v193, %v277
    %v308 = vmul.f32 %v194, %v277
    %v309 = vmul.f32 %v195, %v277
    %v310 = vmul.f32 %v196, %v277
    %v311 = vmul.f32 %v197, %v277
    %v312 = vmul.f32 %v198, %v277
    %v313 = vmul.f32 %v199, %v277
    %v314 = vmul.f32 %v200, %v277
    %v315 = vmul.f32 %v201, %v277
    %v316 = vmul.f32 %v202, %v277
    %v317 = vmul.f32 %v203, %v277
    %v318 = vmul.f32 %v204, %v277
    %v319 = vmul.f32 %v205, %v277
    %v320 = vmul.f32 %v206, %v277
    %v321 = vmul.f32 %v207, %v277
    %v322 = vmul.f32 %v208, %v277
    %v323 = vmul.f32 %v209, %v277
    %v324 = vmul.f32 %v210, %v277
    %v325 = vmul.f32 %v211, %v277
    %v326 = vmul.f32 %v212, %v277
    %v327 = vmul.f32 %v213, %v277
    %v328 = vmul.f32 %v214, %v277
    %v329 = vmul.f32 %v215, %v277
    %v330 = vmul.f32 %v216, %v277
    %v331 = vmul.f32 %v217, %v277
    %v332 = vmul.f32 %v218, %v277
    %v333 = vmul.f32 %v219, %v277
    %v334 = vmul.f32 %v220, %v277
    %v335 = vmul.f32 %v221, %v277
    %v336 = vmul.f32 %v222, %v277
    %v337 = vmul.f32 %v223, %v277
    %v338 = vmul.f32 %v224, %v277
    %v339 = vmul.f32 %v225, %v277
    %v340 = vmul.f32 %v226, %v277
    %v341 = vmul.f32 %v227, %v277
    %v342 = vmul.f32 %v228, %v277
    %v343 = vmul.f32 %v229, %v277
    %v344 = vmul.f32 %v230, %v277
    %v345 = vmul.f32 %v231, %v277
    %v346 = vmul.f32 %v232, %v277
    %v347 = vmul.f32 %v233, %v277
    %v348 = vmul.f32 %v234, %v277
    %v349 = vmul.f32 %v235, %v277
    %v350 = vmul.f32 %v236, %v277
    %v351 = vmul.f32 %v237, %v277
    %v352 = vmul.f32 %v238, %v277
    %v353 = vmul.f32 %v239, %v277
    %v354 = vmul.f32 %v240, %v277
    %v355 = vmul.f32 %v241, %v277
    %v356 = vmul.f32 %v242, %v277
    %v357 = vmul.f32 %v243, %v277
    %v358 = vmul.f32 %v244, %v277
    %v359 = vmul.f32 %v245, %v277
    %v360 = vmul.f32 %v246, %v277
    %v361 = vmul.f32 %v247, %v277
    %v362 = vmul.f32 %v248, %v277
    %v363 = vmul.f32 %v249, %v277
    %v364 = vmul.f32 %v250, %v277
    %v365 = vmul.f32 %v251, %v277
    %v366 = vmul.f32 %v252, %v277
    %v367 = vmul.f32 %v253, %v277
    %v368 = vmul.f32 %v254, %v277
    %v369 = vmul.f32 %v255, %v277
    %v370 = vmul.f32 %v256, %v277
    %v371 = vmul.f32 %v257, %v277
    %v372 = vmul.f32 %v258, %v277
    %v373 = vmul.f32 %v259, %v277
    %v374 = vmul.f32 %v260, %v277
    %v375 = vmul.f32 %v261, %v277
    %v376 = vmul.f32 %v262, %v277
    %v377 = vmul.f32 %v263, %v277
    %v378 = vmul.f32 %v264, %v277
    %v379 = vmul.f32 %v265, %v277
    %v380 = vmul.f32 %v266, %v277
    %v381 = vmul.f32 %v267, %v277
    %s382 = sld [smem:[#allocation2 + $0x3]]
    %v383 = vstv %s382
    %v384 = vmul.f32 %v168, %v383
    %v385 = vmul.f32 %v169, %v383
    %v386 = vmul.f32 %v170, %v383
    %v387 = vmul.f32 %v171, %v383
    %v388 = vmul.f32 %v172, %v383
    %v389 = vmul.f32 %v173, %v383
    %v390 = vmul.f32 %v174, %v383
    %v391 = vmul.f32 %v175, %v383
    %v392 = vmul.f32 %v176, %v383
    %v393 = vmul.f32 %v177, %v383
    %v394 = vmul.f32 %v178, %v383
    %v395 = vmul.f32 %v179, %v383
    %v396 = vmul.f32 %v180, %v383
    %v397 = vmul.f32 %v181, %v383
    %v398 = vmul.f32 %v182, %v383
    %v399 = vmul.f32 %v183, %v383
    %v400 = vmul.f32 %v184, %v383
    %v401 = vmul.f32 %v185, %v383
    %v402 = vmul.f32 %v186, %v383
    %v403 = vmul.f32 %v187, %v383
    %v404 = vmul.f32 %v188, %v383
    %v405 = vmul.f32 %v189, %v383
    %v406 = vmul.f32 %v190, %v383
    %v407 = vmul.f32 %v191, %v383
    %v408 = vmul.f32 %v192, %v383
    %v409 = vmul.f32 %v193, %v383
    %v410 = vmul.f32 %v194, %v383
    %v411 = vmul.f32 %v195, %v383
    %v412 = vmul.f32 %v196, %v383
    %v413 = vmul.f32 %v197, %v383
    %v414 = vmul.f32 %v198, %v383
    %v415 = vmul.f32 %v199, %v383
    %v416 = vmul.f32 %v200, %v383
    %v417 = vmul.f32 %v201, %v383
    %v418 = vmul.f32 %v202, %v383
    %v419 = vmul.f32 %v203, %v383
    %v420 = vmul.f32 %v204, %v383
    %v421 = vmul.f32 %v205, %v383
    %v422 = vmul.f32 %v206, %v383
    %v423 = vmul.f32 %v207, %v383
    %v424 = vmul.f32 %v208, %v383
    %v425 = vmul.f32 %v209, %v383
    %v426 = vmul.f32 %v210, %v383
    %v427 = vmul.f32 %v211, %v383
    %v428 = vmul.f32 %v212, %v383
    %v429 = vmul.f32 %v213, %v383
    %v430 = vmul.f32 %v214, %v383
    %v431 = vmul.f32 %v215, %v383
    %v432 = vmul.f32 %v216, %v383
    %v433 = vmul.f32 %v217, %v383
    %v434 = vmul.f32 %v218, %v383
    %v435 = vmul.f32 %v219, %v383
    %v436 = vmul.f32 %v220, %v383
    %v437 = vmul.f32 %v221, %v383
    %v438 = vmul.f32 %v222, %v383
    %v439 = vmul.f32 %v223, %v383
    %v440 = vmul.f32 %v224, %v383
    %v441 = vmul.f32 %v225, %v383
    %v442 = vmul.f32 %v226, %v383
    %v443 = vmul.f32 %v227, %v383
    %v444 = vmul.f32 %v228, %v383
    %v445 = vmul.f32 %v229, %v383
    %v446 = vmul.f32 %v230, %v383
    %v447 = vmul.f32 %v231, %v383
    %v448 = vmul.f32 %v232, %v383
    %v449 = vmul.f32 %v233, %v383
    %v450 = vmul.f32 %v234, %v383
    %v451 = vmul.f32 %v235, %v383
    %v452 = vmul.f32 %v236, %v383
    %v453 = vmul.f32 %v237, %v383
    %v454 = vmul.f32 %v238, %v383
    %v455 = vmul.f32 %v239, %v383
    %v456 = vmul.f32 %v240, %v383
    %v457 = vmul.f32 %v241, %v383
    %v458 = vmul.f32 %v242, %v383
    %v459 = vmul.f32 %v243, %v383
    %v460 = vmul.f32 %v244, %v383
    %v461 = vmul.f32 %v245, %v383
    %v462 = vmul.f32 %v246, %v383
    %v463 = vmul.f32 %v247, %v383
    %v464 = vmul.f32 %v248, %v383
    %v465 = vmul.f32 %v249, %v383
    %v466 = vmul.f32 %v250, %v383
    %v467 = vmul.f32 %v251, %v383
    %v468 = vmul.f32 %v252, %v383
    %v469 = vmul.f32 %v253, %v383
    %v470 = vmul.f32 %v254, %v383
    %v471 = vmul.f32 %v255, %v383
    %v472 = vmul.f32 %v256, %v383
    %v473 = vmul.f32 %v257, %v383
    %v474 = vmul.f32 %v258, %v383
    %v475 = vmul.f32 %v259, %v383
    %v476 = vmul.f32 %v260, %v383
    %v477 = vmul.f32 %v261, %v383
    %v478 = vmul.f32 %v262, %v383
    %v479 = vmul.f32 %v263, %v383
    %v480 = vmul.f32 %v264, %v383
    %v481 = vmul.f32 %v265, %v383
    %v482 = vmul.f32 %v266, %v383
    %v483 = vmul.f32 %v267, %v383
    %v484 = vmul.f32 %v268, %v383
    %v485 = vmul.f32 %v269, %v383
    %v486 = vmul.f32 %v270, %v383
    %v487 = vmul.f32 %v271, %v383
    %v488 = vadd.f32 %v278, %v384
    %v489 = vadd.f32 %v279, %v385
    %v490 = vadd.f32 %v280, %v386
    %v491 = vadd.f32 %v281, %v387
    %v492 = vadd.f32 %v282, %v388
    %v493 = vadd.f32 %v283, %v389
    %v494 = vadd.f32 %v284, %v390
    %v495 = vadd.f32 %v285, %v391
    %v496 = vadd.f32 %v286, %v392
    %v497 = vadd.f32 %v287, %v393
    %v498 = vadd.f32 %v288, %v394
    %v499 = vadd.f32 %v289, %v395
    %v500 = vadd.f32 %v290, %v396
    %v501 = vadd.f32 %v291, %v397
    %v502 = vadd.f32 %v292, %v398
    %v503 = vadd.f32 %v293, %v399
    %v504 = vadd.f32 %v294, %v400
    %v505 = vadd.f32 %v295, %v401
    %v506 = vadd.f32 %v296, %v402
    %v507 = vadd.f32 %v297, %v403
    %v508 = vadd.f32 %v298, %v404
    %v509 = vadd.f32 %v299, %v405
    %v510 = vadd.f32 %v300, %v406
    %v511 = vadd.f32 %v301, %v407
    %v512 = vadd.f32 %v302, %v408
    %v513 = vadd.f32 %v303, %v409
    %v514 = vadd.f32 %v304, %v410
    %v515 = vadd.f32 %v305, %v411
    %v516 = vadd.f32 %v306, %v412
    %v517 = vadd.f32 %v307, %v413
    %v518 = vadd.f32 %v308, %v414
    %v519 = vadd.f32 %v309, %v415
    %v520 = vadd.f32 %v310, %v416
    %v521 = vadd.f32 %v311, %v417
    %v522 = vadd.f32 %v312, %v418
    %v523 = vadd.f32 %v313, %v419
    %v524 = vadd.f32 %v314, %v420
    %v525 = vadd.f32 %v315, %v421
    %v526 = vadd.f32 %v316, %v422
    %v527 = vadd.f32 %v317, %v423
    %v528 = vadd.f32 %v318, %v424
    %v529 = vadd.f32 %v319, %v425
    %v530 = vadd.f32 %v320, %v426
    %v531 = vadd.f32 %v321, %v427
    %v532 = vadd.f32 %v322, %v428
    %v533 = vadd.f32 %v323, %v429
    %v534 = vadd.f32 %v324, %v430
    %v535 = vadd.f32 %v325, %v431
    %v536 = vadd.f32 %v326, %v432
    %v537 = vadd.f32 %v327, %v433
    %v538 = vadd.f32 %v328, %v434
    %v539 = vadd.f32 %v329, %v435
    %v540 = vadd.f32 %v330, %v436
    %v541 = vadd.f32 %v331, %v437
    %v542 = vadd.f32 %v332, %v438
    %v543 = vadd.f32 %v333, %v439
    %v544 = vadd.f32 %v334, %v440
    %v545 = vadd.f32 %v335, %v441
    %v546 = vadd.f32 %v336, %v442
    %v547 = vadd.f32 %v337, %v443
    %v548 = vadd.f32 %v338, %v444
    %v549 = vadd.f32 %v339, %v445
    %v550 = vadd.f32 %v340, %v446
    %v551 = vadd.f32 %v341, %v447
    %v552 = vadd.f32 %v342, %v448
    %v553 = vadd.f32 %v343, %v449
    %v554 = vadd.f32 %v344, %v450
    %v555 = vadd.f32 %v345, %v451
    %v556 = vadd.f32 %v346, %v452
    %v557 = vadd.f32 %v347, %v453
    %v558 = vadd.f32 %v348, %v454
    %v559 = vadd.f32 %v349, %v455
    %v560 = vadd.f32 %v350, %v456
    %v561 = vadd.f32 %v351, %v457
    %v562 = vadd.f32 %v352, %v458
    %v563 = vadd.f32 %v353, %v459
    %v564 = vadd.f32 %v354, %v460
    %v565 = vadd.f32 %v355, %v461
    %v566 = vadd.f32 %v356, %v462
    %v567 = vadd.f32 %v357, %v463
    %v568 = vadd.f32 %v358, %v464
    %v569 = vadd.f32 %v359, %v465
    %v570 = vadd.f32 %v360, %v466
    %v571 = vadd.f32 %v361, %v467
    %v572 = vadd.f32 %v362, %v468
    %v573 = vadd.f32 %v363, %v469
    %v574 = vadd.f32 %v364, %v470
    %v575 = vadd.f32 %v365, %v471
    %v576 = vadd.f32 %v366, %v472
    %v577 = vadd.f32 %v367, %v473
    %v578 = vadd.f32 %v368, %v474
    %v579 = vadd.f32 %v369, %v475
    %v580 = vadd.f32 %v370, %v476
    %v581 = vadd.f32 %v371, %v477
    %v582 = vadd.f32 %v372, %v478
    %v583 = vadd.f32 %v373, %v479
    %v584 = vadd.f32 %v374, %v480
    %v585 = vadd.f32 %v375, %v481
    %v586 = vadd.f32 %v376, %v482
    %v587 = vadd.f32 %v377, %v483
    %v588 = vadd.f32 %v378, %v484
    %v589 = vadd.f32 %v379, %v485
    %v590 = vadd.f32 %v380, %v486
    %v591 = vadd.f32 %v381, %v487
    %s592 = sld [smem:[#allocation2 + $0x6]]
    %v593 = vstv %s592
    %v594 = vmul.f32 %v172, %v593
    %v595 = vmul.f32 %v173, %v593
    %v596 = vmul.f32 %v174, %v593
    %v597 = vmul.f32 %v175, %v593
    %v598 = vmul.f32 %v176, %v593
    %v599 = vmul.f32 %v177, %v593
    %v600 = vmul.f32 %v178, %v593
    %v601 = vmul.f32 %v179, %v593
    %v602 = vmul.f32 %v180, %v593
    %v603 = vmul.f32 %v181, %v593
    %v604 = vmul.f32 %v182, %v593
    %v605 = vmul.f32 %v183, %v593
    %v606 = vmul.f32 %v184, %v593
    %v607 = vmul.f32 %v185, %v593
    %v608 = vmul.f32 %v186, %v593
    %v609 = vmul.f32 %v187, %v593
    %v610 = vmul.f32 %v188, %v593
    %v611 = vmul.f32 %v189, %v593
    %v612 = vmul.f32 %v190, %v593
    %v613 = vmul.f32 %v191, %v593
    %v614 = vmul.f32 %v192, %v593
    %v615 = vmul.f32 %v193, %v593
    %v616 = vmul.f32 %v194, %v593
    %v617 = vmul.f32 %v195, %v593
    %v618 = vmul.f32 %v196, %v593
    %v619 = vmul.f32 %v197, %v593
    %v620 = vmul.f32 %v198, %v593
    %v621 = vmul.f32 %v199, %v593
    %v622 = vmul.f32 %v200, %v593
    %v623 = vmul.f32 %v201, %v593
    %v624 = vmul.f32 %v202, %v593
    %v625 = vmul.f32 %v203, %v593
    %v626 = vmul.f32 %v204, %v593
    %v627 = vmul.f32 %v205, %v593
    %v628 = vmul.f32 %v206, %v593
    %v629 = vmul.f32 %v207, %v593
    %v630 = vmul.f32 %v208, %v593
    %v631 = vmul.f32 %v209, %v593
    %v632 = vmul.f32 %v210, %v593
    %v633 = vmul.f32 %v211, %v593
    %v634 = vmul.f32 %v212, %v593
    %v635 = vmul.f32 %v213, %v593
    %v636 = vmul.f32 %v214, %v593
    %v637 = vmul.f32 %v215, %v593
    %v638 = vmul.f32 %v216, %v593
    %v639 = vmul.f32 %v217, %v593
    %v640 = vmul.f32 %v218, %v593
    %v641 = vmul.f32 %v219, %v593
    %v642 = vmul.f32 %v220, %v593
    %v643 = vmul.f32 %v221, %v593
    %v644 = vmul.f32 %v222, %v593
    %v645 = vmul.f32 %v223, %v593
    %v646 = vmul.f32 %v224, %v593
    %v647 = vmul.f32 %v225, %v593
    %v648 = vmul.f32 %v226, %v593
    %v649 = vmul.f32 %v227, %v593
    %v650 = vmul.f32 %v228, %v593
    %v651 = vmul.f32 %v229, %v593
    %v652 = vmul.f32 %v230, %v593
    %v653 = vmul.f32 %v231, %v593
    %v654 = vmul.f32 %v232, %v593
    %v655 = vmul.f32 %v233, %v593
    %v656 = vmul.f32 %v234, %v593
    %v657 = vmul.f32 %v235, %v593
    %v658 = vmul.f32 %v236, %v593
    %v659 = vmul.f32 %v237, %v593
    %v660 = vmul.f32 %v238, %v593
    %v661 = vmul.f32 %v239, %v593
    %v662 = vmul.f32 %v240, %v593
    %v663 = vmul.f32 %v241, %v593
    %v664 = vmul.f32 %v242, %v593
    %v665 = vmul.f32 %v243, %v593
    %v666 = vmul.f32 %v244, %v593
    %v667 = vmul.f32 %v245, %v593
    %v668 = vmul.f32 %v246, %v593
    %v669 = vmul.f32 %v247, %v593
    %v670 = vmul.f32 %v248, %v593
    %v671 = vmul.f32 %v249, %v593
    %v672 = vmul.f32 %v250, %v593
    %v673 = vmul.f32 %v251, %v593
    %v674 = vmul.f32 %v252, %v593
    %v675 = vmul.f32 %v253, %v593
    %v676 = vmul.f32 %v254, %v593
    %v677 = vmul.f32 %v255, %v593
    %v678 = vmul.f32 %v256, %v593
    %v679 = vmul.f32 %v257, %v593
    %v680 = vmul.f32 %v258, %v593
    %v681 = vmul.f32 %v259, %v593
    %v682 = vmul.f32 %v260, %v593
    %v683 = vmul.f32 %v261, %v593
    %v684 = vmul.f32 %v262, %v593
    %v685 = vmul.f32 %v263, %v593
    %v686 = vmul.f32 %v264, %v593
    %v687 = vmul.f32 %v265, %v593
    %v688 = vmul.f32 %v266, %v593
    %v689 = vmul.f32 %v267, %v593
    %v690 = vmul.f32 %v268, %v593
    %v691 = vmul.f32 %v269, %v593
    %v692 = vmul.f32 %v270, %v593
    %v693 = vmul.f32 %v271, %v593
    %v694 = vmul.f32 %v272, %v593
    %v695 = vmul.f32 %v273, %v593
    %v696 = vmul.f32 %v274, %v593
    %v697 = vmul.f32 %v275, %v593
    %v698 = vadd.f32 %v488, %v594
    %v699 = vadd.f32 %v489, %v595
    %v700 = vadd.f32 %v490, %v596
    %v701 = vadd.f32 %v491, %v597
    %v702 = vadd.f32 %v492, %v598
    %v703 = vadd.f32 %v493, %v599
    %v704 = vadd.f32 %v494, %v600
    %v705 = vadd.f32 %v495, %v601
    %v706 = vadd.f32 %v496, %v602
    %v707 = vadd.f32 %v497, %v603
    %v708 = vadd.f32 %v498, %v604
    %v709 = vadd.f32 %v499, %v605
    %v710 = vadd.f32 %v500, %v606
    %v711 = vadd.f32 %v501, %v607
    %v712 = vadd.f32 %v502, %v608
    %v713 = vadd.f32 %v503, %v609
    %v714 = vadd.f32 %v504, %v610
    %v715 = vadd.f32 %v505, %v611
    %v716 = vadd.f32 %v506, %v612
    %v717 = vadd.f32 %v507, %v613
    %v718 = vadd.f32 %v508, %v614
    %v719 = vadd.f32 %v509, %v615
    %v720 = vadd.f32 %v510, %v616
    %v721 = vadd.f32 %v511, %v617
    %v722 = vadd.f32 %v512, %v618
    %v723 = vadd.f32 %v513, %v619
    %v724 = vadd.f32 %v514, %v620
    %v725 = vadd.f32 %v515, %v621
    %v726 = vadd.f32 %v516, %v622
    %v727 = vadd.f32 %v517, %v623
    %v728 = vadd.f32 %v518, %v624
    %v729 = vadd.f32 %v519, %v625
    %v730 = vadd.f32 %v520, %v626
    %v731 = vadd.f32 %v521, %v627
    %v732 = vadd.f32 %v522, %v628
    %v733 = vadd.f32 %v523, %v629
    %v734 = vadd.f32 %v524, %v630
    %v735 = vadd.f32 %v525, %v631
    %v736 = vadd.f32 %v526, %v632
    %v737 = vadd.f32 %v527, %v633
    %v738 = vadd.f32 %v528, %v634
    %v739 = vadd.f32 %v529, %v635
    %v740 = vadd.f32 %v530, %v636
    %v741 = vadd.f32 %v531, %v637
    %v742 = vadd.f32 %v532, %v638
    %v743 = vadd.f32 %v533, %v639
    %v744 = vadd.f32 %v534, %v640
    %v745 = vadd.f32 %v535, %v641
    %v746 = vadd.f32 %v536, %v642
    %v747 = vadd.f32 %v537, %v643
    %v748 = vadd.f32 %v538, %v644
    %v749 = vadd.f32 %v539, %v645
    %v750 = vadd.f32 %v540, %v646
    %v751 = vadd.f32 %v541, %v647
    %v752 = vadd.f32 %v542, %v648
    %v753 = vadd.f32 %v543, %v649
    %v754 = vadd.f32 %v544, %v650
    %v755 = vadd.f32 %v545, %v651
    %v756 = vadd.f32 %v546, %v652
    %v757 = vadd.f32 %v547, %v653
    %v758 = vadd.f32 %v548, %v654
    %v759 = vadd.f32 %v549, %v655
    %v760 = vadd.f32 %v550, %v656
    %v761 = vadd.f32 %v551, %v657
    %v762 = vadd.f32 %v552, %v658
    %v763 = vadd.f32 %v553, %v659
    %v764 = vadd.f32 %v554, %v660
    %v765 = vadd.f32 %v555, %v661
    %v766 = vadd.f32 %v556, %v662
    %v767 = vadd.f32 %v557, %v663
    %v768 = vadd.f32 %v558, %v664
    %v769 = vadd.f32 %v559, %v665
    %v770 = vadd.f32 %v560, %v666
    %v771 = vadd.f32 %v561, %v667
    %v772 = vadd.f32 %v562, %v668
    %v773 = vadd.f32 %v563, %v669
    %v774 = vadd.f32 %v564, %v670
    %v775 = vadd.f32 %v565, %v671
    %v776 = vadd.f32 %v566, %v672
    %v777 = vadd.f32 %v567, %v673
    %v778 = vadd.f32 %v568, %v674
    %v779 = vadd.f32 %v569, %v675
    %v780 = vadd.f32 %v570, %v676
    %v781 = vadd.f32 %v571, %v677
    %v782 = vadd.f32 %v572, %v678
    %v783 = vadd.f32 %v573, %v679
    %v784 = vadd.f32 %v574, %v680
    %v785 = vadd.f32 %v575, %v681
    %v786 = vadd.f32 %v576, %v682
    %v787 = vadd.f32 %v577, %v683
    %v788 = vadd.f32 %v578, %v684
    %v789 = vadd.f32 %v579, %v685
    %v790 = vadd.f32 %v580, %v686
    %v791 = vadd.f32 %v581, %v687
    %v792 = vadd.f32 %v582, %v688
    %v793 = vadd.f32 %v583, %v689
    %v794 = vadd.f32 %v584, %v690
    %v795 = vadd.f32 %v585, %v691
    %v796 = vadd.f32 %v586, %v692
    %v797 = vadd.f32 %v587, %v693
    %v798 = vadd.f32 %v588, %v694
    %v799 = vadd.f32 %v589, %v695
    %v800 = vadd.f32 %v590, %v696
    %v801 = vadd.f32 %v591, %v697
    %s802 = sld [smem:[#allocation2 + $0x1]]
    %v803 = vstv %s802
    %v804 = vmul.f32 %v164, %v803
    %v805 = vmul.f32 %v165, %v803
    %v806 = vmul.f32 %v166, %v803
    %v807 = vmul.f32 %v167, %v803
    %v808 = vmul.f32 %v168, %v803
    %v809 = vmul.f32 %v169, %v803
    %v810 = vmul.f32 %v170, %v803
    %v811 = vmul.f32 %v171, %v803
    %v812 = vmul.f32 %v172, %v803
    %v813 = vmul.f32 %v173, %v803
    %v814 = vmul.f32 %v174, %v803
    %v815 = vmul.f32 %v175, %v803
    %v816 = vmul.f32 %v176, %v803
    %v817 = vmul.f32 %v177, %v803
    %v818 = vmul.f32 %v178, %v803
    %v819 = vmul.f32 %v179, %v803
    %v820 = vmul.f32 %v180, %v803
    %v821 = vmul.f32 %v181, %v803
    %v822 = vmul.f32 %v182, %v803
    %v823 = vmul.f32 %v183, %v803
    %v824 = vmul.f32 %v184, %v803
    %v825 = vmul.f32 %v185, %v803
    %v826 = vmul.f32 %v186, %v803
    %v827 = vmul.f32 %v187, %v803
    %v828 = vmul.f32 %v188, %v803
    %v829 = vmul.f32 %v189, %v803
    %v830 = vmul.f32 %v190, %v803
    %v831 = vmul.f32 %v191, %v803
    %v832 = vmul.f32 %v192, %v803
    %v833 = vmul.f32 %v193, %v803
    %v834 = vmul.f32 %v194, %v803
    %v835 = vmul.f32 %v195, %v803
    %v836 = vmul.f32 %v196, %v803
    %v837 = vmul.f32 %v197, %v803
    %v838 = vmul.f32 %v198, %v803
    %v839 = vmul.f32 %v199, %v803
    %v840 = vmul.f32 %v200, %v803
    %v841 = vmul.f32 %v201, %v803
    %v842 = vmul.f32 %v202, %v803
    %v843 = vmul.f32 %v203, %v803
    %v844 = vmul.f32 %v204, %v803
    %v845 = vmul.f32 %v205, %v803
    %v846 = vmul.f32 %v206, %v803
    %v847 = vmul.f32 %v207, %v803
    %v848 = vmul.f32 %v208, %v803
    %v849 = vmul.f32 %v209, %v803
    %v850 = vmul.f32 %v210, %v803
    %v851 = vmul.f32 %v211, %v803
    %v852 = vmul.f32 %v212, %v803
    %v853 = vmul.f32 %v213, %v803
    %v854 = vmul.f32 %v214, %v803
    %v855 = vmul.f32 %v215, %v803
    %v856 = vmul.f32 %v216, %v803
    %v857 = vmul.f32 %v217, %v803
    %v858 = vmul.f32 %v218, %v803
    %v859 = vmul.f32 %v219, %v803
    %v860 = vmul.f32 %v220, %v803
    %v861 = vmul.f32 %v221, %v803
    %v862 = vmul.f32 %v222, %v803
    %v863 = vmul.f32 %v223, %v803
    %v864 = vmul.f32 %v224, %v803
    %v865 = vmul.f32 %v225, %v803
    %v866 = vmul.f32 %v226, %v803
    %v867 = vmul.f32 %v227, %v803
    %v868 = vmul.f32 %v228, %v803
    %v869 = vmul.f32 %v229, %v803
    %v870 = vmul.f32 %v230, %v803
    %v871 = vmul.f32 %v231, %v803
    %v872 = vmul.f32 %v232, %v803
    %v873 = vmul.f32 %v233, %v803
    %v874 = vmul.f32 %v234, %v803
    %v875 = vmul.f32 %v235, %v803
    %v876 = vmul.f32 %v236, %v803
    %v877 = vmul.f32 %v237, %v803
    %v878 = vmul.f32 %v238, %v803
    %v879 = vmul.f32 %v239, %v803
    %v880 = vmul.f32 %v240, %v803
    %v881 = vmul.f32 %v241, %v803
    %v882 = vmul.f32 %v242, %v803
    %v883 = vmul.f32 %v243, %v803
    %v884 = vmul.f32 %v244, %v803
    %v885 = vmul.f32 %v245, %v803
    %v886 = vmul.f32 %v246, %v803
    %v887 = vmul.f32 %v247, %v803
    %v888 = vmul.f32 %v248, %v803
    %v889 = vmul.f32 %v249, %v803
    %v890 = vmul.f32 %v250, %v803
    %v891 = vmul.f32 %v251, %v803
    %v892 = vmul.f32 %v252, %v803
    %v893 = vmul.f32 %v253, %v803
    %v894 = vmul.f32 %v254, %v803
    %v895 = vmul.f32 %v255, %v803
    %v896 = vmul.f32 %v256, %v803
    %v897 = vmul.f32 %v257, %v803
    %v898 = vmul.f32 %v258, %v803
    %v899 = vmul.f32 %v259, %v803
    %v900 = vmul.f32 %v260, %v803
    %v901 = vmul.f32 %v261, %v803
    %v902 = vmul.f32 %v262, %v803
    %v903 = vmul.f32 %v263, %v803
    %v904 = vmul.f32 %v264, %v803
    %v905 = vmul.f32 %v265, %v803
    %v906 = vmul.f32 %v266, %v803
    %v907 = vmul.f32 %v267, %v803
    %vm1012 = vcmask 1046528
    %v1013 = vrot.slane %v804, 1
    %v1014 = vrot.slane %v805, 1
    %v1015 = vsel %vm1012, %v1013, %v1014
    %v1016 = vrot.slane %v806, 1
    %v1017 = vsel %vm1012, %v1014, %v1016
    %v1018 = vrot.slane %v807, 1
    %v1019 = vsel %vm1012, %v1016, %v1018
    %v1020 = vrot.slane %v808, 1
    %v1021 = vrot.slane %v809, 1
    %v1022 = vsel %vm1012, %v1020, %v1021
    %v1023 = vrot.slane %v810, 1
    %v1024 = vsel %vm1012, %v1021, %v1023
    %v1025 = vrot.slane %v811, 1
    %v1026 = vsel %vm1012, %v1023, %v1025
    %v1027 = vrot.slane %v812, 1
    %v1028 = vrot.slane %v813, 1
    %v1029 = vsel %vm1012, %v1027, %v1028
    %v1030 = vrot.slane %v814, 1
    %v1031 = vsel %vm1012, %v1028, %v1030
    %v1032 = vrot.slane %v815, 1
    %v1033 = vsel %vm1012, %v1030, %v1032
    %v1034 = vrot.slane %v816, 1
    %v1035 = vrot.slane %v817, 1
    %v1036 = vsel %vm1012, %v1034, %v1035
    %v1037 = vrot.slane %v818, 1
    %v1038 = vsel %vm1012, %v1035, %v1037
    %v1039 = vrot.slane %v819, 1
    %v1040 = vsel %vm1012, %v1037, %v1039
    %v1041 = vrot.slane %v820, 1
    %v1042 = vrot.slane %v821, 1
    %v1043 = vsel %vm1012, %v1041, %v1042
    %v1044 = vrot.slane %v822, 1
    %v1045 = vsel %vm1012, %v1042, %v1044
    %v1046 = vrot.slane %v823, 1
    %v1047 = vsel %vm1012, %v1044, %v1046
    %v1048 = vrot.slane %v824, 1
    %v1049 = vrot.slane %v825, 1
    %v1050 = vsel %vm1012, %v1048, %v1049
    %v1051 = vrot.slane %v826, 1
    %v1052 = vsel %vm1012, %v1049, %v1051
    %v1053 = vrot.slane %v827, 1
    %v1054 = vsel %vm1012, %v1051, %v1053
    %v1055 = vrot.slane %v828, 1
    %v1056 = vrot.slane %v829, 1
    %v1057 = vsel %vm1012, %v1055, %v1056
    %v1058 = vrot.slane %v830, 1
    %v1059 = vsel %vm1012, %v1056, %v1058
    %v1060 = vrot.slane %v831, 1
    %v1061 = vsel %vm1012, %v1058, %v1060
    %v1062 = vrot.slane %v832, 1
    %v1063 = vrot.slane %v833, 1
    %v1064 = vsel %vm1012, %v1062, %v1063
    %v1065 = vrot.slane %v834, 1
    %v1066 = vsel %vm1012, %v1063, %v1065
    %v1067 = vrot.slane %v835, 1
    %v1068 = vsel %vm1012, %v1065, %v1067
    %v1069 = vrot.slane %v836, 1
    %v1070 = vrot.slane %v837, 1
    %v1071 = vsel %vm1012, %v1069, %v1070
    %v1072 = vrot.slane %v838, 1
    %v1073 = vsel %vm1012, %v1070, %v1072
    %v1074 = vrot.slane %v839, 1
    %v1075 = vsel %vm1012, %v1072, %v1074
    %v1076 = vrot.slane %v840, 1
    %v1077 = vrot.slane %v841, 1
    %v1078 = vsel %vm1012, %v1076, %v1077
    %v1079 = vrot.slane %v842, 1
    %v1080 = vsel %vm1012, %v1077, %v1079
    %v1081 = vrot.slane %v843, 1
    %v1082 = vsel %vm1012, %v1079, %v1081
    %v1083 = vrot.slane %v844, 1
    %v1084 = vrot.slane %v845, 1
    %v1085 = vsel %vm1012, %v1083, %v1084
    %v1086 = vrot.slane %v846, 1
    %v1087 = vsel %vm1012, %v1084, %v1086
    %v1088 = vrot.slane %v847, 1
    %v1089 = vsel %vm1012, %v1086, %v1088
    %v1090 = vrot.slane %v848, 1
    %v1091 = vrot.slane %v849, 1
    %v1092 = vsel %vm1012, %v1090, %v1091
    %v1093 = vrot.slane %v850, 1
    %v1094 = vsel %vm1012, %v1091, %v1093
    %v1095 = vrot.slane %v851, 1
    %v1096 = vsel %vm1012, %v1093, %v1095
    %v1097 = vrot.slane %v852, 1
    %v1098 = vrot.slane %v853, 1
    %v1099 = vsel %vm1012, %v1097, %v1098
    %v1100 = vrot.slane %v854, 1
    %v1101 = vsel %vm1012, %v1098, %v1100
    %v1102 = vrot.slane %v855, 1
    %v1103 = vsel %vm1012, %v1100, %v1102
    %v1104 = vrot.slane %v856, 1
    %v1105 = vrot.slane %v857, 1
    %v1106 = vsel %vm1012, %v1104, %v1105
    %v1107 = vrot.slane %v858, 1
    %v1108 = vsel %vm1012, %v1105, %v1107
    %v1109 = vrot.slane %v859, 1
    %v1110 = vsel %vm1012, %v1107, %v1109
    %v1111 = vrot.slane %v860, 1
    %v1112 = vrot.slane %v861, 1
    %v1113 = vsel %vm1012, %v1111, %v1112
    %v1114 = vrot.slane %v862, 1
    %v1115 = vsel %vm1012, %v1112, %v1114
    %v1116 = vrot.slane %v863, 1
    %v1117 = vsel %vm1012, %v1114, %v1116
    %v1118 = vrot.slane %v864, 1
    %v1119 = vrot.slane %v865, 1
    %v1120 = vsel %vm1012, %v1118, %v1119
    %v1121 = vrot.slane %v866, 1
    %v1122 = vsel %vm1012, %v1119, %v1121
    %v1123 = vrot.slane %v867, 1
    %v1124 = vsel %vm1012, %v1121, %v1123
    %v1125 = vrot.slane %v868, 1
    %v1126 = vrot.slane %v869, 1
    %v1127 = vsel %vm1012, %v1125, %v1126
    %v1128 = vrot.slane %v870, 1
    %v1129 = vsel %vm1012, %v1126, %v1128
    %v1130 = vrot.slane %v871, 1
    %v1131 = vsel %vm1012, %v1128, %v1130
    %v1132 = vrot.slane %v872, 1
    %v1133 = vrot.slane %v873, 1
    %v1134 = vsel %vm1012, %v1132, %v1133
    %v1135 = vrot.slane %v874, 1
    %v1136 = vsel %vm1012, %v1133, %v1135
    %v1137 = vrot.slane %v875, 1
    %v1138 = vsel %vm1012, %v1135, %v1137
    %v1139 = vrot.slane %v876, 1
    %v1140 = vrot.slane %v877, 1
    %v1141 = vsel %vm1012, %v1139, %v1140
    %v1142 = vrot.slane %v878, 1
    %v1143 = vsel %vm1012, %v1140, %v1142
    %v1144 = vrot.slane %v879, 1
    %v1145 = vsel %vm1012, %v1142, %v1144
    %v1146 = vrot.slane %v880, 1
    %v1147 = vrot.slane %v881, 1
    %v1148 = vsel %vm1012, %v1146, %v1147
    %v1149 = vrot.slane %v882, 1
    %v1150 = vsel %vm1012, %v1147, %v1149
    %v1151 = vrot.slane %v883, 1
    %v1152 = vsel %vm1012, %v1149, %v1151
    %v1153 = vrot.slane %v884, 1
    %v1154 = vrot.slane %v885, 1
    %v1155 = vsel %vm1012, %v1153, %v1154
    %v1156 = vrot.slane %v886, 1
    %v1157 = vsel %vm1012, %v1154, %v1156
    %v1158 = vrot.slane %v887, 1
    %v1159 = vsel %vm1012, %v1156, %v1158
    %v1160 = vrot.slane %v888, 1
    %v1161 = vrot.slane %v889, 1
    %v1162 = vsel %vm1012, %v1160, %v1161
    %v1163 = vrot.slane %v890, 1
    %v1164 = vsel %vm1012, %v1161, %v1163
    %v1165 = vrot.slane %v891, 1
    %v1166 = vsel %vm1012, %v1163, %v1165
    %v1167 = vrot.slane %v892, 1
    %v1168 = vrot.slane %v893, 1
    %v1169 = vsel %vm1012, %v1167, %v1168
    %v1170 = vrot.slane %v894, 1
    %v1171 = vsel %vm1012, %v1168, %v1170
    %v1172 = vrot.slane %v895, 1
    %v1173 = vsel %vm1012, %v1170, %v1172
    %v1174 = vrot.slane %v896, 1
    %v1175 = vrot.slane %v897, 1
    %v1176 = vsel %vm1012, %v1174, %v1175
    %v1177 = vrot.slane %v898, 1
    %v1178 = vsel %vm1012, %v1175, %v1177
    %v1179 = vrot.slane %v899, 1
    %v1180 = vsel %vm1012, %v1177, %v1179
    %v1181 = vrot.slane %v900, 1
    %v1182 = vrot.slane %v901, 1
    %v1183 = vsel %vm1012, %v1181, %v1182
    %v1184 = vrot.slane %v902, 1
    %v1185 = vsel %vm1012, %v1182, %v1184
    %v1186 = vrot.slane %v903, 1
    %v1187 = vsel %vm1012, %v1184, %v1186
    %v1188 = vrot.slane %v904, 1
    %v1189 = vrot.slane %v905, 1
    %v1190 = vsel %vm1012, %v1188, %v1189
    %v1191 = vrot.slane %v906, 1
    %v1192 = vsel %vm1012, %v1189, %v1191
    %v1193 = vrot.slane %v907, 1
    %v1194 = vsel %vm1012, %v1191, %v1193
    %v1299 = vadd.f32 %v698, %v1015
    %v1300 = vadd.f32 %v699, %v1017
    %v1301 = vadd.f32 %v700, %v1019
    %v1302 = vadd.f32 %v701, %v1018
    %v1303 = vadd.f32 %v702, %v1022
    %v1304 = vadd.f32 %v703, %v1024
    %v1305 = vadd.f32 %v704, %v1026
    %v1306 = vadd.f32 %v705, %v1025
    %v1307 = vadd.f32 %v706, %v1029
    %v1308 = vadd.f32 %v707, %v1031
    %v1309 = vadd.f32 %v708, %v1033
    %v1310 = vadd.f32 %v709, %v1032
    %v1311 = vadd.f32 %v710, %v1036
    %v1312 = vadd.f32 %v711, %v1038
    %v1313 = vadd.f32 %v712, %v1040
    %v1314 = vadd.f32 %v713, %v1039
    %v1315 = vadd.f32 %v714, %v1043
    %v1316 = vadd.f32 %v715, %v1045
    %v1317 = vadd.f32 %v716, %v1047
    %v1318 = vadd.f32 %v717, %v1046
    %v1319 = vadd.f32 %v718, %v1050
    %v1320 = vadd.f32 %v719, %v1052
    %v1321 = vadd.f32 %v720, %v1054
    %v1322 = vadd.f32 %v721, %v1053
    %v1323 = vadd.f32 %v722, %v1057
    %v1324 = vadd.f32 %v723, %v1059
    %v1325 = vadd.f32 %v724, %v1061
    %v1326 = vadd.f32 %v725, %v1060
    %v1327 = vadd.f32 %v726, %v1064
    %v1328 = vadd.f32 %v727, %v1066
    %v1329 = vadd.f32 %v728, %v1068
    %v1330 = vadd.f32 %v729, %v1067
    %v1331 = vadd.f32 %v730, %v1071
    %v1332 = vadd.f32 %v731, %v1073
    %v1333 = vadd.f32 %v732, %v1075
    %v1334 = vadd.f32 %v733, %v1074
    %v1335 = vadd.f32 %v734, %v1078
    %v1336 = vadd.f32 %v735, %v1080
    %v1337 = vadd.f32 %v736, %v1082
    %v1338 = vadd.f32 %v737, %v1081
    %v1339 = vadd.f32 %v738, %v1085
    %v1340 = vadd.f32 %v739, %v1087
    %v1341 = vadd.f32 %v740, %v1089
    %v1342 = vadd.f32 %v741, %v1088
    %v1343 = vadd.f32 %v742, %v1092
    %v1344 = vadd.f32 %v743, %v1094
    %v1345 = vadd.f32 %v744, %v1096
    %v1346 = vadd.f32 %v745, %v1095
    %v1347 = vadd.f32 %v746, %v1099
    %v1348 = vadd.f32 %v747, %v1101
    %v1349 = vadd.f32 %v748, %v1103
    %v1350 = vadd.f32 %v749, %v1102
    %v1351 = vadd.f32 %v750, %v1106
    %v1352 = vadd.f32 %v751, %v1108
    %v1353 = vadd.f32 %v752, %v1110
    %v1354 = vadd.f32 %v753, %v1109
    %v1355 = vadd.f32 %v754, %v1113
    %v1356 = vadd.f32 %v755, %v1115
    %v1357 = vadd.f32 %v756, %v1117
    %v1358 = vadd.f32 %v757, %v1116
    %v1359 = vadd.f32 %v758, %v1120
    %v1360 = vadd.f32 %v759, %v1122
    %v1361 = vadd.f32 %v760, %v1124
    %v1362 = vadd.f32 %v761, %v1123
    %v1363 = vadd.f32 %v762, %v1127
    %v1364 = vadd.f32 %v763, %v1129
    %v1365 = vadd.f32 %v764, %v1131
    %v1366 = vadd.f32 %v765, %v1130
    %v1367 = vadd.f32 %v766, %v1134
    %v1368 = vadd.f32 %v767, %v1136
    %v1369 = vadd.f32 %v768, %v1138
    %v1370 = vadd.f32 %v769, %v1137
    %v1371 = vadd.f32 %v770, %v1141
    %v1372 = vadd.f32 %v771, %v1143
    %v1373 = vadd.f32 %v772, %v1145
    %v1374 = vadd.f32 %v773, %v1144
    %v1375 = vadd.f32 %v774, %v1148
    %v1376 = vadd.f32 %v775, %v1150
    %v1377 = vadd.f32 %v776, %v1152
    %v1378 = vadd.f32 %v777, %v1151
    %v1379 = vadd.f32 %v778, %v1155
    %v1380 = vadd.f32 %v779, %v1157
    %v1381 = vadd.f32 %v780, %v1159
    %v1382 = vadd.f32 %v781, %v1158
    %v1383 = vadd.f32 %v782, %v1162
    %v1384 = vadd.f32 %v783, %v1164
    %v1385 = vadd.f32 %v784, %v1166
    %v1386 = vadd.f32 %v785, %v1165
    %v1387 = vadd.f32 %v786, %v1169
    %v1388 = vadd.f32 %v787, %v1171
    %v1389 = vadd.f32 %v788, %v1173
    %v1390 = vadd.f32 %v789, %v1172
    %v1391 = vadd.f32 %v790, %v1176
    %v1392 = vadd.f32 %v791, %v1178
    %v1393 = vadd.f32 %v792, %v1180
    %v1394 = vadd.f32 %v793, %v1179
    %v1395 = vadd.f32 %v794, %v1183
    %v1396 = vadd.f32 %v795, %v1185
    %v1397 = vadd.f32 %v796, %v1187
    %v1398 = vadd.f32 %v797, %v1186
    %v1399 = vadd.f32 %v798, %v1190
    %v1400 = vadd.f32 %v799, %v1192
    %v1401 = vadd.f32 %v800, %v1194
    %v1402 = vadd.f32 %v801, %v1193
    %s1403 = sld [smem:[#allocation2 + $0x4]]
    %v1404 = vstv %s1403
    %v1405 = vmul.f32 %v168, %v1404
    %v1406 = vmul.f32 %v169, %v1404
    %v1407 = vmul.f32 %v170, %v1404
    %v1408 = vmul.f32 %v171, %v1404
    %v1409 = vmul.f32 %v172, %v1404
    %v1410 = vmul.f32 %v173, %v1404
    %v1411 = vmul.f32 %v174, %v1404
    %v1412 = vmul.f32 %v175, %v1404
    %v1413 = vmul.f32 %v176, %v1404
    %v1414 = vmul.f32 %v177, %v1404
    %v1415 = vmul.f32 %v178, %v1404
    %v1416 = vmul.f32 %v179, %v1404
    %v1417 = vmul.f32 %v180, %v1404
    %v1418 = vmul.f32 %v181, %v1404
    %v1419 = vmul.f32 %v182, %v1404
    %v1420 = vmul.f32 %v183, %v1404
    %v1421 = vmul.f32 %v184, %v1404
    %v1422 = vmul.f32 %v185, %v1404
    %v1423 = vmul.f32 %v186, %v1404
    %v1424 = vmul.f32 %v187, %v1404
    %v1425 = vmul.f32 %v188, %v1404
    %v1426 = vmul.f32 %v189, %v1404
    %v1427 = vmul.f32 %v190, %v1404
    %v1428 = vmul.f32 %v191, %v1404
    %v1429 = vmul.f32 %v192, %v1404
    %v1430 = vmul.f32 %v193, %v1404
    %v1431 = vmul.f32 %v194, %v1404
    %v1432 = vmul.f32 %v195, %v1404
    %v1433 = vmul.f32 %v196, %v1404
    %v1434 = vmul.f32 %v197, %v1404
    %v1435 = vmul.f32 %v198, %v1404
    %v1436 = vmul.f32 %v199, %v1404
    %v1437 = vmul.f32 %v200, %v1404
    %v1438 = vmul.f32 %v201, %v1404
    %v1439 = vmul.f32 %v202, %v1404
    %v1440 = vmul.f32 %v203, %v1404
    %v1441 = vmul.f32 %v204, %v1404
    %v1442 = vmul.f32 %v205, %v1404
    %v1443 = vmul.f32 %v206, %v1404
    %v1444 = vmul.f32 %v207, %v1404
    %v1445 = vmul.f32 %v208, %v1404
    %v1446 = vmul.f32 %v209, %v1404
    %v1447 = vmul.f32 %v210, %v1404
    %v1448 = vmul.f32 %v211, %v1404
    %v1449 = vmul.f32 %v212, %v1404
    %v1450 = vmul.f32 %v213, %v1404
    %v1451 = vmul.f32 %v214, %v1404
    %v1452 = vmul.f32 %v215, %v1404
    %v1453 = vmul.f32 %v216, %v1404
    %v1454 = vmul.f32 %v217, %v1404
    %v1455 = vmul.f32 %v218, %v1404
    %v1456 = vmul.f32 %v219, %v1404
    %v1457 = vmul.f32 %v220, %v1404
    %v1458 = vmul.f32 %v221, %v1404
    %v1459 = vmul.f32 %v222, %v1404
    %v1460 = vmul.f32 %v223, %v1404
    %v1461 = vmul.f32 %v224, %v1404
    %v1462 = vmul.f32 %v225, %v1404
    %v1463 = vmul.f32 %v226, %v1404
    %v1464 = vmul.f32 %v227, %v1404
    %v1465 = vmul.f32 %v228, %v1404
    %v1466 = vmul.f32 %v229, %v1404
    %v1467 = vmul.f32 %v230, %v1404
    %v1468 = vmul.f32 %v231, %v1404
    %v1469 = vmul.f32 %v232, %v1404
    %v1470 = vmul.f32 %v233, %v1404
    %v1471 = vmul.f32 %v234, %v1404
    %v1472 = vmul.f32 %v235, %v1404
    %v1473 = vmul.f32 %v236, %v1404
    %v1474 = vmul.f32 %v237, %v1404
    %v1475 = vmul.f32 %v238, %v1404
    %v1476 = vmul.f32 %v239, %v1404
    %v1477 = vmul.f32 %v240, %v1404
    %v1478 = vmul.f32 %v241, %v1404
    %v1479 = vmul.f32 %v242, %v1404
    %v1480 = vmul.f32 %v243, %v1404
    %v1481 = vmul.f32 %v244, %v1404
    %v1482 = vmul.f32 %v245, %v1404
    %v1483 = vmul.f32 %v246, %v1404
    %v1484 = vmul.f32 %v247, %v1404
    %v1485 = vmul.f32 %v248, %v1404
    %v1486 = vmul.f32 %v249, %v1404
    %v1487 = vmul.f32 %v250, %v1404
    %v1488 = vmul.f32 %v251, %v1404
    %v1489 = vmul.f32 %v252, %v1404
    %v1490 = vmul.f32 %v253, %v1404
    %v1491 = vmul.f32 %v254, %v1404
    %v1492 = vmul.f32 %v255, %v1404
    %v1493 = vmul.f32 %v256, %v1404
    %v1494 = vmul.f32 %v257, %v1404
    %v1495 = vmul.f32 %v258, %v1404
    %v1496 = vmul.f32 %v259, %v1404
    %v1497 = vmul.f32 %v260, %v1404
    %v1498 = vmul.f32 %v261, %v1404
    %v1499 = vmul.f32 %v262, %v1404
    %v1500 = vmul.f32 %v263, %v1404
    %v1501 = vmul.f32 %v264, %v1404
    %v1502 = vmul.f32 %v265, %v1404
    %v1503 = vmul.f32 %v266, %v1404
    %v1504 = vmul.f32 %v267, %v1404
    %v1505 = vmul.f32 %v268, %v1404
    %v1506 = vmul.f32 %v269, %v1404
    %v1507 = vmul.f32 %v270, %v1404
    %v1508 = vmul.f32 %v271, %v1404
    %v1613 = vrot.slane %v1405, 1
    %v1614 = vrot.slane %v1406, 1
    %v1615 = vsel %vm1012, %v1613, %v1614
    %v1616 = vrot.slane %v1407, 1
    %v1617 = vsel %vm1012, %v1614, %v1616
    %v1618 = vrot.slane %v1408, 1
    %v1619 = vsel %vm1012, %v1616, %v1618
    %v1620 = vrot.slane %v1409, 1
    %v1621 = vrot.slane %v1410, 1
    %v1622 = vsel %vm1012, %v1620, %v1621
    %v1623 = vrot.slane %v1411, 1
    %v1624 = vsel %vm1012, %v1621, %v1623
    %v1625 = vrot.slane %v1412, 1
    %v1626 = vsel %vm1012, %v1623, %v1625
    %v1627 = vrot.slane %v1413, 1
    %v1628 = vrot.slane %v1414, 1
    %v1629 = vsel %vm1012, %v1627, %v1628
    %v1630 = vrot.slane %v1415, 1
    %v1631 = vsel %vm1012, %v1628, %v1630
    %v1632 = vrot.slane %v1416, 1
    %v1633 = vsel %vm1012, %v1630, %v1632
    %v1634 = vrot.slane %v1417, 1
    %v1635 = vrot.slane %v1418, 1
    %v1636 = vsel %vm1012, %v1634, %v1635
    %v1637 = vrot.slane %v1419, 1
    %v1638 = vsel %vm1012, %v1635, %v1637
    %v1639 = vrot.slane %v1420, 1
    %v1640 = vsel %vm1012, %v1637, %v1639
    %v1641 = vrot.slane %v1421, 1
    %v1642 = vrot.slane %v1422, 1
    %v1643 = vsel %vm1012, %v1641, %v1642
    %v1644 = vrot.slane %v1423, 1
    %v1645 = vsel %vm1012, %v1642, %v1644
    %v1646 = vrot.slane %v1424, 1
    %v1647 = vsel %vm1012, %v1644, %v1646
    %v1648 = vrot.slane %v1425, 1
    %v1649 = vrot.slane %v1426, 1
    %v1650 = vsel %vm1012, %v1648, %v1649
    %v1651 = vrot.slane %v1427, 1
    %v1652 = vsel %vm1012, %v1649, %v1651
    %v1653 = vrot.slane %v1428, 1
    %v1654 = vsel %vm1012, %v1651, %v1653
    %v1655 = vrot.slane %v1429, 1
    %v1656 = vrot.slane %v1430, 1
    %v1657 = vsel %vm1012, %v1655, %v1656
    %v1658 = vrot.slane %v1431, 1
    %v1659 = vsel %vm1012, %v1656, %v1658
    %v1660 = vrot.slane %v1432, 1
    %v1661 = vsel %vm1012, %v1658, %v1660
    %v1662 = vrot.slane %v1433, 1
    %v1663 = vrot.slane %v1434, 1
    %v1664 = vsel %vm1012, %v1662, %v1663
    %v1665 = vrot.slane %v1435, 1
    %v1666 = vsel %vm1012, %v1663, %v1665
    %v1667 = vrot.slane %v1436, 1
    %v1668 = vsel %vm1012, %v1665, %v1667
    %v1669 = vrot.slane %v1437, 1
    %v1670 = vrot.slane %v1438, 1
    %v1671 = vsel %vm1012, %v1669, %v1670
    %v1672 = vrot.slane %v1439, 1
    %v1673 = vsel %vm1012, %v1670, %v1672
    %v1674 = vrot.slane %v1440, 1
    %v1675 = vsel %vm1012, %v1672, %v1674
    %v1676 = vrot.slane %v1441, 1
    %v1677 = vrot.slane %v1442, 1
    %v1678 = vsel %vm1012, %v1676, %v1677
    %v1679 = vrot.slane %v1443, 1
    %v1680 = vsel %vm1012, %v1677, %v1679
    %v1681 = vrot.slane %v1444, 1
    %v1682 = vsel %vm1012, %v1679, %v1681
    %v1683 = vrot.slane %v1445, 1
    %v1684 = vrot.slane %v1446, 1
    %v1685 = vsel %vm1012, %v1683, %v1684
    %v1686 = vrot.slane %v1447, 1
    %v1687 = vsel %vm1012, %v1684, %v1686
    %v1688 = vrot.slane %v1448, 1
    %v1689 = vsel %vm1012, %v1686, %v1688
    %v1690 = vrot.slane %v1449, 1
    %v1691 = vrot.slane %v1450, 1
    %v1692 = vsel %vm1012, %v1690, %v1691
    %v1693 = vrot.slane %v1451, 1
    %v1694 = vsel %vm1012, %v1691, %v1693
    %v1695 = vrot.slane %v1452, 1
    %v1696 = vsel %vm1012, %v1693, %v1695
    %v1697 = vrot.slane %v1453, 1
    %v1698 = vrot.slane %v1454, 1
    %v1699 = vsel %vm1012, %v1697, %v1698
    %v1700 = vrot.slane %v1455, 1
    %v1701 = vsel %vm1012, %v1698, %v1700
    %v1702 = vrot.slane %v1456, 1
    %v1703 = vsel %vm1012, %v1700, %v1702
    %v1704 = vrot.slane %v1457, 1
    %v1705 = vrot.slane %v1458, 1
    %v1706 = vsel %vm1012, %v1704, %v1705
    %v1707 = vrot.slane %v1459, 1
    %v1708 = vsel %vm1012, %v1705, %v1707
    %v1709 = vrot.slane %v1460, 1
    %v1710 = vsel %vm1012, %v1707, %v1709
    %v1711 = vrot.slane %v1461, 1
    %v1712 = vrot.slane %v1462, 1
    %v1713 = vsel %vm1012, %v1711, %v1712
    %v1714 = vrot.slane %v1463, 1
    %v1715 = vsel %vm1012, %v1712, %v1714
    %v1716 = vrot.slane %v1464, 1
    %v1717 = vsel %vm1012, %v1714, %v1716
    %v1718 = vrot.slane %v1465, 1
    %v1719 = vrot.slane %v1466, 1
    %v1720 = vsel %vm1012, %v1718, %v1719
    %v1721 = vrot.slane %v1467, 1
    %v1722 = vsel %vm1012, %v1719, %v1721
    %v1723 = vrot.slane %v1468, 1
    %v1724 = vsel %vm1012, %v1721, %v1723
    %v1725 = vrot.slane %v1469, 1
    %v1726 = vrot.slane %v1470, 1
    %v1727 = vsel %vm1012, %v1725, %v1726
    %v1728 = vrot.slane %v1471, 1
    %v1729 = vsel %vm1012, %v1726, %v1728
    %v1730 = vrot.slane %v1472, 1
    %v1731 = vsel %vm1012, %v1728, %v1730
    %v1732 = vrot.slane %v1473, 1
    %v1733 = vrot.slane %v1474, 1
    %v1734 = vsel %vm1012, %v1732, %v1733
    %v1735 = vrot.slane %v1475, 1
    %v1736 = vsel %vm1012, %v1733, %v1735
    %v1737 = vrot.slane %v1476, 1
    %v1738 = vsel %vm1012, %v1735, %v1737
    %v1739 = vrot.slane %v1477, 1
    %v1740 = vrot.slane %v1478, 1
    %v1741 = vsel %vm1012, %v1739, %v1740
    %v1742 = vrot.slane %v1479, 1
    %v1743 = vsel %vm1012, %v1740, %v1742
    %v1744 = vrot.slane %v1480, 1
    %v1745 = vsel %vm1012, %v1742, %v1744
    %v1746 = vrot.slane %v1481, 1
    %v1747 = vrot.slane %v1482, 1
    %v1748 = vsel %vm1012, %v1746, %v1747
    %v1749 = vrot.slane %v1483, 1
    %v1750 = vsel %vm1012, %v1747, %v1749
    %v1751 = vrot.slane %v1484, 1
    %v1752 = vsel %vm1012, %v1749, %v1751
    %v1753 = vrot.slane %v1485, 1
    %v1754 = vrot.slane %v1486, 1
    %v1755 = vsel %vm1012, %v1753, %v1754
    %v1756 = vrot.slane %v1487, 1
    %v1757 = vsel %vm1012, %v1754, %v1756
    %v1758 = vrot.slane %v1488, 1
    %v1759 = vsel %vm1012, %v1756, %v1758
    %v1760 = vrot.slane %v1489, 1
    %v1761 = vrot.slane %v1490, 1
    %v1762 = vsel %vm1012, %v1760, %v1761
    %v1763 = vrot.slane %v1491, 1
    %v1764 = vsel %vm1012, %v1761, %v1763
    %v1765 = vrot.slane %v1492, 1
    %v1766 = vsel %vm1012, %v1763, %v1765
    %v1767 = vrot.slane %v1493, 1
    %v1768 = vrot.slane %v1494, 1
    %v1769 = vsel %vm1012, %v1767, %v1768
    %v1770 = vrot.slane %v1495, 1
    %v1771 = vsel %vm1012, %v1768, %v1770
    %v1772 = vrot.slane %v1496, 1
    %v1773 = vsel %vm1012, %v1770, %v1772
    %v1774 = vrot.slane %v1497, 1
    %v1775 = vrot.slane %v1498, 1
    %v1776 = vsel %vm1012, %v1774, %v1775
    %v1777 = vrot.slane %v1499, 1
    %v1778 = vsel %vm1012, %v1775, %v1777
    %v1779 = vrot.slane %v1500, 1
    %v1780 = vsel %vm1012, %v1777, %v1779
    %v1781 = vrot.slane %v1501, 1
    %v1782 = vrot.slane %v1502, 1
    %v1783 = vsel %vm1012, %v1781, %v1782
    %v1784 = vrot.slane %v1503, 1
    %v1785 = vsel %vm1012, %v1782, %v1784
    %v1786 = vrot.slane %v1504, 1
    %v1787 = vsel %vm1012, %v1784, %v1786
    %v1788 = vrot.slane %v1505, 1
    %v1789 = vrot.slane %v1506, 1
    %v1790 = vsel %vm1012, %v1788, %v1789
    %v1791 = vrot.slane %v1507, 1
    %v1792 = vsel %vm1012, %v1789, %v1791
    %v1793 = vrot.slane %v1508, 1
    %v1794 = vsel %vm1012, %v1791, %v1793
    %v1899 = vadd.f32 %v1299, %v1615
    %v1900 = vadd.f32 %v1300, %v1617
    %v1901 = vadd.f32 %v1301, %v1619
    %v1902 = vadd.f32 %v1302, %v1618
    %v1903 = vadd.f32 %v1303, %v1622
    %v1904 = vadd.f32 %v1304, %v1624
    %v1905 = vadd.f32 %v1305, %v1626
    %v1906 = vadd.f32 %v1306, %v1625
    %v1907 = vadd.f32 %v1307, %v1629
    %v1908 = vadd.f32 %v1308, %v1631
    %v1909 = vadd.f32 %v1309, %v1633
    %v1910 = vadd.f32 %v1310, %v1632
    %v1911 = vadd.f32 %v1311, %v1636
    %v1912 = vadd.f32 %v1312, %v1638
    %v1913 = vadd.f32 %v1313, %v1640
    %v1914 = vadd.f32 %v1314, %v1639
    %v1915 = vadd.f32 %v1315, %v1643
    %v1916 = vadd.f32 %v1316, %v1645
    %v1917 = vadd.f32 %v1317, %v1647
    %v1918 = vadd.f32 %v1318, %v1646
    %v1919 = vadd.f32 %v1319, %v1650
    %v1920 = vadd.f32 %v1320, %v1652
    %v1921 = vadd.f32 %v1321, %v1654
    %v1922 = vadd.f32 %v1322, %v1653
    %v1923 = vadd.f32 %v1323, %v1657
    %v1924 = vadd.f32 %v1324, %v1659
    %v1925 = vadd.f32 %v1325, %v1661
    %v1926 = vadd.f32 %v1326, %v1660
    %v1927 = vadd.f32 %v1327, %v1664
    %v1928 = vadd.f32 %v1328, %v1666
    %v1929 = vadd.f32 %v1329, %v1668
    %v1930 = vadd.f32 %v1330, %v1667
    %v1931 = vadd.f32 %v1331, %v1671
    %v1932 = vadd.f32 %v1332, %v1673
    %v1933 = vadd.f32 %v1333, %v1675
    %v1934 = vadd.f32 %v1334, %v1674
    %v1935 = vadd.f32 %v1335, %v1678
    %v1936 = vadd.f32 %v1336, %v1680
    %v1937 = vadd.f32 %v1337, %v1682
    %v1938 = vadd.f32 %v1338, %v1681
    %v1939 = vadd.f32 %v1339, %v1685
    %v1940 = vadd.f32 %v1340, %v1687
    %v1941 = vadd.f32 %v1341, %v1689
    %v1942 = vadd.f32 %v1342, %v1688
    %v1943 = vadd.f32 %v1343, %v1692
    %v1944 = vadd.f32 %v1344, %v1694
    %v1945 = vadd.f32 %v1345, %v1696
    %v1946 = vadd.f32 %v1346, %v1695
    %v1947 = vadd.f32 %v1347, %v1699
    %v1948 = vadd.f32 %v1348, %v1701
    %v1949 = vadd.f32 %v1349, %v1703
    %v1950 = vadd.f32 %v1350, %v1702
    %v1951 = vadd.f32 %v1351, %v1706
    %v1952 = vadd.f32 %v1352, %v1708
    %v1953 = vadd.f32 %v1353, %v1710
    %v1954 = vadd.f32 %v1354, %v1709
    %v1955 = vadd.f32 %v1355, %v1713
    %v1956 = vadd.f32 %v1356, %v1715
    %v1957 = vadd.f32 %v1357, %v1717
    %v1958 = vadd.f32 %v1358, %v1716
    %v1959 = vadd.f32 %v1359, %v1720
    %v1960 = vadd.f32 %v1360, %v1722
    %v1961 = vadd.f32 %v1361, %v1724
    %v1962 = vadd.f32 %v1362, %v1723
    %v1963 = vadd.f32 %v1363, %v1727
    %v1964 = vadd.f32 %v1364, %v1729
    %v1965 = vadd.f32 %v1365, %v1731
    %v1966 = vadd.f32 %v1366, %v1730
    %v1967 = vadd.f32 %v1367, %v1734
    %v1968 = vadd.f32 %v1368, %v1736
    %v1969 = vadd.f32 %v1369, %v1738
    %v1970 = vadd.f32 %v1370, %v1737
    %v1971 = vadd.f32 %v1371, %v1741
    %v1972 = vadd.f32 %v1372, %v1743
    %v1973 = vadd.f32 %v1373, %v1745
    %v1974 = vadd.f32 %v1374, %v1744
    %v1975 = vadd.f32 %v1375, %v1748
    %v1976 = vadd.f32 %v1376, %v1750
    %v1977 = vadd.f32 %v1377, %v1752
    %v1978 = vadd.f32 %v1378, %v1751
    %v1979 = vadd.f32 %v1379, %v1755
    %v1980 = vadd.f32 %v1380, %v1757
    %v1981 = vadd.f32 %v1381, %v1759
    %v1982 = vadd.f32 %v1382, %v1758
    %v1983 = vadd.f32 %v1383, %v1762
    %v1984 = vadd.f32 %v1384, %v1764
    %v1985 = vadd.f32 %v1385, %v1766
    %v1986 = vadd.f32 %v1386, %v1765
    %v1987 = vadd.f32 %v1387, %v1769
    %v1988 = vadd.f32 %v1388, %v1771
    %v1989 = vadd.f32 %v1389, %v1773
    %v1990 = vadd.f32 %v1390, %v1772
    %v1991 = vadd.f32 %v1391, %v1776
    %v1992 = vadd.f32 %v1392, %v1778
    %v1993 = vadd.f32 %v1393, %v1780
    %v1994 = vadd.f32 %v1394, %v1779
    %v1995 = vadd.f32 %v1395, %v1783
    %v1996 = vadd.f32 %v1396, %v1785
    %v1997 = vadd.f32 %v1397, %v1787
    %v1998 = vadd.f32 %v1398, %v1786
    %v1999 = vadd.f32 %v1399, %v1790
    %v2000 = vadd.f32 %v1400, %v1792
    %v2001 = vadd.f32 %v1401, %v1794
    %v2002 = vadd.f32 %v1402, %v1793
    %s2003 = sld [smem:[#allocation2 + $0x7]]
    %v2004 = vstv %s2003
    %v2005 = vmul.f32 %v172, %v2004
    %v2006 = vmul.f32 %v173, %v2004
    %v2007 = vmul.f32 %v174, %v2004
    %v2008 = vmul.f32 %v175, %v2004
    %v2009 = vmul.f32 %v176, %v2004
    %v2010 = vmul.f32 %v177, %v2004
    %v2011 = vmul.f32 %v178, %v2004
    %v2012 = vmul.f32 %v179, %v2004
    %v2013 = vmul.f32 %v180, %v2004
    %v2014 = vmul.f32 %v181, %v2004
    %v2015 = vmul.f32 %v182, %v2004
    %v2016 = vmul.f32 %v183, %v2004
    %v2017 = vmul.f32 %v184, %v2004
    %v2018 = vmul.f32 %v185, %v2004
    %v2019 = vmul.f32 %v186, %v2004
    %v2020 = vmul.f32 %v187, %v2004
    %v2021 = vmul.f32 %v188, %v2004
    %v2022 = vmul.f32 %v189, %v2004
    %v2023 = vmul.f32 %v190, %v2004
    %v2024 = vmul.f32 %v191, %v2004
    %v2025 = vmul.f32 %v192, %v2004
    %v2026 = vmul.f32 %v193, %v2004
    %v2027 = vmul.f32 %v194, %v2004
    %v2028 = vmul.f32 %v195, %v2004
    %v2029 = vmul.f32 %v196, %v2004
    %v2030 = vmul.f32 %v197, %v2004
    %v2031 = vmul.f32 %v198, %v2004
    %v2032 = vmul.f32 %v199, %v2004
    %v2033 = vmul.f32 %v200, %v2004
    %v2034 = vmul.f32 %v201, %v2004
    %v2035 = vmul.f32 %v202, %v2004
    %v2036 = vmul.f32 %v203, %v2004
    %v2037 = vmul.f32 %v204, %v2004
    %v2038 = vmul.f32 %v205, %v2004
    %v2039 = vmul.f32 %v206, %v2004
    %v2040 = vmul.f32 %v207, %v2004
    %v2041 = vmul.f32 %v208, %v2004
    %v2042 = vmul.f32 %v209, %v2004
    %v2043 = vmul.f32 %v210, %v2004
    %v2044 = vmul.f32 %v211, %v2004
    %v2045 = vmul.f32 %v212, %v2004
    %v2046 = vmul.f32 %v213, %v2004
    %v2047 = vmul.f32 %v214, %v2004
    %v2048 = vmul.f32 %v215, %v2004
    %v2049 = vmul.f32 %v216, %v2004
    %v2050 = vmul.f32 %v217, %v2004
    %v2051 = vmul.f32 %v218, %v2004
    %v2052 = vmul.f32 %v219, %v2004
    %v2053 = vmul.f32 %v220, %v2004
    %v2054 = vmul.f32 %v221, %v2004
    %v2055 = vmul.f32 %v222, %v2004
    %v2056 = vmul.f32 %v223, %v2004
    %v2057 = vmul.f32 %v224, %v2004
    %v2058 = vmul.f32 %v225, %v2004
    %v2059 = vmul.f32 %v226, %v2004
    %v2060 = vmul.f32 %v227, %v2004
    %v2061 = vmul.f32 %v228, %v2004
    %v2062 = vmul.f32 %v229, %v2004
    %v2063 = vmul.f32 %v230, %v2004
    %v2064 = vmul.f32 %v231, %v2004
    %v2065 = vmul.f32 %v232, %v2004
    %v2066 = vmul.f32 %v233, %v2004
    %v2067 = vmul.f32 %v234, %v2004
    %v2068 = vmul.f32 %v235, %v2004
    %v2069 = vmul.f32 %v236, %v2004
    %v2070 = vmul.f32 %v237, %v2004
    %v2071 = vmul.f32 %v238, %v2004
    %v2072 = vmul.f32 %v239, %v2004
    %v2073 = vmul.f32 %v240, %v2004
    %v2074 = vmul.f32 %v241, %v2004
    %v2075 = vmul.f32 %v242, %v2004
    %v2076 = vmul.f32 %v243, %v2004
    %v2077 = vmul.f32 %v244, %v2004
    %v2078 = vmul.f32 %v245, %v2004
    %v2079 = vmul.f32 %v246, %v2004
    %v2080 = vmul.f32 %v247, %v2004
    %v2081 = vmul.f32 %v248, %v2004
    %v2082 = vmul.f32 %v249, %v2004
    %v2083 = vmul.f32 %v250, %v2004
    %v2084 = vmul.f32 %v251, %v2004
    %v2085 = vmul.f32 %v252, %v2004
    %v2086 = vmul.f32 %v253, %v2004
    %v2087 = vmul.f32 %v254, %v2004
    %v2088 = vmul.f32 %v255, %v2004
    %v2089 = vmul.f32 %v256, %v2004
    %v2090 = vmul.f32 %v257, %v2004
    %v2091 = vmul.f32 %v258, %v2004
    %v2092 = vmul.f32 %v259, %v2004
    %v2093 = vmul.f32 %v260, %v2004
    %v2094 = vmul.f32 %v261, %v2004
    %v2095 = vmul.f32 %v262, %v2004
    %v2096 = vmul.f32 %v263, %v2004
    %v2097 = vmul.f32 %v264, %v2004
    %v2098 = vmul.f32 %v265, %v2004
    %v2099 = vmul.f32 %v266, %v2004
    %v2100 = vmul.f32 %v267, %v2004
    %v2101 = vmul.f32 %v268, %v2004
    %v2102 = vmul.f32 %v269, %v2004
    %v2103 = vmul.f32 %v270, %v2004
    %v2104 = vmul.f32 %v271, %v2004
    %v2105 = vmul.f32 %v272, %v2004
    %v2106 = vmul.f32 %v273, %v2004
    %v2107 = vmul.f32 %v274, %v2004
    %v2108 = vmul.f32 %v275, %v2004
    %v2213 = vrot.slane %v2005, 1
    %v2214 = vrot.slane %v2006, 1
    %v2215 = vsel %vm1012, %v2213, %v2214
    %v2216 = vrot.slane %v2007, 1
    %v2217 = vsel %vm1012, %v2214, %v2216
    %v2218 = vrot.slane %v2008, 1
    %v2219 = vsel %vm1012, %v2216, %v2218
    %v2220 = vrot.slane %v2009, 1
    %v2221 = vrot.slane %v2010, 1
    %v2222 = vsel %vm1012, %v2220, %v2221
    %v2223 = vrot.slane %v2011, 1
    %v2224 = vsel %vm1012, %v2221, %v2223
    %v2225 = vrot.slane %v2012, 1
    %v2226 = vsel %vm1012, %v2223, %v2225
    %v2227 = vrot.slane %v2013, 1
    %v2228 = vrot.slane %v2014, 1
    %v2229 = vsel %vm1012, %v2227, %v2228
    %v2230 = vrot.slane %v2015, 1
    %v2231 = vsel %vm1012, %v2228, %v2230
    %v2232 = vrot.slane %v2016, 1
    %v2233 = vsel %vm1012, %v2230, %v2232
    %v2234 = vrot.slane %v2017, 1
    %v2235 = vrot.slane %v2018, 1
    %v2236 = vsel %vm1012, %v2234, %v2235
    %v2237 = vrot.slane %v2019, 1
    %v2238 = vsel %vm1012, %v2235, %v2237
    %v2239 = vrot.slane %v2020, 1
    %v2240 = vsel %vm1012, %v2237, %v2239
    %v2241 = vrot.slane %v2021, 1
    %v2242 = vrot.slane %v2022, 1
    %v2243 = vsel %vm1012, %v2241, %v2242
    %v2244 = vrot.slane %v2023, 1
    %v2245 = vsel %vm1012, %v2242, %v2244
    %v2246 = vrot.slane %v2024, 1
    %v2247 = vsel %vm1012, %v2244, %v2246
    %v2248 = vrot.slane %v2025, 1
    %v2249 = vrot.slane %v2026, 1
    %v2250 = vsel %vm1012, %v2248, %v2249
    %v2251 = vrot.slane %v2027, 1
    %v2252 = vsel %vm1012, %v2249, %v2251
    %v2253 = vrot.slane %v2028, 1
    %v2254 = vsel %vm1012, %v2251, %v2253
    %v2255 = vrot.slane %v2029, 1
    %v2256 = vrot.slane %v2030, 1
    %v2257 = vsel %vm1012, %v2255, %v2256
    %v2258 = vrot.slane %v2031, 1
    %v2259 = vsel %vm1012, %v2256, %v2258
    %v2260 = vrot.slane %v2032, 1
    %v2261 = vsel %vm1012, %v2258, %v2260
    %v2262 = vrot.slane %v2033, 1
    %v2263 = vrot.slane %v2034, 1
    %v2264 = vsel %vm1012, %v2262, %v2263
    %v2265 = vrot.slane %v2035, 1
    %v2266 = vsel %vm1012, %v2263, %v2265
    %v2267 = vrot.slane %v2036, 1
    %v2268 = vsel %vm1012, %v2265, %v2267
    %v2269 = vrot.slane %v2037, 1
    %v2270 = vrot.slane %v2038, 1
    %v2271 = vsel %vm1012, %v2269, %v2270
    %v2272 = vrot.slane %v2039, 1
    %v2273 = vsel %vm1012, %v2270, %v2272
    %v2274 = vrot.slane %v2040, 1
    %v2275 = vsel %vm1012, %v2272, %v2274
    %v2276 = vrot.slane %v2041, 1
    %v2277 = vrot.slane %v2042, 1
    %v2278 = vsel %vm1012, %v2276, %v2277
    %v2279 = vrot.slane %v2043, 1
    %v2280 = vsel %vm1012, %v2277, %v2279
    %v2281 = vrot.slane %v2044, 1
    %v2282 = vsel %vm1012, %v2279, %v2281
    %v2283 = vrot.slane %v2045, 1
    %v2284 = vrot.slane %v2046, 1
    %v2285 = vsel %vm1012, %v2283, %v2284
    %v2286 = vrot.slane %v2047, 1
    %v2287 = vsel %vm1012, %v2284, %v2286
    %v2288 = vrot.slane %v2048, 1
    %v2289 = vsel %vm1012, %v2286, %v2288
    %v2290 = vrot.slane %v2049, 1
    %v2291 = vrot.slane %v2050, 1
    %v2292 = vsel %vm1012, %v2290, %v2291
    %v2293 = vrot.slane %v2051, 1
    %v2294 = vsel %vm1012, %v2291, %v2293
    %v2295 = vrot.slane %v2052, 1
    %v2296 = vsel %vm1012, %v2293, %v2295
    %v2297 = vrot.slane %v2053, 1
    %v2298 = vrot.slane %v2054, 1
    %v2299 = vsel %vm1012, %v2297, %v2298
    %v2300 = vrot.slane %v2055, 1
    %v2301 = vsel %vm1012, %v2298, %v2300
    %v2302 = vrot.slane %v2056, 1
    %v2303 = vsel %vm1012, %v2300, %v2302
    %v2304 = vrot.slane %v2057, 1
    %v2305 = vrot.slane %v2058, 1
    %v2306 = vsel %vm1012, %v2304, %v2305
    %v2307 = vrot.slane %v2059, 1
    %v2308 = vsel %vm1012, %v2305, %v2307
    %v2309 = vrot.slane %v2060, 1
    %v2310 = vsel %vm1012, %v2307, %v2309
    %v2311 = vrot.slane %v2061, 1
    %v2312 = vrot.slane %v2062, 1
    %v2313 = vsel %vm1012, %v2311, %v2312
    %v2314 = vrot.slane %v2063, 1
    %v2315 = vsel %vm1012, %v2312, %v2314
    %v2316 = vrot.slane %v2064, 1
    %v2317 = vsel %vm1012, %v2314, %v2316
    %v2318 = vrot.slane %v2065, 1
    %v2319 = vrot.slane %v2066, 1
    %v2320 = vsel %vm1012, %v2318, %v2319
    %v2321 = vrot.slane %v2067, 1
    %v2322 = vsel %vm1012, %v2319, %v2321
    %v2323 = vrot.slane %v2068, 1
    %v2324 = vsel %vm1012, %v2321, %v2323
    %v2325 = vrot.slane %v2069, 1
    %v2326 = vrot.slane %v2070, 1
    %v2327 = vsel %vm1012, %v2325, %v2326
    %v2328 = vrot.slane %v2071, 1
    %v2329 = vsel %vm1012, %v2326, %v2328
    %v2330 = vrot.slane %v2072, 1
    %v2331 = vsel %vm1012, %v2328, %v2330
    %v2332 = vrot.slane %v2073, 1
    %v2333 = vrot.slane %v2074, 1
    %v2334 = vsel %vm1012, %v2332, %v2333
    %v2335 = vrot.slane %v2075, 1
    %v2336 = vsel %vm1012, %v2333, %v2335
    %v2337 = vrot.slane %v2076, 1
    %v2338 = vsel %vm1012, %v2335, %v2337
    %v2339 = vrot.slane %v2077, 1
    %v2340 = vrot.slane %v2078, 1
    %v2341 = vsel %vm1012, %v2339, %v2340
    %v2342 = vrot.slane %v2079, 1
    %v2343 = vsel %vm1012, %v2340, %v2342
    %v2344 = vrot.slane %v2080, 1
    %v2345 = vsel %vm1012, %v2342, %v2344
    %v2346 = vrot.slane %v2081, 1
    %v2347 = vrot.slane %v2082, 1
    %v2348 = vsel %vm1012, %v2346, %v2347
    %v2349 = vrot.slane %v2083, 1
    %v2350 = vsel %vm1012, %v2347, %v2349
    %v2351 = vrot.slane %v2084, 1
    %v2352 = vsel %vm1012, %v2349, %v2351
    %v2353 = vrot.slane %v2085, 1
    %v2354 = vrot.slane %v2086, 1
    %v2355 = vsel %vm1012, %v2353, %v2354
    %v2356 = vrot.slane %v2087, 1
    %v2357 = vsel %vm1012, %v2354, %v2356
    %v2358 = vrot.slane %v2088, 1
    %v2359 = vsel %vm1012, %v2356, %v2358
    %v2360 = vrot.slane %v2089, 1
    %v2361 = vrot.slane %v2090, 1
    %v2362 = vsel %vm1012, %v2360, %v2361
    %v2363 = vrot.slane %v2091, 1
    %v2364 = vsel %vm1012, %v2361, %v2363
    %v2365 = vrot.slane %v2092, 1
    %v2366 = vsel %vm1012, %v2363, %v2365
    %v2367 = vrot.slane %v2093, 1
    %v2368 = vrot.slane %v2094, 1
    %v2369 = vsel %vm1012, %v2367, %v2368
    %v2370 = vrot.slane %v2095, 1
    %v2371 = vsel %vm1012, %v2368, %v2370
    %v2372 = vrot.slane %v2096, 1
    %v2373 = vsel %vm1012, %v2370, %v2372
    %v2374 = vrot.slane %v2097, 1
    %v2375 = vrot.slane %v2098, 1
    %v2376 = vsel %vm1012, %v2374, %v2375
    %v2377 = vrot.slane %v2099, 1
    %v2378 = vsel %vm1012, %v2375, %v2377
    %v2379 = vrot.slane %v2100, 1
    %v2380 = vsel %vm1012, %v2377, %v2379
    %v2381 = vrot.slane %v2101, 1
    %v2382 = vrot.slane %v2102, 1
    %v2383 = vsel %vm1012, %v2381, %v2382
    %v2384 = vrot.slane %v2103, 1
    %v2385 = vsel %vm1012, %v2382, %v2384
    %v2386 = vrot.slane %v2104, 1
    %v2387 = vsel %vm1012, %v2384, %v2386
    %v2388 = vrot.slane %v2105, 1
    %v2389 = vrot.slane %v2106, 1
    %v2390 = vsel %vm1012, %v2388, %v2389
    %v2391 = vrot.slane %v2107, 1
    %v2392 = vsel %vm1012, %v2389, %v2391
    %v2393 = vrot.slane %v2108, 1
    %v2394 = vsel %vm1012, %v2391, %v2393
    %v2499 = vadd.f32 %v1899, %v2215
    %v2500 = vadd.f32 %v1900, %v2217
    %v2501 = vadd.f32 %v1901, %v2219
    %v2502 = vadd.f32 %v1902, %v2218
    %v2503 = vadd.f32 %v1903, %v2222
    %v2504 = vadd.f32 %v1904, %v2224
    %v2505 = vadd.f32 %v1905, %v2226
    %v2506 = vadd.f32 %v1906, %v2225
    %v2507 = vadd.f32 %v1907, %v2229
    %v2508 = vadd.f32 %v1908, %v2231
    %v2509 = vadd.f32 %v1909, %v2233
    %v2510 = vadd.f32 %v1910, %v2232
    %v2511 = vadd.f32 %v1911, %v2236
    %v2512 = vadd.f32 %v1912, %v2238
    %v2513 = vadd.f32 %v1913, %v2240
    %v2514 = vadd.f32 %v1914, %v2239
    %v2515 = vadd.f32 %v1915, %v2243
    %v2516 = vadd.f32 %v1916, %v2245
    %v2517 = vadd.f32 %v1917, %v2247
    %v2518 = vadd.f32 %v1918, %v2246
    %v2519 = vadd.f32 %v1919, %v2250
    %v2520 = vadd.f32 %v1920, %v2252
    %v2521 = vadd.f32 %v1921, %v2254
    %v2522 = vadd.f32 %v1922, %v2253
    %v2523 = vadd.f32 %v1923, %v2257
    %v2524 = vadd.f32 %v1924, %v2259
    %v2525 = vadd.f32 %v1925, %v2261
    %v2526 = vadd.f32 %v1926, %v2260
    %v2527 = vadd.f32 %v1927, %v2264
    %v2528 = vadd.f32 %v1928, %v2266
    %v2529 = vadd.f32 %v1929, %v2268
    %v2530 = vadd.f32 %v1930, %v2267
    %v2531 = vadd.f32 %v1931, %v2271
    %v2532 = vadd.f32 %v1932, %v2273
    %v2533 = vadd.f32 %v1933, %v2275
    %v2534 = vadd.f32 %v1934, %v2274
    %v2535 = vadd.f32 %v1935, %v2278
    %v2536 = vadd.f32 %v1936, %v2280
    %v2537 = vadd.f32 %v1937, %v2282
    %v2538 = vadd.f32 %v1938, %v2281
    %v2539 = vadd.f32 %v1939, %v2285
    %v2540 = vadd.f32 %v1940, %v2287
    %v2541 = vadd.f32 %v1941, %v2289
    %v2542 = vadd.f32 %v1942, %v2288
    %v2543 = vadd.f32 %v1943, %v2292
    %v2544 = vadd.f32 %v1944, %v2294
    %v2545 = vadd.f32 %v1945, %v2296
    %v2546 = vadd.f32 %v1946, %v2295
    %v2547 = vadd.f32 %v1947, %v2299
    %v2548 = vadd.f32 %v1948, %v2301
    %v2549 = vadd.f32 %v1949, %v2303
    %v2550 = vadd.f32 %v1950, %v2302
    %v2551 = vadd.f32 %v1951, %v2306
    %v2552 = vadd.f32 %v1952, %v2308
    %v2553 = vadd.f32 %v1953, %v2310
    %v2554 = vadd.f32 %v1954, %v2309
    %v2555 = vadd.f32 %v1955, %v2313
    %v2556 = vadd.f32 %v1956, %v2315
    %v2557 = vadd.f32 %v1957, %v2317
    %v2558 = vadd.f32 %v1958, %v2316
    %v2559 = vadd.f32 %v1959, %v2320
    %v2560 = vadd.f32 %v1960, %v2322
    %v2561 = vadd.f32 %v1961, %v2324
    %v2562 = vadd.f32 %v1962, %v2323
    %v2563 = vadd.f32 %v1963, %v2327
    %v2564 = vadd.f32 %v1964, %v2329
    %v2565 = vadd.f32 %v1965, %v2331
    %v2566 = vadd.f32 %v1966, %v2330
    %v2567 = vadd.f32 %v1967, %v2334
    %v2568 = vadd.f32 %v1968, %v2336
    %v2569 = vadd.f32 %v1969, %v2338
    %v2570 = vadd.f32 %v1970, %v2337
    %v2571 = vadd.f32 %v1971, %v2341
    %v2572 = vadd.f32 %v1972, %v2343
    %v2573 = vadd.f32 %v1973, %v2345
    %v2574 = vadd.f32 %v1974, %v2344
    %v2575 = vadd.f32 %v1975, %v2348
    %v2576 = vadd.f32 %v1976, %v2350
    %v2577 = vadd.f32 %v1977, %v2352
    %v2578 = vadd.f32 %v1978, %v2351
    %v2579 = vadd.f32 %v1979, %v2355
    %v2580 = vadd.f32 %v1980, %v2357
    %v2581 = vadd.f32 %v1981, %v2359
    %v2582 = vadd.f32 %v1982, %v2358
    %v2583 = vadd.f32 %v1983, %v2362
    %v2584 = vadd.f32 %v1984, %v2364
    %v2585 = vadd.f32 %v1985, %v2366
    %v2586 = vadd.f32 %v1986, %v2365
    %v2587 = vadd.f32 %v1987, %v2369
    %v2588 = vadd.f32 %v1988, %v2371
    %v2589 = vadd.f32 %v1989, %v2373
    %v2590 = vadd.f32 %v1990, %v2372
    %v2591 = vadd.f32 %v1991, %v2376
    %v2592 = vadd.f32 %v1992, %v2378
    %v2593 = vadd.f32 %v1993, %v2380
    %v2594 = vadd.f32 %v1994, %v2379
    %v2595 = vadd.f32 %v1995, %v2383
    %v2596 = vadd.f32 %v1996, %v2385
    %v2597 = vadd.f32 %v1997, %v2387
    %v2598 = vadd.f32 %v1998, %v2386
    %v2599 = vadd.f32 %v1999, %v2390
    %v2600 = vadd.f32 %v2000, %v2392
    %v2601 = vadd.f32 %v2001, %v2394
    %v2602 = vadd.f32 %v2002, %v2393
    %s2603 = sld [smem:[#allocation2 + $0x2]]
    %v2604 = vstv %s2603
    %v2605 = vmul.f32 %v164, %v2604
    %v2606 = vmul.f32 %v165, %v2604
    %v2607 = vmul.f32 %v166, %v2604
    %v2608 = vmul.f32 %v167, %v2604
    %v2609 = vmul.f32 %v168, %v2604
    %v2610 = vmul.f32 %v169, %v2604
    %v2611 = vmul.f32 %v170, %v2604
    %v2612 = vmul.f32 %v171, %v2604
    %v2613 = vmul.f32 %v172, %v2604
    %v2614 = vmul.f32 %v173, %v2604
    %v2615 = vmul.f32 %v174, %v2604
    %v2616 = vmul.f32 %v175, %v2604
    %v2617 = vmul.f32 %v176, %v2604
    %v2618 = vmul.f32 %v177, %v2604
    %v2619 = vmul.f32 %v178, %v2604
    %v2620 = vmul.f32 %v179, %v2604
    %v2621 = vmul.f32 %v180, %v2604
    %v2622 = vmul.f32 %v181, %v2604
    %v2623 = vmul.f32 %v182, %v2604
    %v2624 = vmul.f32 %v183, %v2604
    %v2625 = vmul.f32 %v184, %v2604
    %v2626 = vmul.f32 %v185, %v2604
    %v2627 = vmul.f32 %v186, %v2604
    %v2628 = vmul.f32 %v187, %v2604
    %v2629 = vmul.f32 %v188, %v2604
    %v2630 = vmul.f32 %v189, %v2604
    %v2631 = vmul.f32 %v190, %v2604
    %v2632 = vmul.f32 %v191, %v2604
    %v2633 = vmul.f32 %v192, %v2604
    %v2634 = vmul.f32 %v193, %v2604
    %v2635 = vmul.f32 %v194, %v2604
    %v2636 = vmul.f32 %v195, %v2604
    %v2637 = vmul.f32 %v196, %v2604
    %v2638 = vmul.f32 %v197, %v2604
    %v2639 = vmul.f32 %v198, %v2604
    %v2640 = vmul.f32 %v199, %v2604
    %v2641 = vmul.f32 %v200, %v2604
    %v2642 = vmul.f32 %v201, %v2604
    %v2643 = vmul.f32 %v202, %v2604
    %v2644 = vmul.f32 %v203, %v2604
    %v2645 = vmul.f32 %v204, %v2604
    %v2646 = vmul.f32 %v205, %v2604
    %v2647 = vmul.f32 %v206, %v2604
    %v2648 = vmul.f32 %v207, %v2604
    %v2649 = vmul.f32 %v208, %v2604
    %v2650 = vmul.f32 %v209, %v2604
    %v2651 = vmul.f32 %v210, %v2604
    %v2652 = vmul.f32 %v211, %v2604
    %v2653 = vmul.f32 %v212, %v2604
    %v2654 = vmul.f32 %v213, %v2604
    %v2655 = vmul.f32 %v214, %v2604
    %v2656 = vmul.f32 %v215, %v2604
    %v2657 = vmul.f32 %v216, %v2604
    %v2658 = vmul.f32 %v217, %v2604
    %v2659 = vmul.f32 %v218, %v2604
    %v2660 = vmul.f32 %v219, %v2604
    %v2661 = vmul.f32 %v220, %v2604
    %v2662 = vmul.f32 %v221, %v2604
    %v2663 = vmul.f32 %v222, %v2604
    %v2664 = vmul.f32 %v223, %v2604
    %v2665 = vmul.f32 %v224, %v2604
    %v2666 = vmul.f32 %v225, %v2604
    %v2667 = vmul.f32 %v226, %v2604
    %v2668 = vmul.f32 %v227, %v2604
    %v2669 = vmul.f32 %v228, %v2604
    %v2670 = vmul.f32 %v229, %v2604
    %v2671 = vmul.f32 %v230, %v2604
    %v2672 = vmul.f32 %v231, %v2604
    %v2673 = vmul.f32 %v232, %v2604
    %v2674 = vmul.f32 %v233, %v2604
    %v2675 = vmul.f32 %v234, %v2604
    %v2676 = vmul.f32 %v235, %v2604
    %v2677 = vmul.f32 %v236, %v2604
    %v2678 = vmul.f32 %v237, %v2604
    %v2679 = vmul.f32 %v238, %v2604
    %v2680 = vmul.f32 %v239, %v2604
    %v2681 = vmul.f32 %v240, %v2604
    %v2682 = vmul.f32 %v241, %v2604
    %v2683 = vmul.f32 %v242, %v2604
    %v2684 = vmul.f32 %v243, %v2604
    %v2685 = vmul.f32 %v244, %v2604
    %v2686 = vmul.f32 %v245, %v2604
    %v2687 = vmul.f32 %v246, %v2604
    %v2688 = vmul.f32 %v247, %v2604
    %v2689 = vmul.f32 %v248, %v2604
    %v2690 = vmul.f32 %v249, %v2604
    %v2691 = vmul.f32 %v250, %v2604
    %v2692 = vmul.f32 %v251, %v2604
    %v2693 = vmul.f32 %v252, %v2604
    %v2694 = vmul.f32 %v253, %v2604
    %v2695 = vmul.f32 %v254, %v2604
    %v2696 = vmul.f32 %v255, %v2604
    %v2697 = vmul.f32 %v256, %v2604
    %v2698 = vmul.f32 %v257, %v2604
    %v2699 = vmul.f32 %v258, %v2604
    %v2700 = vmul.f32 %v259, %v2604
    %v2701 = vmul.f32 %v260, %v2604
    %v2702 = vmul.f32 %v261, %v2604
    %v2703 = vmul.f32 %v262, %v2604
    %v2704 = vmul.f32 %v263, %v2604
    %v2705 = vmul.f32 %v264, %v2604
    %v2706 = vmul.f32 %v265, %v2604
    %v2707 = vmul.f32 %v266, %v2604
    %v2708 = vmul.f32 %v267, %v2604
    %vm2813 = vcmask 1045504
    %v2814 = vrot.slane %v2605, 2
    %v2815 = vrot.slane %v2606, 2
    %v2816 = vsel %vm2813, %v2814, %v2815
    %v2817 = vrot.slane %v2607, 2
    %v2818 = vsel %vm2813, %v2815, %v2817
    %v2819 = vrot.slane %v2608, 2
    %v2820 = vsel %vm2813, %v2817, %v2819
    %v2821 = vrot.slane %v2609, 2
    %v2822 = vrot.slane %v2610, 2
    %v2823 = vsel %vm2813, %v2821, %v2822
    %v2824 = vrot.slane %v2611, 2
    %v2825 = vsel %vm2813, %v2822, %v2824
    %v2826 = vrot.slane %v2612, 2
    %v2827 = vsel %vm2813, %v2824, %v2826
    %v2828 = vrot.slane %v2613, 2
    %v2829 = vrot.slane %v2614, 2
    %v2830 = vsel %vm2813, %v2828, %v2829
    %v2831 = vrot.slane %v2615, 2
    %v2832 = vsel %vm2813, %v2829, %v2831
    %v2833 = vrot.slane %v2616, 2
    %v2834 = vsel %vm2813, %v2831, %v2833
    %v2835 = vrot.slane %v2617, 2
    %v2836 = vrot.slane %v2618, 2
    %v2837 = vsel %vm2813, %v2835, %v2836
    %v2838 = vrot.slane %v2619, 2
    %v2839 = vsel %vm2813, %v2836, %v2838
    %v2840 = vrot.slane %v2620, 2
    %v2841 = vsel %vm2813, %v2838, %v2840
    %v2842 = vrot.slane %v2621, 2
    %v2843 = vrot.slane %v2622, 2
    %v2844 = vsel %vm2813, %v2842, %v2843
    %v2845 = vrot.slane %v2623, 2
    %v2846 = vsel %vm2813, %v2843, %v2845
    %v2847 = vrot.slane %v2624, 2
    %v2848 = vsel %vm2813, %v2845, %v2847
    %v2849 = vrot.slane %v2625, 2
    %v2850 = vrot.slane %v2626, 2
    %v2851 = vsel %vm2813, %v2849, %v2850
    %v2852 = vrot.slane %v2627, 2
    %v2853 = vsel %vm2813, %v2850, %v2852
    %v2854 = vrot.slane %v2628, 2
    %v2855 = vsel %vm2813, %v2852, %v2854
    %v2856 = vrot.slane %v2629, 2
    %v2857 = vrot.slane %v2630, 2
    %v2858 = vsel %vm2813, %v2856, %v2857
    %v2859 = vrot.slane %v2631, 2
    %v2860 = vsel %vm2813, %v2857, %v2859
    %v2861 = vrot.slane %v2632, 2
    %v2862 = vsel %vm2813, %v2859, %v2861
    %v2863 = vrot.slane %v2633, 2
    %v2864 = vrot.slane %v2634, 2
    %v2865 = vsel %vm2813, %v2863, %v2864
    %v2866 = vrot.slane %v2635, 2
    %v2867 = vsel %vm2813, %v2864, %v2866
    %v2868 = vrot.slane %v2636, 2
    %v2869 = vsel %vm2813, %v2866, %v2868
    %v2870 = vrot.slane %v2637, 2
    %v2871 = vrot.slane %v2638, 2
    %v2872 = vsel %vm2813, %v2870, %v2871
    %v2873 = vrot.slane %v2639, 2
    %v2874 = vsel %vm2813, %v2871, %v2873
    %v2875 = vrot.slane %v2640, 2
    %v2876 = vsel %vm2813, %v2873, %v2875
    %v2877 = vrot.slane %v2641, 2
    %v2878 = vrot.slane %v2642, 2
    %v2879 = vsel %vm2813, %v2877, %v2878
    %v2880 = vrot.slane %v2643, 2
    %v2881 = vsel %vm2813, %v2878, %v2880
    %v2882 = vrot.slane %v2644, 2
    %v2883 = vsel %vm2813, %v2880, %v2882
    %v2884 = vrot.slane %v2645, 2
    %v2885 = vrot.slane %v2646, 2
    %v2886 = vsel %vm2813, %v2884, %v2885
    %v2887 = vrot.slane %v2647, 2
    %v2888 = vsel %vm2813, %v2885, %v2887
    %v2889 = vrot.slane %v2648, 2
    %v2890 = vsel %vm2813, %v2887, %v2889
    %v2891 = vrot.slane %v2649, 2
    %v2892 = vrot.slane %v2650, 2
    %v2893 = vsel %vm2813, %v2891, %v2892
    %v2894 = vrot.slane %v2651, 2
    %v2895 = vsel %vm2813, %v2892, %v2894
    %v2896 = vrot.slane %v2652, 2
    %v2897 = vsel %vm2813, %v2894, %v2896
    %v2898 = vrot.slane %v2653, 2
    %v2899 = vrot.slane %v2654, 2
    %v2900 = vsel %vm2813, %v2898, %v2899
    %v2901 = vrot.slane %v2655, 2
    %v2902 = vsel %vm2813, %v2899, %v2901
    %v2903 = vrot.slane %v2656, 2
    %v2904 = vsel %vm2813, %v2901, %v2903
    %v2905 = vrot.slane %v2657, 2
    %v2906 = vrot.slane %v2658, 2
    %v2907 = vsel %vm2813, %v2905, %v2906
    %v2908 = vrot.slane %v2659, 2
    %v2909 = vsel %vm2813, %v2906, %v2908
    %v2910 = vrot.slane %v2660, 2
    %v2911 = vsel %vm2813, %v2908, %v2910
    %v2912 = vrot.slane %v2661, 2
    %v2913 = vrot.slane %v2662, 2
    %v2914 = vsel %vm2813, %v2912, %v2913
    %v2915 = vrot.slane %v2663, 2
    %v2916 = vsel %vm2813, %v2913, %v2915
    %v2917 = vrot.slane %v2664, 2
    %v2918 = vsel %vm2813, %v2915, %v2917
    %v2919 = vrot.slane %v2665, 2
    %v2920 = vrot.slane %v2666, 2
    %v2921 = vsel %vm2813, %v2919, %v2920
    %v2922 = vrot.slane %v2667, 2
    %v2923 = vsel %vm2813, %v2920, %v2922
    %v2924 = vrot.slane %v2668, 2
    %v2925 = vsel %vm2813, %v2922, %v2924
    %v2926 = vrot.slane %v2669, 2
    %v2927 = vrot.slane %v2670, 2
    %v2928 = vsel %vm2813, %v2926, %v2927
    %v2929 = vrot.slane %v2671, 2
    %v2930 = vsel %vm2813, %v2927, %v2929
    %v2931 = vrot.slane %v2672, 2
    %v2932 = vsel %vm2813, %v2929, %v2931
    %v2933 = vrot.slane %v2673, 2
    %v2934 = vrot.slane %v2674, 2
    %v2935 = vsel %vm2813, %v2933, %v2934
    %v2936 = vrot.slane %v2675, 2
    %v2937 = vsel %vm2813, %v2934, %v2936
    %v2938 = vrot.slane %v2676, 2
    %v2939 = vsel %vm2813, %v2936, %v2938
    %v2940 = vrot.slane %v2677, 2
    %v2941 = vrot.slane %v2678, 2
    %v2942 = vsel %vm2813, %v2940, %v2941
    %v2943 = vrot.slane %v2679, 2
    %v2944 = vsel %vm2813, %v2941, %v2943
    %v2945 = vrot.slane %v2680, 2
    %v2946 = vsel %vm2813, %v2943, %v2945
    %v2947 = vrot.slane %v2681, 2
    %v2948 = vrot.slane %v2682, 2
    %v2949 = vsel %vm2813, %v2947, %v2948
    %v2950 = vrot.slane %v2683, 2
    %v2951 = vsel %vm2813, %v2948, %v2950
    %v2952 = vrot.slane %v2684, 2
    %v2953 = vsel %vm2813, %v2950, %v2952
    %v2954 = vrot.slane %v2685, 2
    %v2955 = vrot.slane %v2686, 2
    %v2956 = vsel %vm2813, %v2954, %v2955
    %v2957 = vrot.slane %v2687, 2
    %v2958 = vsel %vm2813, %v2955, %v2957
    %v2959 = vrot.slane %v2688, 2
    %v2960 = vsel %vm2813, %v2957, %v2959
    %v2961 = vrot.slane %v2689, 2
    %v2962 = vrot.slane %v2690, 2
    %v2963 = vsel %vm2813, %v2961, %v2962
    %v2964 = vrot.slane %v2691, 2
    %v2965 = vsel %vm2813, %v2962, %v2964
    %v2966 = vrot.slane %v2692, 2
    %v2967 = vsel %vm2813, %v2964, %v2966
    %v2968 = vrot.slane %v2693, 2
    %v2969 = vrot.slane %v2694, 2
    %v2970 = vsel %vm2813, %v2968, %v2969
    %v2971 = vrot.slane %v2695, 2
    %v2972 = vsel %vm2813, %v2969, %v2971
    %v2973 = vrot.slane %v2696, 2
    %v2974 = vsel %vm2813, %v2971, %v2973
    %v2975 = vrot.slane %v2697, 2
    %v2976 = vrot.slane %v2698, 2
    %v2977 = vsel %vm2813, %v2975, %v2976
    %v2978 = vrot.slane %v2699, 2
    %v2979 = vsel %vm2813, %v2976, %v2978
    %v2980 = vrot.slane %v2700, 2
    %v2981 = vsel %vm2813, %v2978, %v2980
    %v2982 = vrot.slane %v2701, 2
    %v2983 = vrot.slane %v2702, 2
    %v2984 = vsel %vm2813, %v2982, %v2983
    %v2985 = vrot.slane %v2703, 2
    %v2986 = vsel %vm2813, %v2983, %v2985
    %v2987 = vrot.slane %v2704, 2
    %v2988 = vsel %vm2813, %v2985, %v2987
    %v2989 = vrot.slane %v2705, 2
    %v2990 = vrot.slane %v2706, 2
    %v2991 = vsel %vm2813, %v2989, %v2990
    %v2992 = vrot.slane %v2707, 2
    %v2993 = vsel %vm2813, %v2990, %v2992
    %v2994 = vrot.slane %v2708, 2
    %v2995 = vsel %vm2813, %v2992, %v2994
    %v3100 = vadd.f32 %v2499, %v2816
    %v3101 = vadd.f32 %v2500, %v2818
    %v3102 = vadd.f32 %v2501, %v2820
    %v3103 = vadd.f32 %v2502, %v2819
    %v3104 = vadd.f32 %v2503, %v2823
    %v3105 = vadd.f32 %v2504, %v2825
    %v3106 = vadd.f32 %v2505, %v2827
    %v3107 = vadd.f32 %v2506, %v2826
    %v3108 = vadd.f32 %v2507, %v2830
    %v3109 = vadd.f32 %v2508, %v2832
    %v3110 = vadd.f32 %v2509, %v2834
    %v3111 = vadd.f32 %v2510, %v2833
    %v3112 = vadd.f32 %v2511, %v2837
    %v3113 = vadd.f32 %v2512, %v2839
    %v3114 = vadd.f32 %v2513, %v2841
    %v3115 = vadd.f32 %v2514, %v2840
    %v3116 = vadd.f32 %v2515, %v2844
    %v3117 = vadd.f32 %v2516, %v2846
    %v3118 = vadd.f32 %v2517, %v2848
    %v3119 = vadd.f32 %v2518, %v2847
    %v3120 = vadd.f32 %v2519, %v2851
    %v3121 = vadd.f32 %v2520, %v2853
    %v3122 = vadd.f32 %v2521, %v2855
    %v3123 = vadd.f32 %v2522, %v2854
    %v3124 = vadd.f32 %v2523, %v2858
    %v3125 = vadd.f32 %v2524, %v2860
    %v3126 = vadd.f32 %v2525, %v2862
    %v3127 = vadd.f32 %v2526, %v2861
    %v3128 = vadd.f32 %v2527, %v2865
    %v3129 = vadd.f32 %v2528, %v2867
    %v3130 = vadd.f32 %v2529, %v2869
    %v3131 = vadd.f32 %v2530, %v2868
    %v3132 = vadd.f32 %v2531, %v2872
    %v3133 = vadd.f32 %v2532, %v2874
    %v3134 = vadd.f32 %v2533, %v2876
    %v3135 = vadd.f32 %v2534, %v2875
    %v3136 = vadd.f32 %v2535, %v2879
    %v3137 = vadd.f32 %v2536, %v2881
    %v3138 = vadd.f32 %v2537, %v2883
    %v3139 = vadd.f32 %v2538, %v2882
    %v3140 = vadd.f32 %v2539, %v2886
    %v3141 = vadd.f32 %v2540, %v2888
    %v3142 = vadd.f32 %v2541, %v2890
    %v3143 = vadd.f32 %v2542, %v2889
    %v3144 = vadd.f32 %v2543, %v2893
    %v3145 = vadd.f32 %v2544, %v2895
    %v3146 = vadd.f32 %v2545, %v2897
    %v3147 = vadd.f32 %v2546, %v2896
    %v3148 = vadd.f32 %v2547, %v2900
    %v3149 = vadd.f32 %v2548, %v2902
    %v3150 = vadd.f32 %v2549, %v2904
    %v3151 = vadd.f32 %v2550, %v2903
    %v3152 = vadd.f32 %v2551, %v2907
    %v3153 = vadd.f32 %v2552, %v2909
    %v3154 = vadd.f32 %v2553, %v2911
    %v3155 = vadd.f32 %v2554, %v2910
    %v3156 = vadd.f32 %v2555, %v2914
    %v3157 = vadd.f32 %v2556, %v2916
    %v3158 = vadd.f32 %v2557, %v2918
    %v3159 = vadd.f32 %v2558, %v2917
    %v3160 = vadd.f32 %v2559, %v2921
    %v3161 = vadd.f32 %v2560, %v2923
    %v3162 = vadd.f32 %v2561, %v2925
    %v3163 = vadd.f32 %v2562, %v2924
    %v3164 = vadd.f32 %v2563, %v2928
    %v3165 = vadd.f32 %v2564, %v2930
    %v3166 = vadd.f32 %v2565, %v2932
    %v3167 = vadd.f32 %v2566, %v2931
    %v3168 = vadd.f32 %v2567, %v2935
    %v3169 = vadd.f32 %v2568, %v2937
    %v3170 = vadd.f32 %v2569, %v2939
    %v3171 = vadd.f32 %v2570, %v2938
    %v3172 = vadd.f32 %v2571, %v2942
    %v3173 = vadd.f32 %v2572, %v2944
    %v3174 = vadd.f32 %v2573, %v2946
    %v3175 = vadd.f32 %v2574, %v2945
    %v3176 = vadd.f32 %v2575, %v2949
    %v3177 = vadd.f32 %v2576, %v2951
    %v3178 = vadd.f32 %v2577, %v2953
    %v3179 = vadd.f32 %v2578, %v2952
    %v3180 = vadd.f32 %v2579, %v2956
    %v3181 = vadd.f32 %v2580, %v2958
    %v3182 = vadd.f32 %v2581, %v2960
    %v3183 = vadd.f32 %v2582, %v2959
    %v3184 = vadd.f32 %v2583, %v2963
    %v3185 = vadd.f32 %v2584, %v2965
    %v3186 = vadd.f32 %v2585, %v2967
    %v3187 = vadd.f32 %v2586, %v2966
    %v3188 = vadd.f32 %v2587, %v2970
    %v3189 = vadd.f32 %v2588, %v2972
    %v3190 = vadd.f32 %v2589, %v2974
    %v3191 = vadd.f32 %v2590, %v2973
    %v3192 = vadd.f32 %v2591, %v2977
    %v3193 = vadd.f32 %v2592, %v2979
    %v3194 = vadd.f32 %v2593, %v2981
    %v3195 = vadd.f32 %v2594, %v2980
    %v3196 = vadd.f32 %v2595, %v2984
    %v3197 = vadd.f32 %v2596, %v2986
    %v3198 = vadd.f32 %v2597, %v2988
    %v3199 = vadd.f32 %v2598, %v2987
    %v3200 = vadd.f32 %v2599, %v2991
    %v3201 = vadd.f32 %v2600, %v2993
    %v3202 = vadd.f32 %v2601, %v2995
    %v3203 = vadd.f32 %v2602, %v2994
    %s3204 = sld [smem:[#allocation2 + $0x5]]
    %v3205 = vstv %s3204
    %v3206 = vmul.f32 %v168, %v3205
    %v3207 = vmul.f32 %v169, %v3205
    %v3208 = vmul.f32 %v170, %v3205
    %v3209 = vmul.f32 %v171, %v3205
    %v3210 = vmul.f32 %v172, %v3205
    %v3211 = vmul.f32 %v173, %v3205
    %v3212 = vmul.f32 %v174, %v3205
    %v3213 = vmul.f32 %v175, %v3205
    %v3214 = vmul.f32 %v176, %v3205
    %v3215 = vmul.f32 %v177, %v3205
    %v3216 = vmul.f32 %v178, %v3205
    %v3217 = vmul.f32 %v179, %v3205
    %v3218 = vmul.f32 %v180, %v3205
    %v3219 = vmul.f32 %v181, %v3205
    %v3220 = vmul.f32 %v182, %v3205
    %v3221 = vmul.f32 %v183, %v3205
    %v3222 = vmul.f32 %v184, %v3205
    %v3223 = vmul.f32 %v185, %v3205
    %v3224 = vmul.f32 %v186, %v3205
    %v3225 = vmul.f32 %v187, %v3205
    %v3226 = vmul.f32 %v188, %v3205
    %v3227 = vmul.f32 %v189, %v3205
    %v3228 = vmul.f32 %v190, %v3205
    %v3229 = vmul.f32 %v191, %v3205
    %v3230 = vmul.f32 %v192, %v3205
    %v3231 = vmul.f32 %v193, %v3205
    %v3232 = vmul.f32 %v194, %v3205
    %v3233 = vmul.f32 %v195, %v3205
    %v3234 = vmul.f32 %v196, %v3205
    %v3235 = vmul.f32 %v197, %v3205
    %v3236 = vmul.f32 %v198, %v3205
    %v3237 = vmul.f32 %v199, %v3205
    %v3238 = vmul.f32 %v200, %v3205
    %v3239 = vmul.f32 %v201, %v3205
    %v3240 = vmul.f32 %v202, %v3205
    %v3241 = vmul.f32 %v203, %v3205
    %v3242 = vmul.f32 %v204, %v3205
    %v3243 = vmul.f32 %v205, %v3205
    %v3244 = vmul.f32 %v206, %v3205
    %v3245 = vmul.f32 %v207, %v3205
    %v3246 = vmul.f32 %v208, %v3205
    %v3247 = vmul.f32 %v209, %v3205
    %v3248 = vmul.f32 %v210, %v3205
    %v3249 = vmul.f32 %v211, %v3205
    %v3250 = vmul.f32 %v212, %v3205
    %v3251 = vmul.f32 %v213, %v3205
    %v3252 = vmul.f32 %v214, %v3205
    %v3253 = vmul.f32 %v215, %v3205
    %v3254 = vmul.f32 %v216, %v3205
    %v3255 = vmul.f32 %v217, %v3205
    %v3256 = vmul.f32 %v218, %v3205
    %v3257 = vmul.f32 %v219, %v3205
    %v3258 = vmul.f32 %v220, %v3205
    %v3259 = vmul.f32 %v221, %v3205
    %v3260 = vmul.f32 %v222, %v3205
    %v3261 = vmul.f32 %v223, %v3205
    %v3262 = vmul.f32 %v224, %v3205
    %v3263 = vmul.f32 %v225, %v3205
    %v3264 = vmul.f32 %v226, %v3205
    %v3265 = vmul.f32 %v227, %v3205
    %v3266 = vmul.f32 %v228, %v3205
    %v3267 = vmul.f32 %v229, %v3205
    %v3268 = vmul.f32 %v230, %v3205
    %v3269 = vmul.f32 %v231, %v3205
    %v3270 = vmul.f32 %v232, %v3205
    %v3271 = vmul.f32 %v233, %v3205
    %v3272 = vmul.f32 %v234, %v3205
    %v3273 = vmul.f32 %v235, %v3205
    %v3274 = vmul.f32 %v236, %v3205
    %v3275 = vmul.f32 %v237, %v3205
    %v3276 = vmul.f32 %v238, %v3205
    %v3277 = vmul.f32 %v239, %v3205
    %v3278 = vmul.f32 %v240, %v3205
    %v3279 = vmul.f32 %v241, %v3205
    %v3280 = vmul.f32 %v242, %v3205
    %v3281 = vmul.f32 %v243, %v3205
    %v3282 = vmul.f32 %v244, %v3205
    %v3283 = vmul.f32 %v245, %v3205
    %v3284 = vmul.f32 %v246, %v3205
    %v3285 = vmul.f32 %v247, %v3205
    %v3286 = vmul.f32 %v248, %v3205
    %v3287 = vmul.f32 %v249, %v3205
    %v3288 = vmul.f32 %v250, %v3205
    %v3289 = vmul.f32 %v251, %v3205
    %v3290 = vmul.f32 %v252, %v3205
    %v3291 = vmul.f32 %v253, %v3205
    %v3292 = vmul.f32 %v254, %v3205
    %v3293 = vmul.f32 %v255, %v3205
    %v3294 = vmul.f32 %v256, %v3205
    %v3295 = vmul.f32 %v257, %v3205
    %v3296 = vmul.f32 %v258, %v3205
    %v3297 = vmul.f32 %v259, %v3205
    %v3298 = vmul.f32 %v260, %v3205
    %v3299 = vmul.f32 %v261, %v3205
    %v3300 = vmul.f32 %v262, %v3205
    %v3301 = vmul.f32 %v263, %v3205
    %v3302 = vmul.f32 %v264, %v3205
    %v3303 = vmul.f32 %v265, %v3205
    %v3304 = vmul.f32 %v266, %v3205
    %v3305 = vmul.f32 %v267, %v3205
    %v3306 = vmul.f32 %v268, %v3205
    %v3307 = vmul.f32 %v269, %v3205
    %v3308 = vmul.f32 %v270, %v3205
    %v3309 = vmul.f32 %v271, %v3205
    %v3414 = vrot.slane %v3206, 2
    %v3415 = vrot.slane %v3207, 2
    %v3416 = vsel %vm2813, %v3414, %v3415
    %v3417 = vrot.slane %v3208, 2
    %v3418 = vsel %vm2813, %v3415, %v3417
    %v3419 = vrot.slane %v3209, 2
    %v3420 = vsel %vm2813, %v3417, %v3419
    %v3421 = vrot.slane %v3210, 2
    %v3422 = vrot.slane %v3211, 2
    %v3423 = vsel %vm2813, %v3421, %v3422
    %v3424 = vrot.slane %v3212, 2
    %v3425 = vsel %vm2813, %v3422, %v3424
    %v3426 = vrot.slane %v3213, 2
    %v3427 = vsel %vm2813, %v3424, %v3426
    %v3428 = vrot.slane %v3214, 2
    %v3429 = vrot.slane %v3215, 2
    %v3430 = vsel %vm2813, %v3428, %v3429
    %v3431 = vrot.slane %v3216, 2
    %v3432 = vsel %vm2813, %v3429, %v3431
    %v3433 = vrot.slane %v3217, 2
    %v3434 = vsel %vm2813, %v3431, %v3433
    %v3435 = vrot.slane %v3218, 2
    %v3436 = vrot.slane %v3219, 2
    %v3437 = vsel %vm2813, %v3435, %v3436
    %v3438 = vrot.slane %v3220, 2
    %v3439 = vsel %vm2813, %v3436, %v3438
    %v3440 = vrot.slane %v3221, 2
    %v3441 = vsel %vm2813, %v3438, %v3440
    %v3442 = vrot.slane %v3222, 2
    %v3443 = vrot.slane %v3223, 2
    %v3444 = vsel %vm2813, %v3442, %v3443
    %v3445 = vrot.slane %v3224, 2
    %v3446 = vsel %vm2813, %v3443, %v3445
    %v3447 = vrot.slane %v3225, 2
    %v3448 = vsel %vm2813, %v3445, %v3447
    %v3449 = vrot.slane %v3226, 2
    %v3450 = vrot.slane %v3227, 2
    %v3451 = vsel %vm2813, %v3449, %v3450
    %v3452 = vrot.slane %v3228, 2
    %v3453 = vsel %vm2813, %v3450, %v3452
    %v3454 = vrot.slane %v3229, 2
    %v3455 = vsel %vm2813, %v3452, %v3454
    %v3456 = vrot.slane %v3230, 2
    %v3457 = vrot.slane %v3231, 2
    %v3458 = vsel %vm2813, %v3456, %v3457
    %v3459 = vrot.slane %v3232, 2
    %v3460 = vsel %vm2813, %v3457, %v3459
    %v3461 = vrot.slane %v3233, 2
    %v3462 = vsel %vm2813, %v3459, %v3461
    %v3463 = vrot.slane %v3234, 2
    %v3464 = vrot.slane %v3235, 2
    %v3465 = vsel %vm2813, %v3463, %v3464
    %v3466 = vrot.slane %v3236, 2
    %v3467 = vsel %vm2813, %v3464, %v3466
    %v3468 = vrot.slane %v3237, 2
    %v3469 = vsel %vm2813, %v3466, %v3468
    %v3470 = vrot.slane %v3238, 2
    %v3471 = vrot.slane %v3239, 2
    %v3472 = vsel %vm2813, %v3470, %v3471
    %v3473 = vrot.slane %v3240, 2
    %v3474 = vsel %vm2813, %v3471, %v3473
    %v3475 = vrot.slane %v3241, 2
    %v3476 = vsel %vm2813, %v3473, %v3475
    %v3477 = vrot.slane %v3242, 2
    %v3478 = vrot.slane %v3243, 2
    %v3479 = vsel %vm2813, %v3477, %v3478
    %v3480 = vrot.slane %v3244, 2
    %v3481 = vsel %vm2813, %v3478, %v3480
    %v3482 = vrot.slane %v3245, 2
    %v3483 = vsel %vm2813, %v3480, %v3482
    %v3484 = vrot.slane %v3246, 2
    %v3485 = vrot.slane %v3247, 2
    %v3486 = vsel %vm2813, %v3484, %v3485
    %v3487 = vrot.slane %v3248, 2
    %v3488 = vsel %vm2813, %v3485, %v3487
    %v3489 = vrot.slane %v3249, 2
    %v3490 = vsel %vm2813, %v3487, %v3489
    %v3491 = vrot.slane %v3250, 2
    %v3492 = vrot.slane %v3251, 2
    %v3493 = vsel %vm2813, %v3491, %v3492
    %v3494 = vrot.slane %v3252, 2
    %v3495 = vsel %vm2813, %v3492, %v3494
    %v3496 = vrot.slane %v3253, 2
    %v3497 = vsel %vm2813, %v3494, %v3496
    %v3498 = vrot.slane %v3254, 2
    %v3499 = vrot.slane %v3255, 2
    %v3500 = vsel %vm2813, %v3498, %v3499
    %v3501 = vrot.slane %v3256, 2
    %v3502 = vsel %vm2813, %v3499, %v3501
    %v3503 = vrot.slane %v3257, 2
    %v3504 = vsel %vm2813, %v3501, %v3503
    %v3505 = vrot.slane %v3258, 2
    %v3506 = vrot.slane %v3259, 2
    %v3507 = vsel %vm2813, %v3505, %v3506
    %v3508 = vrot.slane %v3260, 2
    %v3509 = vsel %vm2813, %v3506, %v3508
    %v3510 = vrot.slane %v3261, 2
    %v3511 = vsel %vm2813, %v3508, %v3510
    %v3512 = vrot.slane %v3262, 2
    %v3513 = vrot.slane %v3263, 2
    %v3514 = vsel %vm2813, %v3512, %v3513
    %v3515 = vrot.slane %v3264, 2
    %v3516 = vsel %vm2813, %v3513, %v3515
    %v3517 = vrot.slane %v3265, 2
    %v3518 = vsel %vm2813, %v3515, %v3517
    %v3519 = vrot.slane %v3266, 2
    %v3520 = vrot.slane %v3267, 2
    %v3521 = vsel %vm2813, %v3519, %v3520
    %v3522 = vrot.slane %v3268, 2
    %v3523 = vsel %vm2813, %v3520, %v3522
    %v3524 = vrot.slane %v3269, 2
    %v3525 = vsel %vm2813, %v3522, %v3524
    %v3526 = vrot.slane %v3270, 2
    %v3527 = vrot.slane %v3271, 2
    %v3528 = vsel %vm2813, %v3526, %v3527
    %v3529 = vrot.slane %v3272, 2
    %v3530 = vsel %vm2813, %v3527, %v3529
    %v3531 = vrot.slane %v3273, 2
    %v3532 = vsel %vm2813, %v3529, %v3531
    %v3533 = vrot.slane %v3274, 2
    %v3534 = vrot.slane %v3275, 2
    %v3535 = vsel %vm2813, %v3533, %v3534
    %v3536 = vrot.slane %v3276, 2
    %v3537 = vsel %vm2813, %v3534, %v3536
    %v3538 = vrot.slane %v3277, 2
    %v3539 = vsel %vm2813, %v3536, %v3538
    %v3540 = vrot.slane %v3278, 2
    %v3541 = vrot.slane %v3279, 2
    %v3542 = vsel %vm2813, %v3540, %v3541
    %v3543 = vrot.slane %v3280, 2
    %v3544 = vsel %vm2813, %v3541, %v3543
    %v3545 = vrot.slane %v3281, 2
    %v3546 = vsel %vm2813, %v3543, %v3545
    %v3547 = vrot.slane %v3282, 2
    %v3548 = vrot.slane %v3283, 2
    %v3549 = vsel %vm2813, %v3547, %v3548
    %v3550 = vrot.slane %v3284, 2
    %v3551 = vsel %vm2813, %v3548, %v3550
    %v3552 = vrot.slane %v3285, 2
    %v3553 = vsel %vm2813, %v3550, %v3552
    %v3554 = vrot.slane %v3286, 2
    %v3555 = vrot.slane %v3287, 2
    %v3556 = vsel %vm2813, %v3554, %v3555
    %v3557 = vrot.slane %v3288, 2
    %v3558 = vsel %vm2813, %v3555, %v3557
    %v3559 = vrot.slane %v3289, 2
    %v3560 = vsel %vm2813, %v3557, %v3559
    %v3561 = vrot.slane %v3290, 2
    %v3562 = vrot.slane %v3291, 2
    %v3563 = vsel %vm2813, %v3561, %v3562
    %v3564 = vrot.slane %v3292, 2
    %v3565 = vsel %vm2813, %v3562, %v3564
    %v3566 = vrot.slane %v3293, 2
    %v3567 = vsel %vm2813, %v3564, %v3566
    %v3568 = vrot.slane %v3294, 2
    %v3569 = vrot.slane %v3295, 2
    %v3570 = vsel %vm2813, %v3568, %v3569
    %v3571 = vrot.slane %v3296, 2
    %v3572 = vsel %vm2813, %v3569, %v3571
    %v3573 = vrot.slane %v3297, 2
    %v3574 = vsel %vm2813, %v3571, %v3573
    %v3575 = vrot.slane %v3298, 2
    %v3576 = vrot.slane %v3299, 2
    %v3577 = vsel %vm2813, %v3575, %v3576
    %v3578 = vrot.slane %v3300, 2
    %v3579 = vsel %vm2813, %v3576, %v3578
    %v3580 = vrot.slane %v3301, 2
    %v3581 = vsel %vm2813, %v3578, %v3580
    %v3582 = vrot.slane %v3302, 2
    %v3583 = vrot.slane %v3303, 2
    %v3584 = vsel %vm2813, %v3582, %v3583
    %v3585 = vrot.slane %v3304, 2
    %v3586 = vsel %vm2813, %v3583, %v3585
    %v3587 = vrot.slane %v3305, 2
    %v3588 = vsel %vm2813, %v3585, %v3587
    %v3589 = vrot.slane %v3306, 2
    %v3590 = vrot.slane %v3307, 2
    %v3591 = vsel %vm2813, %v3589, %v3590
    %v3592 = vrot.slane %v3308, 2
    %v3593 = vsel %vm2813, %v3590, %v3592
    %v3594 = vrot.slane %v3309, 2
    %v3595 = vsel %vm2813, %v3592, %v3594
    %v3700 = vadd.f32 %v3100, %v3416
    %v3701 = vadd.f32 %v3101, %v3418
    %v3702 = vadd.f32 %v3102, %v3420
    %v3703 = vadd.f32 %v3103, %v3419
    %v3704 = vadd.f32 %v3104, %v3423
    %v3705 = vadd.f32 %v3105, %v3425
    %v3706 = vadd.f32 %v3106, %v3427
    %v3707 = vadd.f32 %v3107, %v3426
    %v3708 = vadd.f32 %v3108, %v3430
    %v3709 = vadd.f32 %v3109, %v3432
    %v3710 = vadd.f32 %v3110, %v3434
    %v3711 = vadd.f32 %v3111, %v3433
    %v3712 = vadd.f32 %v3112, %v3437
    %v3713 = vadd.f32 %v3113, %v3439
    %v3714 = vadd.f32 %v3114, %v3441
    %v3715 = vadd.f32 %v3115, %v3440
    %v3716 = vadd.f32 %v3116, %v3444
    %v3717 = vadd.f32 %v3117, %v3446
    %v3718 = vadd.f32 %v3118, %v3448
    %v3719 = vadd.f32 %v3119, %v3447
    %v3720 = vadd.f32 %v3120, %v3451
    %v3721 = vadd.f32 %v3121, %v3453
    %v3722 = vadd.f32 %v3122, %v3455
    %v3723 = vadd.f32 %v3123, %v3454
    %v3724 = vadd.f32 %v3124, %v3458
    %v3725 = vadd.f32 %v3125, %v3460
    %v3726 = vadd.f32 %v3126, %v3462
    %v3727 = vadd.f32 %v3127, %v3461
    %v3728 = vadd.f32 %v3128, %v3465
    %v3729 = vadd.f32 %v3129, %v3467
    %v3730 = vadd.f32 %v3130, %v3469
    %v3731 = vadd.f32 %v3131, %v3468
    %v3732 = vadd.f32 %v3132, %v3472
    %v3733 = vadd.f32 %v3133, %v3474
    %v3734 = vadd.f32 %v3134, %v3476
    %v3735 = vadd.f32 %v3135, %v3475
    %v3736 = vadd.f32 %v3136, %v3479
    %v3737 = vadd.f32 %v3137, %v3481
    %v3738 = vadd.f32 %v3138, %v3483
    %v3739 = vadd.f32 %v3139, %v3482
    %v3740 = vadd.f32 %v3140, %v3486
    %v3741 = vadd.f32 %v3141, %v3488
    %v3742 = vadd.f32 %v3142, %v3490
    %v3743 = vadd.f32 %v3143, %v3489
    %v3744 = vadd.f32 %v3144, %v3493
    %v3745 = vadd.f32 %v3145, %v3495
    %v3746 = vadd.f32 %v3146, %v3497
    %v3747 = vadd.f32 %v3147, %v3496
    %v3748 = vadd.f32 %v3148, %v3500
    %v3749 = vadd.f32 %v3149, %v3502
    %v3750 = vadd.f32 %v3150, %v3504
    %v3751 = vadd.f32 %v3151, %v3503
    %v3752 = vadd.f32 %v3152, %v3507
    %v3753 = vadd.f32 %v3153, %v3509
    %v3754 = vadd.f32 %v3154, %v3511
    %v3755 = vadd.f32 %v3155, %v3510
    %v3756 = vadd.f32 %v3156, %v3514
    %v3757 = vadd.f32 %v3157, %v3516
    %v3758 = vadd.f32 %v3158, %v3518
    %v3759 = vadd.f32 %v3159, %v3517
    %v3760 = vadd.f32 %v3160, %v3521
    %v3761 = vadd.f32 %v3161, %v3523
    %v3762 = vadd.f32 %v3162, %v3525
    %v3763 = vadd.f32 %v3163, %v3524
    %v3764 = vadd.f32 %v3164, %v3528
    %v3765 = vadd.f32 %v3165, %v3530
    %v3766 = vadd.f32 %v3166, %v3532
    %v3767 = vadd.f32 %v3167, %v3531
    %v3768 = vadd.f32 %v3168, %v3535
    %v3769 = vadd.f32 %v3169, %v3537
    %v3770 = vadd.f32 %v3170, %v3539
    %v3771 = vadd.f32 %v3171, %v3538
    %v3772 = vadd.f32 %v3172, %v3542
    %v3773 = vadd.f32 %v3173, %v3544
    %v3774 = vadd.f32 %v3174, %v3546
    %v3775 = vadd.f32 %v3175, %v3545
    %v3776 = vadd.f32 %v3176, %v3549
    %v3777 = vadd.f32 %v3177, %v3551
    %v3778 = vadd.f32 %v3178, %v3553
    %v3779 = vadd.f32 %v3179, %v3552
    %v3780 = vadd.f32 %v3180, %v3556
    %v3781 = vadd.f32 %v3181, %v3558
    %v3782 = vadd.f32 %v3182, %v3560
    %v3783 = vadd.f32 %v3183, %v3559
    %v3784 = vadd.f32 %v3184, %v3563
    %v3785 = vadd.f32 %v3185, %v3565
    %v3786 = vadd.f32 %v3186, %v3567
    %v3787 = vadd.f32 %v3187, %v3566
    %v3788 = vadd.f32 %v3188, %v3570
    %v3789 = vadd.f32 %v3189, %v3572
    %v3790 = vadd.f32 %v3190, %v3574
    %v3791 = vadd.f32 %v3191, %v3573
    %v3792 = vadd.f32 %v3192, %v3577
    %v3793 = vadd.f32 %v3193, %v3579
    %v3794 = vadd.f32 %v3194, %v3581
    %v3795 = vadd.f32 %v3195, %v3580
    %v3796 = vadd.f32 %v3196, %v3584
    %v3797 = vadd.f32 %v3197, %v3586
    %v3798 = vadd.f32 %v3198, %v3588
    %v3799 = vadd.f32 %v3199, %v3587
    %v3800 = vadd.f32 %v3200, %v3591
    %v3801 = vadd.f32 %v3201, %v3593
    %v3802 = vadd.f32 %v3202, %v3595
    %v3803 = vadd.f32 %v3203, %v3594
    %s3804 = sld [smem:[#allocation2 + $0x8]]
    %v3805 = vstv %s3804
    %v3806 = vmul.f32 %v172, %v3805
    %v3807 = vmul.f32 %v173, %v3805
    %v3808 = vmul.f32 %v174, %v3805
    %v3809 = vmul.f32 %v175, %v3805
    %v3810 = vmul.f32 %v176, %v3805
    %v3811 = vmul.f32 %v177, %v3805
    %v3812 = vmul.f32 %v178, %v3805
    %v3813 = vmul.f32 %v179, %v3805
    %v3814 = vmul.f32 %v180, %v3805
    %v3815 = vmul.f32 %v181, %v3805
    %v3816 = vmul.f32 %v182, %v3805
    %v3817 = vmul.f32 %v183, %v3805
    %v3818 = vmul.f32 %v184, %v3805
    %v3819 = vmul.f32 %v185, %v3805
    %v3820 = vmul.f32 %v186, %v3805
    %v3821 = vmul.f32 %v187, %v3805
    %v3822 = vmul.f32 %v188, %v3805
    %v3823 = vmul.f32 %v189, %v3805
    %v3824 = vmul.f32 %v190, %v3805
    %v3825 = vmul.f32 %v191, %v3805
    %v3826 = vmul.f32 %v192, %v3805
    %v3827 = vmul.f32 %v193, %v3805
    %v3828 = vmul.f32 %v194, %v3805
    %v3829 = vmul.f32 %v195, %v3805
    %v3830 = vmul.f32 %v196, %v3805
    %v3831 = vmul.f32 %v197, %v3805
    %v3832 = vmul.f32 %v198, %v3805
    %v3833 = vmul.f32 %v199, %v3805
    %v3834 = vmul.f32 %v200, %v3805
    %v3835 = vmul.f32 %v201, %v3805
    %v3836 = vmul.f32 %v202, %v3805
    %v3837 = vmul.f32 %v203, %v3805
    %v3838 = vmul.f32 %v204, %v3805
    %v3839 = vmul.f32 %v205, %v3805
    %v3840 = vmul.f32 %v206, %v3805
    %v3841 = vmul.f32 %v207, %v3805
    %v3842 = vmul.f32 %v208, %v3805
    %v3843 = vmul.f32 %v209, %v3805
    %v3844 = vmul.f32 %v210, %v3805
    %v3845 = vmul.f32 %v211, %v3805
    %v3846 = vmul.f32 %v212, %v3805
    %v3847 = vmul.f32 %v213, %v3805
    %v3848 = vmul.f32 %v214, %v3805
    %v3849 = vmul.f32 %v215, %v3805
    %v3850 = vmul.f32 %v216, %v3805
    %v3851 = vmul.f32 %v217, %v3805
    %v3852 = vmul.f32 %v218, %v3805
    %v3853 = vmul.f32 %v219, %v3805
    %v3854 = vmul.f32 %v220, %v3805
    %v3855 = vmul.f32 %v221, %v3805
    %v3856 = vmul.f32 %v222, %v3805
    %v3857 = vmul.f32 %v223, %v3805
    %v3858 = vmul.f32 %v224, %v3805
    %v3859 = vmul.f32 %v225, %v3805
    %v3860 = vmul.f32 %v226, %v3805
    %v3861 = vmul.f32 %v227, %v3805
    %v3862 = vmul.f32 %v228, %v3805
    %v3863 = vmul.f32 %v229, %v3805
    %v3864 = vmul.f32 %v230, %v3805
    %v3865 = vmul.f32 %v231, %v3805
    %v3866 = vmul.f32 %v232, %v3805
    %v3867 = vmul.f32 %v233, %v3805
    %v3868 = vmul.f32 %v234, %v3805
    %v3869 = vmul.f32 %v235, %v3805
    %v3870 = vmul.f32 %v236, %v3805
    %v3871 = vmul.f32 %v237, %v3805
    %v3872 = vmul.f32 %v238, %v3805
    %v3873 = vmul.f32 %v239, %v3805
    %v3874 = vmul.f32 %v240, %v3805
    %v3875 = vmul.f32 %v241, %v3805
    %v3876 = vmul.f32 %v242, %v3805
    %v3877 = vmul.f32 %v243, %v3805
    %v3878 = vmul.f32 %v244, %v3805
    %v3879 = vmul.f32 %v245, %v3805
    %v3880 = vmul.f32 %v246, %v3805
    %v3881 = vmul.f32 %v247, %v3805
    %v3882 = vmul.f32 %v248, %v3805
    %v3883 = vmul.f32 %v249, %v3805
    %v3884 = vmul.f32 %v250, %v3805
    %v3885 = vmul.f32 %v251, %v3805
    %v3886 = vmul.f32 %v252, %v3805
    %v3887 = vmul.f32 %v253, %v3805
    %v3888 = vmul.f32 %v254, %v3805
    %v3889 = vmul.f32 %v255, %v3805
    %v3890 = vmul.f32 %v256, %v3805
    %v3891 = vmul.f32 %v257, %v3805
    %v3892 = vmul.f32 %v258, %v3805
    %v3893 = vmul.f32 %v259, %v3805
    %v3894 = vmul.f32 %v260, %v3805
    %v3895 = vmul.f32 %v261, %v3805
    %v3896 = vmul.f32 %v262, %v3805
    %v3897 = vmul.f32 %v263, %v3805
    %v3898 = vmul.f32 %v264, %v3805
    %v3899 = vmul.f32 %v265, %v3805
    %v3900 = vmul.f32 %v266, %v3805
    %v3901 = vmul.f32 %v267, %v3805
    %v3902 = vmul.f32 %v268, %v3805
    %v3903 = vmul.f32 %v269, %v3805
    %v3904 = vmul.f32 %v270, %v3805
    %v3905 = vmul.f32 %v271, %v3805
    %v3906 = vmul.f32 %v272, %v3805
    %v3907 = vmul.f32 %v273, %v3805
    %v3908 = vmul.f32 %v274, %v3805
    %v3909 = vmul.f32 %v275, %v3805
    %v4014 = vrot.slane %v3806, 2
    %v4015 = vrot.slane %v3807, 2
    %v4016 = vsel %vm2813, %v4014, %v4015
    %v4017 = vrot.slane %v3808, 2
    %v4018 = vsel %vm2813, %v4015, %v4017
    %v4019 = vrot.slane %v3809, 2
    %v4020 = vsel %vm2813, %v4017, %v4019
    %v4021 = vrot.slane %v3810, 2
    %v4022 = vrot.slane %v3811, 2
    %v4023 = vsel %vm2813, %v4021, %v4022
    %v4024 = vrot.slane %v3812, 2
    %v4025 = vsel %vm2813, %v4022, %v4024
    %v4026 = vrot.slane %v3813, 2
    %v4027 = vsel %vm2813, %v4024, %v4026
    %v4028 = vrot.slane %v3814, 2
    %v4029 = vrot.slane %v3815, 2
    %v4030 = vsel %vm2813, %v4028, %v4029
    %v4031 = vrot.slane %v3816, 2
    %v4032 = vsel %vm2813, %v4029, %v4031
    %v4033 = vrot.slane %v3817, 2
    %v4034 = vsel %vm2813, %v4031, %v4033
    %v4035 = vrot.slane %v3818, 2
    %v4036 = vrot.slane %v3819, 2
    %v4037 = vsel %vm2813, %v4035, %v4036
    %v4038 = vrot.slane %v3820, 2
    %v4039 = vsel %vm2813, %v4036, %v4038
    %v4040 = vrot.slane %v3821, 2
    %v4041 = vsel %vm2813, %v4038, %v4040
    %v4042 = vrot.slane %v3822, 2
    %v4043 = vrot.slane %v3823, 2
    %v4044 = vsel %vm2813, %v4042, %v4043
    %v4045 = vrot.slane %v3824, 2
    %v4046 = vsel %vm2813, %v4043, %v4045
    %v4047 = vrot.slane %v3825, 2
    %v4048 = vsel %vm2813, %v4045, %v4047
    %v4049 = vrot.slane %v3826, 2
    %v4050 = vrot.slane %v3827, 2
    %v4051 = vsel %vm2813, %v4049, %v4050
    %v4052 = vrot.slane %v3828, 2
    %v4053 = vsel %vm2813, %v4050, %v4052
    %v4054 = vrot.slane %v3829, 2
    %v4055 = vsel %vm2813, %v4052, %v4054
    %v4056 = vrot.slane %v3830, 2
    %v4057 = vrot.slane %v3831, 2
    %v4058 = vsel %vm2813, %v4056, %v4057
    %v4059 = vrot.slane %v3832, 2
    %v4060 = vsel %vm2813, %v4057, %v4059
    %v4061 = vrot.slane %v3833, 2
    %v4062 = vsel %vm2813, %v4059, %v4061
    %v4063 = vrot.slane %v3834, 2
    %v4064 = vrot.slane %v3835, 2
    %v4065 = vsel %vm2813, %v4063, %v4064
    %v4066 = vrot.slane %v3836, 2
    %v4067 = vsel %vm2813, %v4064, %v4066
    %v4068 = vrot.slane %v3837, 2
    %v4069 = vsel %vm2813, %v4066, %v4068
    %v4070 = vrot.slane %v3838, 2
    %v4071 = vrot.slane %v3839, 2
    %v4072 = vsel %vm2813, %v4070, %v4071
    %v4073 = vrot.slane %v3840, 2
    %v4074 = vsel %vm2813, %v4071, %v4073
    %v4075 = vrot.slane %v3841, 2
    %v4076 = vsel %vm2813, %v4073, %v4075
    %v4077 = vrot.slane %v3842, 2
    %v4078 = vrot.slane %v3843, 2
    %v4079 = vsel %vm2813, %v4077, %v4078
    %v4080 = vrot.slane %v3844, 2
    %v4081 = vsel %vm2813, %v4078, %v4080
    %v4082 = vrot.slane %v3845, 2
    %v4083 = vsel %vm2813, %v4080, %v4082
    %v4084 = vrot.slane %v3846, 2
    %v4085 = vrot.slane %v3847, 2
    %v4086 = vsel %vm2813, %v4084, %v4085
    %v4087 = vrot.slane %v3848, 2
    %v4088 = vsel %vm2813, %v4085, %v4087
    %v4089 = vrot.slane %v3849, 2
    %v4090 = vsel %vm2813, %v4087, %v4089
    %v4091 = vrot.slane %v3850, 2
    %v4092 = vrot.slane %v3851, 2
    %v4093 = vsel %vm2813, %v4091, %v4092
    %v4094 = vrot.slane %v3852, 2
    %v4095 = vsel %vm2813, %v4092, %v4094
    %v4096 = vrot.slane %v3853, 2
    %v4097 = vsel %vm2813, %v4094, %v4096
    %v4098 = vrot.slane %v3854, 2
    %v4099 = vrot.slane %v3855, 2
    %v4100 = vsel %vm2813, %v4098, %v4099
    %v4101 = vrot.slane %v3856, 2
    %v4102 = vsel %vm2813, %v4099, %v4101
    %v4103 = vrot.slane %v3857, 2
    %v4104 = vsel %vm2813, %v4101, %v4103
    %v4105 = vrot.slane %v3858, 2
    %v4106 = vrot.slane %v3859, 2
    %v4107 = vsel %vm2813, %v4105, %v4106
    %v4108 = vrot.slane %v3860, 2
    %v4109 = vsel %vm2813, %v4106, %v4108
    %v4110 = vrot.slane %v3861, 2
    %v4111 = vsel %vm2813, %v4108, %v4110
    %v4112 = vrot.slane %v3862, 2
    %v4113 = vrot.slane %v3863, 2
    %v4114 = vsel %vm2813, %v4112, %v4113
    %v4115 = vrot.slane %v3864, 2
    %v4116 = vsel %vm2813, %v4113, %v4115
    %v4117 = vrot.slane %v3865, 2
    %v4118 = vsel %vm2813, %v4115, %v4117
    %v4119 = vrot.slane %v3866, 2
    %v4120 = vrot.slane %v3867, 2
    %v4121 = vsel %vm2813, %v4119, %v4120
    %v4122 = vrot.slane %v3868, 2
    %v4123 = vsel %vm2813, %v4120, %v4122
    %v4124 = vrot.slane %v3869, 2
    %v4125 = vsel %vm2813, %v4122, %v4124
    %v4126 = vrot.slane %v3870, 2
    %v4127 = vrot.slane %v3871, 2
    %v4128 = vsel %vm2813, %v4126, %v4127
    %v4129 = vrot.slane %v3872, 2
    %v4130 = vsel %vm2813, %v4127, %v4129
    %v4131 = vrot.slane %v3873, 2
    %v4132 = vsel %vm2813, %v4129, %v4131
    %v4133 = vrot.slane %v3874, 2
    %v4134 = vrot.slane %v3875, 2
    %v4135 = vsel %vm2813, %v4133, %v4134
    %v4136 = vrot.slane %v3876, 2
    %v4137 = vsel %vm2813, %v4134, %v4136
    %v4138 = vrot.slane %v3877, 2
    %v4139 = vsel %vm2813, %v4136, %v4138
    %v4140 = vrot.slane %v3878, 2
    %v4141 = vrot.slane %v3879, 2
    %v4142 = vsel %vm2813, %v4140, %v4141
    %v4143 = vrot.slane %v3880, 2
    %v4144 = vsel %vm2813, %v4141, %v4143
    %v4145 = vrot.slane %v3881, 2
    %v4146 = vsel %vm2813, %v4143, %v4145
    %v4147 = vrot.slane %v3882, 2
    %v4148 = vrot.slane %v3883, 2
    %v4149 = vsel %vm2813, %v4147, %v4148
    %v4150 = vrot.slane %v3884, 2
    %v4151 = vsel %vm2813, %v4148, %v4150
    %v4152 = vrot.slane %v3885, 2
    %v4153 = vsel %vm2813, %v4150, %v4152
    %v4154 = vrot.slane %v3886, 2
    %v4155 = vrot.slane %v3887, 2
    %v4156 = vsel %vm2813, %v4154, %v4155
    %v4157 = vrot.slane %v3888, 2
    %v4158 = vsel %vm2813, %v4155, %v4157
    %v4159 = vrot.slane %v3889, 2
    %v4160 = vsel %vm2813, %v4157, %v4159
    %v4161 = vrot.slane %v3890, 2
    %v4162 = vrot.slane %v3891, 2
    %v4163 = vsel %vm2813, %v4161, %v4162
    %v4164 = vrot.slane %v3892, 2
    %v4165 = vsel %vm2813, %v4162, %v4164
    %v4166 = vrot.slane %v3893, 2
    %v4167 = vsel %vm2813, %v4164, %v4166
    %v4168 = vrot.slane %v3894, 2
    %v4169 = vrot.slane %v3895, 2
    %v4170 = vsel %vm2813, %v4168, %v4169
    %v4171 = vrot.slane %v3896, 2
    %v4172 = vsel %vm2813, %v4169, %v4171
    %v4173 = vrot.slane %v3897, 2
    %v4174 = vsel %vm2813, %v4171, %v4173
    %v4175 = vrot.slane %v3898, 2
    %v4176 = vrot.slane %v3899, 2
    %v4177 = vsel %vm2813, %v4175, %v4176
    %v4178 = vrot.slane %v3900, 2
    %v4179 = vsel %vm2813, %v4176, %v4178
    %v4180 = vrot.slane %v3901, 2
    %v4181 = vsel %vm2813, %v4178, %v4180
    %v4182 = vrot.slane %v3902, 2
    %v4183 = vrot.slane %v3903, 2
    %v4184 = vsel %vm2813, %v4182, %v4183
    %v4185 = vrot.slane %v3904, 2
    %v4186 = vsel %vm2813, %v4183, %v4185
    %v4187 = vrot.slane %v3905, 2
    %v4188 = vsel %vm2813, %v4185, %v4187
    %v4189 = vrot.slane %v3906, 2
    %v4190 = vrot.slane %v3907, 2
    %v4191 = vsel %vm2813, %v4189, %v4190
    %v4192 = vrot.slane %v3908, 2
    %v4193 = vsel %vm2813, %v4190, %v4192
    %v4194 = vrot.slane %v3909, 2
    %v4195 = vsel %vm2813, %v4192, %v4194
    %v4300 = vadd.f32 %v3700, %v4016
    %v4301 = vadd.f32 %v3701, %v4018
    %v4302 = vadd.f32 %v3702, %v4020
    %v4303 = vadd.f32 %v3703, %v4019
    %v4304 = vadd.f32 %v3704, %v4023
    %v4305 = vadd.f32 %v3705, %v4025
    %v4306 = vadd.f32 %v3706, %v4027
    %v4307 = vadd.f32 %v3707, %v4026
    %v4308 = vadd.f32 %v3708, %v4030
    %v4309 = vadd.f32 %v3709, %v4032
    %v4310 = vadd.f32 %v3710, %v4034
    %v4311 = vadd.f32 %v3711, %v4033
    %v4312 = vadd.f32 %v3712, %v4037
    %v4313 = vadd.f32 %v3713, %v4039
    %v4314 = vadd.f32 %v3714, %v4041
    %v4315 = vadd.f32 %v3715, %v4040
    %v4316 = vadd.f32 %v3716, %v4044
    %v4317 = vadd.f32 %v3717, %v4046
    %v4318 = vadd.f32 %v3718, %v4048
    %v4319 = vadd.f32 %v3719, %v4047
    %v4320 = vadd.f32 %v3720, %v4051
    %v4321 = vadd.f32 %v3721, %v4053
    %v4322 = vadd.f32 %v3722, %v4055
    %v4323 = vadd.f32 %v3723, %v4054
    %v4324 = vadd.f32 %v3724, %v4058
    %v4325 = vadd.f32 %v3725, %v4060
    %v4326 = vadd.f32 %v3726, %v4062
    %v4327 = vadd.f32 %v3727, %v4061
    %v4328 = vadd.f32 %v3728, %v4065
    %v4329 = vadd.f32 %v3729, %v4067
    %v4330 = vadd.f32 %v3730, %v4069
    %v4331 = vadd.f32 %v3731, %v4068
    %v4332 = vadd.f32 %v3732, %v4072
    %v4333 = vadd.f32 %v3733, %v4074
    %v4334 = vadd.f32 %v3734, %v4076
    %v4335 = vadd.f32 %v3735, %v4075
    %v4336 = vadd.f32 %v3736, %v4079
    %v4337 = vadd.f32 %v3737, %v4081
    %v4338 = vadd.f32 %v3738, %v4083
    %v4339 = vadd.f32 %v3739, %v4082
    %v4340 = vadd.f32 %v3740, %v4086
    %v4341 = vadd.f32 %v3741, %v4088
    %v4342 = vadd.f32 %v3742, %v4090
    %v4343 = vadd.f32 %v3743, %v4089
    %v4344 = vadd.f32 %v3744, %v4093
    %v4345 = vadd.f32 %v3745, %v4095
    %v4346 = vadd.f32 %v3746, %v4097
    %v4347 = vadd.f32 %v3747, %v4096
    %v4348 = vadd.f32 %v3748, %v4100
    %v4349 = vadd.f32 %v3749, %v4102
    %v4350 = vadd.f32 %v3750, %v4104
    %v4351 = vadd.f32 %v3751, %v4103
    %v4352 = vadd.f32 %v3752, %v4107
    %v4353 = vadd.f32 %v3753, %v4109
    %v4354 = vadd.f32 %v3754, %v4111
    %v4355 = vadd.f32 %v3755, %v4110
    %v4356 = vadd.f32 %v3756, %v4114
    %v4357 = vadd.f32 %v3757, %v4116
    %v4358 = vadd.f32 %v3758, %v4118
    %v4359 = vadd.f32 %v3759, %v4117
    %v4360 = vadd.f32 %v3760, %v4121
    %v4361 = vadd.f32 %v3761, %v4123
    %v4362 = vadd.f32 %v3762, %v4125
    %v4363 = vadd.f32 %v3763, %v4124
    %v4364 = vadd.f32 %v3764, %v4128
    %v4365 = vadd.f32 %v3765, %v4130
    %v4366 = vadd.f32 %v3766, %v4132
    %v4367 = vadd.f32 %v3767, %v4131
    %v4368 = vadd.f32 %v3768, %v4135
    %v4369 = vadd.f32 %v3769, %v4137
    %v4370 = vadd.f32 %v3770, %v4139
    %v4371 = vadd.f32 %v3771, %v4138
    %v4372 = vadd.f32 %v3772, %v4142
    %v4373 = vadd.f32 %v3773, %v4144
    %v4374 = vadd.f32 %v3774, %v4146
    %v4375 = vadd.f32 %v3775, %v4145
    %v4376 = vadd.f32 %v3776, %v4149
    %v4377 = vadd.f32 %v3777, %v4151
    %v4378 = vadd.f32 %v3778, %v4153
    %v4379 = vadd.f32 %v3779, %v4152
    %v4380 = vadd.f32 %v3780, %v4156
    %v4381 = vadd.f32 %v3781, %v4158
    %v4382 = vadd.f32 %v3782, %v4160
    %v4383 = vadd.f32 %v3783, %v4159
    %v4384 = vadd.f32 %v3784, %v4163
    %v4385 = vadd.f32 %v3785, %v4165
    %v4386 = vadd.f32 %v3786, %v4167
    %v4387 = vadd.f32 %v3787, %v4166
    %v4388 = vadd.f32 %v3788, %v4170
    %v4389 = vadd.f32 %v3789, %v4172
    %v4390 = vadd.f32 %v3790, %v4174
    %v4391 = vadd.f32 %v3791, %v4173
    %v4392 = vadd.f32 %v3792, %v4177
    %v4393 = vadd.f32 %v3793, %v4179
    %v4394 = vadd.f32 %v3794, %v4181
    %v4395 = vadd.f32 %v3795, %v4180
    %v4396 = vadd.f32 %v3796, %v4184
    %v4397 = vadd.f32 %v3797, %v4186
    %v4398 = vadd.f32 %v3798, %v4188
    %v4399 = vadd.f32 %v3799, %v4187
    %v4400 = vadd.f32 %v3800, %v4191
    %v4401 = vadd.f32 %v3801, %v4193
    %v4402 = vadd.f32 %v3802, %v4195
    %v4403 = vadd.f32 %v3803, %v4194
    %s4404 = sld [smem:[#allocation4]]
    %v4405 = vstv %s4404
    %v4406 = vadd.f32 %v4300, %v4405
    %v4407 = vadd.f32 %v4301, %v4405
    %v4408 = vadd.f32 %v4302, %v4405
    %v4409 = vadd.f32 %v4303, %v4405
    %v4410 = vadd.f32 %v4304, %v4405
    %v4411 = vadd.f32 %v4305, %v4405
    %v4412 = vadd.f32 %v4306, %v4405
    %v4413 = vadd.f32 %v4307, %v4405
    %v4414 = vadd.f32 %v4308, %v4405
    %v4415 = vadd.f32 %v4309, %v4405
    %v4416 = vadd.f32 %v4310, %v4405
    %v4417 = vadd.f32 %v4311, %v4405
    %v4418 = vadd.f32 %v4312, %v4405
    %v4419 = vadd.f32 %v4313, %v4405
    %v4420 = vadd.f32 %v4314, %v4405
    %v4421 = vadd.f32 %v4315, %v4405
    %v4422 = vadd.f32 %v4316, %v4405
    %v4423 = vadd.f32 %v4317, %v4405
    %v4424 = vadd.f32 %v4318, %v4405
    %v4425 = vadd.f32 %v4319, %v4405
    %v4426 = vadd.f32 %v4320, %v4405
    %v4427 = vadd.f32 %v4321, %v4405
    %v4428 = vadd.f32 %v4322, %v4405
    %v4429 = vadd.f32 %v4323, %v4405
    %v4430 = vadd.f32 %v4324, %v4405
    %v4431 = vadd.f32 %v4325, %v4405
    %v4432 = vadd.f32 %v4326, %v4405
    %v4433 = vadd.f32 %v4327, %v4405
    %v4434 = vadd.f32 %v4328, %v4405
    %v4435 = vadd.f32 %v4329, %v4405
    %v4436 = vadd.f32 %v4330, %v4405
    %v4437 = vadd.f32 %v4331, %v4405
    %v4438 = vadd.f32 %v4332, %v4405
    %v4439 = vadd.f32 %v4333, %v4405
    %v4440 = vadd.f32 %v4334, %v4405
    %v4441 = vadd.f32 %v4335, %v4405
    %v4442 = vadd.f32 %v4336, %v4405
    %v4443 = vadd.f32 %v4337, %v4405
    %v4444 = vadd.f32 %v4338, %v4405
    %v4445 = vadd.f32 %v4339, %v4405
    %v4446 = vadd.f32 %v4340, %v4405
    %v4447 = vadd.f32 %v4341, %v4405
    %v4448 = vadd.f32 %v4342, %v4405
    %v4449 = vadd.f32 %v4343, %v4405
    %v4450 = vadd.f32 %v4344, %v4405
    %v4451 = vadd.f32 %v4345, %v4405
    %v4452 = vadd.f32 %v4346, %v4405
    %v4453 = vadd.f32 %v4347, %v4405
    %v4454 = vadd.f32 %v4348, %v4405
    %v4455 = vadd.f32 %v4349, %v4405
    %v4456 = vadd.f32 %v4350, %v4405
    %v4457 = vadd.f32 %v4351, %v4405
    %v4458 = vadd.f32 %v4352, %v4405
    %v4459 = vadd.f32 %v4353, %v4405
    %v4460 = vadd.f32 %v4354, %v4405
    %v4461 = vadd.f32 %v4355, %v4405
    %v4462 = vadd.f32 %v4356, %v4405
    %v4463 = vadd.f32 %v4357, %v4405
    %v4464 = vadd.f32 %v4358, %v4405
    %v4465 = vadd.f32 %v4359, %v4405
    %v4466 = vadd.f32 %v4360, %v4405
    %v4467 = vadd.f32 %v4361, %v4405
    %v4468 = vadd.f32 %v4362, %v4405
    %v4469 = vadd.f32 %v4363, %v4405
    %v4470 = vadd.f32 %v4364, %v4405
    %v4471 = vadd.f32 %v4365, %v4405
    %v4472 = vadd.f32 %v4366, %v4405
    %v4473 = vadd.f32 %v4367, %v4405
    %v4474 = vadd.f32 %v4368, %v4405
    %v4475 = vadd.f32 %v4369, %v4405
    %v4476 = vadd.f32 %v4370, %v4405
    %v4477 = vadd.f32 %v4371, %v4405
    %v4478 = vadd.f32 %v4372, %v4405
    %v4479 = vadd.f32 %v4373, %v4405
    %v4480 = vadd.f32 %v4374, %v4405
    %v4481 = vadd.f32 %v4375, %v4405
    %v4482 = vadd.f32 %v4376, %v4405
    %v4483 = vadd.f32 %v4377, %v4405
    %v4484 = vadd.f32 %v4378, %v4405
    %v4485 = vadd.f32 %v4379, %v4405
    %v4486 = vadd.f32 %v4380, %v4405
    %v4487 = vadd.f32 %v4381, %v4405
    %v4488 = vadd.f32 %v4382, %v4405
    %v4489 = vadd.f32 %v4383, %v4405
    %v4490 = vadd.f32 %v4384, %v4405
    %v4491 = vadd.f32 %v4385, %v4405
    %v4492 = vadd.f32 %v4386, %v4405
    %v4493 = vadd.f32 %v4387, %v4405
    %v4494 = vadd.f32 %v4388, %v4405
    %v4495 = vadd.f32 %v4389, %v4405
    %v4496 = vadd.f32 %v4390, %v4405
    %v4497 = vadd.f32 %v4391, %v4405
    %v4498 = vadd.f32 %v4392, %v4405
    %v4499 = vadd.f32 %v4393, %v4405
    %v4500 = vadd.f32 %v4394, %v4405
    %v4501 = vadd.f32 %v4395, %v4405
    %v4502 = vadd.f32 %v4396, %v4405
    %v4503 = vadd.f32 %v4397, %v4405
    %v4504 = vadd.f32 %v4398, %v4405
    %v4505 = vadd.f32 %v4399, %v4405
    %v4506 = vadd.f32 %v4400, %v4405
    %v4507 = vadd.f32 %v4401, %v4405
    %v4508 = vadd.f32 %v4402, %v4405
    %v4509 = vadd.f32 %v4403, %v4405
    %v4510 = vmax.f32 %v4406, 0.0
    %v4511 = vmax.f32 %v4407, 0.0
    %v4512 = vmax.f32 %v4408, 0.0
    %v4513 = vmax.f32 %v4409, 0.0
    %v4514 = vmax.f32 %v4410, 0.0
    %v4515 = vmax.f32 %v4411, 0.0
    %v4516 = vmax.f32 %v4412, 0.0
    %v4517 = vmax.f32 %v4413, 0.0
    %v4518 = vmax.f32 %v4414, 0.0
    %v4519 = vmax.f32 %v4415, 0.0
    %v4520 = vmax.f32 %v4416, 0.0
    %v4521 = vmax.f32 %v4417, 0.0
    %v4522 = vmax.f32 %v4418, 0.0
    %v4523 = vmax.f32 %v4419, 0.0
    %v4524 = vmax.f32 %v4420, 0.0
    %v4525 = vmax.f32 %v4421, 0.0
    %v4526 = vmax.f32 %v4422, 0.0
    %v4527 = vmax.f32 %v4423, 0.0
    %v4528 = vmax.f32 %v4424, 0.0
    %v4529 = vmax.f32 %v4425, 0.0
    %v4530 = vmax.f32 %v4426, 0.0
    %v4531 = vmax.f32 %v4427, 0.0
    %v4532 = vmax.f32 %v4428, 0.0
    %v4533 = vmax.f32 %v4429, 0.0
    %v4534 = vmax.f32 %v4430, 0.0
    %v4535 = vmax.f32 %v4431, 0.0
    %v4536 = vmax.f32 %v4432, 0.0
    %v4537 = vmax.f32 %v4433, 0.0
    %v4538 = vmax.f32 %v4434, 0.0
    %v4539 = vmax.f32 %v4435, 0.0
    %v4540 = vmax.f32 %v4436, 0.0
    %v4541 = vmax.f32 %v4437, 0.0
    %v4542 = vmax.f32 %v4438, 0.0
    %v4543 = vmax.f32 %v4439, 0.0
    %v4544 = vmax.f32 %v4440, 0.0
    %v4545 = vmax.f32 %v4441, 0.0
    %v4546 = vmax.f32 %v4442, 0.0
    %v4547 = vmax.f32 %v4443, 0.0
    %v4548 = vmax.f32 %v4444, 0.0
    %v4549 = vmax.f32 %v4445, 0.0
    %v4550 = vmax.f32 %v4446, 0.0
    %v4551 = vmax.f32 %v4447, 0.0
    %v4552 = vmax.f32 %v4448, 0.0
    %v4553 = vmax.f32 %v4449, 0.0
    %v4554 = vmax.f32 %v4450, 0.0
    %v4555 = vmax.f32 %v4451, 0.0
    %v4556 = vmax.f32 %v4452, 0.0
    %v4557 = vmax.f32 %v4453, 0.0
    %v4558 = vmax.f32 %v4454, 0.0
    %v4559 = vmax.f32 %v4455, 0.0
    %v4560 = vmax.f32 %v4456, 0.0
    %v4561 = vmax.f32 %v4457, 0.0
    %v4562 = vmax.f32 %v4458, 0.0
    %v4563 = vmax.f32 %v4459, 0.0
    %v4564 = vmax.f32 %v4460, 0.0
    %v4565 = vmax.f32 %v4461, 0.0
    %v4566 = vmax.f32 %v4462, 0.0
    %v4567 = vmax.f32 %v4463, 0.0
    %v4568 = vmax.f32 %v4464, 0.0
    %v4569 = vmax.f32 %v4465, 0.0
    %v4570 = vmax.f32 %v4466, 0.0
    %v4571 = vmax.f32 %v4467, 0.0
    %v4572 = vmax.f32 %v4468, 0.0
    %v4573 = vmax.f32 %v4469, 0.0
    %v4574 = vmax.f32 %v4470, 0.0
    %v4575 = vmax.f32 %v4471, 0.0
    %v4576 = vmax.f32 %v4472, 0.0
    %v4577 = vmax.f32 %v4473, 0.0
    %v4578 = vmax.f32 %v4474, 0.0
    %v4579 = vmax.f32 %v4475, 0.0
    %v4580 = vmax.f32 %v4476, 0.0
    %v4581 = vmax.f32 %v4477, 0.0
    %v4582 = vmax.f32 %v4478, 0.0
    %v4583 = vmax.f32 %v4479, 0.0
    %v4584 = vmax.f32 %v4480, 0.0
    %v4585 = vmax.f32 %v4481, 0.0
    %v4586 = vmax.f32 %v4482, 0.0
    %v4587 = vmax.f32 %v4483, 0.0
    %v4588 = vmax.f32 %v4484, 0.0
    %v4589 = vmax.f32 %v4485, 0.0
    %v4590 = vmax.f32 %v4486, 0.0
    %v4591 = vmax.f32 %v4487, 0.0
    %v4592 = vmax.f32 %v4488, 0.0
    %v4593 = vmax.f32 %v4489, 0.0
    %v4594 = vmax.f32 %v4490, 0.0
    %v4595 = vmax.f32 %v4491, 0.0
    %v4596 = vmax.f32 %v4492, 0.0
    %v4597 = vmax.f32 %v4493, 0.0
    %v4598 = vmax.f32 %v4494, 0.0
    %v4599 = vmax.f32 %v4495, 0.0
    %v4600 = vmax.f32 %v4496, 0.0
    %v4601 = vmax.f32 %v4497, 0.0
    %v4602 = vmax.f32 %v4498, 0.0
    %v4603 = vmax.f32 %v4499, 0.0
    %v4604 = vmax.f32 %v4500, 0.0
    %v4605 = vmax.f32 %v4501, 0.0
    %v4606 = vmax.f32 %v4502, 0.0
    %v4607 = vmax.f32 %v4503, 0.0
    %v4608 = vmax.f32 %v4504, 0.0
    %v4609 = vmax.f32 %v4505, 0.0
    %v4610 = vmax.f32 %v4506, 0.0
    %v4611 = vmax.f32 %v4507, 0.0
    %v4612 = vmax.f32 %v4508, 0.0
    %v4613 = vmax.f32 %v4509, 0.0
    %v4614 = vadd.f32 %v4510, %v4514
    %v4615 = vadd.f32 %v4614, %v4518
    %v4616 = vadd.f32 %v4615, %v4522
    %v4617 = vadd.f32 %v4616, %v4526
    %v4618 = vadd.f32 %v4617, %v4530
    %v4619 = vadd.f32 %v4618, %v4534
    %v4620 = vadd.f32 %v4619, %v4538
    %v4621 = vadd.f32 %v4620, %v4542
    %v4622 = vadd.f32 %v4621, %v4546
    %v4623 = vadd.f32 %v4622, %v4550
    %v4624 = vadd.f32 %v4623, %v4554
    %v4625 = vadd.f32 %v4624, %v4558
    %v4626 = vadd.f32 %v4625, %v4562
    %v4627 = vadd.f32 %v4626, %v4566
    %v4628 = vadd.f32 %v4627, %v4570
    %v4629 = vadd.f32 %v4628, %v4574
    %v4630 = vadd.f32 %v4629, %v4578
    %v4631 = vadd.f32 %v4630, %v4582
    %v4632 = vadd.f32 %v4631, %v4586
    %v4633 = vadd.f32 %v4632, %v4590
    %v4634 = vadd.f32 %v4633, %v4594
    %v4635 = vadd.f32 %v4634, %v4598
    %v4636 = vadd.f32 %v4635, %v4602
    %v4637 = vadd.f32 %v4636, %v4606
    %v4638 = vadd.f32 %v4637, %v4610
    %v4639 = vadd.f32 %v4511, %v4515
    %v4640 = vadd.f32 %v4639, %v4519
    %v4641 = vadd.f32 %v4640, %v4523
    %v4642 = vadd.f32 %v4641, %v4527
    %v4643 = vadd.f32 %v4642, %v4531
    %v4644 = vadd.f32 %v4643, %v4535
    %v4645 = vadd.f32 %v4644, %v4539
    %v4646 = vadd.f32 %v4645, %v4543
    %v4647 = vadd.f32 %v4646, %v4547
    %v4648 = vadd.f32 %v4647, %v4551
    %v4649 = vadd.f32 %v4648, %v4555
    %v4650 = vadd.f32 %v4649, %v4559
    %v4651 = vadd.f32 %v4650, %v4563
    %v4652 = vadd.f32 %v4651, %v4567
    %v4653 = vadd.f32 %v4652, %v4571
    %v4654 = vadd.f32 %v4653, %v4575
    %v4655 = vadd.f32 %v4654, %v4579
    %v4656 = vadd.f32 %v4655, %v4583
    %v4657 = vadd.f32 %v4656, %v4587
    %v4658 = vadd.f32 %v4657, %v4591
    %v4659 = vadd.f32 %v4658, %v4595
    %v4660 = vadd.f32 %v4659, %v4599
    %v4661 = vadd.f32 %v4660, %v4603
    %v4662 = vadd.f32 %v4661, %v4607
    %v4663 = vadd.f32 %v4662, %v4611
    %v4664 = vadd.f32 %v4512, %v4516
    %v4665 = vadd.f32 %v4664, %v4520
    %v4666 = vadd.f32 %v4665, %v4524
    %v4667 = vadd.f32 %v4666, %v4528
    %v4668 = vadd.f32 %v4667, %v4532
    %v4669 = vadd.f32 %v4668, %v4536
    %v4670 = vadd.f32 %v4669, %v4540
    %v4671 = vadd.f32 %v4670, %v4544
    %v4672 = vadd.f32 %v4671, %v4548
    %v4673 = vadd.f32 %v4672, %v4552
    %v4674 = vadd.f32 %v4673, %v4556
    %v4675 = vadd.f32 %v4674, %v4560
    %v4676 = vadd.f32 %v4675, %v4564
    %v4677 = vadd.f32 %v4676, %v4568
    %v4678 = vadd.f32 %v4677, %v4572
    %v4679 = vadd.f32 %v4678, %v4576
    %v4680 = vadd.f32 %v4679, %v4580
    %v4681 = vadd.f32 %v4680, %v4584
    %v4682 = vadd.f32 %v4681, %v4588
    %v4683 = vadd.f32 %v4682, %v4592
    %v4684 = vadd.f32 %v4683, %v4596
    %v4685 = vadd.f32 %v4684, %v4600
    %v4686 = vadd.f32 %v4685, %v4604
    %v4687 = vadd.f32 %v4686, %v4608
    %v4688 = vadd.f32 %v4687, %v4612
    %vm4689 = vcmask 1041408
    %v4690 = vsel %vm4689, %v4513, 0.0
    %v4691 = vsel %vm4689, %v4517, 0.0
    %v4692 = vadd.f32 %v4690, %v4691
    %v4693 = vsel %vm4689, %v4521, 0.0
    %v4694 = vadd.f32 %v4692, %v4693
    %v4695 = vsel %vm4689, %v4525, 0.0
    %v4696 = vadd.f32 %v4694, %v4695
    %v4697 = vsel %vm4689, %v4529, 0.0
    %v4698 = vadd.f32 %v4696, %v4697
    %v4699 = vsel %vm4689, %v4533, 0.0
    %v4700 = vadd.f32 %v4698, %v4699
    %v4701 = vsel %vm4689, %v4537, 0.0
    %v4702 = vadd.f32 %v4700, %v4701
    %v4703 = vsel %vm4689, %v4541, 0.0
    %v4704 = vadd.f32 %v4702, %v4703
    %v4705 = vsel %vm4689, %v4545, 0.0
    %v4706 = vadd.f32 %v4704, %v4705
    %v4707 = vsel %vm4689, %v4549, 0.0
    %v4708 = vadd.f32 %v4706, %v4707
    %v4709 = vsel %vm4689, %v4553, 0.0
    %v4710 = vadd.f32 %v4708, %v4709
    %v4711 = vsel %vm4689, %v4557, 0.0
    %v4712 = vadd.f32 %v4710, %v4711
    %v4713 = vsel %vm4689, %v4561, 0.0
    %v4714 = vadd.f32 %v4712, %v4713
    %v4715 = vsel %vm4689, %v4565, 0.0
    %v4716 = vadd.f32 %v4714, %v4715
    %v4717 = vsel %vm4689, %v4569, 0.0
    %v4718 = vadd.f32 %v4716, %v4717
    %v4719 = vsel %vm4689, %v4573, 0.0
    %v4720 = vadd.f32 %v4718, %v4719
    %v4721 = vsel %vm4689, %v4577, 0.0
    %v4722 = vadd.f32 %v4720, %v4721
    %v4723 = vsel %vm4689, %v4581, 0.0
    %v4724 = vadd.f32 %v4722, %v4723
    %v4725 = vsel %vm4689, %v4585, 0.0
    %v4726 = vadd.f32 %v4724, %v4725
    %v4727 = vsel %vm4689, %v4589, 0.0
    %v4728 = vadd.f32 %v4726, %v4727
    %v4729 = vsel %vm4689, %v4593, 0.0
    %v4730 = vadd.f32 %v4728, %v4729
    %v4731 = vsel %vm4689, %v4597, 0.0
    %v4732 = vadd.f32 %v4730, %v4731
    %v4733 = vsel %vm4689, %v4601, 0.0
    %v4734 = vadd.f32 %v4732, %v4733
    %v4735 = vsel %vm4689, %v4605, 0.0
    %v4736 = vadd.f32 %v4734, %v4735
    %v4737 = vsel %vm4689, %v4609, 0.0
    %v4738 = vadd.f32 %v4736, %v4737
    %v4739 = vsel %vm4689, %v4613, 0.0
    %v4740 = vadd.f32 %v4738, %v4739
    %v4741 = vadd.f32 %v4638, %v4663
    %v4742 = vadd.f32 %v4741, %v4688
    %v4743 = vsel %vm4689, %v4740, 0.0
    %v4744 = vadd.f32 %v4742, %v4743
    %v4745 = vrot.slane %v4744, 4
    %v4746 = vadd.f32 %v4744, %v4745
    %v4747 = vrot.slane %v4746, 2
    %v4748 = vadd.f32 %v4746, %v4747
    %v4749 = vrot.slane %v4748, 1
    %v4750 = vadd.f32 %v4748, %v4749
    %v4751 = vmul.f32 %v4510, %v4510
    %v4752 = vmul.f32 %v4511, %v4511
    %v4753 = vmul.f32 %v4512, %v4512
    %v4754 = vmul.f32 %v4513, %v4513
    %v4755 = vmul.f32 %v4514, %v4514
    %v4756 = vmul.f32 %v4515, %v4515
    %v4757 = vmul.f32 %v4516, %v4516
    %v4758 = vmul.f32 %v4517, %v4517
    %v4759 = vmul.f32 %v4518, %v4518
    %v4760 = vmul.f32 %v4519, %v4519
    %v4761 = vmul.f32 %v4520, %v4520
    %v4762 = vmul.f32 %v4521, %v4521
    %v4763 = vmul.f32 %v4522, %v4522
    %v4764 = vmul.f32 %v4523, %v4523
    %v4765 = vmul.f32 %v4524, %v4524
    %v4766 = vmul.f32 %v4525, %v4525
    %v4767 = vmul.f32 %v4526, %v4526
    %v4768 = vmul.f32 %v4527, %v4527
    %v4769 = vmul.f32 %v4528, %v4528
    %v4770 = vmul.f32 %v4529, %v4529
    %v4771 = vmul.f32 %v4530, %v4530
    %v4772 = vmul.f32 %v4531, %v4531
    %v4773 = vmul.f32 %v4532, %v4532
    %v4774 = vmul.f32 %v4533, %v4533
    %v4775 = vmul.f32 %v4534, %v4534
    %v4776 = vmul.f32 %v4535, %v4535
    %v4777 = vmul.f32 %v4536, %v4536
    %v4778 = vmul.f32 %v4537, %v4537
    %v4779 = vmul.f32 %v4538, %v4538
    %v4780 = vmul.f32 %v4539, %v4539
    %v4781 = vmul.f32 %v4540, %v4540
    %v4782 = vmul.f32 %v4541, %v4541
    %v4783 = vmul.f32 %v4542, %v4542
    %v4784 = vmul.f32 %v4543, %v4543
    %v4785 = vmul.f32 %v4544, %v4544
    %v4786 = vmul.f32 %v4545, %v4545
    %v4787 = vmul.f32 %v4546, %v4546
    %v4788 = vmul.f32 %v4547, %v4547
    %v4789 = vmul.f32 %v4548, %v4548
    %v4790 = vmul.f32 %v4549, %v4549
    %v4791 = vmul.f32 %v4550, %v4550
    %v4792 = vmul.f32 %v4551, %v4551
    %v4793 = vmul.f32 %v4552, %v4552
    %v4794 = vmul.f32 %v4553, %v4553
    %v4795 = vmul.f32 %v4554, %v4554
    %v4796 = vmul.f32 %v4555, %v4555
    %v4797 = vmul.f32 %v4556, %v4556
    %v4798 = vmul.f32 %v4557, %v4557
    %v4799 = vmul.f32 %v4558, %v4558
    %v4800 = vmul.f32 %v4559, %v4559
    %v4801 = vmul.f32 %v4560, %v4560
    %v4802 = vmul.f32 %v4561, %v4561
    %v4803 = vmul.f32 %v4562, %v4562
    %v4804 = vmul.f32 %v4563, %v4563
    %v4805 = vmul.f32 %v4564, %v4564
    %v4806 = vmul.f32 %v4565, %v4565
    %v4807 = vmul.f32 %v4566, %v4566
    %v4808 = vmul.f32 %v4567, %v4567
    %v4809 = vmul.f32 %v4568, %v4568
    %v4810 = vmul.f32 %v4569, %v4569
    %v4811 = vmul.f32 %v4570, %v4570
    %v4812 = vmul.f32 %v4571, %v4571
    %v4813 = vmul.f32 %v4572, %v4572
    %v4814 = vmul.f32 %v4573, %v4573
    %v4815 = vmul.f32 %v4574, %v4574
    %v4816 = vmul.f32 %v4575, %v4575
    %v4817 = vmul.f32 %v4576, %v4576
    %v4818 = vmul.f32 %v4577, %v4577
    %v4819 = vmul.f32 %v4578, %v4578
    %v4820 = vmul.f32 %v4579, %v4579
    %v4821 = vmul.f32 %v4580, %v4580
    %v4822 = vmul.f32 %v4581, %v4581
    %v4823 = vmul.f32 %v4582, %v4582
    %v4824 = vmul.f32 %v4583, %v4583
    %v4825 = vmul.f32 %v4584, %v4584
    %v4826 = vmul.f32 %v4585, %v4585
    %v4827 = vmul.f32 %v4586, %v4586
    %v4828 = vmul.f32 %v4587, %v4587
    %v4829 = vmul.f32 %v4588, %v4588
    %v4830 = vmul.f32 %v4589, %v4589
    %v4831 = vmul.f32 %v4590, %v4590
    %v4832 = vmul.f32 %v4591, %v4591
    %v4833 = vmul.f32 %v4592, %v4592
    %v4834 = vmul.f32 %v4593, %v4593
    %v4835 = vmul.f32 %v4594, %v4594
    %v4836 = vmul.f32 %v4595, %v4595
    %v4837 = vmul.f32 %v4596, %v4596
    %v4838 = vmul.f32 %v4597, %v4597
    %v4839 = vmul.f32 %v4598, %v4598
    %v4840 = vmul.f32 %v4599, %v4599
    %v4841 = vmul.f32 %v4600, %v4600
    %v4842 = vmul.f32 %v4601, %v4601
    %v4843 = vmul.f32 %v4602, %v4602
    %v4844 = vmul.f32 %v4603, %v4603
    %v4845 = vmul.f32 %v4604, %v4604
    %v4846 = vmul.f32 %v4605, %v4605
    %v4847 = vmul.f32 %v4606, %v4606
    %v4848 = vmul.f32 %v4607, %v4607
    %v4849 = vmul.f32 %v4608, %v4608
    %v4850 = vmul.f32 %v4609, %v4609
    %v4851 = vmul.f32 %v4610, %v4610
    %v4852 = vmul.f32 %v4611, %v4611
    %v4853 = vmul.f32 %v4612, %v4612
    %v4854 = vmul.f32 %v4613, %v4613
    %v4855 = vadd.f32 %v4751, %v4755
    %v4856 = vadd.f32 %v4855, %v4759
    %v4857 = vadd.f32 %v4856, %v4763
    %v4858 = vadd.f32 %v4857, %v4767
    %v4859 = vadd.f32 %v4858, %v4771
    %v4860 = vadd.f32 %v4859, %v4775
    %v4861 = vadd.f32 %v4860, %v4779
    %v4862 = vadd.f32 %v4861, %v4783
    %v4863 = vadd.f32 %v4862, %v4787
    %v4864 = vadd.f32 %v4863, %v4791
    %v4865 = vadd.f32 %v4864, %v4795
    %v4866 = vadd.f32 %v4865, %v4799
    %v4867 = vadd.f32 %v4866, %v4803
    %v4868 = vadd.f32 %v4867, %v4807
    %v4869 = vadd.f32 %v4868, %v4811
    %v4870 = vadd.f32 %v4869, %v4815
    %v4871 = vadd.f32 %v4870, %v4819
    %v4872 = vadd.f32 %v4871, %v4823
    %v4873 = vadd.f32 %v4872, %v4827
    %v4874 = vadd.f32 %v4873, %v4831
    %v4875 = vadd.f32 %v4874, %v4835
    %v4876 = vadd.f32 %v4875, %v4839
    %v4877 = vadd.f32 %v4876, %v4843
    %v4878 = vadd.f32 %v4877, %v4847
    %v4879 = vadd.f32 %v4878, %v4851
    %v4880 = vadd.f32 %v4752, %v4756
    %v4881 = vadd.f32 %v4880, %v4760
    %v4882 = vadd.f32 %v4881, %v4764
    %v4883 = vadd.f32 %v4882, %v4768
    %v4884 = vadd.f32 %v4883, %v4772
    %v4885 = vadd.f32 %v4884, %v4776
    %v4886 = vadd.f32 %v4885, %v4780
    %v4887 = vadd.f32 %v4886, %v4784
    %v4888 = vadd.f32 %v4887, %v4788
    %v4889 = vadd.f32 %v4888, %v4792
    %v4890 = vadd.f32 %v4889, %v4796
    %v4891 = vadd.f32 %v4890, %v4800
    %v4892 = vadd.f32 %v4891, %v4804
    %v4893 = vadd.f32 %v4892, %v4808
    %v4894 = vadd.f32 %v4893, %v4812
    %v4895 = vadd.f32 %v4894, %v4816
    %v4896 = vadd.f32 %v4895, %v4820
    %v4897 = vadd.f32 %v4896, %v4824
    %v4898 = vadd.f32 %v4897, %v4828
    %v4899 = vadd.f32 %v4898, %v4832
    %v4900 = vadd.f32 %v4899, %v4836
    %v4901 = vadd.f32 %v4900, %v4840
    %v4902 = vadd.f32 %v4901, %v4844
    %v4903 = vadd.f32 %v4902, %v4848
    %v4904 = vadd.f32 %v4903, %v4852
    %v4905 = vadd.f32 %v4753, %v4757
    %v4906 = vadd.f32 %v4905, %v4761
    %v4907 = vadd.f32 %v4906, %v4765
    %v4908 = vadd.f32 %v4907, %v4769
    %v4909 = vadd.f32 %v4908, %v4773
    %v4910 = vadd.f32 %v4909, %v4777
    %v4911 = vadd.f32 %v4910, %v4781
    %v4912 = vadd.f32 %v4911, %v4785
    %v4913 = vadd.f32 %v4912, %v4789
    %v4914 = vadd.f32 %v4913, %v4793
    %v4915 = vadd.f32 %v4914, %v4797
    %v4916 = vadd.f32 %v4915, %v4801
    %v4917 = vadd.f32 %v4916, %v4805
    %v4918 = vadd.f32 %v4917, %v4809
    %v4919 = vadd.f32 %v4918, %v4813
    %v4920 = vadd.f32 %v4919, %v4817
    %v4921 = vadd.f32 %v4920, %v4821
    %v4922 = vadd.f32 %v4921, %v4825
    %v4923 = vadd.f32 %v4922, %v4829
    %v4924 = vadd.f32 %v4923, %v4833
    %v4925 = vadd.f32 %v4924, %v4837
    %v4926 = vadd.f32 %v4925, %v4841
    %v4927 = vadd.f32 %v4926, %v4845
    %v4928 = vadd.f32 %v4927, %v4849
    %v4929 = vadd.f32 %v4928, %v4853
    %v4930 = vsel %vm4689, %v4754, 0.0
    %v4931 = vsel %vm4689, %v4758, 0.0
    %v4932 = vadd.f32 %v4930, %v4931
    %v4933 = vsel %vm4689, %v4762, 0.0
    %v4934 = vadd.f32 %v4932, %v4933
    %v4935 = vsel %vm4689, %v4766, 0.0
    %v4936 = vadd.f32 %v4934, %v4935
    %v4937 = vsel %vm4689, %v4770, 0.0
    %v4938 = vadd.f32 %v4936, %v4937
    %v4939 = vsel %vm4689, %v4774, 0.0
    %v4940 = vadd.f32 %v4938, %v4939
    %v4941 = vsel %vm4689, %v4778, 0.0
    %v4942 = vadd.f32 %v4940, %v4941
    %v4943 = vsel %vm4689, %v4782, 0.0
    %v4944 = vadd.f32 %v4942, %v4943
    %v4945 = vsel %vm4689, %v4786, 0.0
    %v4946 = vadd.f32 %v4944, %v4945
    %v4947 = vsel %vm4689, %v4790, 0.0
    %v4948 = vadd.f32 %v4946, %v4947
    %v4949 = vsel %vm4689, %v4794, 0.0
    %v4950 = vadd.f32 %v4948, %v4949
    %v4951 = vsel %vm4689, %v4798, 0.0
    %v4952 = vadd.f32 %v4950, %v4951
    %v4953 = vsel %vm4689, %v4802, 0.0
    %v4954 = vadd.f32 %v4952, %v4953
    %v4955 = vsel %vm4689, %v4806, 0.0
    %v4956 = vadd.f32 %v4954, %v4955
    %v4957 = vsel %vm4689, %v4810, 0.0
    %v4958 = vadd.f32 %v4956, %v4957
    %v4959 = vsel %vm4689, %v4814, 0.0
    %v4960 = vadd.f32 %v4958, %v4959
    %v4961 = vsel %vm4689, %v4818, 0.0
    %v4962 = vadd.f32 %v4960, %v4961
    %v4963 = vsel %vm4689, %v4822, 0.0
    %v4964 = vadd.f32 %v4962, %v4963
    %v4965 = vsel %vm4689, %v4826, 0.0
    %v4966 = vadd.f32 %v4964, %v4965
    %v4967 = vsel %vm4689, %v4830, 0.0
    %v4968 = vadd.f32 %v4966, %v4967
    %v4969 = vsel %vm4689, %v4834, 0.0
    %v4970 = vadd.f32 %v4968, %v4969
    %v4971 = vsel %vm4689, %v4838, 0.0
    %v4972 = vadd.f32 %v4970, %v4971
    %v4973 = vsel %vm4689, %v4842, 0.0
    %v4974 = vadd.f32 %v4972, %v4973
    %v4975 = vsel %vm4689, %v4846, 0.0
    %v4976 = vadd.f32 %v4974, %v4975
    %v4977 = vsel %vm4689, %v4850, 0.0
    %v4978 = vadd.f32 %v4976, %v4977
    %v4979 = vsel %vm4689, %v4854, 0.0
    %v4980 = vadd.f32 %v4978, %v4979
    %v4981 = vadd.f32 %v4879, %v4904
    %v4982 = vadd.f32 %v4981, %v4929
    %v4983 = vsel %vm4689, %v4980, 0.0
    %v4984 = vadd.f32 %v4982, %v4983
    %v4985 = vrot.slane %v4984, 4
    %v4986 = vadd.f32 %v4984, %v4985
    %v4987 = vrot.slane %v4986, 2
    %v4988 = vadd.f32 %v4986, %v4987
    %v4989 = vrot.slane %v4988, 1
    %v4990 = vadd.f32 %v4988, %v4989
    %v4991 = vmul.f32 %v4750, 0.00147929
    %v4992 = vmul.f32 %v4990, 0.00147929
    %v4993 = vmul.f32 %v4991, %v4991
    %v4994 = vsub.f32 %v4992, %v4993
    %v4995 = vsub.f32 %v4510, %v4991
    %v4996 = vsub.f32 %v4511, %v4991
    %v4997 = vsub.f32 %v4512, %v4991
    %v4998 = vsub.f32 %v4513, %v4991
    %v4999 = vsub.f32 %v4514, %v4991
    %v5000 = vsub.f32 %v4515, %v4991
    %v5001 = vsub.f32 %v4516, %v4991
    %v5002 = vsub.f32 %v4517, %v4991
    %v5003 = vsub.f32 %v4518, %v4991
    %v5004 = vsub.f32 %v4519, %v4991
    %v5005 = vsub.f32 %v4520, %v4991
    %v5006 = vsub.f32 %v4521, %v4991
    %v5007 = vsub.f32 %v4522, %v4991
    %v5008 = vsub.f32 %v4523, %v4991
    %v5009 = vsub.f32 %v4524, %v4991
    %v5010 = vsub.f32 %v4525, %v4991
    %v5011 = vsub.f32 %v4526, %v4991
    %v5012 = vsub.f32 %v4527, %v4991
    %v5013 = vsub.f32 %v4528, %v4991
    %v5014 = vsub.f32 %v4529, %v4991
    %v5015 = vsub.f32 %v4530, %v4991
    %v5016 = vsub.f32 %v4531, %v4991
    %v5017 = vsub.f32 %v4532, %v4991
    %v5018 = vsub.f32 %v4533, %v4991
    %v5019 = vsub.f32 %v4534, %v4991
    %v5020 = vsub.f32 %v4535, %v4991
    %v5021 = vsub.f32 %v4536, %v4991
    %v5022 = vsub.f32 %v4537, %v4991
    %v5023 = vsub.f32 %v4538, %v4991
    %v5024 = vsub.f32 %v4539, %v4991
    %v5025 = vsub.f32 %v4540, %v4991
    %v5026 = vsub.f32 %v4541, %v4991
    %v5027 = vsub.f32 %v4542, %v4991
    %v5028 = vsub.f32 %v4543, %v4991
    %v5029 = vsub.f32 %v4544, %v4991
    %v5030 = vsub.f32 %v4545, %v4991
    %v5031 = vsub.f32 %v4546, %v4991
    %v5032 = vsub.f32 %v4547, %v4991
    %v5033 = vsub.f32 %v4548, %v4991
    %v5034 = vsub.f32 %v4549, %v4991
    %v5035 = vsub.f32 %v4550, %v4991
    %v5036 = vsub.f32 %v4551, %v4991
    %v5037 = vsub.f32 %v4552, %v4991
    %v5038 = vsub.f32 %v4553, %v4991
    %v5039 = vsub.f32 %v4554, %v4991
    %v5040 = vsub.f32 %v4555, %v4991
    %v5041 = vsub.f32 %v4556, %v4991
    %v5042 = vsub.f32 %v4557, %v4991
    %v5043 = vsub.f32 %v4558, %v4991
    %v5044 = vsub.f32 %v4559, %v4991
    %v5045 = vsub.f32 %v4560, %v4991
    %v5046 = vsub.f32 %v4561, %v4991
    %v5047 = vsub.f32 %v4562, %v4991
    %v5048 = vsub.f32 %v4563, %v4991
    %v5049 = vsub.f32 %v4564, %v4991
    %v5050 = vsub.f32 %v4565, %v4991
    %v5051 = vsub.f32 %v4566, %v4991
    %v5052 = vsub.f32 %v4567, %v4991
    %v5053 = vsub.f32 %v4568, %v4991
    %v5054 = vsub.f32 %v4569, %v4991
    %v5055 = vsub.f32 %v4570, %v4991
    %v5056 = vsub.f32 %v4571, %v4991
    %v5057 = vsub.f32 %v4572, %v4991
    %v5058 = vsub.f32 %v4573, %v4991
    %v5059 = vsub.f32 %v4574, %v4991
    %v5060 = vsub.f32 %v4575, %v4991
    %v5061 = vsub.f32 %v4576, %v4991
    %v5062 = vsub.f32 %v4577, %v4991
    %v5063 = vsub.f32 %v4578, %v4991
    %v5064 = vsub.f32 %v4579, %v4991
    %v5065 = vsub.f32 %v4580, %v4991
    %v5066 = vsub.f32 %v4581, %v4991
    %v5067 = vsub.f32 %v4582, %v4991
    %v5068 = vsub.f32 %v4583, %v4991
    %v5069 = vsub.f32 %v4584, %v4991
    %v5070 = vsub.f32 %v4585, %v4991
    %v5071 = vsub.f32 %v4586, %v4991
    %v5072 = vsub.f32 %v4587, %v4991
    %v5073 = vsub.f32 %v4588, %v4991
    %v5074 = vsub.f32 %v4589, %v4991
    %v5075 = vsub.f32 %v4590, %v4991
    %v5076 = vsub.f32 %v4591, %v4991
    %v5077 = vsub.f32 %v4592, %v4991
    %v5078 = vsub.f32 %v4593, %v4991
    %v5079 = vsub.f32 %v4594, %v4991
    %v5080 = vsub.f32 %v4595, %v4991
    %v5081 = vsub.f32 %v4596, %v4991
    %v5082 = vsub.f32 %v4597, %v4991
    %v5083 = vsub.f32 %v4598, %v4991
    %v5084 = vsub.f32 %v4599, %v4991
    %v5085 = vsub.f32 %v4600, %v4991
    %v5086 = vsub.f32 %v4601, %v4991
    %v5087 = vsub.f32 %v4602, %v4991
    %v5088 = vsub.f32 %v4603, %v4991
    %v5089 = vsub.f32 %v4604, %v4991
    %v5090 = vsub.f32 %v4605, %v4991
    %v5091 = vsub.f32 %v4606, %v4991
    %v5092 = vsub.f32 %v4607, %v4991
    %v5093 = vsub.f32 %v4608, %v4991
    %v5094 = vsub.f32 %v4609, %v4991
    %v5095 = vsub.f32 %v4610, %v4991
    %v5096 = vsub.f32 %v4611, %v4991
    %v5097 = vsub.f32 %v4612, %v4991
    %v5098 = vsub.f32 %v4613, %v4991
    %v5099 = vadd.f32 %v4994, 1e-05
    %v5100 = vrsqrt.pop %v5099
    %v5101 = vmul.f32 %v4995, %v5100
    %v5102 = vmul.f32 %v4996, %v5100
    %v5103 = vmul.f32 %v4997, %v5100
    %v5104 = vmul.f32 %v4998, %v5100
    %v5105 = vmul.f32 %v4999, %v5100
    %v5106 = vmul.f32 %v5000, %v5100
    %v5107 = vmul.f32 %v5001, %v5100
    %v5108 = vmul.f32 %v5002, %v5100
    %v5109 = vmul.f32 %v5003, %v5100
    %v5110 = vmul.f32 %v5004, %v5100
    %v5111 = vmul.f32 %v5005, %v5100
    %v5112 = vmul.f32 %v5006, %v5100
    %v5113 = vmul.f32 %v5007, %v5100
    %v5114 = vmul.f32 %v5008, %v5100
    %v5115 = vmul.f32 %v5009, %v5100
    %v5116 = vmul.f32 %v5010, %v5100
    %v5117 = vmul.f32 %v5011, %v5100
    %v5118 = vmul.f32 %v5012, %v5100
    %v5119 = vmul.f32 %v5013, %v5100
    %v5120 = vmul.f32 %v5014, %v5100
    %v5121 = vmul.f32 %v5015, %v5100
    %v5122 = vmul.f32 %v5016, %v5100
    %v5123 = vmul.f32 %v5017, %v5100
    %v5124 = vmul.f32 %v5018, %v5100
    %v5125 = vmul.f32 %v5019, %v5100
    %v5126 = vmul.f32 %v5020, %v5100
    %v5127 = vmul.f32 %v5021, %v5100
    %v5128 = vmul.f32 %v5022, %v5100
    %v5129 = vmul.f32 %v5023, %v5100
    %v5130 = vmul.f32 %v5024, %v5100
    %v5131 = vmul.f32 %v5025, %v5100
    %v5132 = vmul.f32 %v5026, %v5100
    %v5133 = vmul.f32 %v5027, %v5100
    %v5134 = vmul.f32 %v5028, %v5100
    %v5135 = vmul.f32 %v5029, %v5100
    %v5136 = vmul.f32 %v5030, %v5100
    %v5137 = vmul.f32 %v5031, %v5100
    %v5138 = vmul.f32 %v5032, %v5100
    %v5139 = vmul.f32 %v5033, %v5100
    %v5140 = vmul.f32 %v5034, %v5100
    %v5141 = vmul.f32 %v5035, %v5100
    %v5142 = vmul.f32 %v5036, %v5100
    %v5143 = vmul.f32 %v5037, %v5100
    %v5144 = vmul.f32 %v5038, %v5100
    %v5145 = vmul.f32 %v5039, %v5100
    %v5146 = vmul.f32 %v5040, %v5100
    %v5147 = vmul.f32 %v5041, %v5100
    %v5148 = vmul.f32 %v5042, %v5100
    %v5149 = vmul.f32 %v5043, %v5100
    %v5150 = vmul.f32 %v5044, %v5100
    %v5151 = vmul.f32 %v5045, %v5100
    %v5152 = vmul.f32 %v5046, %v5100
    %v5153 = vmul.f32 %v5047, %v5100
    %v5154 = vmul.f32 %v5048, %v5100
    %v5155 = vmul.f32 %v5049, %v5100
    %v5156 = vmul.f32 %v5050, %v5100
    %v5157 = vmul.f32 %v5051, %v5100
    %v5158 = vmul.f32 %v5052, %v5100
    %v5159 = vmul.f32 %v5053, %v5100
    %v5160 = vmul.f32 %v5054, %v5100
    %v5161 = vmul.f32 %v5055, %v5100
    %v5162 = vmul.f32 %v5056, %v5100
    %v5163 = vmul.f32 %v5057, %v5100
    %v5164 = vmul.f32 %v5058, %v5100
    %v5165 = vmul.f32 %v5059, %v5100
    %v5166 = vmul.f32 %v5060, %v5100
    %v5167 = vmul.f32 %v5061, %v5100
    %v5168 = vmul.f32 %v5062, %v5100
    %v5169 = vmul.f32 %v5063, %v5100
    %v5170 = vmul.f32 %v5064, %v5100
    %v5171 = vmul.f32 %v5065, %v5100
    %v5172 = vmul.f32 %v5066, %v5100
    %v5173 = vmul.f32 %v5067, %v5100
    %v5174 = vmul.f32 %v5068, %v5100
    %v5175 = vmul.f32 %v5069, %v5100
    %v5176 = vmul.f32 %v5070, %v5100
    %v5177 = vmul.f32 %v5071, %v5100
    %v5178 = vmul.f32 %v5072, %v5100
    %v5179 = vmul.f32 %v5073, %v5100
    %v5180 = vmul.f32 %v5074, %v5100
    %v5181 = vmul.f32 %v5075, %v5100
    %v5182 = vmul.f32 %v5076, %v5100
    %v5183 = vmul.f32 %v5077, %v5100
    %v5184 = vmul.f32 %v5078, %v5100
    %v5185 = vmul.f32 %v5079, %v5100
    %v5186 = vmul.f32 %v5080, %v5100
    %v5187 = vmul.f32 %v5081, %v5100
    %v5188 = vmul.f32 %v5082, %v5100
    %v5189 = vmul.f32 %v5083, %v5100
    %v5190 = vmul.f32 %v5084, %v5100
    %v5191 = vmul.f32 %v5085, %v5100
    %v5192 = vmul.f32 %v5086, %v5100
    %v5193 = vmul.f32 %v5087, %v5100
    %v5194 = vmul.f32 %v5088, %v5100
    %v5195 = vmul.f32 %v5089, %v5100
    %v5196 = vmul.f32 %v5090, %v5100
    %v5197 = vmul.f32 %v5091, %v5100
    %v5198 = vmul.f32 %v5092, %v5100
    %v5199 = vmul.f32 %v5093, %v5100
    %v5200 = vmul.f32 %v5094, %v5100
    %v5201 = vmul.f32 %v5095, %v5100
    %v5202 = vmul.f32 %v5096, %v5100
    %v5203 = vmul.f32 %v5097, %v5100
    %v5204 = vmul.f32 %v5098, %v5100
    %s5205 = sld [smem:[#allocation2 + $0x80]]
    %v5206 = vstv %s5205
    %v5207 = vmul.f32 %v5101, %v5206
    %v5208 = vmul.f32 %v5102, %v5206
    %v5209 = vmul.f32 %v5103, %v5206
    %v5210 = vmul.f32 %v5105, %v5206
    %v5211 = vmul.f32 %v5106, %v5206
    %v5212 = vmul.f32 %v5107, %v5206
    %v5213 = vmul.f32 %v5109, %v5206
    %v5214 = vmul.f32 %v5110, %v5206
    %v5215 = vmul.f32 %v5111, %v5206
    %v5216 = vmul.f32 %v5113, %v5206
    %v5217 = vmul.f32 %v5114, %v5206
    %v5218 = vmul.f32 %v5115, %v5206
    %v5219 = vmul.f32 %v5117, %v5206
    %v5220 = vmul.f32 %v5118, %v5206
    %v5221 = vmul.f32 %v5119, %v5206
    %v5222 = vmul.f32 %v5121, %v5206
    %v5223 = vmul.f32 %v5122, %v5206
    %v5224 = vmul.f32 %v5123, %v5206
    %v5225 = vmul.f32 %v5125, %v5206
    %v5226 = vmul.f32 %v5126, %v5206
    %v5227 = vmul.f32 %v5127, %v5206
    %v5228 = vmul.f32 %v5129, %v5206
    %v5229 = vmul.f32 %v5130, %v5206
    %v5230 = vmul.f32 %v5131, %v5206
    %v5231 = vmul.f32 %v5133, %v5206
    %v5232 = vmul.f32 %v5134, %v5206
    %v5233 = vmul.f32 %v5135, %v5206
    %v5234 = vmul.f32 %v5137, %v5206
    %v5235 = vmul.f32 %v5138, %v5206
    %v5236 = vmul.f32 %v5139, %v5206
    %v5237 = vmul.f32 %v5141, %v5206
    %v5238 = vmul.f32 %v5142, %v5206
    %v5239 = vmul.f32 %v5143, %v5206
    %v5240 = vmul.f32 %v5145, %v5206
    %v5241 = vmul.f32 %v5146, %v5206
    %v5242 = vmul.f32 %v5147, %v5206
    %v5243 = vmul.f32 %v5149, %v5206
    %v5244 = vmul.f32 %v5150, %v5206
    %v5245 = vmul.f32 %v5151, %v5206
    %v5246 = vmul.f32 %v5153, %v5206
    %v5247 = vmul.f32 %v5154, %v5206
    %v5248 = vmul.f32 %v5155, %v5206
    %v5249 = vmul.f32 %v5157, %v5206
    %v5250 = vmul.f32 %v5158, %v5206
    %v5251 = vmul.f32 %v5159, %v5206
    %v5252 = vmul.f32 %v5161, %v5206
    %v5253 = vmul.f32 %v5162, %v5206
    %v5254 = vmul.f32 %v5163, %v5206
    %v5255 = vmul.f32 %v5165, %v5206
    %v5256 = vmul.f32 %v5166, %v5206
    %v5257 = vmul.f32 %v5167, %v5206
    %v5258 = vmul.f32 %v5169, %v5206
    %v5259 = vmul.f32 %v5170, %v5206
    %v5260 = vmul.f32 %v5171, %v5206
    %v5261 = vmul.f32 %v5173, %v5206
    %v5262 = vmul.f32 %v5174, %v5206
    %v5263 = vmul.f32 %v5175, %v5206
    %v5264 = vmul.f32 %v5177, %v5206
    %v5265 = vmul.f32 %v5178, %v5206
    %v5266 = vmul.f32 %v5179, %v5206
    %v5267 = vmul.f32 %v5181, %v5206
    %v5268 = vmul.f32 %v5182, %v5206
    %v5269 = vmul.f32 %v5183, %v5206
    %v5270 = vmul.f32 %v5185, %v5206
    %v5271 = vmul.f32 %v5186, %v5206
    %v5272 = vmul.f32 %v5187, %v5206
    %v5273 = vmul.f32 %v5189, %v5206
    %v5274 = vmul.f32 %v5190, %v5206
    %v5275 = vmul.f32 %v5191, %v5206
    %v5276 = vmul.f32 %v5193, %v5206
    %v5277 = vmul.f32 %v5194, %v5206
    %v5278 = vmul.f32 %v5195, %v5206
    %s5279 = sld [smem:[#allocation2 + $0x83]]
    %v5280 = vstv %s5279
    %v5281 = vmul.f32 %v5105, %v5280
    %v5282 = vmul.f32 %v5106, %v5280
    %v5283 = vmul.f32 %v5107, %v5280
    %v5284 = vmul.f32 %v5109, %v5280
    %v5285 = vmul.f32 %v5110, %v5280
    %v5286 = vmul.f32 %v5111, %v5280
    %v5287 = vmul.f32 %v5113, %v5280
    %v5288 = vmul.f32 %v5114, %v5280
    %v5289 = vmul.f32 %v5115, %v5280
    %v5290 = vmul.f32 %v5117, %v5280
    %v5291 = vmul.f32 %v5118, %v5280
    %v5292 = vmul.f32 %v5119, %v5280
    %v5293 = vmul.f32 %v5121, %v5280
    %v5294 = vmul.f32 %v5122, %v5280
    %v5295 = vmul.f32 %v5123, %v5280
    %v5296 = vmul.f32 %v5125, %v5280
    %v5297 = vmul.f32 %v5126, %v5280
    %v5298 = vmul.f32 %v5127, %v5280
    %v5299 = vmul.f32 %v5129, %v5280
    %v5300 = vmul.f32 %v5130, %v5280
    %v5301 = vmul.f32 %v5131, %v5280
    %v5302 = vmul.f32 %v5133, %v5280
    %v5303 = vmul.f32 %v5134, %v5280
    %v5304 = vmul.f32 %v5135, %v5280
    %v5305 = vmul.f32 %v5137, %v5280
    %v5306 = vmul.f32 %v5138, %v5280
    %v5307 = vmul.f32 %v5139, %v5280
    %v5308 = vmul.f32 %v5141, %v5280
    %v5309 = vmul.f32 %v5142, %v5280
    %v5310 = vmul.f32 %v5143, %v5280
    %v5311 = vmul.f32 %v5145, %v5280
    %v5312 = vmul.f32 %v5146, %v5280
    %v5313 = vmul.f32 %v5147, %v5280
    %v5314 = vmul.f32 %v5149, %v5280
    %v5315 = vmul.f32 %v5150, %v5280
    %v5316 = vmul.f32 %v5151, %v5280
    %v5317 = vmul.f32 %v5153, %v5280
    %v5318 = vmul.f32 %v5154, %v5280
    %v5319 = vmul.f32 %v5155, %v5280
    %v5320 = vmul.f32 %v5157, %v5280
    %v5321 = vmul.f32 %v5158, %v5280
    %v5322 = vmul.f32 %v5159, %v5280
    %v5323 = vmul.f32 %v5161, %v5280
    %v5324 = vmul.f32 %v5162, %v5280
    %v5325 = vmul.f32 %v5163, %v5280
    %v5326 = vmul.f32 %v5165, %v5280
    %v5327 = vmul.f32 %v5166, %v5280
    %v5328 = vmul.f32 %v5167, %v5280
    %v5329 = vmul.f32 %v5169, %v5280
    %v5330 = vmul.f32 %v5170, %v5280
    %v5331 = vmul.f32 %v5171, %v5280
    %v5332 = vmul.f32 %v5173, %v5280
    %v5333 = vmul.f32 %v5174, %v5280
    %v5334 = vmul.f32 %v5175, %v5280
    %v5335 = vmul.f32 %v5177, %v5280
    %v5336 = vmul.f32 %v5178, %v5280
    %v5337 = vmul.f32 %v5179, %v5280
    %v5338 = vmul.f32 %v5181, %v5280
    %v5339 = vmul.f32 %v5182, %v5280
    %v5340 = vmul.f32 %v5183, %v5280
    %v5341 = vmul.f32 %v5185, %v5280
    %v5342 = vmul.f32 %v5186, %v5280
    %v5343 = vmul.f32 %v5187, %v5280
    %v5344 = vmul.f32 %v5189, %v5280
    %v5345 = vmul.f32 %v5190, %v5280
    %v5346 = vmul.f32 %v5191, %v5280
    %v5347 = vmul.f32 %v5193, %v5280
    %v5348 = vmul.f32 %v5194, %v5280
    %v5349 = vmul.f32 %v5195, %v5280
    %v5350 = vmul.f32 %v5197, %v5280
    %v5351 = vmul.f32 %v5198, %v5280
    %v5352 = vmul.f32 %v5199, %v5280
    %v5353 = vadd.f32 %v5207, %v5281
    %v5354 = vadd.f32 %v5208, %v5282
    %v5355 = vadd.f32 %v5209, %v5283
    %v5356 = vadd.f32 %v5210, %v5284
    %v5357 = vadd.f32 %v5211, %v5285
    %v5358 = vadd.f32 %v5212, %v5286
    %v5359 = vadd.f32 %v5213, %v5287
    %v5360 = vadd.f32 %v5214, %v5288
    %v5361 = vadd.f32 %v5215, %v5289
    %v5362 = vadd.f32 %v5216, %v5290
    %v5363 = vadd.f32 %v5217, %v5291
    %v5364 = vadd.f32 %v5218, %v5292
    %v5365 = vadd.f32 %v5219, %v5293
    %v5366 = vadd.f32 %v5220, %v5294
    %v5367 = vadd.f32 %v5221, %v5295
    %v5368 = vadd.f32 %v5222, %v5296
    %v5369 = vadd.f32 %v5223, %v5297
    %v5370 = vadd.f32 %v5224, %v5298
    %v5371 = vadd.f32 %v5225, %v5299
    %v5372 = vadd.f32 %v5226, %v5300
    %v5373 = vadd.f32 %v5227, %v5301
    %v5374 = vadd.f32 %v5228, %v5302
    %v5375 = vadd.f32 %v5229, %v5303
    %v5376 = vadd.f32 %v5230, %v5304
    %v5377 = vadd.f32 %v5231, %v5305
    %v5378 = vadd.f32 %v5232, %v5306
    %v5379 = vadd.f32 %v5233, %v5307
    %v5380 = vadd.f32 %v5234, %v5308
    %v5381 = vadd.f32 %v5235, %v5309
    %v5382 = vadd.f32 %v5236, %v5310
    %v5383 = vadd.f32 %v5237, %v5311
    %v5384 = vadd.f32 %v5238, %v5312
    %v5385 = vadd.f32 %v5239, %v5313
    %v5386 = vadd.f32 %v5240, %v5314
    %v5387 = vadd.f32 %v5241, %v5315
    %v5388 = vadd.f32 %v5242, %v5316
    %v5389 = vadd.f32 %v5243, %v5317
    %v5390 = vadd.f32 %v5244, %v5318
    %v5391 = vadd.f32 %v5245, %v5319
    %v5392 = vadd.f32 %v5246, %v5320
    %v5393 = vadd.f32 %v5247, %v5321
    %v5394 = vadd.f32 %v5248, %v5322
    %v5395 = vadd.f32 %v5249, %v5323
    %v5396 = vadd.f32 %v5250, %v5324
    %v5397 = vadd.f32 %v5251, %v5325
    %v5398 = vadd.f32 %v5252, %v5326
    %v5399 = vadd.f32 %v5253, %v5327
    %v5400 = vadd.f32 %v5254, %v5328
    %v5401 = vadd.f32 %v5255, %v5329
    %v5402 = vadd.f32 %v5256, %v5330
    %v5403 = vadd.f32 %v5257, %v5331
    %v5404 = vadd.f32 %v5258, %v5332
    %v5405 = vadd.f32 %v5259, %v5333
    %v5406 = vadd.f32 %v5260, %v5334
    %v5407 = vadd.f32 %v5261, %v5335
    %v5408 = vadd.f32 %v5262, %v5336
    %v5409 = vadd.f32 %v5263, %v5337
    %v5410 = vadd.f32 %v5264, %v5338
    %v5411 = vadd.f32 %v5265, %v5339
    %v5412 = vadd.f32 %v5266, %v5340
    %v5413 = vadd.f32 %v5267, %v5341
    %v5414 = vadd.f32 %v5268, %v5342
    %v5415 = vadd.f32 %v5269, %v5343
    %v5416 = vadd.f32 %v5270, %v5344
    %v5417 = vadd.f32 %v5271, %v5345
    %v5418 = vadd.f32 %v5272, %v5346
    %v5419 = vadd.f32 %v5273, %v5347
    %v5420 = vadd.f32 %v5274, %v5348
    %v5421 = vadd.f32 %v5275, %v5349
    %v5422 = vadd.f32 %v5276, %v5350
    %v5423 = vadd.f32 %v5277, %v5351
    %v5424 = vadd.f32 %v5278, %v5352
    %s5425 = sld [smem:[#allocation2 + $0x86]]
    %v5426 = vstv %s5425
    %v5427 = vmul.f32 %v5109, %v5426
    %v5428 = vmul.f32 %v5110, %v5426
    %v5429 = vmul.f32 %v5111, %v5426
    %v5430 = vmul.f32 %v5113, %v5426
    %v5431 = vmul.f32 %v5114, %v5426
    %v5432 = vmul.f32 %v5115, %v5426
    %v5433 = vmul.f32 %v5117, %v5426
    %v5434 = vmul.f32 %v5118, %v5426
    %v5435 = vmul.f32 %v5119, %v5426
    %v5436 = vmul.f32 %v5121, %v5426
    %v5437 = vmul.f32 %v5122, %v5426
    %v5438 = vmul.f32 %v5123, %v5426
    %v5439 = vmul.f32 %v5125, %v5426
    %v5440 = vmul.f32 %v5126, %v5426
    %v5441 = vmul.f32 %v5127, %v5426
    %v5442 = vmul.f32 %v5129, %v5426
    %v5443 = vmul.f32 %v5130, %v5426
    %v5444 = vmul.f32 %v5131, %v5426
    %v5445 = vmul.f32 %v5133, %v5426
    %v5446 = vmul.f32 %v5134, %v5426
    %v5447 = vmul.f32 %v5135, %v5426
    %v5448 = vmul.f32 %v5137, %v5426
    %v5449 = vmul.f32 %v5138, %v5426
    %v5450 = vmul.f32 %v5139, %v5426
    %v5451 = vmul.f32 %v5141, %v5426
    %v5452 = vmul.f32 %v5142, %v5426
    %v5453 = vmul.f32 %v5143, %v5426
    %v5454 = vmul.f32 %v5145, %v5426
    %v5455 = vmul.f32 %v5146, %v5426
    %v5456 = vmul.f32 %v5147, %v5426
    %v5457 = vmul.f32 %v5149, %v5426
    %v5458 = vmul.f32 %v5150, %v5426
    %v5459 = vmul.f32 %v5151, %v5426
    %v5460 = vmul.f32 %v5153, %v5426
    %v5461 = vmul.f32 %v5154, %v5426
    %v5462 = vmul.f32 %v5155, %v5426
    %v5463 = vmul.f32 %v5157, %v5426
    %v5464 = vmul.f32 %v5158, %v5426
    %v5465 = vmul.f32 %v5159, %v5426
    %v5466 = vmul.f32 %v5161, %v5426
    %v5467 = vmul.f32 %v5162, %v5426
    %v5468 = vmul.f32 %v5163, %v5426
    %v5469 = vmul.f32 %v5165, %v5426
    %v5470 = vmul.f32 %v5166, %v5426
    %v5471 = vmul.f32 %v5167, %v5426
    %v5472 = vmul.f32 %v5169, %v5426
    %v5473 = vmul.f32 %v5170, %v5426
    %v5474 = vmul.f32 %v5171, %v5426
    %v5475 = vmul.f32 %v5173, %v5426
    %v5476 = vmul.f32 %v5174, %v5426
    %v5477 = vmul.f32 %v5175, %v5426
    %v5478 = vmul.f32 %v5177, %v5426
    %v5479 = vmul.f32 %v5178, %v5426
    %v5480 = vmul.f32 %v5179, %v5426
    %v5481 = vmul.f32 %v5181, %v5426
    %v5482 = vmul.f32 %v5182, %v5426
    %v5483 = vmul.f32 %v5183, %v5426
    %v5484 = vmul.f32 %v5185, %v5426
    %v5485 = vmul.f32 %v5186, %v5426
    %v5486 = vmul.f32 %v5187, %v5426
    %v5487 = vmul.f32 %v5189, %v5426
    %v5488 = vmul.f32 %v5190, %v5426
    %v5489 = vmul.f32 %v5191, %v5426
    %v5490 = vmul.f32 %v5193, %v5426
    %v5491 = vmul.f32 %v5194, %v5426
    %v5492 = vmul.f32 %v5195, %v5426
    %v5493 = vmul.f32 %v5197, %v5426
    %v5494 = vmul.f32 %v5198, %v5426
    %v5495 = vmul.f32 %v5199, %v5426
    %v5496 = vmul.f32 %v5201, %v5426
    %v5497 = vmul.f32 %v5202, %v5426
    %v5498 = vmul.f32 %v5203, %v5426
    %v5499 = vadd.f32 %v5353, %v5427
    %v5500 = vadd.f32 %v5354, %v5428
    %v5501 = vadd.f32 %v5355, %v5429
    %v5502 = vadd.f32 %v5356, %v5430
    %v5503 = vadd.f32 %v5357, %v5431
    %v5504 = vadd.f32 %v5358, %v5432
    %v5505 = vadd.f32 %v5359, %v5433
    %v5506 = vadd.f32 %v5360, %v5434
    %v5507 = vadd.f32 %v5361, %v5435
    %v5508 = vadd.f32 %v5362, %v5436
    %v5509 = vadd.f32 %v5363, %v5437
    %v5510 = vadd.f32 %v5364, %v5438
    %v5511 = vadd.f32 %v5365, %v5439
    %v5512 = vadd.f32 %v5366, %v5440
    %v5513 = vadd.f32 %v5367, %v5441
    %v5514 = vadd.f32 %v5368, %v5442
    %v5515 = vadd.f32 %v5369, %v5443
    %v5516 = vadd.f32 %v5370, %v5444
    %v5517 = vadd.f32 %v5371, %v5445
    %v5518 = vadd.f32 %v5372, %v5446
    %v5519 = vadd.f32 %v5373, %v5447
    %v5520 = vadd.f32 %v5374, %v5448
    %v5521 = vadd.f32 %v5375, %v5449
    %v5522 = vadd.f32 %v5376, %v5450
    %v5523 = vadd.f32 %v5377, %v5451
    %v5524 = vadd.f32 %v5378, %v5452
    %v5525 = vadd.f32 %v5379, %v5453
    %v5526 = vadd.f32 %v5380, %v5454
    %v5527 = vadd.f32 %v5381, %v5455
    %v5528 = vadd.f32 %v5382, %v5456
    %v5529 = vadd.f32 %v5383, %v5457
    %v5530 = vadd.f32 %v5384, %v5458
    %v5531 = vadd.f32 %v5385, %v5459
    %v5532 = vadd.f32 %v5386, %v5460
    %v5533 = vadd.f32 %v5387, %v5461
    %v5534 = vadd.f32 %v5388, %v5462
    %v5535 = vadd.f32 %v5389, %v5463
    %v5536 = vadd.f32 %v5390, %v5464
    %v5537 = vadd.f32 %v5391, %v5465
    %v5538 = vadd.f32 %v5392, %v5466
    %v5539 = vadd.f32 %v5393, %v5467
    %v5540 = vadd.f32 %v5394, %v5468
    %v5541 = vadd.f32 %v5395, %v5469
    %v5542 = vadd.f32 %v5396, %v5470
    %v5543 = vadd.f32 %v5397, %v5471
    %v5544 = vadd.f32 %v5398, %v5472
    %v5545 = vadd.f32 %v5399, %v5473
    %v5546 = vadd.f32 %v5400, %v5474
    %v5547 = vadd.f32 %v5401, %v5475
    %v5548 = vadd.f32 %v5402, %v5476
    %v5549 = vadd.f32 %v5403, %v5477
    %v5550 = vadd.f32 %v5404, %v5478
    %v5551 = vadd.f32 %v5405, %v5479
    %v5552 = vadd.f32 %v5406, %v5480
    %v5553 = vadd.f32 %v5407, %v5481
    %v5554 = vadd.f32 %v5408, %v5482
    %v5555 = vadd.f32 %v5409, %v5483
    %v5556 = vadd.f32 %v5410, %v5484
    %v5557 = vadd.f32 %v5411, %v5485
    %v5558 = vadd.f32 %v5412, %v5486
    %v5559 = vadd.f32 %v5413, %v5487
    %v5560 = vadd.f32 %v5414, %v5488
    %v5561 = vadd.f32 %v5415, %v5489
    %v5562 = vadd.f32 %v5416, %v5490
    %v5563 = vadd.f32 %v5417, %v5491
    %v5564 = vadd.f32 %v5418, %v5492
    %v5565 = vadd.f32 %v5419, %v5493
    %v5566 = vadd.f32 %v5420, %v5494
    %v5567 = vadd.f32 %v5421, %v5495
    %v5568 = vadd.f32 %v5422, %v5496
    %v5569 = vadd.f32 %v5423, %v5497
    %v5570 = vadd.f32 %v5424, %v5498
    %s5571 = sld [smem:[#allocation2 + $0x81]]
    %v5572 = vstv %s5571
    %v5573 = vmul.f32 %v5101, %v5572
    %v5574 = vmul.f32 %v5102, %v5572
    %v5575 = vmul.f32 %v5103, %v5572
    %v5576 = vmul.f32 %v5104, %v5572
    %v5577 = vmul.f32 %v5105, %v5572
    %v5578 = vmul.f32 %v5106, %v5572
    %v5579 = vmul.f32 %v5107, %v5572
    %v5580 = vmul.f32 %v5108, %v5572
    %v5581 = vmul.f32 %v5109, %v5572
    %v5582 = vmul.f32 %v5110, %v5572
    %v5583 = vmul.f32 %v5111, %v5572
    %v5584 = vmul.f32 %v5112, %v5572
    %v5585 = vmul.f32 %v5113, %v5572
    %v5586 = vmul.f32 %v5114, %v5572
    %v5587 = vmul.f32 %v5115, %v5572
    %v5588 = vmul.f32 %v5116, %v5572
    %v5589 = vmul.f32 %v5117, %v5572
    %v5590 = vmul.f32 %v5118, %v5572
    %v5591 = vmul.f32 %v5119, %v5572
    %v5592 = vmul.f32 %v5120, %v5572
    %v5593 = vmul.f32 %v5121, %v5572
    %v5594 = vmul.f32 %v5122, %v5572
    %v5595 = vmul.f32 %v5123, %v5572
    %v5596 = vmul.f32 %v5124, %v5572
    %v5597 = vmul.f32 %v5125, %v5572
    %v5598 = vmul.f32 %v5126, %v5572
    %v5599 = vmul.f32 %v5127, %v5572
    %v5600 = vmul.f32 %v5128, %v5572
    %v5601 = vmul.f32 %v5129, %v5572
    %v5602 = vmul.f32 %v5130, %v5572
    %v5603 = vmul.f32 %v5131, %v5572
    %v5604 = vmul.f32 %v5132, %v5572
    %v5605 = vmul.f32 %v5133, %v5572
    %v5606 = vmul.f32 %v5134, %v5572
    %v5607 = vmul.f32 %v5135, %v5572
    %v5608 = vmul.f32 %v5136, %v5572
    %v5609 = vmul.f32 %v5137, %v5572
    %v5610 = vmul.f32 %v5138, %v5572
    %v5611 = vmul.f32 %v5139, %v5572
    %v5612 = vmul.f32 %v5140, %v5572
    %v5613 = vmul.f32 %v5141, %v5572
    %v5614 = vmul.f32 %v5142, %v5572
    %v5615 = vmul.f32 %v5143, %v5572
    %v5616 = vmul.f32 %v5144, %v5572
    %v5617 = vmul.f32 %v5145, %v5572
    %v5618 = vmul.f32 %v5146, %v5572
    %v5619 = vmul.f32 %v5147, %v5572
    %v5620 = vmul.f32 %v5148, %v5572
    %v5621 = vmul.f32 %v5149, %v5572
    %v5622 = vmul.f32 %v5150, %v5572
    %v5623 = vmul.f32 %v5151, %v5572
    %v5624 = vmul.f32 %v5152, %v5572
    %v5625 = vmul.f32 %v5153, %v5572
    %v5626 = vmul.f32 %v5154, %v5572
    %v5627 = vmul.f32 %v5155, %v5572
    %v5628 = vmul.f32 %v5156, %v5572
    %v5629 = vmul.f32 %v5157, %v5572
    %v5630 = vmul.f32 %v5158, %v5572
    %v5631 = vmul.f32 %v5159, %v5572
    %v5632 = vmul.f32 %v5160, %v5572
    %v5633 = vmul.f32 %v5161, %v5572
    %v5634 = vmul.f32 %v5162, %v5572
    %v5635 = vmul.f32 %v5163, %v5572
    %v5636 = vmul.f32 %v5164, %v5572
    %v5637 = vmul.f32 %v5165, %v5572
    %v5638 = vmul.f32 %v5166, %v5572
    %v5639 = vmul.f32 %v5167, %v5572
    %v5640 = vmul.f32 %v5168, %v5572
    %v5641 = vmul.f32 %v5169, %v5572
    %v5642 = vmul.f32 %v5170, %v5572
    %v5643 = vmul.f32 %v5171, %v5572
    %v5644 = vmul.f32 %v5172, %v5572
    %v5645 = vmul.f32 %v5173, %v5572
    %v5646 = vmul.f32 %v5174, %v5572
    %v5647 = vmul.f32 %v5175, %v5572
    %v5648 = vmul.f32 %v5176, %v5572
    %v5649 = vmul.f32 %v5177, %v5572
    %v5650 = vmul.f32 %v5178, %v5572
    %v5651 = vmul.f32 %v5179, %v5572
    %v5652 = vmul.f32 %v5180, %v5572
    %v5653 = vmul.f32 %v5181, %v5572
    %v5654 = vmul.f32 %v5182, %v5572
    %v5655 = vmul.f32 %v5183, %v5572
    %v5656 = vmul.f32 %v5184, %v5572
    %v5657 = vmul.f32 %v5185, %v5572
    %v5658 = vmul.f32 %v5186, %v5572
    %v5659 = vmul.f32 %v5187, %v5572
    %v5660 = vmul.f32 %v5188, %v5572
    %v5661 = vmul.f32 %v5189, %v5572
    %v5662 = vmul.f32 %v5190, %v5572
    %v5663 = vmul.f32 %v5191, %v5572
    %v5664 = vmul.f32 %v5192, %v5572
    %v5665 = vmul.f32 %v5193, %v5572
    %v5666 = vmul.f32 %v5194, %v5572
    %v5667 = vmul.f32 %v5195, %v5572
    %v5668 = vmul.f32 %v5196, %v5572
    %v5765 = vrot.slane %v5573, 1
    %v5766 = vrot.slane %v5574, 1
    %v5767 = vsel %vm1012, %v5765, %v5766
    %v5768 = vrot.slane %v5575, 1
    %v5769 = vsel %vm1012, %v5766, %v5768
    %v5770 = vrot.slane %v5576, 1
    %v5771 = vsel %vm1012, %v5768, %v5770
    %v5772 = vrot.slane %v5577, 1
    %v5773 = vrot.slane %v5578, 1
    %v5774 = vsel %vm1012, %v5772, %v5773
    %v5775 = vrot.slane %v5579, 1
    %v5776 = vsel %vm1012, %v5773, %v5775
    %v5777 = vrot.slane %v5580, 1
    %v5778 = vsel %vm1012, %v5775, %v5777
    %v5779 = vrot.slane %v5581, 1
    %v5780 = vrot.slane %v5582, 1
    %v5781 = vsel %vm1012, %v5779, %v5780
    %v5782 = vrot.slane %v5583, 1
    %v5783 = vsel %vm1012, %v5780, %v5782
    %v5784 = vrot.slane %v5584, 1
    %v5785 = vsel %vm1012, %v5782, %v5784
    %v5786 = vrot.slane %v5585, 1
    %v5787 = vrot.slane %v5586, 1
    %v5788 = vsel %vm1012, %v5786, %v5787
    %v5789 = vrot.slane %v5587, 1
    %v5790 = vsel %vm1012, %v5787, %v5789
    %v5791 = vrot.slane %v5588, 1
    %v5792 = vsel %vm1012, %v5789, %v5791
    %v5793 = vrot.slane %v5589, 1
    %v5794 = vrot.slane %v5590, 1
    %v5795 = vsel %vm1012, %v5793, %v5794
    %v5796 = vrot.slane %v5591, 1
    %v5797 = vsel %vm1012, %v5794, %v5796
    %v5798 = vrot.slane %v5592, 1
    %v5799 = vsel %vm1012, %v5796, %v5798
    %v5800 = vrot.slane %v5593, 1
    %v5801 = vrot.slane %v5594, 1
    %v5802 = vsel %vm1012, %v5800, %v5801
    %v5803 = vrot.slane %v5595, 1
    %v5804 = vsel %vm1012, %v5801, %v5803
    %v5805 = vrot.slane %v5596, 1
    %v5806 = vsel %vm1012, %v5803, %v5805
    %v5807 = vrot.slane %v5597, 1
    %v5808 = vrot.slane %v5598, 1
    %v5809 = vsel %vm1012, %v5807, %v5808
    %v5810 = vrot.slane %v5599, 1
    %v5811 = vsel %vm1012, %v5808, %v5810
    %v5812 = vrot.slane %v5600, 1
    %v5813 = vsel %vm1012, %v5810, %v5812
    %v5814 = vrot.slane %v5601, 1
    %v5815 = vrot.slane %v5602, 1
    %v5816 = vsel %vm1012, %v5814, %v5815
    %v5817 = vrot.slane %v5603, 1
    %v5818 = vsel %vm1012, %v5815, %v5817
    %v5819 = vrot.slane %v5604, 1
    %v5820 = vsel %vm1012, %v5817, %v5819
    %v5821 = vrot.slane %v5605, 1
    %v5822 = vrot.slane %v5606, 1
    %v5823 = vsel %vm1012, %v5821, %v5822
    %v5824 = vrot.slane %v5607, 1
    %v5825 = vsel %vm1012, %v5822, %v5824
    %v5826 = vrot.slane %v5608, 1
    %v5827 = vsel %vm1012, %v5824, %v5826
    %v5828 = vrot.slane %v5609, 1
    %v5829 = vrot.slane %v5610, 1
    %v5830 = vsel %vm1012, %v5828, %v5829
    %v5831 = vrot.slane %v5611, 1
    %v5832 = vsel %vm1012, %v5829, %v5831
    %v5833 = vrot.slane %v5612, 1
    %v5834 = vsel %vm1012, %v5831, %v5833
    %v5835 = vrot.slane %v5613, 1
    %v5836 = vrot.slane %v5614, 1
    %v5837 = vsel %vm1012, %v5835, %v5836
    %v5838 = vrot.slane %v5615, 1
    %v5839 = vsel %vm1012, %v5836, %v5838
    %v5840 = vrot.slane %v5616, 1
    %v5841 = vsel %vm1012, %v5838, %v5840
    %v5842 = vrot.slane %v5617, 1
    %v5843 = vrot.slane %v5618, 1
    %v5844 = vsel %vm1012, %v5842, %v5843
    %v5845 = vrot.slane %v5619, 1
    %v5846 = vsel %vm1012, %v5843, %v5845
    %v5847 = vrot.slane %v5620, 1
    %v5848 = vsel %vm1012, %v5845, %v5847
    %v5849 = vrot.slane %v5621, 1
    %v5850 = vrot.slane %v5622, 1
    %v5851 = vsel %vm1012, %v5849, %v5850
    %v5852 = vrot.slane %v5623, 1
    %v5853 = vsel %vm1012, %v5850, %v5852
    %v5854 = vrot.slane %v5624, 1
    %v5855 = vsel %vm1012, %v5852, %v5854
    %v5856 = vrot.slane %v5625, 1
    %v5857 = vrot.slane %v5626, 1
    %v5858 = vsel %vm1012, %v5856, %v5857
    %v5859 = vrot.slane %v5627, 1
    %v5860 = vsel %vm1012, %v5857, %v5859
    %v5861 = vrot.slane %v5628, 1
    %v5862 = vsel %vm1012, %v5859, %v5861
    %v5863 = vrot.slane %v5629, 1
    %v5864 = vrot.slane %v5630, 1
    %v5865 = vsel %vm1012, %v5863, %v5864
    %v5866 = vrot.slane %v5631, 1
    %v5867 = vsel %vm1012, %v5864, %v5866
    %v5868 = vrot.slane %v5632, 1
    %v5869 = vsel %vm1012, %v5866, %v5868
    %v5870 = vrot.slane %v5633, 1
    %v5871 = vrot.slane %v5634, 1
    %v5872 = vsel %vm1012, %v5870, %v5871
    %v5873 = vrot.slane %v5635, 1
    %v5874 = vsel %vm1012, %v5871, %v5873
    %v5875 = vrot.slane %v5636, 1
    %v5876 = vsel %vm1012, %v5873, %v5875
    %v5877 = vrot.slane %v5637, 1
    %v5878 = vrot.slane %v5638, 1
    %v5879 = vsel %vm1012, %v5877, %v5878
    %v5880 = vrot.slane %v5639, 1
    %v5881 = vsel %vm1012, %v5878, %v5880
    %v5882 = vrot.slane %v5640, 1
    %v5883 = vsel %vm1012, %v5880, %v5882
    %v5884 = vrot.slane %v5641, 1
    %v5885 = vrot.slane %v5642, 1
    %v5886 = vsel %vm1012, %v5884, %v5885
    %v5887 = vrot.slane %v5643, 1
    %v5888 = vsel %vm1012, %v5885, %v5887
    %v5889 = vrot.slane %v5644, 1
    %v5890 = vsel %vm1012, %v5887, %v5889
    %v5891 = vrot.slane %v5645, 1
    %v5892 = vrot.slane %v5646, 1
    %v5893 = vsel %vm1012, %v5891, %v5892
    %v5894 = vrot.slane %v5647, 1
    %v5895 = vsel %vm1012, %v5892, %v5894
    %v5896 = vrot.slane %v5648, 1
    %v5897 = vsel %vm1012, %v5894, %v5896
    %v5898 = vrot.slane %v5649, 1
    %v5899 = vrot.slane %v5650, 1
    %v5900 = vsel %vm1012, %v5898, %v5899
    %v5901 = vrot.slane %v5651, 1
    %v5902 = vsel %vm1012, %v5899, %v5901
    %v5903 = vrot.slane %v5652, 1
    %v5904 = vsel %vm1012, %v5901, %v5903
    %v5905 = vrot.slane %v5653, 1
    %v5906 = vrot.slane %v5654, 1
    %v5907 = vsel %vm1012, %v5905, %v5906
    %v5908 = vrot.slane %v5655, 1
    %v5909 = vsel %vm1012, %v5906, %v5908
    %v5910 = vrot.slane %v5656, 1
    %v5911 = vsel %vm1012, %v5908, %v5910
    %v5912 = vrot.slane %v5657, 1
    %v5913 = vrot.slane %v5658, 1
    %v5914 = vsel %vm1012, %v5912, %v5913
    %v5915 = vrot.slane %v5659, 1
    %v5916 = vsel %vm1012, %v5913, %v5915
    %v5917 = vrot.slane %v5660, 1
    %v5918 = vsel %vm1012, %v5915, %v5917
    %v5919 = vrot.slane %v5661, 1
    %v5920 = vrot.slane %v5662, 1
    %v5921 = vsel %vm1012, %v5919, %v5920
    %v5922 = vrot.slane %v5663, 1
    %v5923 = vsel %vm1012, %v5920, %v5922
    %v5924 = vrot.slane %v5664, 1
    %v5925 = vsel %vm1012, %v5922, %v5924
    %v5926 = vrot.slane %v5665, 1
    %v5927 = vrot.slane %v5666, 1
    %v5928 = vsel %vm1012, %v5926, %v5927
    %v5929 = vrot.slane %v5667, 1
    %v5930 = vsel %vm1012, %v5927, %v5929
    %v5931 = vrot.slane %v5668, 1
    %v5932 = vsel %vm1012, %v5929, %v5931
    %v6005 = vadd.f32 %v5499, %v5767
    %v6006 = vadd.f32 %v5500, %v5769
    %v6007 = vadd.f32 %v5501, %v5771
    %v6008 = vadd.f32 %v5502, %v5774
    %v6009 = vadd.f32 %v5503, %v5776
    %v6010 = vadd.f32 %v5504, %v5778
    %v6011 = vadd.f32 %v5505, %v5781
    %v6012 = vadd.f32 %v5506, %v5783
    %v6013 = vadd.f32 %v5507, %v5785
    %v6014 = vadd.f32 %v5508, %v5788
    %v6015 = vadd.f32 %v5509, %v5790
    %v6016 = vadd.f32 %v5510, %v5792
    %v6017 = vadd.f32 %v5511, %v5795
    %v6018 = vadd.f32 %v5512, %v5797
    %v6019 = vadd.f32 %v5513, %v5799
    %v6020 = vadd.f32 %v5514, %v5802
    %v6021 = vadd.f32 %v5515, %v5804
    %v6022 = vadd.f32 %v5516, %v5806
    %v6023 = vadd.f32 %v5517, %v5809
    %v6024 = vadd.f32 %v5518, %v5811
    %v6025 = vadd.f32 %v5519, %v5813
    %v6026 = vadd.f32 %v5520, %v5816
    %v6027 = vadd.f32 %v5521, %v5818
    %v6028 = vadd.f32 %v5522, %v5820
    %v6029 = vadd.f32 %v5523, %v5823
    %v6030 = vadd.f32 %v5524, %v5825
    %v6031 = vadd.f32 %v5525, %v5827
    %v6032 = vadd.f32 %v5526, %v5830
    %v6033 = vadd.f32 %v5527, %v5832
    %v6034 = vadd.f32 %v5528, %v5834
    %v6035 = vadd.f32 %v5529, %v5837
    %v6036 = vadd.f32 %v5530, %v5839
    %v6037 = vadd.f32 %v5531, %v5841
    %v6038 = vadd.f32 %v5532, %v5844
    %v6039 = vadd.f32 %v5533, %v5846
    %v6040 = vadd.f32 %v5534, %v5848
    %v6041 = vadd.f32 %v5535, %v5851
    %v6042 = vadd.f32 %v5536, %v5853
    %v6043 = vadd.f32 %v5537, %v5855
    %v6044 = vadd.f32 %v5538, %v5858
    %v6045 = vadd.f32 %v5539, %v5860
    %v6046 = vadd.f32 %v5540, %v5862
    %v6047 = vadd.f32 %v5541, %v5865
    %v6048 = vadd.f32 %v5542, %v5867
    %v6049 = vadd.f32 %v5543, %v5869
    %v6050 = vadd.f32 %v5544, %v5872
    %v6051 = vadd.f32 %v5545, %v5874
    %v6052 = vadd.f32 %v5546, %v5876
    %v6053 = vadd.f32 %v5547, %v5879
    %v6054 = vadd.f32 %v5548, %v5881
    %v6055 = vadd.f32 %v5549, %v5883
    %v6056 = vadd.f32 %v5550, %v5886
    %v6057 = vadd.f32 %v5551, %v5888
    %v6058 = vadd.f32 %v5552, %v5890
    %v6059 = vadd.f32 %v5553, %v5893
    %v6060 = vadd.f32 %v5554, %v5895
    %v6061 = vadd.f32 %v5555, %v5897
    %v6062 = vadd.f32 %v5556, %v5900
    %v6063 = vadd.f32 %v5557, %v5902
    %v6064 = vadd.f32 %v5558, %v5904
    %v6065 = vadd.f32 %v5559, %v5907
    %v6066 = vadd.f32 %v5560, %v5909
    %v6067 = vadd.f32 %v5561, %v5911
    %v6068 = vadd.f32 %v5562, %v5914
    %v6069 = vadd.f32 %v5563, %v5916
    %v6070 = vadd.f32 %v5564, %v5918
    %v6071 = vadd.f32 %v5565, %v5921
    %v6072 = vadd.f32 %v5566, %v5923
    %v6073 = vadd.f32 %v5567, %v5925
    %v6074 = vadd.f32 %v5568, %v5928
    %v6075 = vadd.f32 %v5569, %v5930
    %v6076 = vadd.f32 %v5570, %v5932
    %s6077 = sld [smem:[#allocation2 + $0x84]]
    %v6078 = vstv %s6077
    %v6079 = vmul.f32 %v5105, %v6078
    %v6080 = vmul.f32 %v5106, %v6078
    %v6081 = vmul.f32 %v5107, %v6078
    %v6082 = vmul.f32 %v5108, %v6078
    %v6083 = vmul.f32 %v5109, %v6078
    %v6084 = vmul.f32 %v5110, %v6078
    %v6085 = vmul.f32 %v5111, %v6078
    %v6086 = vmul.f32 %v5112, %v6078
    %v6087 = vmul.f32 %v5113, %v6078
    %v6088 = vmul.f32 %v5114, %v6078
    %v6089 = vmul.f32 %v5115, %v6078
    %v6090 = vmul.f32 %v5116, %v6078
    %v6091 = vmul.f32 %v5117, %v6078
    %v6092 = vmul.f32 %v5118, %v6078
    %v6093 = vmul.f32 %v5119, %v6078
    %v6094 = vmul.f32 %v5120, %v6078
    %v6095 = vmul.f32 %v5121, %v6078
    %v6096 = vmul.f32 %v5122, %v6078
    %v6097 = vmul.f32 %v5123, %v6078
    %v6098 = vmul.f32 %v5124, %v6078
    %v6099 = vmul.f32 %v5125, %v6078
    %v6100 = vmul.f32 %v5126, %v6078
    %v6101 = vmul.f32 %v5127, %v6078
    %v6102 = vmul.f32 %v5128, %v6078
    %v6103 = vmul.f32 %v5129, %v6078
    %v6104 = vmul.f32 %v5130, %v6078
    %v6105 = vmul.f32 %v5131, %v6078
    %v6106 = vmul.f32 %v5132, %v6078
    %v6107 = vmul.f32 %v5133, %v6078
    %v6108 = vmul.f32 %v5134, %v6078
    %v6109 = vmul.f32 %v5135, %v6078
    %v6110 = vmul.f32 %v5136, %v6078
    %v6111 = vmul.f32 %v5137, %v6078
    %v6112 = vmul.f32 %v5138, %v6078
    %v6113 = vmul.f32 %v5139, %v6078
    %v6114 = vmul.f32 %v5140, %v6078
    %v6115 = vmul.f32 %v5141, %v6078
    %v6116 = vmul.f32 %v5142, %v6078
    %v6117 = vmul.f32 %v5143, %v6078
    %v6118 = vmul.f32 %v5144, %v6078
    %v6119 = vmul.f32 %v5145, %v6078
    %v6120 = vmul.f32 %v5146, %v6078
    %v6121 = vmul.f32 %v5147, %v6078
    %v6122 = vmul.f32 %v5148, %v6078
    %v6123 = vmul.f32 %v5149, %v6078
    %v6124 = vmul.f32 %v5150, %v6078
    %v6125 = vmul.f32 %v5151, %v6078
    %v6126 = vmul.f32 %v5152, %v6078
    %v6127 = vmul.f32 %v5153, %v6078
    %v6128 = vmul.f32 %v5154, %v6078
    %v6129 = vmul.f32 %v5155, %v6078
    %v6130 = vmul.f32 %v5156, %v6078
    %v6131 = vmul.f32 %v5157, %v6078
    %v6132 = vmul.f32 %v5158, %v6078
    %v6133 = vmul.f32 %v5159, %v6078
    %v6134 = vmul.f32 %v5160, %v6078
    %v6135 = vmul.f32 %v5161, %v6078
    %v6136 = vmul.f32 %v5162, %v6078
    %v6137 = vmul.f32 %v5163, %v6078
    %v6138 = vmul.f32 %v5164, %v6078
    %v6139 = vmul.f32 %v5165, %v6078
    %v6140 = vmul.f32 %v5166, %v6078
    %v6141 = vmul.f32 %v5167, %v6078
    %v6142 = vmul.f32 %v5168, %v6078
    %v6143 = vmul.f32 %v5169, %v6078
    %v6144 = vmul.f32 %v5170, %v6078
    %v6145 = vmul.f32 %v5171, %v6078
    %v6146 = vmul.f32 %v5172, %v6078
    %v6147 = vmul.f32 %v5173, %v6078
    %v6148 = vmul.f32 %v5174, %v6078
    %v6149 = vmul.f32 %v5175, %v6078
    %v6150 = vmul.f32 %v5176, %v6078
    %v6151 = vmul.f32 %v5177, %v6078
    %v6152 = vmul.f32 %v5178, %v6078
    %v6153 = vmul.f32 %v5179, %v6078
    %v6154 = vmul.f32 %v5180, %v6078
    %v6155 = vmul.f32 %v5181, %v6078
    %v6156 = vmul.f32 %v5182, %v6078
    %v6157 = vmul.f32 %v5183, %v6078
    %v6158 = vmul.f32 %v5184, %v6078
    %v6159 = vmul.f32 %v5185, %v6078
    %v6160 = vmul.f32 %v5186, %v6078
    %v6161 = vmul.f32 %v5187, %v6078
    %v6162 = vmul.f32 %v5188, %v6078
    %v6163 = vmul.f32 %v5189, %v6078
    %v6164 = vmul.f32 %v5190, %v6078
    %v6165 = vmul.f32 %v5191, %v6078
    %v6166 = vmul.f32 %v5192, %v6078
    %v6167 = vmul.f32 %v5193, %v6078
    %v6168 = vmul.f32 %v5194, %v6078
    %v6169 = vmul.f32 %v5195, %v6078
    %v6170 = vmul.f32 %v5196, %v6078
    %v6171 = vmul.f32 %v5197, %v6078
    %v6172 = vmul.f32 %v5198, %v6078
    %v6173 = vmul.f32 %v5199, %v6078
    %v6174 = vmul.f32 %v5200, %v6078
    %v6271 = vrot.slane %v6079, 1
    %v6272 = vrot.slane %v6080, 1
    %v6273 = vsel %vm1012, %v6271, %v6272
    %v6274 = vrot.slane %v6081, 1
    %v6275 = vsel %vm1012, %v6272, %v6274
    %v6276 = vrot.slane %v6082, 1
    %v6277 = vsel %vm1012, %v6274, %v6276
    %v6278 = vrot.slane %v6083, 1
    %v6279 = vrot.slane %v6084, 1
    %v6280 = vsel %vm1012, %v6278, %v6279
    %v6281 = vrot.slane %v6085, 1
    %v6282 = vsel %vm1012, %v6279, %v6281
    %v6283 = vrot.slane %v6086, 1
    %v6284 = vsel %vm1012, %v6281, %v6283
    %v6285 = vrot.slane %v6087, 1
    %v6286 = vrot.slane %v6088, 1
    %v6287 = vsel %vm1012, %v6285, %v6286
    %v6288 = vrot.slane %v6089, 1
    %v6289 = vsel %vm1012, %v6286, %v6288
    %v6290 = vrot.slane %v6090, 1
    %v6291 = vsel %vm1012, %v6288, %v6290
    %v6292 = vrot.slane %v6091, 1
    %v6293 = vrot.slane %v6092, 1
    %v6294 = vsel %vm1012, %v6292, %v6293
    %v6295 = vrot.slane %v6093, 1
    %v6296 = vsel %vm1012, %v6293, %v6295
    %v6297 = vrot.slane %v6094, 1
    %v6298 = vsel %vm1012, %v6295, %v6297
    %v6299 = vrot.slane %v6095, 1
    %v6300 = vrot.slane %v6096, 1
    %v6301 = vsel %vm1012, %v6299, %v6300
    %v6302 = vrot.slane %v6097, 1
    %v6303 = vsel %vm1012, %v6300, %v6302
    %v6304 = vrot.slane %v6098, 1
    %v6305 = vsel %vm1012, %v6302, %v6304
    %v6306 = vrot.slane %v6099, 1
    %v6307 = vrot.slane %v6100, 1
    %v6308 = vsel %vm1012, %v6306, %v6307
    %v6309 = vrot.slane %v6101, 1
    %v6310 = vsel %vm1012, %v6307, %v6309
    %v6311 = vrot.slane %v6102, 1
    %v6312 = vsel %vm1012, %v6309, %v6311
    %v6313 = vrot.slane %v6103, 1
    %v6314 = vrot.slane %v6104, 1
    %v6315 = vsel %vm1012, %v6313, %v6314
    %v6316 = vrot.slane %v6105, 1
    %v6317 = vsel %vm1012, %v6314, %v6316
    %v6318 = vrot.slane %v6106, 1
    %v6319 = vsel %vm1012, %v6316, %v6318
    %v6320 = vrot.slane %v6107, 1
    %v6321 = vrot.slane %v6108, 1
    %v6322 = vsel %vm1012, %v6320, %v6321
    %v6323 = vrot.slane %v6109, 1
    %v6324 = vsel %vm1012, %v6321, %v6323
    %v6325 = vrot.slane %v6110, 1
    %v6326 = vsel %vm1012, %v6323, %v6325
    %v6327 = vrot.slane %v6111, 1
    %v6328 = vrot.slane %v6112, 1
    %v6329 = vsel %vm1012, %v6327, %v6328
    %v6330 = vrot.slane %v6113, 1
    %v6331 = vsel %vm1012, %v6328, %v6330
    %v6332 = vrot.slane %v6114, 1
    %v6333 = vsel %vm1012, %v6330, %v6332
    %v6334 = vrot.slane %v6115, 1
    %v6335 = vrot.slane %v6116, 1
    %v6336 = vsel %vm1012, %v6334, %v6335
    %v6337 = vrot.slane %v6117, 1
    %v6338 = vsel %vm1012, %v6335, %v6337
    %v6339 = vrot.slane %v6118, 1
    %v6340 = vsel %vm1012, %v6337, %v6339
    %v6341 = vrot.slane %v6119, 1
    %v6342 = vrot.slane %v6120, 1
    %v6343 = vsel %vm1012, %v6341, %v6342
    %v6344 = vrot.slane %v6121, 1
    %v6345 = vsel %vm1012, %v6342, %v6344
    %v6346 = vrot.slane %v6122, 1
    %v6347 = vsel %vm1012, %v6344, %v6346
    %v6348 = vrot.slane %v6123, 1
    %v6349 = vrot.slane %v6124, 1
    %v6350 = vsel %vm1012, %v6348, %v6349
    %v6351 = vrot.slane %v6125, 1
    %v6352 = vsel %vm1012, %v6349, %v6351
    %v6353 = vrot.slane %v6126, 1
    %v6354 = vsel %vm1012, %v6351, %v6353
    %v6355 = vrot.slane %v6127, 1
    %v6356 = vrot.slane %v6128, 1
    %v6357 = vsel %vm1012, %v6355, %v6356
    %v6358 = vrot.slane %v6129, 1
    %v6359 = vsel %vm1012, %v6356, %v6358
    %v6360 = vrot.slane %v6130, 1
    %v6361 = vsel %vm1012, %v6358, %v6360
    %v6362 = vrot.slane %v6131, 1
    %v6363 = vrot.slane %v6132, 1
    %v6364 = vsel %vm1012, %v6362, %v6363
    %v6365 = vrot.slane %v6133, 1
    %v6366 = vsel %vm1012, %v6363, %v6365
    %v6367 = vrot.slane %v6134, 1
    %v6368 = vsel %vm1012, %v6365, %v6367
    %v6369 = vrot.slane %v6135, 1
    %v6370 = vrot.slane %v6136, 1
    %v6371 = vsel %vm1012, %v6369, %v6370
    %v6372 = vrot.slane %v6137, 1
    %v6373 = vsel %vm1012, %v6370, %v6372
    %v6374 = vrot.slane %v6138, 1
    %v6375 = vsel %vm1012, %v6372, %v6374
    %v6376 = vrot.slane %v6139, 1
    %v6377 = vrot.slane %v6140, 1
    %v6378 = vsel %vm1012, %v6376, %v6377
    %v6379 = vrot.slane %v6141, 1
    %v6380 = vsel %vm1012, %v6377, %v6379
    %v6381 = vrot.slane %v6142, 1
    %v6382 = vsel %vm1012, %v6379, %v6381
    %v6383 = vrot.slane %v6143, 1
    %v6384 = vrot.slane %v6144, 1
    %v6385 = vsel %vm1012, %v6383, %v6384
    %v6386 = vrot.slane %v6145, 1
    %v6387 = vsel %vm1012, %v6384, %v6386
    %v6388 = vrot.slane %v6146, 1
    %v6389 = vsel %vm1012, %v6386, %v6388
    %v6390 = vrot.slane %v6147, 1
    %v6391 = vrot.slane %v6148, 1
    %v6392 = vsel %vm1012, %v6390, %v6391
    %v6393 = vrot.slane %v6149, 1
    %v6394 = vsel %vm1012, %v6391, %v6393
    %v6395 = vrot.slane %v6150, 1
    %v6396 = vsel %vm1012, %v6393, %v6395
    %v6397 = vrot.slane %v6151, 1
    %v6398 = vrot.slane %v6152, 1
    %v6399 = vsel %vm1012, %v6397, %v6398
    %v6400 = vrot.slane %v6153, 1
    %v6401 = vsel %vm1012, %v6398, %v6400
    %v6402 = vrot.slane %v6154, 1
    %v6403 = vsel %vm1012, %v6400, %v6402
    %v6404 = vrot.slane %v6155, 1
    %v6405 = vrot.slane %v6156, 1
    %v6406 = vsel %vm1012, %v6404, %v6405
    %v6407 = vrot.slane %v6157, 1
    %v6408 = vsel %vm1012, %v6405, %v6407
    %v6409 = vrot.slane %v6158, 1
    %v6410 = vsel %vm1012, %v6407, %v6409
    %v6411 = vrot.slane %v6159, 1
    %v6412 = vrot.slane %v6160, 1
    %v6413 = vsel %vm1012, %v6411, %v6412
    %v6414 = vrot.slane %v6161, 1
    %v6415 = vsel %vm1012, %v6412, %v6414
    %v6416 = vrot.slane %v6162, 1
    %v6417 = vsel %vm1012, %v6414, %v6416
    %v6418 = vrot.slane %v6163, 1
    %v6419 = vrot.slane %v6164, 1
    %v6420 = vsel %vm1012, %v6418, %v6419
    %v6421 = vrot.slane %v6165, 1
    %v6422 = vsel %vm1012, %v6419, %v6421
    %v6423 = vrot.slane %v6166, 1
    %v6424 = vsel %vm1012, %v6421, %v6423
    %v6425 = vrot.slane %v6167, 1
    %v6426 = vrot.slane %v6168, 1
    %v6427 = vsel %vm1012, %v6425, %v6426
    %v6428 = vrot.slane %v6169, 1
    %v6429 = vsel %vm1012, %v6426, %v6428
    %v6430 = vrot.slane %v6170, 1
    %v6431 = vsel %vm1012, %v6428, %v6430
    %v6432 = vrot.slane %v6171, 1
    %v6433 = vrot.slane %v6172, 1
    %v6434 = vsel %vm1012, %v6432, %v6433
    %v6435 = vrot.slane %v6173, 1
    %v6436 = vsel %vm1012, %v6433, %v6435
    %v6437 = vrot.slane %v6174, 1
    %v6438 = vsel %vm1012, %v6435, %v6437
    %v6511 = vadd.f32 %v6005, %v6273
    %v6512 = vadd.f32 %v6006, %v6275
    %v6513 = vadd.f32 %v6007, %v6277
    %v6514 = vadd.f32 %v6008, %v6280
    %v6515 = vadd.f32 %v6009, %v6282
    %v6516 = vadd.f32 %v6010, %v6284
    %v6517 = vadd.f32 %v6011, %v6287
    %v6518 = vadd.f32 %v6012, %v6289
    %v6519 = vadd.f32 %v6013, %v6291
    %v6520 = vadd.f32 %v6014, %v6294
    %v6521 = vadd.f32 %v6015, %v6296
    %v6522 = vadd.f32 %v6016, %v6298
    %v6523 = vadd.f32 %v6017, %v6301
    %v6524 = vadd.f32 %v6018, %v6303
    %v6525 = vadd.f32 %v6019, %v6305
    %v6526 = vadd.f32 %v6020, %v6308
    %v6527 = vadd.f32 %v6021, %v6310
    %v6528 = vadd.f32 %v6022, %v6312
    %v6529 = vadd.f32 %v6023, %v6315
    %v6530 = vadd.f32 %v6024, %v6317
    %v6531 = vadd.f32 %v6025, %v6319
    %v6532 = vadd.f32 %v6026, %v6322
    %v6533 = vadd.f32 %v6027, %v6324
    %v6534 = vadd.f32 %v6028, %v6326
    %v6535 = vadd.f32 %v6029, %v6329
    %v6536 = vadd.f32 %v6030, %v6331
    %v6537 = vadd.f32 %v6031, %v6333
    %v6538 = vadd.f32 %v6032, %v6336
    %v6539 = vadd.f32 %v6033, %v6338
    %v6540 = vadd.f32 %v6034, %v6340
    %v6541 = vadd.f32 %v6035, %v6343
    %v6542 = vadd.f32 %v6036, %v6345
    %v6543 = vadd.f32 %v6037, %v6347
    %v6544 = vadd.f32 %v6038, %v6350
    %v6545 = vadd.f32 %v6039, %v6352
    %v6546 = vadd.f32 %v6040, %v6354
    %v6547 = vadd.f32 %v6041, %v6357
    %v6548 = vadd.f32 %v6042, %v6359
    %v6549 = vadd.f32 %v6043, %v6361
    %v6550 = vadd.f32 %v6044, %v6364
    %v6551 = vadd.f32 %v6045, %v6366
    %v6552 = vadd.f32 %v6046, %v6368
    %v6553 = vadd.f32 %v6047, %v6371
    %v6554 = vadd.f32 %v6048, %v6373
    %v6555 = vadd.f32 %v6049, %v6375
    %v6556 = vadd.f32 %v6050, %v6378
    %v6557 = vadd.f32 %v6051, %v6380
    %v6558 = vadd.f32 %v6052, %v6382
    %v6559 = vadd.f32 %v6053, %v6385
    %v6560 = vadd.f32 %v6054, %v6387
    %v6561 = vadd.f32 %v6055, %v6389
    %v6562 = vadd.f32 %v6056, %v6392
    %v6563 = vadd.f32 %v6057, %v6394
    %v6564 = vadd.f32 %v6058, %v6396
    %v6565 = vadd.f32 %v6059, %v6399
    %v6566 = vadd.f32 %v6060, %v6401
    %v6567 = vadd.f32 %v6061, %v6403
    %v6568 = vadd.f32 %v6062, %v6406
    %v6569 = vadd.f32 %v6063, %v6408
    %v6570 = vadd.f32 %v6064, %v6410
    %v6571 = vadd.f32 %v6065, %v6413
    %v6572 = vadd.f32 %v6066, %v6415
    %v6573 = vadd.f32 %v6067, %v6417
    %v6574 = vadd.f32 %v6068, %v6420
    %v6575 = vadd.f32 %v6069, %v6422
    %v6576 = vadd.f32 %v6070, %v6424
    %v6577 = vadd.f32 %v6071, %v6427
    %v6578 = vadd.f32 %v6072, %v6429
    %v6579 = vadd.f32 %v6073, %v6431
    %v6580 = vadd.f32 %v6074, %v6434
    %v6581 = vadd.f32 %v6075, %v6436
    %v6582 = vadd.f32 %v6076, %v6438
    %s6583 = sld [smem:[#allocation2 + $0x87]]
    %v6584 = vstv %s6583
    %v6585 = vmul.f32 %v5109, %v6584
    %v6586 = vmul.f32 %v5110, %v6584
    %v6587 = vmul.f32 %v5111, %v6584
    %v6588 = vmul.f32 %v5112, %v6584
    %v6589 = vmul.f32 %v5113, %v6584
    %v6590 = vmul.f32 %v5114, %v6584
    %v6591 = vmul.f32 %v5115, %v6584
    %v6592 = vmul.f32 %v5116, %v6584
    %v6593 = vmul.f32 %v5117, %v6584
    %v6594 = vmul.f32 %v5118, %v6584
    %v6595 = vmul.f32 %v5119, %v6584
    %v6596 = vmul.f32 %v5120, %v6584
    %v6597 = vmul.f32 %v5121, %v6584
    %v6598 = vmul.f32 %v5122, %v6584
    %v6599 = vmul.f32 %v5123, %v6584
    %v6600 = vmul.f32 %v5124, %v6584
    %v6601 = vmul.f32 %v5125, %v6584
    %v6602 = vmul.f32 %v5126, %v6584
    %v6603 = vmul.f32 %v5127, %v6584
    %v6604 = vmul.f32 %v5128, %v6584
    %v6605 = vmul.f32 %v5129, %v6584
    %v6606 = vmul.f32 %v5130, %v6584
    %v6607 = vmul.f32 %v5131, %v6584
    %v6608 = vmul.f32 %v5132, %v6584
    %v6609 = vmul.f32 %v5133, %v6584
    %v6610 = vmul.f32 %v5134, %v6584
    %v6611 = vmul.f32 %v5135, %v6584
    %v6612 = vmul.f32 %v5136, %v6584
    %v6613 = vmul.f32 %v5137, %v6584
    %v6614 = vmul.f32 %v5138, %v6584
    %v6615 = vmul.f32 %v5139, %v6584
    %v6616 = vmul.f32 %v5140, %v6584
    %v6617 = vmul.f32 %v5141, %v6584
    %v6618 = vmul.f32 %v5142, %v6584
    %v6619 = vmul.f32 %v5143, %v6584
    %v6620 = vmul.f32 %v5144, %v6584
    %v6621 = vmul.f32 %v5145, %v6584
    %v6622 = vmul.f32 %v5146, %v6584
    %v6623 = vmul.f32 %v5147, %v6584
    %v6624 = vmul.f32 %v5148, %v6584
    %v6625 = vmul.f32 %v5149, %v6584
    %v6626 = vmul.f32 %v5150, %v6584
    %v6627 = vmul.f32 %v5151, %v6584
    %v6628 = vmul.f32 %v5152, %v6584
    %v6629 = vmul.f32 %v5153, %v6584
    %v6630 = vmul.f32 %v5154, %v6584
    %v6631 = vmul.f32 %v5155, %v6584
    %v6632 = vmul.f32 %v5156, %v6584
    %v6633 = vmul.f32 %v5157, %v6584
    %v6634 = vmul.f32 %v5158, %v6584
    %v6635 = vmul.f32 %v5159, %v6584
    %v6636 = vmul.f32 %v5160, %v6584
    %v6637 = vmul.f32 %v5161, %v6584
    %v6638 = vmul.f32 %v5162, %v6584
    %v6639 = vmul.f32 %v5163, %v6584
    %v6640 = vmul.f32 %v5164, %v6584
    %v6641 = vmul.f32 %v5165, %v6584
    %v6642 = vmul.f32 %v5166, %v6584
    %v6643 = vmul.f32 %v5167, %v6584
    %v6644 = vmul.f32 %v5168, %v6584
    %v6645 = vmul.f32 %v5169, %v6584
    %v6646 = vmul.f32 %v5170, %v6584
    %v6647 = vmul.f32 %v5171, %v6584
    %v6648 = vmul.f32 %v5172, %v6584
    %v6649 = vmul.f32 %v5173, %v6584
    %v6650 = vmul.f32 %v5174, %v6584
    %v6651 = vmul.f32 %v5175, %v6584
    %v6652 = vmul.f32 %v5176, %v6584
    %v6653 = vmul.f32 %v5177, %v6584
    %v6654 = vmul.f32 %v5178, %v6584
    %v6655 = vmul.f32 %v5179, %v6584
    %v6656 = vmul.f32 %v5180, %v6584
    %v6657 = vmul.f32 %v5181, %v6584
    %v6658 = vmul.f32 %v5182, %v6584
    %v6659 = vmul.f32 %v5183, %v6584
    %v6660 = vmul.f32 %v5184, %v6584
    %v6661 = vmul.f32 %v5185, %v6584
    %v6662 = vmul.f32 %v5186, %v6584
    %v6663 = vmul.f32 %v5187, %v6584
    %v6664 = vmul.f32 %v5188, %v6584
    %v6665 = vmul.f32 %v5189, %v6584
    %v6666 = vmul.f32 %v5190, %v6584
    %v6667 = vmul.f32 %v5191, %v6584
    %v6668 = vmul.f32 %v5192, %v6584
    %v6669 = vmul.f32 %v5193, %v6584
    %v6670 = vmul.f32 %v5194, %v6584
    %v6671 = vmul.f32 %v5195, %v6584
    %v6672 = vmul.f32 %v5196, %v6584
    %v6673 = vmul.f32 %v5197, %v6584
    %v6674 = vmul.f32 %v5198, %v6584
    %v6675 = vmul.f32 %v5199, %v6584
    %v6676 = vmul.f32 %v5200, %v6584
    %v6677 = vmul.f32 %v5201, %v6584
    %v6678 = vmul.f32 %v5202, %v6584
    %v6679 = vmul.f32 %v5203, %v6584
    %v6680 = vmul.f32 %v5204, %v6584
    %v6777 = vrot.slane %v6585, 1
    %v6778 = vrot.slane %v6586, 1
    %v6779 = vsel %vm1012, %v6777, %v6778
    %v6780 = vrot.slane %v6587, 1
    %v6781 = vsel %vm1012, %v6778, %v6780
    %v6782 = vrot.slane %v6588, 1
    %v6783 = vsel %vm1012, %v6780, %v6782
    %v6784 = vrot.slane %v6589, 1
    %v6785 = vrot.slane %v6590, 1
    %v6786 = vsel %vm1012, %v6784, %v6785
    %v6787 = vrot.slane %v6591, 1
    %v6788 = vsel %vm1012, %v6785, %v6787
    %v6789 = vrot.slane %v6592, 1
    %v6790 = vsel %vm1012, %v6787, %v6789
    %v6791 = vrot.slane %v6593, 1
    %v6792 = vrot.slane %v6594, 1
    %v6793 = vsel %vm1012, %v6791, %v6792
    %v6794 = vrot.slane %v6595, 1
    %v6795 = vsel %vm1012, %v6792, %v6794
    %v6796 = vrot.slane %v6596, 1
    %v6797 = vsel %vm1012, %v6794, %v6796
    %v6798 = vrot.slane %v6597, 1
    %v6799 = vrot.slane %v6598, 1
    %v6800 = vsel %vm1012, %v6798, %v6799
    %v6801 = vrot.slane %v6599, 1
    %v6802 = vsel %vm1012, %v6799, %v6801
    %v6803 = vrot.slane %v6600, 1
    %v6804 = vsel %vm1012, %v6801, %v6803
    %v6805 = vrot.slane %v6601, 1
    %v6806 = vrot.slane %v6602, 1
    %v6807 = vsel %vm1012, %v6805, %v6806
    %v6808 = vrot.slane %v6603, 1
    %v6809 = vsel %vm1012, %v6806, %v6808
    %v6810 = vrot.slane %v6604, 1
    %v6811 = vsel %vm1012, %v6808, %v6810
    %v6812 = vrot.slane %v6605, 1
    %v6813 = vrot.slane %v6606, 1
    %v6814 = vsel %vm1012, %v6812, %v6813
    %v6815 = vrot.slane %v6607, 1
    %v6816 = vsel %vm1012, %v6813, %v6815
    %v6817 = vrot.slane %v6608, 1
    %v6818 = vsel %vm1012, %v6815, %v6817
    %v6819 = vrot.slane %v6609, 1
    %v6820 = vrot.slane %v6610, 1
    %v6821 = vsel %vm1012, %v6819, %v6820
    %v6822 = vrot.slane %v6611, 1
    %v6823 = vsel %vm1012, %v6820, %v6822
    %v6824 = vrot.slane %v6612, 1
    %v6825 = vsel %vm1012, %v6822, %v6824
    %v6826 = vrot.slane %v6613, 1
    %v6827 = vrot.slane %v6614, 1
    %v6828 = vsel %vm1012, %v6826, %v6827
    %v6829 = vrot.slane %v6615, 1
    %v6830 = vsel %vm1012, %v6827, %v6829
    %v6831 = vrot.slane %v6616, 1
    %v6832 = vsel %vm1012, %v6829, %v6831
    %v6833 = vrot.slane %v6617, 1
    %v6834 = vrot.slane %v6618, 1
    %v6835 = vsel %vm1012, %v6833, %v6834
    %v6836 = vrot.slane %v6619, 1
    %v6837 = vsel %vm1012, %v6834, %v6836
    %v6838 = vrot.slane %v6620, 1
    %v6839 = vsel %vm1012, %v6836, %v6838
    %v6840 = vrot.slane %v6621, 1
    %v6841 = vrot.slane %v6622, 1
    %v6842 = vsel %vm1012, %v6840, %v6841
    %v6843 = vrot.slane %v6623, 1
    %v6844 = vsel %vm1012, %v6841, %v6843
    %v6845 = vrot.slane %v6624, 1
    %v6846 = vsel %vm1012, %v6843, %v6845
    %v6847 = vrot.slane %v6625, 1
    %v6848 = vrot.slane %v6626, 1
    %v6849 = vsel %vm1012, %v6847, %v6848
    %v6850 = vrot.slane %v6627, 1
    %v6851 = vsel %vm1012, %v6848, %v6850
    %v6852 = vrot.slane %v6628, 1
    %v6853 = vsel %vm1012, %v6850, %v6852
    %v6854 = vrot.slane %v6629, 1
    %v6855 = vrot.slane %v6630, 1
    %v6856 = vsel %vm1012, %v6854, %v6855
    %v6857 = vrot.slane %v6631, 1
    %v6858 = vsel %vm1012, %v6855, %v6857
    %v6859 = vrot.slane %v6632, 1
    %v6860 = vsel %vm1012, %v6857, %v6859
    %v6861 = vrot.slane %v6633, 1
    %v6862 = vrot.slane %v6634, 1
    %v6863 = vsel %vm1012, %v6861, %v6862
    %v6864 = vrot.slane %v6635, 1
    %v6865 = vsel %vm1012, %v6862, %v6864
    %v6866 = vrot.slane %v6636, 1
    %v6867 = vsel %vm1012, %v6864, %v6866
    %v6868 = vrot.slane %v6637, 1
    %v6869 = vrot.slane %v6638, 1
    %v6870 = vsel %vm1012, %v6868, %v6869
    %v6871 = vrot.slane %v6639, 1
    %v6872 = vsel %vm1012, %v6869, %v6871
    %v6873 = vrot.slane %v6640, 1
    %v6874 = vsel %vm1012, %v6871, %v6873
    %v6875 = vrot.slane %v6641, 1
    %v6876 = vrot.slane %v6642, 1
    %v6877 = vsel %vm1012, %v6875, %v6876
    %v6878 = vrot.slane %v6643, 1
    %v6879 = vsel %vm1012, %v6876, %v6878
    %v6880 = vrot.slane %v6644, 1
    %v6881 = vsel %vm1012, %v6878, %v6880
    %v6882 = vrot.slane %v6645, 1
    %v6883 = vrot.slane %v6646, 1
    %v6884 = vsel %vm1012, %v6882, %v6883
    %v6885 = vrot.slane %v6647, 1
    %v6886 = vsel %vm1012, %v6883, %v6885
    %v6887 = vrot.slane %v6648, 1
    %v6888 = vsel %vm1012, %v6885, %v6887
    %v6889 = vrot.slane %v6649, 1
    %v6890 = vrot.slane %v6650, 1
    %v6891 = vsel %vm1012, %v6889, %v6890
    %v6892 = vrot.slane %v6651, 1
    %v6893 = vsel %vm1012, %v6890, %v6892
    %v6894 = vrot.slane %v6652, 1
    %v6895 = vsel %vm1012, %v6892, %v6894
    %v6896 = vrot.slane %v6653, 1
    %v6897 = vrot.slane %v6654, 1
    %v6898 = vsel %vm1012, %v6896, %v6897
    %v6899 = vrot.slane %v6655, 1
    %v6900 = vsel %vm1012, %v6897, %v6899
    %v6901 = vrot.slane %v6656, 1
    %v6902 = vsel %vm1012, %v6899, %v6901
    %v6903 = vrot.slane %v6657, 1
    %v6904 = vrot.slane %v6658, 1
    %v6905 = vsel %vm1012, %v6903, %v6904
    %v6906 = vrot.slane %v6659, 1
    %v6907 = vsel %vm1012, %v6904, %v6906
    %v6908 = vrot.slane %v6660, 1
    %v6909 = vsel %vm1012, %v6906, %v6908
    %v6910 = vrot.slane %v6661, 1
    %v6911 = vrot.slane %v6662, 1
    %v6912 = vsel %vm1012, %v6910, %v6911
    %v6913 = vrot.slane %v6663, 1
    %v6914 = vsel %vm1012, %v6911, %v6913
    %v6915 = vrot.slane %v6664, 1
    %v6916 = vsel %vm1012, %v6913, %v6915
    %v6917 = vrot.slane %v6665, 1
    %v6918 = vrot.slane %v6666, 1
    %v6919 = vsel %vm1012, %v6917, %v6918
    %v6920 = vrot.slane %v6667, 1
    %v6921 = vsel %vm1012, %v6918, %v6920
    %v6922 = vrot.slane %v6668, 1
    %v6923 = vsel %vm1012, %v6920, %v6922
    %v6924 = vrot.slane %v6669, 1
    %v6925 = vrot.slane %v6670, 1
    %v6926 = vsel %vm1012, %v6924, %v6925
    %v6927 = vrot.slane %v6671, 1
    %v6928 = vsel %vm1012, %v6925, %v6927
    %v6929 = vrot.slane %v6672, 1
    %v6930 = vsel %vm1012, %v6927, %v6929
    %v6931 = vrot.slane %v6673, 1
    %v6932 = vrot.slane %v6674, 1
    %v6933 = vsel %vm1012, %v6931, %v6932
    %v6934 = vrot.slane %v6675, 1
    %v6935 = vsel %vm1012, %v6932, %v6934
    %v6936 = vrot.slane %v6676, 1
    %v6937 = vsel %vm1012, %v6934, %v6936
    %v6938 = vrot.slane %v6677, 1
    %v6939 = vrot.slane %v6678, 1
    %v6940 = vsel %vm1012, %v6938, %v6939
    %v6941 = vrot.slane %v6679, 1
    %v6942 = vsel %vm1012, %v6939, %v6941
    %v6943 = vrot.slane %v6680, 1
    %v6944 = vsel %vm1012, %v6941, %v6943
    %v7017 = vadd.f32 %v6511, %v6779
    %v7018 = vadd.f32 %v6512, %v6781
    %v7019 = vadd.f32 %v6513, %v6783
    %v7020 = vadd.f32 %v6514, %v6786
    %v7021 = vadd.f32 %v6515, %v6788
    %v7022 = vadd.f32 %v6516, %v6790
    %v7023 = vadd.f32 %v6517, %v6793
    %v7024 = vadd.f32 %v6518, %v6795
    %v7025 = vadd.f32 %v6519, %v6797
    %v7026 = vadd.f32 %v6520, %v6800
    %v7027 = vadd.f32 %v6521, %v6802
    %v7028 = vadd.f32 %v6522, %v6804
    %v7029 = vadd.f32 %v6523, %v6807
    %v7030 = vadd.f32 %v6524, %v6809
    %v7031 = vadd.f32 %v6525, %v6811
    %v7032 = vadd.f32 %v6526, %v6814
    %v7033 = vadd.f32 %v6527, %v6816
    %v7034 = vadd.f32 %v6528, %v6818
    %v7035 = vadd.f32 %v6529, %v6821
    %v7036 = vadd.f32 %v6530, %v6823
    %v7037 = vadd.f32 %v6531, %v6825
    %v7038 = vadd.f32 %v6532, %v6828
    %v7039 = vadd.f32 %v6533, %v6830
    %v7040 = vadd.f32 %v6534, %v6832
    %v7041 = vadd.f32 %v6535, %v6835
    %v7042 = vadd.f32 %v6536, %v6837
    %v7043 = vadd.f32 %v6537, %v6839
    %v7044 = vadd.f32 %v6538, %v6842
    %v7045 = vadd.f32 %v6539, %v6844
    %v7046 = vadd.f32 %v6540, %v6846
    %v7047 = vadd.f32 %v6541, %v6849
    %v7048 = vadd.f32 %v6542, %v6851
    %v7049 = vadd.f32 %v6543, %v6853
    %v7050 = vadd.f32 %v6544, %v6856
    %v7051 = vadd.f32 %v6545, %v6858
    %v7052 = vadd.f32 %v6546, %v6860
    %v7053 = vadd.f32 %v6547, %v6863
    %v7054 = vadd.f32 %v6548, %v6865
    %v7055 = vadd.f32 %v6549, %v6867
    %v7056 = vadd.f32 %v6550, %v6870
    %v7057 = vadd.f32 %v6551, %v6872
    %v7058 = vadd.f32 %v6552, %v6874
    %v7059 = vadd.f32 %v6553, %v6877
    %v7060 = vadd.f32 %v6554, %v6879
    %v7061 = vadd.f32 %v6555, %v6881
    %v7062 = vadd.f32 %v6556, %v6884
    %v7063 = vadd.f32 %v6557, %v6886
    %v7064 = vadd.f32 %v6558, %v6888
    %v7065 = vadd.f32 %v6559, %v6891
    %v7066 = vadd.f32 %v6560, %v6893
    %v7067 = vadd.f32 %v6561, %v6895
    %v7068 = vadd.f32 %v6562, %v6898
    %v7069 = vadd.f32 %v6563, %v6900
    %v7070 = vadd.f32 %v6564, %v6902
    %v7071 = vadd.f32 %v6565, %v6905
    %v7072 = vadd.f32 %v6566, %v6907
    %v7073 = vadd.f32 %v6567, %v6909
    %v7074 = vadd.f32 %v6568, %v6912
    %v7075 = vadd.f32 %v6569, %v6914
    %v7076 = vadd.f32 %v6570, %v6916
    %v7077 = vadd.f32 %v6571, %v6919
    %v7078 = vadd.f32 %v6572, %v6921
    %v7079 = vadd.f32 %v6573, %v6923
    %v7080 = vadd.f32 %v6574, %v6926
    %v7081 = vadd.f32 %v6575, %v6928
    %v7082 = vadd.f32 %v6576, %v6930
    %v7083 = vadd.f32 %v6577, %v6933
    %v7084 = vadd.f32 %v6578, %v6935
    %v7085 = vadd.f32 %v6579, %v6937
    %v7086 = vadd.f32 %v6580, %v6940
    %v7087 = vadd.f32 %v6581, %v6942
    %v7088 = vadd.f32 %v6582, %v6944
    %s7089 = sld [smem:[#allocation2 + $0x82]]
    %v7090 = vstv %s7089
    %v7091 = vmul.f32 %v5101, %v7090
    %v7092 = vmul.f32 %v5102, %v7090
    %v7093 = vmul.f32 %v5103, %v7090
    %v7094 = vmul.f32 %v5104, %v7090
    %v7095 = vmul.f32 %v5105, %v7090
    %v7096 = vmul.f32 %v5106, %v7090
    %v7097 = vmul.f32 %v5107, %v7090
    %v7098 = vmul.f32 %v5108, %v7090
    %v7099 = vmul.f32 %v5109, %v7090
    %v7100 = vmul.f32 %v5110, %v7090
    %v7101 = vmul.f32 %v5111, %v7090
    %v7102 = vmul.f32 %v5112, %v7090
    %v7103 = vmul.f32 %v5113, %v7090
    %v7104 = vmul.f32 %v5114, %v7090
    %v7105 = vmul.f32 %v5115, %v7090
    %v7106 = vmul.f32 %v5116, %v7090
    %v7107 = vmul.f32 %v5117, %v7090
    %v7108 = vmul.f32 %v5118, %v7090
    %v7109 = vmul.f32 %v5119, %v7090
    %v7110 = vmul.f32 %v5120, %v7090
    %v7111 = vmul.f32 %v5121, %v7090
    %v7112 = vmul.f32 %v5122, %v7090
    %v7113 = vmul.f32 %v5123, %v7090
    %v7114 = vmul.f32 %v5124, %v7090
    %v7115 = vmul.f32 %v5125, %v7090
    %v7116 = vmul.f32 %v5126, %v7090
    %v7117 = vmul.f32 %v5127, %v7090
    %v7118 = vmul.f32 %v5128, %v7090
    %v7119 = vmul.f32 %v5129, %v7090
    %v7120 = vmul.f32 %v5130, %v7090
    %v7121 = vmul.f32 %v5131, %v7090
    %v7122 = vmul.f32 %v5132, %v7090
    %v7123 = vmul.f32 %v5133, %v7090
    %v7124 = vmul.f32 %v5134, %v7090
    %v7125 = vmul.f32 %v5135, %v7090
    %v7126 = vmul.f32 %v5136, %v7090
    %v7127 = vmul.f32 %v5137, %v7090
    %v7128 = vmul.f32 %v5138, %v7090
    %v7129 = vmul.f32 %v5139, %v7090
    %v7130 = vmul.f32 %v5140, %v7090
    %v7131 = vmul.f32 %v5141, %v7090
    %v7132 = vmul.f32 %v5142, %v7090
    %v7133 = vmul.f32 %v5143, %v7090
    %v7134 = vmul.f32 %v5144, %v7090
    %v7135 = vmul.f32 %v5145, %v7090
    %v7136 = vmul.f32 %v5146, %v7090
    %v7137 = vmul.f32 %v5147, %v7090
    %v7138 = vmul.f32 %v5148, %v7090
    %v7139 = vmul.f32 %v5149, %v7090
    %v7140 = vmul.f32 %v5150, %v7090
    %v7141 = vmul.f32 %v5151, %v7090
    %v7142 = vmul.f32 %v5152, %v7090
    %v7143 = vmul.f32 %v5153, %v7090
    %v7144 = vmul.f32 %v5154, %v7090
    %v7145 = vmul.f32 %v5155, %v7090
    %v7146 = vmul.f32 %v5156, %v7090
    %v7147 = vmul.f32 %v5157, %v7090
    %v7148 = vmul.f32 %v5158, %v7090
    %v7149 = vmul.f32 %v5159, %v7090
    %v7150 = vmul.f32 %v5160, %v7090
    %v7151 = vmul.f32 %v5161, %v7090
    %v7152 = vmul.f32 %v5162, %v7090
    %v7153 = vmul.f32 %v5163, %v7090
    %v7154 = vmul.f32 %v5164, %v7090
    %v7155 = vmul.f32 %v5165, %v7090
    %v7156 = vmul.f32 %v5166, %v7090
    %v7157 = vmul.f32 %v5167, %v7090
    %v7158 = vmul.f32 %v5168, %v7090
    %v7159 = vmul.f32 %v5169, %v7090
    %v7160 = vmul.f32 %v5170, %v7090
    %v7161 = vmul.f32 %v5171, %v7090
    %v7162 = vmul.f32 %v5172, %v7090
    %v7163 = vmul.f32 %v5173, %v7090
    %v7164 = vmul.f32 %v5174, %v7090
    %v7165 = vmul.f32 %v5175, %v7090
    %v7166 = vmul.f32 %v5176, %v7090
    %v7167 = vmul.f32 %v5177, %v7090
    %v7168 = vmul.f32 %v5178, %v7090
    %v7169 = vmul.f32 %v5179, %v7090
    %v7170 = vmul.f32 %v5180, %v7090
    %v7171 = vmul.f32 %v5181, %v7090
    %v7172 = vmul.f32 %v5182, %v7090
    %v7173 = vmul.f32 %v5183, %v7090
    %v7174 = vmul.f32 %v5184, %v7090
    %v7175 = vmul.f32 %v5185, %v7090
    %v7176 = vmul.f32 %v5186, %v7090
    %v7177 = vmul.f32 %v5187, %v7090
    %v7178 = vmul.f32 %v5188, %v7090
    %v7179 = vmul.f32 %v5189, %v7090
    %v7180 = vmul.f32 %v5190, %v7090
    %v7181 = vmul.f32 %v5191, %v7090
    %v7182 = vmul.f32 %v5192, %v7090
    %v7183 = vmul.f32 %v5193, %v7090
    %v7184 = vmul.f32 %v5194, %v7090
    %v7185 = vmul.f32 %v5195, %v7090
    %v7186 = vmul.f32 %v5196, %v7090
    %v7283 = vrot.slane %v7091, 2
    %v7284 = vrot.slane %v7092, 2
    %v7285 = vsel %vm2813, %v7283, %v7284
    %v7286 = vrot.slane %v7093, 2
    %v7287 = vsel %vm2813, %v7284, %v7286
    %v7288 = vrot.slane %v7094, 2
    %v7289 = vsel %vm2813, %v7286, %v7288
    %v7290 = vrot.slane %v7095, 2
    %v7291 = vrot.slane %v7096, 2
    %v7292 = vsel %vm2813, %v7290, %v7291
    %v7293 = vrot.slane %v7097, 2
    %v7294 = vsel %vm2813, %v7291, %v7293
    %v7295 = vrot.slane %v7098, 2
    %v7296 = vsel %vm2813, %v7293, %v7295
    %v7297 = vrot.slane %v7099, 2
    %v7298 = vrot.slane %v7100, 2
    %v7299 = vsel %vm2813, %v7297, %v7298
    %v7300 = vrot.slane %v7101, 2
    %v7301 = vsel %vm2813, %v7298, %v7300
    %v7302 = vrot.slane %v7102, 2
    %v7303 = vsel %vm2813, %v7300, %v7302
    %v7304 = vrot.slane %v7103, 2
    %v7305 = vrot.slane %v7104, 2
    %v7306 = vsel %vm2813, %v7304, %v7305
    %v7307 = vrot.slane %v7105, 2
    %v7308 = vsel %vm2813, %v7305, %v7307
    %v7309 = vrot.slane %v7106, 2
    %v7310 = vsel %vm2813, %v7307, %v7309
    %v7311 = vrot.slane %v7107, 2
    %v7312 = vrot.slane %v7108, 2
    %v7313 = vsel %vm2813, %v7311, %v7312
    %v7314 = vrot.slane %v7109, 2
    %v7315 = vsel %vm2813, %v7312, %v7314
    %v7316 = vrot.slane %v7110, 2
    %v7317 = vsel %vm2813, %v7314, %v7316
    %v7318 = vrot.slane %v7111, 2
    %v7319 = vrot.slane %v7112, 2
    %v7320 = vsel %vm2813, %v7318, %v7319
    %v7321 = vrot.slane %v7113, 2
    %v7322 = vsel %vm2813, %v7319, %v7321
    %v7323 = vrot.slane %v7114, 2
    %v7324 = vsel %vm2813, %v7321, %v7323
    %v7325 = vrot.slane %v7115, 2
    %v7326 = vrot.slane %v7116, 2
    %v7327 = vsel %vm2813, %v7325, %v7326
    %v7328 = vrot.slane %v7117, 2
    %v7329 = vsel %vm2813, %v7326, %v7328
    %v7330 = vrot.slane %v7118, 2
    %v7331 = vsel %vm2813, %v7328, %v7330
    %v7332 = vrot.slane %v7119, 2
    %v7333 = vrot.slane %v7120, 2
    %v7334 = vsel %vm2813, %v7332, %v7333
    %v7335 = vrot.slane %v7121, 2
    %v7336 = vsel %vm2813, %v7333, %v7335
    %v7337 = vrot.slane %v7122, 2
    %v7338 = vsel %vm2813, %v7335, %v7337
    %v7339 = vrot.slane %v7123, 2
    %v7340 = vrot.slane %v7124, 2
    %v7341 = vsel %vm2813, %v7339, %v7340
    %v7342 = vrot.slane %v7125, 2
    %v7343 = vsel %vm2813, %v7340, %v7342
    %v7344 = vrot.slane %v7126, 2
    %v7345 = vsel %vm2813, %v7342, %v7344
    %v7346 = vrot.slane %v7127, 2
    %v7347 = vrot.slane %v7128, 2
    %v7348 = vsel %vm2813, %v7346, %v7347
    %v7349 = vrot.slane %v7129, 2
    %v7350 = vsel %vm2813, %v7347, %v7349
    %v7351 = vrot.slane %v7130, 2
    %v7352 = vsel %vm2813, %v7349, %v7351
    %v7353 = vrot.slane %v7131, 2
    %v7354 = vrot.slane %v7132, 2
    %v7355 = vsel %vm2813, %v7353, %v7354
    %v7356 = vrot.slane %v7133, 2
    %v7357 = vsel %vm2813, %v7354, %v7356
    %v7358 = vrot.slane %v7134, 2
    %v7359 = vsel %vm2813, %v7356, %v7358
    %v7360 = vrot.slane %v7135, 2
    %v7361 = vrot.slane %v7136, 2
    %v7362 = vsel %vm2813, %v7360, %v7361
    %v7363 = vrot.slane %v7137, 2
    %v7364 = vsel %vm2813, %v7361, %v7363
    %v7365 = vrot.slane %v7138, 2
    %v7366 = vsel %vm2813, %v7363, %v7365
    %v7367 = vrot.slane %v7139, 2
    %v7368 = vrot.slane %v7140, 2
    %v7369 = vsel %vm2813, %v7367, %v7368
    %v7370 = vrot.slane %v7141, 2
    %v7371 = vsel %vm2813, %v7368, %v7370
    %v7372 = vrot.slane %v7142, 2
    %v7373 = vsel %vm2813, %v7370, %v7372
    %v7374 = vrot.slane %v7143, 2
    %v7375 = vrot.slane %v7144, 2
    %v7376 = vsel %vm2813, %v7374, %v7375
    %v7377 = vrot.slane %v7145, 2
    %v7378 = vsel %vm2813, %v7375, %v7377
    %v7379 = vrot.slane %v7146, 2
    %v7380 = vsel %vm2813, %v7377, %v7379
    %v7381 = vrot.slane %v7147, 2
    %v7382 = vrot.slane %v7148, 2
    %v7383 = vsel %vm2813, %v7381, %v7382
    %v7384 = vrot.slane %v7149, 2
    %v7385 = vsel %vm2813, %v7382, %v7384
    %v7386 = vrot.slane %v7150, 2
    %v7387 = vsel %vm2813, %v7384, %v7386
    %v7388 = vrot.slane %v7151, 2
    %v7389 = vrot.slane %v7152, 2
    %v7390 = vsel %vm2813, %v7388, %v7389
    %v7391 = vrot.slane %v7153, 2
    %v7392 = vsel %vm2813, %v7389, %v7391
    %v7393 = vrot.slane %v7154, 2
    %v7394 = vsel %vm2813, %v7391, %v7393
    %v7395 = vrot.slane %v7155, 2
    %v7396 = vrot.slane %v7156, 2
    %v7397 = vsel %vm2813, %v7395, %v7396
    %v7398 = vrot.slane %v7157, 2
    %v7399 = vsel %vm2813, %v7396, %v7398
    %v7400 = vrot.slane %v7158, 2
    %v7401 = vsel %vm2813, %v7398, %v7400
    %v7402 = vrot.slane %v7159, 2
    %v7403 = vrot.slane %v7160, 2
    %v7404 = vsel %vm2813, %v7402, %v7403
    %v7405 = vrot.slane %v7161, 2
    %v7406 = vsel %vm2813, %v7403, %v7405
    %v7407 = vrot.slane %v7162, 2
    %v7408 = vsel %vm2813, %v7405, %v7407
    %v7409 = vrot.slane %v7163, 2
    %v7410 = vrot.slane %v7164, 2
    %v7411 = vsel %vm2813, %v7409, %v7410
    %v7412 = vrot.slane %v7165, 2
    %v7413 = vsel %vm2813, %v7410, %v7412
    %v7414 = vrot.slane %v7166, 2
    %v7415 = vsel %vm2813, %v7412, %v7414
    %v7416 = vrot.slane %v7167, 2
    %v7417 = vrot.slane %v7168, 2
    %v7418 = vsel %vm2813, %v7416, %v7417
    %v7419 = vrot.slane %v7169, 2
    %v7420 = vsel %vm2813, %v7417, %v7419
    %v7421 = vrot.slane %v7170, 2
    %v7422 = vsel %vm2813, %v7419, %v7421
    %v7423 = vrot.slane %v7171, 2
    %v7424 = vrot.slane %v7172, 2
    %v7425 = vsel %vm2813, %v7423, %v7424
    %v7426 = vrot.slane %v7173, 2
    %v7427 = vsel %vm2813, %v7424, %v7426
    %v7428 = vrot.slane %v7174, 2
    %v7429 = vsel %vm2813, %v7426, %v7428
    %v7430 = vrot.slane %v7175, 2
    %v7431 = vrot.slane %v7176, 2
    %v7432 = vsel %vm2813, %v7430, %v7431
    %v7433 = vrot.slane %v7177, 2
    %v7434 = vsel %vm2813, %v7431, %v7433
    %v7435 = vrot.slane %v7178, 2
    %v7436 = vsel %vm2813, %v7433, %v7435
    %v7437 = vrot.slane %v7179, 2
    %v7438 = vrot.slane %v7180, 2
    %v7439 = vsel %vm2813, %v7437, %v7438
    %v7440 = vrot.slane %v7181, 2
    %v7441 = vsel %vm2813, %v7438, %v7440
    %v7442 = vrot.slane %v7182, 2
    %v7443 = vsel %vm2813, %v7440, %v7442
    %v7444 = vrot.slane %v7183, 2
    %v7445 = vrot.slane %v7184, 2
    %v7446 = vsel %vm2813, %v7444, %v7445
    %v7447 = vrot.slane %v7185, 2
    %v7448 = vsel %vm2813, %v7445, %v7447
    %v7449 = vrot.slane %v7186, 2
    %v7450 = vsel %vm2813, %v7447, %v7449
    %v7523 = vadd.f32 %v7017, %v7285
    %v7524 = vadd.f32 %v7018, %v7287
    %v7525 = vadd.f32 %v7019, %v7289
    %v7526 = vadd.f32 %v7020, %v7292
    %v7527 = vadd.f32 %v7021, %v7294
    %v7528 = vadd.f32 %v7022, %v7296
    %v7529 = vadd.f32 %v7023, %v7299
    %v7530 = vadd.f32 %v7024, %v7301
    %v7531 = vadd.f32 %v7025, %v7303
    %v7532 = vadd.f32 %v7026, %v7306
    %v7533 = vadd.f32 %v7027, %v7308
    %v7534 = vadd.f32 %v7028, %v7310
    %v7535 = vadd.f32 %v7029, %v7313
    %v7536 = vadd.f32 %v7030, %v7315
    %v7537 = vadd.f32 %v7031, %v7317
    %v7538 = vadd.f32 %v7032, %v7320
    %v7539 = vadd.f32 %v7033, %v7322
    %v7540 = vadd.f32 %v7034, %v7324
    %v7541 = vadd.f32 %v7035, %v7327
    %v7542 = vadd.f32 %v7036, %v7329
    %v7543 = vadd.f32 %v7037, %v7331
    %v7544 = vadd.f32 %v7038, %v7334
    %v7545 = vadd.f32 %v7039, %v7336
    %v7546 = vadd.f32 %v7040, %v7338
    %v7547 = vadd.f32 %v7041, %v7341
    %v7548 = vadd.f32 %v7042, %v7343
    %v7549 = vadd.f32 %v7043, %v7345
    %v7550 = vadd.f32 %v7044, %v7348
    %v7551 = vadd.f32 %v7045, %v7350
    %v7552 = vadd.f32 %v7046, %v7352
    %v7553 = vadd.f32 %v7047, %v7355
    %v7554 = vadd.f32 %v7048, %v7357
    %v7555 = vadd.f32 %v7049, %v7359
    %v7556 = vadd.f32 %v7050, %v7362
    %v7557 = vadd.f32 %v7051, %v7364
    %v7558 = vadd.f32 %v7052, %v7366
    %v7559 = vadd.f32 %v7053, %v7369
    %v7560 = vadd.f32 %v7054, %v7371
    %v7561 = vadd.f32 %v7055, %v7373
    %v7562 = vadd.f32 %v7056, %v7376
    %v7563 = vadd.f32 %v7057, %v7378
    %v7564 = vadd.f32 %v7058, %v7380
    %v7565 = vadd.f32 %v7059, %v7383
    %v7566 = vadd.f32 %v7060, %v7385
    %v7567 = vadd.f32 %v7061, %v7387
    %v7568 = vadd.f32 %v7062, %v7390
    %v7569 = vadd.f32 %v7063, %v7392
    %v7570 = vadd.f32 %v7064, %v7394
    %v7571 = vadd.f32 %v7065, %v7397
    %v7572 = vadd.f32 %v7066, %v7399
    %v7573 = vadd.f32 %v7067, %v7401
    %v7574 = vadd.f32 %v7068, %v7404
    %v7575 = vadd.f32 %v7069, %v7406
    %v7576 = vadd.f32 %v7070, %v7408
    %v7577 = vadd.f32 %v7071, %v7411
    %v7578 = vadd.f32 %v7072, %v7413
    %v7579 = vadd.f32 %v7073, %v7415
    %v7580 = vadd.f32 %v7074, %v7418
    %v7581 = vadd.f32 %v7075, %v7420
    %v7582 = vadd.f32 %v7076, %v7422
    %v7583 = vadd.f32 %v7077, %v7425
    %v7584 = vadd.f32 %v7078, %v7427
    %v7585 = vadd.f32 %v7079, %v7429
    %v7586 = vadd.f32 %v7080, %v7432
    %v7587 = vadd.f32 %v7081, %v7434
    %v7588 = vadd.f32 %v7082, %v7436
    %v7589 = vadd.f32 %v7083, %v7439
    %v7590 = vadd.f32 %v7084, %v7441
    %v7591 = vadd.f32 %v7085, %v7443
    %v7592 = vadd.f32 %v7086, %v7446
    %v7593 = vadd.f32 %v7087, %v7448
    %v7594 = vadd.f32 %v7088, %v7450
    %s7595 = sld [smem:[#allocation2 + $0x85]]
    %v7596 = vstv %s7595
    %v7597 = vmul.f32 %v5105, %v7596
    %v7598 = vmul.f32 %v5106, %v7596
    %v7599 = vmul.f32 %v5107, %v7596
    %v7600 = vmul.f32 %v5108, %v7596
    %v7601 = vmul.f32 %v5109, %v7596
    %v7602 = vmul.f32 %v5110, %v7596
    %v7603 = vmul.f32 %v5111, %v7596
    %v7604 = vmul.f32 %v5112, %v7596
    %v7605 = vmul.f32 %v5113, %v7596
    %v7606 = vmul.f32 %v5114, %v7596
    %v7607 = vmul.f32 %v5115, %v7596
    %v7608 = vmul.f32 %v5116, %v7596
    %v7609 = vmul.f32 %v5117, %v7596
    %v7610 = vmul.f32 %v5118, %v7596
    %v7611 = vmul.f32 %v5119, %v7596
    %v7612 = vmul.f32 %v5120, %v7596
    %v7613 = vmul.f32 %v5121, %v7596
    %v7614 = vmul.f32 %v5122, %v7596
    %v7615 = vmul.f32 %v5123, %v7596
    %v7616 = vmul.f32 %v5124, %v7596
    %v7617 = vmul.f32 %v5125, %v7596
    %v7618 = vmul.f32 %v5126, %v7596
    %v7619 = vmul.f32 %v5127, %v7596
    %v7620 = vmul.f32 %v5128, %v7596
    %v7621 = vmul.f32 %v5129, %v7596
    %v7622 = vmul.f32 %v5130, %v7596
    %v7623 = vmul.f32 %v5131, %v7596
    %v7624 = vmul.f32 %v5132, %v7596
    %v7625 = vmul.f32 %v5133, %v7596
    %v7626 = vmul.f32 %v5134, %v7596
    %v7627 = vmul.f32 %v5135, %v7596
    %v7628 = vmul.f32 %v5136, %v7596
    %v7629 = vmul.f32 %v5137, %v7596
    %v7630 = vmul.f32 %v5138, %v7596
    %v7631 = vmul.f32 %v5139, %v7596
    %v7632 = vmul.f32 %v5140, %v7596
    %v7633 = vmul.f32 %v5141, %v7596
    %v7634 = vmul.f32 %v5142, %v7596
    %v7635 = vmul.f32 %v5143, %v7596
    %v7636 = vmul.f32 %v5144, %v7596
    %v7637 = vmul.f32 %v5145, %v7596
    %v7638 = vmul.f32 %v5146, %v7596
    %v7639 = vmul.f32 %v5147, %v7596
    %v7640 = vmul.f32 %v5148, %v7596
    %v7641 = vmul.f32 %v5149, %v7596
    %v7642 = vmul.f32 %v5150, %v7596
    %v7643 = vmul.f32 %v5151, %v7596
    %v7644 = vmul.f32 %v5152, %v7596
    %v7645 = vmul.f32 %v5153, %v7596
    %v7646 = vmul.f32 %v5154, %v7596
    %v7647 = vmul.f32 %v5155, %v7596
    %v7648 = vmul.f32 %v5156, %v7596
    %v7649 = vmul.f32 %v5157, %v7596
    %v7650 = vmul.f32 %v5158, %v7596
    %v7651 = vmul.f32 %v5159, %v7596
    %v7652 = vmul.f32 %v5160, %v7596
    %v7653 = vmul.f32 %v5161, %v7596
    %v7654 = vmul.f32 %v5162, %v7596
    %v7655 = vmul.f32 %v5163, %v7596
    %v7656 = vmul.f32 %v5164, %v7596
    %v7657 = vmul.f32 %v5165, %v7596
    %v7658 = vmul.f32 %v5166, %v7596
    %v7659 = vmul.f32 %v5167, %v7596
    %v7660 = vmul.f32 %v5168, %v7596
    %v7661 = vmul.f32 %v5169, %v7596
    %v7662 = vmul.f32 %v5170, %v7596
    %v7663 = vmul.f32 %v5171, %v7596
    %v7664 = vmul.f32 %v5172, %v7596
    %v7665 = vmul.f32 %v5173, %v7596
    %v7666 = vmul.f32 %v5174, %v7596
    %v7667 = vmul.f32 %v5175, %v7596
    %v7668 = vmul.f32 %v5176, %v7596
    %v7669 = vmul.f32 %v5177, %v7596
    %v7670 = vmul.f32 %v5178, %v7596
    %v7671 = vmul.f32 %v5179, %v7596
    %v7672 = vmul.f32 %v5180, %v7596
    %v7673 = vmul.f32 %v5181, %v7596
    %v7674 = vmul.f32 %v5182, %v7596
    %v7675 = vmul.f32 %v5183, %v7596
    %v7676 = vmul.f32 %v5184, %v7596
    %v7677 = vmul.f32 %v5185, %v7596
    %v7678 = vmul.f32 %v5186, %v7596
    %v7679 = vmul.f32 %v5187, %v7596
    %v7680 = vmul.f32 %v5188, %v7596
    %v7681 = vmul.f32 %v5189, %v7596
    %v7682 = vmul.f32 %v5190, %v7596
    %v7683 = vmul.f32 %v5191, %v7596
    %v7684 = vmul.f32 %v5192, %v7596
    %v7685 = vmul.f32 %v5193, %v7596
    %v7686 = vmul.f32 %v5194, %v7596
    %v7687 = vmul.f32 %v5195, %v7596
    %v7688 = vmul.f32 %v5196, %v7596
    %v7689 = vmul.f32 %v5197, %v7596
    %v7690 = vmul.f32 %v5198, %v7596
    %v7691 = vmul.f32 %v5199, %v7596
    %v7692 = vmul.f32 %v5200, %v7596
    %v7789 = vrot.slane %v7597, 2
    %v7790 = vrot.slane %v7598, 2
    %v7791 = vsel %vm2813, %v7789, %v7790
    %v7792 = vrot.slane %v7599, 2
    %v7793 = vsel %vm2813, %v7790, %v7792
    %v7794 = vrot.slane %v7600, 2
    %v7795 = vsel %vm2813, %v7792, %v7794
    %v7796 = vrot.slane %v7601, 2
    %v7797 = vrot.slane %v7602, 2
    %v7798 = vsel %vm2813, %v7796, %v7797
    %v7799 = vrot.slane %v7603, 2
    %v7800 = vsel %vm2813, %v7797, %v7799
    %v7801 = vrot.slane %v7604, 2
    %v7802 = vsel %vm2813, %v7799, %v7801
    %v7803 = vrot.slane %v7605, 2
    %v7804 = vrot.slane %v7606, 2
    %v7805 = vsel %vm2813, %v7803, %v7804
    %v7806 = vrot.slane %v7607, 2
    %v7807 = vsel %vm2813, %v7804, %v7806
    %v7808 = vrot.slane %v7608, 2
    %v7809 = vsel %vm2813, %v7806, %v7808
    %v7810 = vrot.slane %v7609, 2
    %v7811 = vrot.slane %v7610, 2
    %v7812 = vsel %vm2813, %v7810, %v7811
    %v7813 = vrot.slane %v7611, 2
    %v7814 = vsel %vm2813, %v7811, %v7813
    %v7815 = vrot.slane %v7612, 2
    %v7816 = vsel %vm2813, %v7813, %v7815
    %v7817 = vrot.slane %v7613, 2
    %v7818 = vrot.slane %v7614, 2
    %v7819 = vsel %vm2813, %v7817, %v7818
    %v7820 = vrot.slane %v7615, 2
    %v7821 = vsel %vm2813, %v7818, %v7820
    %v7822 = vrot.slane %v7616, 2
    %v7823 = vsel %vm2813, %v7820, %v7822
    %v7824 = vrot.slane %v7617, 2
    %v7825 = vrot.slane %v7618, 2
    %v7826 = vsel %vm2813, %v7824, %v7825
    %v7827 = vrot.slane %v7619, 2
    %v7828 = vsel %vm2813, %v7825, %v7827
    %v7829 = vrot.slane %v7620, 2
    %v7830 = vsel %vm2813, %v7827, %v7829
    %v7831 = vrot.slane %v7621, 2
    %v7832 = vrot.slane %v7622, 2
    %v7833 = vsel %vm2813, %v7831, %v7832
    %v7834 = vrot.slane %v7623, 2
    %v7835 = vsel %vm2813, %v7832, %v7834
    %v7836 = vrot.slane %v7624, 2
    %v7837 = vsel %vm2813, %v7834, %v7836
    %v7838 = vrot.slane %v7625, 2
    %v7839 = vrot.slane %v7626, 2
    %v7840 = vsel %vm2813, %v7838, %v7839
    %v7841 = vrot.slane %v7627, 2
    %v7842 = vsel %vm2813, %v7839, %v7841
    %v7843 = vrot.slane %v7628, 2
    %v7844 = vsel %vm2813, %v7841, %v7843
    %v7845 = vrot.slane %v7629, 2
    %v7846 = vrot.slane %v7630, 2
    %v7847 = vsel %vm2813, %v7845, %v7846
    %v7848 = vrot.slane %v7631, 2
    %v7849 = vsel %vm2813, %v7846, %v7848
    %v7850 = vrot.slane %v7632, 2
    %v7851 = vsel %vm2813, %v7848, %v7850
    %v7852 = vrot.slane %v7633, 2
    %v7853 = vrot.slane %v7634, 2
    %v7854 = vsel %vm2813, %v7852, %v7853
    %v7855 = vrot.slane %v7635, 2
    %v7856 = vsel %vm2813, %v7853, %v7855
    %v7857 = vrot.slane %v7636, 2
    %v7858 = vsel %vm2813, %v7855, %v7857
    %v7859 = vrot.slane %v7637, 2
    %v7860 = vrot.slane %v7638, 2
    %v7861 = vsel %vm2813, %v7859, %v7860
    %v7862 = vrot.slane %v7639, 2
    %v7863 = vsel %vm2813, %v7860, %v7862
    %v7864 = vrot.slane %v7640, 2
    %v7865 = vsel %vm2813, %v7862, %v7864
    %v7866 = vrot.slane %v7641, 2
    %v7867 = vrot.slane %v7642, 2
    %v7868 = vsel %vm2813, %v7866, %v7867
    %v7869 = vrot.slane %v7643, 2
    %v7870 = vsel %vm2813, %v7867, %v7869
    %v7871 = vrot.slane %v7644, 2
    %v7872 = vsel %vm2813, %v7869, %v7871
    %v7873 = vrot.slane %v7645, 2
    %v7874 = vrot.slane %v7646, 2
    %v7875 = vsel %vm2813, %v7873, %v7874
    %v7876 = vrot.slane %v7647, 2
    %v7877 = vsel %vm2813, %v7874, %v7876
    %v7878 = vrot.slane %v7648, 2
    %v7879 = vsel %vm2813, %v7876, %v7878
    %v7880 = vrot.slane %v7649, 2
    %v7881 = vrot.slane %v7650, 2
    %v7882 = vsel %vm2813, %v7880, %v7881
    %v7883 = vrot.slane %v7651, 2
    %v7884 = vsel %vm2813, %v7881, %v7883
    %v7885 = vrot.slane %v7652, 2
    %v7886 = vsel %vm2813, %v7883, %v7885
    %v7887 = vrot.slane %v7653, 2
    %v7888 = vrot.slane %v7654, 2
    %v7889 = vsel %vm2813, %v7887, %v7888
    %v7890 = vrot.slane %v7655, 2
    %v7891 = vsel %vm2813, %v7888, %v7890
    %v7892 = vrot.slane %v7656, 2
    %v7893 = vsel %vm2813, %v7890, %v7892
    %v7894 = vrot.slane %v7657, 2
    %v7895 = vrot.slane %v7658, 2
    %v7896 = vsel %vm2813, %v7894, %v7895
    %v7897 = vrot.slane %v7659, 2
    %v7898 = vsel %vm2813, %v7895, %v7897
    %v7899 = vrot.slane %v7660, 2
    %v7900 = vsel %vm2813, %v7897, %v7899
    %v7901 = vrot.slane %v7661, 2
    %v7902 = vrot.slane %v7662, 2
    %v7903 = vsel %vm2813, %v7901, %v7902
    %v7904 = vrot.slane %v7663, 2
    %v7905 = vsel %vm2813, %v7902, %v7904
    %v7906 = vrot.slane %v7664, 2
    %v7907 = vsel %vm2813, %v7904, %v7906
    %v7908 = vrot.slane %v7665, 2
    %v7909 = vrot.slane %v7666, 2
    %v7910 = vsel %vm2813, %v7908, %v7909
    %v7911 = vrot.slane %v7667, 2
    %v7912 = vsel %vm2813, %v7909, %v7911
    %v7913 = vrot.slane %v7668, 2
    %v7914 = vsel %vm2813, %v7911, %v7913
    %v7915 = vrot.slane %v7669, 2
    %v7916 = vrot.slane %v7670, 2
    %v7917 = vsel %vm2813, %v7915, %v7916
    %v7918 = vrot.slane %v7671, 2
    %v7919 = vsel %vm2813, %v7916, %v7918
    %v7920 = vrot.slane %v7672, 2
    %v7921 = vsel %vm2813, %v7918, %v7920
    %v7922 = vrot.slane %v7673, 2
    %v7923 = vrot.slane %v7674, 2
    %v7924 = vsel %vm2813, %v7922, %v7923
    %v7925 = vrot.slane %v7675, 2
    %v7926 = vsel %vm2813, %v7923, %v7925
    %v7927 = vrot.slane %v7676, 2
    %v7928 = vsel %vm2813, %v7925, %v7927
    %v7929 = vrot.slane %v7677, 2
    %v7930 = vrot.slane %v7678, 2
    %v7931 = vsel %vm2813, %v7929, %v7930
    %v7932 = vrot.slane %v7679, 2
    %v7933 = vsel %vm2813, %v7930, %v7932
    %v7934 = vrot.slane %v7680, 2
    %v7935 = vsel %vm2813, %v7932, %v7934
    %v7936 = vrot.slane %v7681, 2
    %v7937 = vrot.slane %v7682, 2
    %v7938 = vsel %vm2813, %v7936, %v7937
    %v7939 = vrot.slane %v7683, 2
    %v7940 = vsel %vm2813, %v7937, %v7939
    %v7941 = vrot.slane %v7684, 2
    %v7942 = vsel %vm2813, %v7939, %v7941
    %v7943 = vrot.slane %v7685, 2
    %v7944 = vrot.slane %v7686, 2
    %v7945 = vsel %vm2813, %v7943, %v7944
    %v7946 = vrot.slane %v7687, 2
    %v7947 = vsel %vm2813, %v7944, %v7946
    %v7948 = vrot.slane %v7688, 2
    %v7949 = vsel %vm2813, %v7946, %v7948
    %v7950 = vrot.slane %v7689, 2
    %v7951 = vrot.slane %v7690, 2
    %v7952 = vsel %vm2813, %v7950, %v7951
    %v7953 = vrot.slane %v7691, 2
    %v7954 = vsel %vm2813, %v7951, %v7953
    %v7955 = vrot.slane %v7692, 2
    %v7956 = vsel %vm2813, %v7953, %v7955
    %v8029 = vadd.f32 %v7523, %v7791
    %v8030 = vadd.f32 %v7524, %v7793
    %v8031 = vadd.f32 %v7525, %v7795
    %v8032 = vadd.f32 %v7526, %v7798
    %v8033 = vadd.f32 %v7527, %v7800
    %v8034 = vadd.f32 %v7528, %v7802
    %v8035 = vadd.f32 %v7529, %v7805
    %v8036 = vadd.f32 %v7530, %v7807
    %v8037 = vadd.f32 %v7531, %v7809
    %v8038 = vadd.f32 %v7532, %v7812
    %v8039 = vadd.f32 %v7533, %v7814
    %v8040 = vadd.f32 %v7534, %v7816
    %v8041 = vadd.f32 %v7535, %v7819
    %v8042 = vadd.f32 %v7536, %v7821
    %v8043 = vadd.f32 %v7537, %v7823
    %v8044 = vadd.f32 %v7538, %v7826
    %v8045 = vadd.f32 %v7539, %v7828
    %v8046 = vadd.f32 %v7540, %v7830
    %v8047 = vadd.f32 %v7541, %v7833
    %v8048 = vadd.f32 %v7542, %v7835
    %v8049 = vadd.f32 %v7543, %v7837
    %v8050 = vadd.f32 %v7544, %v7840
    %v8051 = vadd.f32 %v7545, %v7842
    %v8052 = vadd.f32 %v7546, %v7844
    %v8053 = vadd.f32 %v7547, %v7847
    %v8054 = vadd.f32 %v7548, %v7849
    %v8055 = vadd.f32 %v7549, %v7851
    %v8056 = vadd.f32 %v7550, %v7854
    %v8057 = vadd.f32 %v7551, %v7856
    %v8058 = vadd.f32 %v7552, %v7858
    %v8059 = vadd.f32 %v7553, %v7861
    %v8060 = vadd.f32 %v7554, %v7863
    %v8061 = vadd.f32 %v7555, %v7865
    %v8062 = vadd.f32 %v7556, %v7868
    %v8063 = vadd.f32 %v7557, %v7870
    %v8064 = vadd.f32 %v7558, %v7872
    %v8065 = vadd.f32 %v7559, %v7875
    %v8066 = vadd.f32 %v7560, %v7877
    %v8067 = vadd.f32 %v7561, %v7879
    %v8068 = vadd.f32 %v7562, %v7882
    %v8069 = vadd.f32 %v7563, %v7884
    %v8070 = vadd.f32 %v7564, %v7886
    %v8071 = vadd.f32 %v7565, %v7889
    %v8072 = vadd.f32 %v7566, %v7891
    %v8073 = vadd.f32 %v7567, %v7893
    %v8074 = vadd.f32 %v7568, %v7896
    %v8075 = vadd.f32 %v7569, %v7898
    %v8076 = vadd.f32 %v7570, %v7900
    %v8077 = vadd.f32 %v7571, %v7903
    %v8078 = vadd.f32 %v7572, %v7905
    %v8079 = vadd.f32 %v7573, %v7907
    %v8080 = vadd.f32 %v7574, %v7910
    %v8081 = vadd.f32 %v7575, %v7912
    %v8082 = vadd.f32 %v7576, %v7914
    %v8083 = vadd.f32 %v7577, %v7917
    %v8084 = vadd.f32 %v7578, %v7919
    %v8085 = vadd.f32 %v7579, %v7921
    %v8086 = vadd.f32 %v7580, %v7924
    %v8087 = vadd.f32 %v7581, %v7926
    %v8088 = vadd.f32 %v7582, %v7928
    %v8089 = vadd.f32 %v7583, %v7931
    %v8090 = vadd.f32 %v7584, %v7933
    %v8091 = vadd.f32 %v7585, %v7935
    %v8092 = vadd.f32 %v7586, %v7938
    %v8093 = vadd.f32 %v7587, %v7940
    %v8094 = vadd.f32 %v7588, %v7942
    %v8095 = vadd.f32 %v7589, %v7945
    %v8096 = vadd.f32 %v7590, %v7947
    %v8097 = vadd.f32 %v7591, %v7949
    %v8098 = vadd.f32 %v7592, %v7952
    %v8099 = vadd.f32 %v7593, %v7954
    %v8100 = vadd.f32 %v7594, %v7956
    %s8101 = sld [smem:[#allocation2 + $0x88]]
    %v8102 = vstv %s8101
    %v8103 = vmul.f32 %v5109, %v8102
    %v8104 = vmul.f32 %v5110, %v8102
    %v8105 = vmul.f32 %v5111, %v8102
    %v8106 = vmul.f32 %v5112, %v8102
    %v8107 = vmul.f32 %v5113, %v8102
    %v8108 = vmul.f32 %v5114, %v8102
    %v8109 = vmul.f32 %v5115, %v8102
    %v8110 = vmul.f32 %v5116, %v8102
    %v8111 = vmul.f32 %v5117, %v8102
    %v8112 = vmul.f32 %v5118, %v8102
    %v8113 = vmul.f32 %v5119, %v8102
    %v8114 = vmul.f32 %v5120, %v8102
    %v8115 = vmul.f32 %v5121, %v8102
    %v8116 = vmul.f32 %v5122, %v8102
    %v8117 = vmul.f32 %v5123, %v8102
    %v8118 = vmul.f32 %v5124, %v8102
    %v8119 = vmul.f32 %v5125, %v8102
    %v8120 = vmul.f32 %v5126, %v8102
    %v8121 = vmul.f32 %v5127, %v8102
    %v8122 = vmul.f32 %v5128, %v8102
    %v8123 = vmul.f32 %v5129, %v8102
    %v8124 = vmul.f32 %v5130, %v8102
    %v8125 = vmul.f32 %v5131, %v8102
    %v8126 = vmul.f32 %v5132, %v8102
    %v8127 = vmul.f32 %v5133, %v8102
    %v8128 = vmul.f32 %v5134, %v8102
    %v8129 = vmul.f32 %v5135, %v8102
    %v8130 = vmul.f32 %v5136, %v8102
    %v8131 = vmul.f32 %v5137, %v8102
    %v8132 = vmul.f32 %v5138, %v8102
    %v8133 = vmul.f32 %v5139, %v8102
    %v8134 = vmul.f32 %v5140, %v8102
    %v8135 = vmul.f32 %v5141, %v8102
    %v8136 = vmul.f32 %v5142, %v8102
    %v8137 = vmul.f32 %v5143, %v8102
    %v8138 = vmul.f32 %v5144, %v8102
    %v8139 = vmul.f32 %v5145, %v8102
    %v8140 = vmul.f32 %v5146, %v8102
    %v8141 = vmul.f32 %v5147, %v8102
    %v8142 = vmul.f32 %v5148, %v8102
    %v8143 = vmul.f32 %v5149, %v8102
    %v8144 = vmul.f32 %v5150, %v8102
    %v8145 = vmul.f32 %v5151, %v8102
    %v8146 = vmul.f32 %v5152, %v8102
    %v8147 = vmul.f32 %v5153, %v8102
    %v8148 = vmul.f32 %v5154, %v8102
    %v8149 = vmul.f32 %v5155, %v8102
    %v8150 = vmul.f32 %v5156, %v8102
    %v8151 = vmul.f32 %v5157, %v8102
    %v8152 = vmul.f32 %v5158, %v8102
    %v8153 = vmul.f32 %v5159, %v8102
    %v8154 = vmul.f32 %v5160, %v8102
    %v8155 = vmul.f32 %v5161, %v8102
    %v8156 = vmul.f32 %v5162, %v8102
    %v8157 = vmul.f32 %v5163, %v8102
    %v8158 = vmul.f32 %v5164, %v8102
    %v8159 = vmul.f32 %v5165, %v8102
    %v8160 = vmul.f32 %v5166, %v8102
    %v8161 = vmul.f32 %v5167, %v8102
    %v8162 = vmul.f32 %v5168, %v8102
    %v8163 = vmul.f32 %v5169, %v8102
    %v8164 = vmul.f32 %v5170, %v8102
    %v8165 = vmul.f32 %v5171, %v8102
    %v8166 = vmul.f32 %v5172, %v8102
    %v8167 = vmul.f32 %v5173, %v8102
    %v8168 = vmul.f32 %v5174, %v8102
    %v8169 = vmul.f32 %v5175, %v8102
    %v8170 = vmul.f32 %v5176, %v8102
    %v8171 = vmul.f32 %v5177, %v8102
    %v8172 = vmul.f32 %v5178, %v8102
    %v8173 = vmul.f32 %v5179, %v8102
    %v8174 = vmul.f32 %v5180, %v8102
    %v8175 = vmul.f32 %v5181, %v8102
    %v8176 = vmul.f32 %v5182, %v8102
    %v8177 = vmul.f32 %v5183, %v8102
    %v8178 = vmul.f32 %v5184, %v8102
    %v8179 = vmul.f32 %v5185, %v8102
    %v8180 = vmul.f32 %v5186, %v8102
    %v8181 = vmul.f32 %v5187, %v8102
    %v8182 = vmul.f32 %v5188, %v8102
    %v8183 = vmul.f32 %v5189, %v8102
    %v8184 = vmul.f32 %v5190, %v8102
    %v8185 = vmul.f32 %v5191, %v8102
    %v8186 = vmul.f32 %v5192, %v8102
    %v8187 = vmul.f32 %v5193, %v8102
    %v8188 = vmul.f32 %v5194, %v8102
    %v8189 = vmul.f32 %v5195, %v8102
    %v8190 = vmul.f32 %v5196, %v8102
    %v8191 = vmul.f32 %v5197, %v8102
    %v8192 = vmul.f32 %v5198, %v8102
    %v8193 = vmul.f32 %v5199, %v8102
    %v8194 = vmul.f32 %v5200, %v8102
    %v8195 = vmul.f32 %v5201, %v8102
    %v8196 = vmul.f32 %v5202, %v8102
    %v8197 = vmul.f32 %v5203, %v8102
    %v8198 = vmul.f32 %v5204, %v8102
    %v8295 = vrot.slane %v8103, 2
    %v8296 = vrot.slane %v8104, 2
    %v8297 = vsel %vm2813, %v8295, %v8296
    %v8298 = vrot.slane %v8105, 2
    %v8299 = vsel %vm2813, %v8296, %v8298
    %v8300 = vrot.slane %v8106, 2
    %v8301 = vsel %vm2813, %v8298, %v8300
    %v8302 = vrot.slane %v8107, 2
    %v8303 = vrot.slane %v8108, 2
    %v8304 = vsel %vm2813, %v8302, %v8303
    %v8305 = vrot.slane %v8109, 2
    %v8306 = vsel %vm2813, %v8303, %v8305
    %v8307 = vrot.slane %v8110, 2
    %v8308 = vsel %vm2813, %v8305, %v8307
    %v8309 = vrot.slane %v8111, 2
    %v8310 = vrot.slane %v8112, 2
    %v8311 = vsel %vm2813, %v8309, %v8310
    %v8312 = vrot.slane %v8113, 2
    %v8313 = vsel %vm2813, %v8310, %v8312
    %v8314 = vrot.slane %v8114, 2
    %v8315 = vsel %vm2813, %v8312, %v8314
    %v8316 = vrot.slane %v8115, 2
    %v8317 = vrot.slane %v8116, 2
    %v8318 = vsel %vm2813, %v8316, %v8317
    %v8319 = vrot.slane %v8117, 2
    %v8320 = vsel %vm2813, %v8317, %v8319
    %v8321 = vrot.slane %v8118, 2
    %v8322 = vsel %vm2813, %v8319, %v8321
    %v8323 = vrot.slane %v8119, 2
    %v8324 = vrot.slane %v8120, 2
    %v8325 = vsel %vm2813, %v8323, %v8324
    %v8326 = vrot.slane %v8121, 2
    %v8327 = vsel %vm2813, %v8324, %v8326
    %v8328 = vrot.slane %v8122, 2
    %v8329 = vsel %vm2813, %v8326, %v8328
    %v8330 = vrot.slane %v8123, 2
    %v8331 = vrot.slane %v8124, 2
    %v8332 = vsel %vm2813, %v8330, %v8331
    %v8333 = vrot.slane %v8125, 2
    %v8334 = vsel %vm2813, %v8331, %v8333
    %v8335 = vrot.slane %v8126, 2
    %v8336 = vsel %vm2813, %v8333, %v8335
    %v8337 = vrot.slane %v8127, 2
    %v8338 = vrot.slane %v8128, 2
    %v8339 = vsel %vm2813, %v8337, %v8338
    %v8340 = vrot.slane %v8129, 2
    %v8341 = vsel %vm2813, %v8338, %v8340
    %v8342 = vrot.slane %v8130, 2
    %v8343 = vsel %vm2813, %v8340, %v8342
    %v8344 = vrot.slane %v8131, 2
    %v8345 = vrot.slane %v8132, 2
    %v8346 = vsel %vm2813, %v8344, %v8345
    %v8347 = vrot.slane %v8133, 2
    %v8348 = vsel %vm2813, %v8345, %v8347
    %v8349 = vrot.slane %v8134, 2
    %v8350 = vsel %vm2813, %v8347, %v8349
    %v8351 = vrot.slane %v8135, 2
    %v8352 = vrot.slane %v8136, 2
    %v8353 = vsel %vm2813, %v8351, %v8352
    %v8354 = vrot.slane %v8137, 2
    %v8355 = vsel %vm2813, %v8352, %v8354
    %v8356 = vrot.slane %v8138, 2
    %v8357 = vsel %vm2813, %v8354, %v8356
    %v8358 = vrot.slane %v8139, 2
    %v8359 = vrot.slane %v8140, 2
    %v8360 = vsel %vm2813, %v8358, %v8359
    %v8361 = vrot.slane %v8141, 2
    %v8362 = vsel %vm2813, %v8359, %v8361
    %v8363 = vrot.slane %v8142, 2
    %v8364 = vsel %vm2813, %v8361, %v8363
    %v8365 = vrot.slane %v8143, 2
    %v8366 = vrot.slane %v8144, 2
    %v8367 = vsel %vm2813, %v8365, %v8366
    %v8368 = vrot.slane %v8145, 2
    %v8369 = vsel %vm2813, %v8366, %v8368
    %v8370 = vrot.slane %v8146, 2
    %v8371 = vsel %vm2813, %v8368, %v8370
    %v8372 = vrot.slane %v8147, 2
    %v8373 = vrot.slane %v8148, 2
    %v8374 = vsel %vm2813, %v8372, %v8373
    %v8375 = vrot.slane %v8149, 2
    %v8376 = vsel %vm2813, %v8373, %v8375
    %v8377 = vrot.slane %v8150, 2
    %v8378 = vsel %vm2813, %v8375, %v8377
    %v8379 = vrot.slane %v8151, 2
    %v8380 = vrot.slane %v8152, 2
    %v8381 = vsel %vm2813, %v8379, %v8380
    %v8382 = vrot.slane %v8153, 2
    %v8383 = vsel %vm2813, %v8380, %v8382
    %v8384 = vrot.slane %v8154, 2
    %v8385 = vsel %vm2813, %v8382, %v8384
    %v8386 = vrot.slane %v8155, 2
    %v8387 = vrot.slane %v8156, 2
    %v8388 = vsel %vm2813, %v8386, %v8387
    %v8389 = vrot.slane %v8157, 2
    %v8390 = vsel %vm2813, %v8387, %v8389
    %v8391 = vrot.slane %v8158, 2
    %v8392 = vsel %vm2813, %v8389, %v8391
    %v8393 = vrot.slane %v8159, 2
    %v8394 = vrot.slane %v8160, 2
    %v8395 = vsel %vm2813, %v8393, %v8394
    %v8396 = vrot.slane %v8161, 2
    %v8397 = vsel %vm2813, %v8394, %v8396
    %v8398 = vrot.slane %v8162, 2
    %v8399 = vsel %vm2813, %v8396, %v8398
    %v8400 = vrot.slane %v8163, 2
    %v8401 = vrot.slane %v8164, 2
    %v8402 = vsel %vm2813, %v8400, %v8401
    %v8403 = vrot.slane %v8165, 2
    %v8404 = vsel %vm2813, %v8401, %v8403
    %v8405 = vrot.slane %v8166, 2
    %v8406 = vsel %vm2813, %v8403, %v8405
    %v8407 = vrot.slane %v8167, 2
    %v8408 = vrot.slane %v8168, 2
    %v8409 = vsel %vm2813, %v8407, %v8408
    %v8410 = vrot.slane %v8169, 2
    %v8411 = vsel %vm2813, %v8408, %v8410
    %v8412 = vrot.slane %v8170, 2
    %v8413 = vsel %vm2813, %v8410, %v8412
    %v8414 = vrot.slane %v8171, 2
    %v8415 = vrot.slane %v8172, 2
    %v8416 = vsel %vm2813, %v8414, %v8415
    %v8417 = vrot.slane %v8173, 2
    %v8418 = vsel %vm2813, %v8415, %v8417
    %v8419 = vrot.slane %v8174, 2
    %v8420 = vsel %vm2813, %v8417, %v8419
    %v8421 = vrot.slane %v8175, 2
    %v8422 = vrot.slane %v8176, 2
    %v8423 = vsel %vm2813, %v8421, %v8422
    %v8424 = vrot.slane %v8177, 2
    %v8425 = vsel %vm2813, %v8422, %v8424
    %v8426 = vrot.slane %v8178, 2
    %v8427 = vsel %vm2813, %v8424, %v8426
    %v8428 = vrot.slane %v8179, 2
    %v8429 = vrot.slane %v8180, 2
    %v8430 = vsel %vm2813, %v8428, %v8429
    %v8431 = vrot.slane %v8181, 2
    %v8432 = vsel %vm2813, %v8429, %v8431
    %v8433 = vrot.slane %v8182, 2
    %v8434 = vsel %vm2813, %v8431, %v8433
    %v8435 = vrot.slane %v8183, 2
    %v8436 = vrot.slane %v8184, 2
    %v8437 = vsel %vm2813, %v8435, %v8436
    %v8438 = vrot.slane %v8185, 2
    %v8439 = vsel %vm2813, %v8436, %v8438
    %v8440 = vrot.slane %v8186, 2
    %v8441 = vsel %vm2813, %v8438, %v8440
    %v8442 = vrot.slane %v8187, 2
    %v8443 = vrot.slane %v8188, 2
    %v8444 = vsel %vm2813, %v8442, %v8443
    %v8445 = vrot.slane %v8189, 2
    %v8446 = vsel %vm2813, %v8443, %v8445
    %v8447 = vrot.slane %v8190, 2
    %v8448 = vsel %vm2813, %v8445, %v8447
    %v8449 = vrot.slane %v8191, 2
    %v8450 = vrot.slane %v8192, 2
    %v8451 = vsel %vm2813, %v8449, %v8450
    %v8452 = vrot.slane %v8193, 2
    %v8453 = vsel %vm2813, %v8450, %v8452
    %v8454 = vrot.slane %v8194, 2
    %v8455 = vsel %vm2813, %v8452, %v8454
    %v8456 = vrot.slane %v8195, 2
    %v8457 = vrot.slane %v8196, 2
    %v8458 = vsel %vm2813, %v8456, %v8457
    %v8459 = vrot.slane %v8197, 2
    %v8460 = vsel %vm2813, %v8457, %v8459
    %v8461 = vrot.slane %v8198, 2
    %v8462 = vsel %vm2813, %v8459, %v8461
    %v8535 = vadd.f32 %v8029, %v8297
    %v8536 = vadd.f32 %v8030, %v8299
    %v8537 = vadd.f32 %v8031, %v8301
    %v8538 = vadd.f32 %v8032, %v8304
    %v8539 = vadd.f32 %v8033, %v8306
    %v8540 = vadd.f32 %v8034, %v8308
    %v8541 = vadd.f32 %v8035, %v8311
    %v8542 = vadd.f32 %v8036, %v8313
    %v8543 = vadd.f32 %v8037, %v8315
    %v8544 = vadd.f32 %v8038, %v8318
    %v8545 = vadd.f32 %v8039, %v8320
    %v8546 = vadd.f32 %v8040, %v8322
    %v8547 = vadd.f32 %v8041, %v8325
    %v8548 = vadd.f32 %v8042, %v8327
    %v8549 = vadd.f32 %v8043, %v8329
    %v8550 = vadd.f32 %v8044, %v8332
    %v8551 = vadd.f32 %v8045, %v8334
    %v8552 = vadd.f32 %v8046, %v8336
    %v8553 = vadd.f32 %v8047, %v8339
    %v8554 = vadd.f32 %v8048, %v8341
    %v8555 = vadd.f32 %v8049, %v8343
    %v8556 = vadd.f32 %v8050, %v8346
    %v8557 = vadd.f32 %v8051, %v8348
    %v8558 = vadd.f32 %v8052, %v8350
    %v8559 = vadd.f32 %v8053, %v8353
    %v8560 = vadd.f32 %v8054, %v8355
    %v8561 = vadd.f32 %v8055, %v8357
    %v8562 = vadd.f32 %v8056, %v8360
    %v8563 = vadd.f32 %v8057, %v8362
    %v8564 = vadd.f32 %v8058, %v8364
    %v8565 = vadd.f32 %v8059, %v8367
    %v8566 = vadd.f32 %v8060, %v8369
    %v8567 = vadd.f32 %v8061, %v8371
    %v8568 = vadd.f32 %v8062, %v8374
    %v8569 = vadd.f32 %v8063, %v8376
    %v8570 = vadd.f32 %v8064, %v8378
    %v8571 = vadd.f32 %v8065, %v8381
    %v8572 = vadd.f32 %v8066, %v8383
    %v8573 = vadd.f32 %v8067, %v8385
    %v8574 = vadd.f32 %v8068, %v8388
    %v8575 = vadd.f32 %v8069, %v8390
    %v8576 = vadd.f32 %v8070, %v8392
    %v8577 = vadd.f32 %v8071, %v8395
    %v8578 = vadd.f32 %v8072, %v8397
    %v8579 = vadd.f32 %v8073, %v8399
    %v8580 = vadd.f32 %v8074, %v8402
    %v8581 = vadd.f32 %v8075, %v8404
    %v8582 = vadd.f32 %v8076, %v8406
    %v8583 = vadd.f32 %v8077, %v8409
    %v8584 = vadd.f32 %v8078, %v8411
    %v8585 = vadd.f32 %v8079, %v8413
    %v8586 = vadd.f32 %v8080, %v8416
    %v8587 = vadd.f32 %v8081, %v8418
    %v8588 = vadd.f32 %v8082, %v8420
    %v8589 = vadd.f32 %v8083, %v8423
    %v8590 = vadd.f32 %v8084, %v8425
    %v8591 = vadd.f32 %v8085, %v8427
    %v8592 = vadd.f32 %v8086, %v8430
    %v8593 = vadd.f32 %v8087, %v8432
    %v8594 = vadd.f32 %v8088, %v8434
    %v8595 = vadd.f32 %v8089, %v8437
    %v8596 = vadd.f32 %v8090, %v8439
    %v8597 = vadd.f32 %v8091, %v8441
    %v8598 = vadd.f32 %v8092, %v8444
    %v8599 = vadd.f32 %v8093, %v8446
    %v8600 = vadd.f32 %v8094, %v8448
    %v8601 = vadd.f32 %v8095, %v8451
    %v8602 = vadd.f32 %v8096, %v8453
    %v8603 = vadd.f32 %v8097, %v8455
    %v8604 = vadd.f32 %v8098, %v8458
    %v8605 = vadd.f32 %v8099, %v8460
    %v8606 = vadd.f32 %v8100, %v8462
    %s8607 = sld [smem:[#allocation4 + $0x1]]
    %v8608 = vstv %s8607
    %v8609 = vadd.f32 %v8535, %v8608
    %v8610 = vadd.f32 %v8536, %v8608
    %v8611 = vadd.f32 %v8537, %v8608
    %v8612 = vadd.f32 %v8538, %v8608
    %v8613 = vadd.f32 %v8539, %v8608
    %v8614 = vadd.f32 %v8540, %v8608
    %v8615 = vadd.f32 %v8541, %v8608
    %v8616 = vadd.f32 %v8542, %v8608
    %v8617 = vadd.f32 %v8543, %v8608
    %v8618 = vadd.f32 %v8544, %v8608
    %v8619 = vadd.f32 %v8545, %v8608
    %v8620 = vadd.f32 %v8546, %v8608
    %v8621 = vadd.f32 %v8547, %v8608
    %v8622 = vadd.f32 %v8548, %v8608
    %v8623 = vadd.f32 %v8549, %v8608
    %v8624 = vadd.f32 %v8550, %v8608
    %v8625 = vadd.f32 %v8551, %v8608
    %v8626 = vadd.f32 %v8552, %v8608
    %v8627 = vadd.f32 %v8553, %v8608
    %v8628 = vadd.f32 %v8554, %v8608
    %v8629 = vadd.f32 %v8555, %v8608
    %v8630 = vadd.f32 %v8556, %v8608
    %v8631 = vadd.f32 %v8557, %v8608
    %v8632 = vadd.f32 %v8558, %v8608
    %v8633 = vadd.f32 %v8559, %v8608
    %v8634 = vadd.f32 %v8560, %v8608
    %v8635 = vadd.f32 %v8561, %v8608
    %v8636 = vadd.f32 %v8562, %v8608
    %v8637 = vadd.f32 %v8563, %v8608
    %v8638 = vadd.f32 %v8564, %v8608
    %v8639 = vadd.f32 %v8565, %v8608
    %v8640 = vadd.f32 %v8566, %v8608
    %v8641 = vadd.f32 %v8567, %v8608
    %v8642 = vadd.f32 %v8568, %v8608
    %v8643 = vadd.f32 %v8569, %v8608
    %v8644 = vadd.f32 %v8570, %v8608
    %v8645 = vadd.f32 %v8571, %v8608
    %v8646 = vadd.f32 %v8572, %v8608
    %v8647 = vadd.f32 %v8573, %v8608
    %v8648 = vadd.f32 %v8574, %v8608
    %v8649 = vadd.f32 %v8575, %v8608
    %v8650 = vadd.f32 %v8576, %v8608
    %v8651 = vadd.f32 %v8577, %v8608
    %v8652 = vadd.f32 %v8578, %v8608
    %v8653 = vadd.f32 %v8579, %v8608
    %v8654 = vadd.f32 %v8580, %v8608
    %v8655 = vadd.f32 %v8581, %v8608
    %v8656 = vadd.f32 %v8582, %v8608
    %v8657 = vadd.f32 %v8583, %v8608
    %v8658 = vadd.f32 %v8584, %v8608
    %v8659 = vadd.f32 %v8585, %v8608
    %v8660 = vadd.f32 %v8586, %v8608
    %v8661 = vadd.f32 %v8587, %v8608
    %v8662 = vadd.f32 %v8588, %v8608
    %v8663 = vadd.f32 %v8589, %v8608
    %v8664 = vadd.f32 %v8590, %v8608
    %v8665 = vadd.f32 %v8591, %v8608
    %v8666 = vadd.f32 %v8592, %v8608
    %v8667 = vadd.f32 %v8593, %v8608
    %v8668 = vadd.f32 %v8594, %v8608
    %v8669 = vadd.f32 %v8595, %v8608
    %v8670 = vadd.f32 %v8596, %v8608
    %v8671 = vadd.f32 %v8597, %v8608
    %v8672 = vadd.f32 %v8598, %v8608
    %v8673 = vadd.f32 %v8599, %v8608
    %v8674 = vadd.f32 %v8600, %v8608
    %v8675 = vadd.f32 %v8601, %v8608
    %v8676 = vadd.f32 %v8602, %v8608
    %v8677 = vadd.f32 %v8603, %v8608
    %v8678 = vadd.f32 %v8604, %v8608
    %v8679 = vadd.f32 %v8605, %v8608
    %v8680 = vadd.f32 %v8606, %v8608
    %v8681 = vmax.f32 %v8609, 0.0
    %v8682 = vmax.f32 %v8610, 0.0
    %v8683 = vmax.f32 %v8611, 0.0
    %v8684 = vmax.f32 %v8612, 0.0
    %v8685 = vmax.f32 %v8613, 0.0
    %v8686 = vmax.f32 %v8614, 0.0
    %v8687 = vmax.f32 %v8615, 0.0
    %v8688 = vmax.f32 %v8616, 0.0
    %v8689 = vmax.f32 %v8617, 0.0
    %v8690 = vmax.f32 %v8618, 0.0
    %v8691 = vmax.f32 %v8619, 0.0
    %v8692 = vmax.f32 %v8620, 0.0
    %v8693 = vmax.f32 %v8621, 0.0
    %v8694 = vmax.f32 %v8622, 0.0
    %v8695 = vmax.f32 %v8623, 0.0
    %v8696 = vmax.f32 %v8624, 0.0
    %v8697 = vmax.f32 %v8625, 0.0
    %v8698 = vmax.f32 %v8626, 0.0
    %v8699 = vmax.f32 %v8627, 0.0
    %v8700 = vmax.f32 %v8628, 0.0
    %v8701 = vmax.f32 %v8629, 0.0
    %v8702 = vmax.f32 %v8630, 0.0
    %v8703 = vmax.f32 %v8631, 0.0
    %v8704 = vmax.f32 %v8632, 0.0
    %v8705 = vmax.f32 %v8633, 0.0
    %v8706 = vmax.f32 %v8634, 0.0
    %v8707 = vmax.f32 %v8635, 0.0
    %v8708 = vmax.f32 %v8636, 0.0
    %v8709 = vmax.f32 %v8637, 0.0
    %v8710 = vmax.f32 %v8638, 0.0
    %v8711 = vmax.f32 %v8639, 0.0
    %v8712 = vmax.f32 %v8640, 0.0
    %v8713 = vmax.f32 %v8641, 0.0
    %v8714 = vmax.f32 %v8642, 0.0
    %v8715 = vmax.f32 %v8643, 0.0
    %v8716 = vmax.f32 %v8644, 0.0
    %v8717 = vmax.f32 %v8645, 0.0
    %v8718 = vmax.f32 %v8646, 0.0
    %v8719 = vmax.f32 %v8647, 0.0
    %v8720 = vmax.f32 %v8648, 0.0
    %v8721 = vmax.f32 %v8649, 0.0
    %v8722 = vmax.f32 %v8650, 0.0
    %v8723 = vmax.f32 %v8651, 0.0
    %v8724 = vmax.f32 %v8652, 0.0
    %v8725 = vmax.f32 %v8653, 0.0
    %v8726 = vmax.f32 %v8654, 0.0
    %v8727 = vmax.f32 %v8655, 0.0
    %v8728 = vmax.f32 %v8656, 0.0
    %v8729 = vmax.f32 %v8657, 0.0
    %v8730 = vmax.f32 %v8658, 0.0
    %v8731 = vmax.f32 %v8659, 0.0
    %v8732 = vmax.f32 %v8660, 0.0
    %v8733 = vmax.f32 %v8661, 0.0
    %v8734 = vmax.f32 %v8662, 0.0
    %v8735 = vmax.f32 %v8663, 0.0
    %v8736 = vmax.f32 %v8664, 0.0
    %v8737 = vmax.f32 %v8665, 0.0
    %v8738 = vmax.f32 %v8666, 0.0
    %v8739 = vmax.f32 %v8667, 0.0
    %v8740 = vmax.f32 %v8668, 0.0
    %v8741 = vmax.f32 %v8669, 0.0
    %v8742 = vmax.f32 %v8670, 0.0
    %v8743 = vmax.f32 %v8671, 0.0
    %v8744 = vmax.f32 %v8672, 0.0
    %v8745 = vmax.f32 %v8673, 0.0
    %v8746 = vmax.f32 %v8674, 0.0
    %v8747 = vmax.f32 %v8675, 0.0
    %v8748 = vmax.f32 %v8676, 0.0
    %v8749 = vmax.f32 %v8677, 0.0
    %v8750 = vmax.f32 %v8678, 0.0
    %v8751 = vmax.f32 %v8679, 0.0
    %v8752 = vmax.f32 %v8680, 0.0
    %v8753 = vadd.f32 %v8681, %v8684
    %v8754 = vadd.f32 %v8753, %v8687
    %v8755 = vadd.f32 %v8754, %v8690
    %v8756 = vadd.f32 %v8755, %v8693
    %v8757 = vadd.f32 %v8756, %v8696
    %v8758 = vadd.f32 %v8757, %v8699
    %v8759 = vadd.f32 %v8758, %v8702
    %v8760 = vadd.f32 %v8759, %v8705
    %v8761 = vadd.f32 %v8760, %v8708
    %v8762 = vadd.f32 %v8761, %v8711
    %v8763 = vadd.f32 %v8762, %v8714
    %v8764 = vadd.f32 %v8763, %v8717
    %v8765 = vadd.f32 %v8764, %v8720
    %v8766 = vadd.f32 %v8765, %v8723
    %v8767 = vadd.f32 %v8766, %v8726
    %v8768 = vadd.f32 %v8767, %v8729
    %v8769 = vadd.f32 %v8768, %v8732
    %v8770 = vadd.f32 %v8769, %v8735
    %v8771 = vadd.f32 %v8770, %v8738
    %v8772 = vadd.f32 %v8771, %v8741
    %v8773 = vadd.f32 %v8772, %v8744
    %v8774 = vadd.f32 %v8773, %v8747
    %v8775 = vadd.f32 %v8774, %v8750
    %v8776 = vadd.f32 %v8682, %v8685
    %v8777 = vadd.f32 %v8776, %v8688
    %v8778 = vadd.f32 %v8777, %v8691
    %v8779 = vadd.f32 %v8778, %v8694
    %v8780 = vadd.f32 %v8779, %v8697
    %v8781 = vadd.f32 %v8780, %v8700
    %v8782 = vadd.f32 %v8781, %v8703
    %v8783 = vadd.f32 %v8782, %v8706
    %v8784 = vadd.f32 %v8783, %v8709
    %v8785 = vadd.f32 %v8784, %v8712
    %v8786 = vadd.f32 %v8785, %v8715
    %v8787 = vadd.f32 %v8786, %v8718
    %v8788 = vadd.f32 %v8787, %v8721
    %v8789 = vadd.f32 %v8788, %v8724
    %v8790 = vadd.f32 %v8789, %v8727
    %v8791 = vadd.f32 %v8790, %v8730
    %v8792 = vadd.f32 %v8791, %v8733
    %v8793 = vadd.f32 %v8792, %v8736
    %v8794 = vadd.f32 %v8793, %v8739
    %v8795 = vadd.f32 %v8794, %v8742
    %v8796 = vadd.f32 %v8795, %v8745
    %v8797 = vadd.f32 %v8796, %v8748
    %v8798 = vadd.f32 %v8797, %v8751
    %v8799 = vadd.f32 %v8683, %v8686
    %v8800 = vadd.f32 %v8799, %v8689
    %v8801 = vadd.f32 %v8800, %v8692
    %v8802 = vadd.f32 %v8801, %v8695
    %v8803 = vadd.f32 %v8802, %v8698
    %v8804 = vadd.f32 %v8803, %v8701
    %v8805 = vadd.f32 %v8804, %v8704
    %v8806 = vadd.f32 %v8805, %v8707
    %v8807 = vadd.f32 %v8806, %v8710
    %v8808 = vadd.f32 %v8807, %v8713
    %v8809 = vadd.f32 %v8808, %v8716
    %v8810 = vadd.f32 %v8809, %v8719
    %v8811 = vadd.f32 %v8810, %v8722
    %v8812 = vadd.f32 %v8811, %v8725
    %v8813 = vadd.f32 %v8812, %v8728
    %v8814 = vadd.f32 %v8813, %v8731
    %v8815 = vadd.f32 %v8814, %v8734
    %v8816 = vadd.f32 %v8815, %v8737
    %v8817 = vadd.f32 %v8816, %v8740
    %v8818 = vadd.f32 %v8817, %v8743
    %v8819 = vadd.f32 %v8818, %v8746
    %v8820 = vadd.f32 %v8819, %v8749
    %v8821 = vadd.f32 %v8820, %v8752
    %v8822 = vadd.f32 %v8775, %v8798
    %v8823 = vadd.f32 %v8822, %v8821
    %v8824 = vrot.slane %v8823, 4
    %v8825 = vadd.f32 %v8823, %v8824
    %v8826 = vrot.slane %v8825, 2
    %v8827 = vadd.f32 %v8825, %v8826
    %v8828 = vrot.slane %v8827, 1
    %v8829 = vadd.f32 %v8827, %v8828
    %v8830 = vmul.f32 %v8681, %v8681
    %v8831 = vmul.f32 %v8682, %v8682
    %v8832 = vmul.f32 %v8683, %v8683
    %v8833 = vmul.f32 %v8684, %v8684
    %v8834 = vmul.f32 %v8685, %v8685
    %v8835 = vmul.f32 %v8686, %v8686
    %v8836 = vmul.f32 %v8687, %v8687
    %v8837 = vmul.f32 %v8688, %v8688
    %v8838 = vmul.f32 %v8689, %v8689
    %v8839 = vmul.f32 %v8690, %v8690
    %v8840 = vmul.f32 %v8691, %v8691
    %v8841 = vmul.f32 %v8692, %v8692
    %v8842 = vmul.f32 %v8693, %v8693
    %v8843 = vmul.f32 %v8694, %v8694
    %v8844 = vmul.f32 %v8695, %v8695
    %v8845 = vmul.f32 %v8696, %v8696
    %v8846 = vmul.f32 %v8697, %v8697
    %v8847 = vmul.f32 %v8698, %v8698
    %v8848 = vmul.f32 %v8699, %v8699
    %v8849 = vmul.f32 %v8700, %v8700
    %v8850 = vmul.f32 %v8701, %v8701
    %v8851 = vmul.f32 %v8702, %v8702
    %v8852 = vmul.f32 %v8703, %v8703
    %v8853 = vmul.f32 %v8704, %v8704
    %v8854 = vmul.f32 %v8705, %v8705
    %v8855 = vmul.f32 %v8706, %v8706
    %v8856 = vmul.f32 %v8707, %v8707
    %v8857 = vmul.f32 %v8708, %v8708
    %v8858 = vmul.f32 %v8709, %v8709
    %v8859 = vmul.f32 %v8710, %v8710
    %v8860 = vmul.f32 %v8711, %v8711
    %v8861 = vmul.f32 %v8712, %v8712
    %v8862 = vmul.f32 %v8713, %v8713
    %v8863 = vmul.f32 %v8714, %v8714
    %v8864 = vmul.f32 %v8715, %v8715
    %v8865 = vmul.f32 %v8716, %v8716
    %v8866 = vmul.f32 %v8717, %v8717
    %v8867 = vmul.f32 %v8718, %v8718
    %v8868 = vmul.f32 %v8719, %v8719
    %v8869 = vmul.f32 %v8720, %v8720
    %v8870 = vmul.f32 %v8721, %v8721
    %v8871 = vmul.f32 %v8722, %v8722
    %v8872 = vmul.f32 %v8723, %v8723
    %v8873 = vmul.f32 %v8724, %v8724
    %v8874 = vmul.f32 %v8725, %v8725
    %v8875 = vmul.f32 %v8726, %v8726
    %v8876 = vmul.f32 %v8727, %v8727
    %v8877 = vmul.f32 %v8728, %v8728
    %v8878 = vmul.f32 %v8729, %v8729
    %v8879 = vmul.f32 %v8730, %v8730
    %v8880 = vmul.f32 %v8731, %v8731
    %v8881 = vmul.f32 %v8732, %v8732
    %v8882 = vmul.f32 %v8733, %v8733
    %v8883 = vmul.f32 %v8734, %v8734
    %v8884 = vmul.f32 %v8735, %v8735
    %v8885 = vmul.f32 %v8736, %v8736
    %v8886 = vmul.f32 %v8737, %v8737
    %v8887 = vmul.f32 %v8738, %v8738
    %v8888 = vmul.f32 %v8739, %v8739
    %v8889 = vmul.f32 %v8740, %v8740
    %v8890 = vmul.f32 %v8741, %v8741
    %v8891 = vmul.f32 %v8742, %v8742
    %v8892 = vmul.f32 %v8743, %v8743
    %v8893 = vmul.f32 %v8744, %v8744
    %v8894 = vmul.f32 %v8745, %v8745
    %v8895 = vmul.f32 %v8746, %v8746
    %v8896 = vmul.f32 %v8747, %v8747
    %v8897 = vmul.f32 %v8748, %v8748
    %v8898 = vmul.f32 %v8749, %v8749
    %v8899 = vmul.f32 %v8750, %v8750
    %v8900 = vmul.f32 %v8751, %v8751
    %v8901 = vmul.f32 %v8752, %v8752
    %v8902 = vadd.f32 %v8830, %v8833
    %v8903 = vadd.f32 %v8902, %v8836
    %v8904 = vadd.f32 %v8903, %v8839
    %v8905 = vadd.f32 %v8904, %v8842
    %v8906 = vadd.f32 %v8905, %v8845
    %v8907 = vadd.f32 %v8906, %v8848
    %v8908 = vadd.f32 %v8907, %v8851
    %v8909 = vadd.f32 %v8908, %v8854
    %v8910 = vadd.f32 %v8909, %v8857
    %v8911 = vadd.f32 %v8910, %v8860
    %v8912 = vadd.f32 %v8911, %v8863
    %v8913 = vadd.f32 %v8912, %v8866
    %v8914 = vadd.f32 %v8913, %v8869
    %v8915 = vadd.f32 %v8914, %v8872
    %v8916 = vadd.f32 %v8915, %v8875
    %v8917 = vadd.f32 %v8916, %v8878
    %v8918 = vadd.f32 %v8917, %v8881
    %v8919 = vadd.f32 %v8918, %v8884
    %v8920 = vadd.f32 %v8919, %v8887
    %v8921 = vadd.f32 %v8920, %v8890
    %v8922 = vadd.f32 %v8921, %v8893
    %v8923 = vadd.f32 %v8922, %v8896
    %v8924 = vadd.f32 %v8923, %v8899
    %v8925 = vadd.f32 %v8831, %v8834
    %v8926 = vadd.f32 %v8925, %v8837
    %v8927 = vadd.f32 %v8926, %v8840
    %v8928 = vadd.f32 %v8927, %v8843
    %v8929 = vadd.f32 %v8928, %v8846
    %v8930 = vadd.f32 %v8929, %v8849
    %v8931 = vadd.f32 %v8930, %v8852
    %v8932 = vadd.f32 %v8931, %v8855
    %v8933 = vadd.f32 %v8932, %v8858
    %v8934 = vadd.f32 %v8933, %v8861
    %v8935 = vadd.f32 %v8934, %v8864
    %v8936 = vadd.f32 %v8935, %v8867
    %v8937 = vadd.f32 %v8936, %v8870
    %v8938 = vadd.f32 %v8937, %v8873
    %v8939 = vadd.f32 %v8938, %v8876
    %v8940 = vadd.f32 %v8939, %v8879
    %v8941 = vadd.f32 %v8940, %v8882
    %v8942 = vadd.f32 %v8941, %v8885
    %v8943 = vadd.f32 %v8942, %v8888
    %v8944 = vadd.f32 %v8943, %v8891
    %v8945 = vadd.f32 %v8944, %v8894
    %v8946 = vadd.f32 %v8945, %v8897
    %v8947 = vadd.f32 %v8946, %v8900
    %v8948 = vadd.f32 %v8832, %v8835
    %v8949 = vadd.f32 %v8948, %v8838
    %v8950 = vadd.f32 %v8949, %v8841
    %v8951 = vadd.f32 %v8950, %v8844
    %v8952 = vadd.f32 %v8951, %v8847
    %v8953 = vadd.f32 %v8952, %v8850
    %v8954 = vadd.f32 %v8953, %v8853
    %v8955 = vadd.f32 %v8954, %v8856
    %v8956 = vadd.f32 %v8955, %v8859
    %v8957 = vadd.f32 %v8956, %v8862
    %v8958 = vadd.f32 %v8957, %v8865
    %v8959 = vadd.f32 %v8958, %v8868
    %v8960 = vadd.f32 %v8959, %v8871
    %v8961 = vadd.f32 %v8960, %v8874
    %v8962 = vadd.f32 %v8961, %v8877
    %v8963 = vadd.f32 %v8962, %v8880
    %v8964 = vadd.f32 %v8963, %v8883
    %v8965 = vadd.f32 %v8964, %v8886
    %v8966 = vadd.f32 %v8965, %v8889
    %v8967 = vadd.f32 %v8966, %v8892
    %v8968 = vadd.f32 %v8967, %v8895
    %v8969 = vadd.f32 %v8968, %v8898
    %v8970 = vadd.f32 %v8969, %v8901
    %v8971 = vadd.f32 %v8924, %v8947
    %v8972 = vadd.f32 %v8971, %v8970
    %v8973 = vrot.slane %v8972, 4
    %v8974 = vadd.f32 %v8972, %v8973
    %v8975 = vrot.slane %v8974, 2
    %v8976 = vadd.f32 %v8974, %v8975
    %v8977 = vrot.slane %v8976, 1
    %v8978 = vadd.f32 %v8976, %v8977
    %v8979 = vmul.f32 %v8829, 0.0017361111
    %v8980 = vmul.f32 %v8978, 0.0017361111
    %v8981 = vmul.f32 %v8979, %v8979
    %v8982 = vsub.f32 %v8980, %v8981
    %v8983 = vsub.f32 %v8681, %v8979
    %v8984 = vsub.f32 %v8682, %v8979
    %v8985 = vsub.f32 %v8683, %v8979
    %v8986 = vsub.f32 %v8684, %v8979
    %v8987 = vsub.f32 %v8685, %v8979
    %v8988 = vsub.f32 %v8686, %v8979
    %v8989 = vsub.f32 %v8687, %v8979
    %v8990 = vsub.f32 %v8688, %v8979
    %v8991 = vsub.f32 %v8689, %v8979
    %v8992 = vsub.f32 %v8690, %v8979
    %v8993 = vsub.f32 %v8691, %v8979
    %v8994 = vsub.f32 %v8692, %v8979
    %v8995 = vsub.f32 %v8693, %v8979
    %v8996 = vsub.f32 %v8694, %v8979
    %v8997 = vsub.f32 %v8695, %v8979
    %v8998 = vsub.f32 %v8696, %v8979
    %v8999 = vsub.f32 %v8697, %v8979
    %v9000 = vsub.f32 %v8698, %v8979
    %v9001 = vsub.f32 %v8699, %v8979
    %v9002 = vsub.f32 %v8700, %v8979
    %v9003 = vsub.f32 %v8701, %v8979
    %v9004 = vsub.f32 %v8702, %v8979
    %v9005 = vsub.f32 %v8703, %v8979
    %v9006 = vsub.f32 %v8704, %v8979
    %v9007 = vsub.f32 %v8705, %v8979
    %v9008 = vsub.f32 %v8706, %v8979
    %v9009 = vsub.f32 %v8707, %v8979
    %v9010 = vsub.f32 %v8708, %v8979
    %v9011 = vsub.f32 %v8709, %v8979
    %v9012 = vsub.f32 %v8710, %v8979
    %v9013 = vsub.f32 %v8711, %v8979
    %v9014 = vsub.f32 %v8712, %v8979
    %v9015 = vsub.f32 %v8713, %v8979
    %v9016 = vsub.f32 %v8714, %v8979
    %v9017 = vsub.f32 %v8715, %v8979
    %v9018 = vsub.f32 %v8716, %v8979
    %v9019 = vsub.f32 %v8717, %v8979
    %v9020 = vsub.f32 %v8718, %v8979
    %v9021 = vsub.f32 %v8719, %v8979
    %v9022 = vsub.f32 %v8720, %v8979
    %v9023 = vsub.f32 %v8721, %v8979
    %v9024 = vsub.f32 %v8722, %v8979
    %v9025 = vsub.f32 %v8723, %v8979
    %v9026 = vsub.f32 %v8724, %v8979
    %v9027 = vsub.f32 %v8725, %v8979
    %v9028 = vsub.f32 %v8726, %v8979
    %v9029 = vsub.f32 %v8727, %v8979
    %v9030 = vsub.f32 %v8728, %v8979
    %v9031 = vsub.f32 %v8729, %v8979
    %v9032 = vsub.f32 %v8730, %v8979
    %v9033 = vsub.f32 %v8731, %v8979
    %v9034 = vsub.f32 %v8732, %v8979
    %v9035 = vsub.f32 %v8733, %v8979
    %v9036 = vsub.f32 %v8734, %v8979
    %v9037 = vsub.f32 %v8735, %v8979
    %v9038 = vsub.f32 %v8736, %v8979
    %v9039 = vsub.f32 %v8737, %v8979
    %v9040 = vsub.f32 %v8738, %v8979
    %v9041 = vsub.f32 %v8739, %v8979
    %v9042 = vsub.f32 %v8740, %v8979
    %v9043 = vsub.f32 %v8741, %v8979
    %v9044 = vsub.f32 %v8742, %v8979
    %v9045 = vsub.f32 %v8743, %v8979
    %v9046 = vsub.f32 %v8744, %v8979
    %v9047 = vsub.f32 %v8745, %v8979
    %v9048 = vsub.f32 %v8746, %v8979
    %v9049 = vsub.f32 %v8747, %v8979
    %v9050 = vsub.f32 %v8748, %v8979
    %v9051 = vsub.f32 %v8749, %v8979
    %v9052 = vsub.f32 %v8750, %v8979
    %v9053 = vsub.f32 %v8751, %v8979
    %v9054 = vsub.f32 %v8752, %v8979
    %v9055 = vadd.f32 %v8982, 1e-05
    %v9056 = vrsqrt.pop %v9055
    %v9057 = vmul.f32 %v8983, %v9056
    %v9058 = vmul.f32 %v8984, %v9056
    %v9059 = vmul.f32 %v8985, %v9056
    %v9060 = vmul.f32 %v8986, %v9056
    %v9061 = vmul.f32 %v8987, %v9056
    %v9062 = vmul.f32 %v8988, %v9056
    %v9063 = vmul.f32 %v8989, %v9056
    %v9064 = vmul.f32 %v8990, %v9056
    %v9065 = vmul.f32 %v8991, %v9056
    %v9066 = vmul.f32 %v8992, %v9056
    %v9067 = vmul.f32 %v8993, %v9056
    %v9068 = vmul.f32 %v8994, %v9056
    %v9069 = vmul.f32 %v8995, %v9056
    %v9070 = vmul.f32 %v8996, %v9056
    %v9071 = vmul.f32 %v8997, %v9056
    %v9072 = vmul.f32 %v8998, %v9056
    %v9073 = vmul.f32 %v8999, %v9056
    %v9074 = vmul.f32 %v9000, %v9056
    %v9075 = vmul.f32 %v9001, %v9056
    %v9076 = vmul.f32 %v9002, %v9056
    %v9077 = vmul.f32 %v9003, %v9056
    %v9078 = vmul.f32 %v9004, %v9056
    %v9079 = vmul.f32 %v9005, %v9056
    %v9080 = vmul.f32 %v9006, %v9056
    %v9081 = vmul.f32 %v9007, %v9056
    %v9082 = vmul.f32 %v9008, %v9056
    %v9083 = vmul.f32 %v9009, %v9056
    %v9084 = vmul.f32 %v9010, %v9056
    %v9085 = vmul.f32 %v9011, %v9056
    %v9086 = vmul.f32 %v9012, %v9056
    %v9087 = vmul.f32 %v9013, %v9056
    %v9088 = vmul.f32 %v9014, %v9056
    %v9089 = vmul.f32 %v9015, %v9056
    %v9090 = vmul.f32 %v9016, %v9056
    %v9091 = vmul.f32 %v9017, %v9056
    %v9092 = vmul.f32 %v9018, %v9056
    %v9093 = vmul.f32 %v9019, %v9056
    %v9094 = vmul.f32 %v9020, %v9056
    %v9095 = vmul.f32 %v9021, %v9056
    %v9096 = vmul.f32 %v9022, %v9056
    %v9097 = vmul.f32 %v9023, %v9056
    %v9098 = vmul.f32 %v9024, %v9056
    %v9099 = vmul.f32 %v9025, %v9056
    %v9100 = vmul.f32 %v9026, %v9056
    %v9101 = vmul.f32 %v9027, %v9056
    %v9102 = vmul.f32 %v9028, %v9056
    %v9103 = vmul.f32 %v9029, %v9056
    %v9104 = vmul.f32 %v9030, %v9056
    %v9105 = vmul.f32 %v9031, %v9056
    %v9106 = vmul.f32 %v9032, %v9056
    %v9107 = vmul.f32 %v9033, %v9056
    %v9108 = vmul.f32 %v9034, %v9056
    %v9109 = vmul.f32 %v9035, %v9056
    %v9110 = vmul.f32 %v9036, %v9056
    %v9111 = vmul.f32 %v9037, %v9056
    %v9112 = vmul.f32 %v9038, %v9056
    %v9113 = vmul.f32 %v9039, %v9056
    %v9114 = vmul.f32 %v9040, %v9056
    %v9115 = vmul.f32 %v9041, %v9056
    %v9116 = vmul.f32 %v9042, %v9056
    %v9117 = vmul.f32 %v9043, %v9056
    %v9118 = vmul.f32 %v9044, %v9056
    %v9119 = vmul.f32 %v9045, %v9056
    %v9120 = vmul.f32 %v9046, %v9056
    %v9121 = vmul.f32 %v9047, %v9056
    %v9122 = vmul.f32 %v9048, %v9056
    %v9123 = vmul.f32 %v9049, %v9056
    %v9124 = vmul.f32 %v9050, %v9056
    %v9125 = vmul.f32 %v9051, %v9056
    %v9126 = vmul.f32 %v9052, %v9056
    %v9127 = vmul.f32 %v9053, %v9056
    %v9128 = vmul.f32 %v9054, %v9056
    %s9129 = sld [smem:[#allocation2 + $0x100]]
    %v9130 = vstv %s9129
    %v9131 = vmul.f32 %v9057, %v9130
    %v9132 = vmul.f32 %v9058, %v9130
    %v9133 = vmul.f32 %v9059, %v9130
    %v9134 = vmul.f32 %v9060, %v9130
    %v9135 = vmul.f32 %v9061, %v9130
    %v9136 = vmul.f32 %v9062, %v9130
    %v9137 = vmul.f32 %v9063, %v9130
    %v9138 = vmul.f32 %v9064, %v9130
    %v9139 = vmul.f32 %v9065, %v9130
    %v9140 = vmul.f32 %v9066, %v9130
    %v9141 = vmul.f32 %v9067, %v9130
    %v9142 = vmul.f32 %v9068, %v9130
    %v9143 = vmul.f32 %v9069, %v9130
    %v9144 = vmul.f32 %v9070, %v9130
    %v9145 = vmul.f32 %v9071, %v9130
    %v9146 = vmul.f32 %v9072, %v9130
    %v9147 = vmul.f32 %v9073, %v9130
    %v9148 = vmul.f32 %v9074, %v9130
    %v9149 = vmul.f32 %v9075, %v9130
    %v9150 = vmul.f32 %v9076, %v9130
    %v9151 = vmul.f32 %v9077, %v9130
    %v9152 = vmul.f32 %v9078, %v9130
    %v9153 = vmul.f32 %v9079, %v9130
    %v9154 = vmul.f32 %v9080, %v9130
    %v9155 = vmul.f32 %v9081, %v9130
    %v9156 = vmul.f32 %v9082, %v9130
    %v9157 = vmul.f32 %v9083, %v9130
    %v9158 = vmul.f32 %v9084, %v9130
    %v9159 = vmul.f32 %v9085, %v9130
    %v9160 = vmul.f32 %v9086, %v9130
    %v9161 = vmul.f32 %v9087, %v9130
    %v9162 = vmul.f32 %v9088, %v9130
    %v9163 = vmul.f32 %v9089, %v9130
    %v9164 = vmul.f32 %v9090, %v9130
    %v9165 = vmul.f32 %v9091, %v9130
    %v9166 = vmul.f32 %v9092, %v9130
    %v9167 = vmul.f32 %v9093, %v9130
    %v9168 = vmul.f32 %v9094, %v9130
    %v9169 = vmul.f32 %v9095, %v9130
    %v9170 = vmul.f32 %v9096, %v9130
    %v9171 = vmul.f32 %v9097, %v9130
    %v9172 = vmul.f32 %v9098, %v9130
    %v9173 = vmul.f32 %v9099, %v9130
    %v9174 = vmul.f32 %v9100, %v9130
    %v9175 = vmul.f32 %v9101, %v9130
    %v9176 = vmul.f32 %v9102, %v9130
    %v9177 = vmul.f32 %v9103, %v9130
    %v9178 = vmul.f32 %v9104, %v9130
    %v9179 = vmul.f32 %v9105, %v9130
    %v9180 = vmul.f32 %v9106, %v9130
    %v9181 = vmul.f32 %v9107, %v9130
    %v9182 = vmul.f32 %v9108, %v9130
    %v9183 = vmul.f32 %v9109, %v9130
    %v9184 = vmul.f32 %v9110, %v9130
    %v9185 = vmul.f32 %v9111, %v9130
    %v9186 = vmul.f32 %v9112, %v9130
    %v9187 = vmul.f32 %v9113, %v9130
    %v9188 = vmul.f32 %v9114, %v9130
    %v9189 = vmul.f32 %v9115, %v9130
    %v9190 = vmul.f32 %v9116, %v9130
    %v9191 = vmul.f32 %v9117, %v9130
    %v9192 = vmul.f32 %v9118, %v9130
    %v9193 = vmul.f32 %v9119, %v9130
    %v9194 = vmul.f32 %v9120, %v9130
    %v9195 = vmul.f32 %v9121, %v9130
    %v9196 = vmul.f32 %v9122, %v9130
    %s9197 = sld [smem:[#allocation2 + $0x103]]
    %v9198 = vstv %s9197
    %v9199 = vmul.f32 %v9060, %v9198
    %v9200 = vmul.f32 %v9061, %v9198
    %v9201 = vmul.f32 %v9062, %v9198
    %v9202 = vmul.f32 %v9063, %v9198
    %v9203 = vmul.f32 %v9064, %v9198
    %v9204 = vmul.f32 %v9065, %v9198
    %v9205 = vmul.f32 %v9066, %v9198
    %v9206 = vmul.f32 %v9067, %v9198
    %v9207 = vmul.f32 %v9068, %v9198
    %v9208 = vmul.f32 %v9069, %v9198
    %v9209 = vmul.f32 %v9070, %v9198
    %v9210 = vmul.f32 %v9071, %v9198
    %v9211 = vmul.f32 %v9072, %v9198
    %v9212 = vmul.f32 %v9073, %v9198
    %v9213 = vmul.f32 %v9074, %v9198
    %v9214 = vmul.f32 %v9075, %v9198
    %v9215 = vmul.f32 %v9076, %v9198
    %v9216 = vmul.f32 %v9077, %v9198
    %v9217 = vmul.f32 %v9078, %v9198
    %v9218 = vmul.f32 %v9079, %v9198
    %v9219 = vmul.f32 %v9080, %v9198
    %v9220 = vmul.f32 %v9081, %v9198
    %v9221 = vmul.f32 %v9082, %v9198
    %v9222 = vmul.f32 %v9083, %v9198
    %v9223 = vmul.f32 %v9084, %v9198
    %v9224 = vmul.f32 %v9085, %v9198
    %v9225 = vmul.f32 %v9086, %v9198
    %v9226 = vmul.f32 %v9087, %v9198
    %v9227 = vmul.f32 %v9088, %v9198
    %v9228 = vmul.f32 %v9089, %v9198
    %v9229 = vmul.f32 %v9090, %v9198
    %v9230 = vmul.f32 %v9091, %v9198
    %v9231 = vmul.f32 %v9092, %v9198
    %v9232 = vmul.f32 %v9093, %v9198
    %v9233 = vmul.f32 %v9094, %v9198
    %v9234 = vmul.f32 %v9095, %v9198
    %v9235 = vmul.f32 %v9096, %v9198
    %v9236 = vmul.f32 %v9097, %v9198
    %v9237 = vmul.f32 %v9098, %v9198
    %v9238 = vmul.f32 %v9099, %v9198
    %v9239 = vmul.f32 %v9100, %v9198
    %v9240 = vmul.f32 %v9101, %v9198
    %v9241 = vmul.f32 %v9102, %v9198
    %v9242 = vmul.f32 %v9103, %v9198
    %v9243 = vmul.f32 %v9104, %v9198
    %v9244 = vmul.f32 %v9105, %v9198
    %v9245 = vmul.f32 %v9106, %v9198
    %v9246 = vmul.f32 %v9107, %v9198
    %v9247 = vmul.f32 %v9108, %v9198
    %v9248 = vmul.f32 %v9109, %v9198
    %v9249 = vmul.f32 %v9110, %v9198
    %v9250 = vmul.f32 %v9111, %v9198
    %v9251 = vmul.f32 %v9112, %v9198
    %v9252 = vmul.f32 %v9113, %v9198
    %v9253 = vmul.f32 %v9114, %v9198
    %v9254 = vmul.f32 %v9115, %v9198
    %v9255 = vmul.f32 %v9116, %v9198
    %v9256 = vmul.f32 %v9117, %v9198
    %v9257 = vmul.f32 %v9118, %v9198
    %v9258 = vmul.f32 %v9119, %v9198
    %v9259 = vmul.f32 %v9120, %v9198
    %v9260 = vmul.f32 %v9121, %v9198
    %v9261 = vmul.f32 %v9122, %v9198
    %v9262 = vmul.f32 %v9123, %v9198
    %v9263 = vmul.f32 %v9124, %v9198
    %v9264 = vmul.f32 %v9125, %v9198
    %v9265 = vadd.f32 %v9131, %v9199
    %v9266 = vadd.f32 %v9132, %v9200
    %v9267 = vadd.f32 %v9133, %v9201
    %v9268 = vadd.f32 %v9134, %v9202
    %v9269 = vadd.f32 %v9135, %v9203
    %v9270 = vadd.f32 %v9136, %v9204
    %v9271 = vadd.f32 %v9137, %v9205
    %v9272 = vadd.f32 %v9138, %v9206
    %v9273 = vadd.f32 %v9139, %v9207
    %v9274 = vadd.f32 %v9140, %v9208
    %v9275 = vadd.f32 %v9141, %v9209
    %v9276 = vadd.f32 %v9142, %v9210
    %v9277 = vadd.f32 %v9143, %v9211
    %v9278 = vadd.f32 %v9144, %v9212
    %v9279 = vadd.f32 %v9145, %v9213
    %v9280 = vadd.f32 %v9146, %v9214
    %v9281 = vadd.f32 %v9147, %v9215
    %v9282 = vadd.f32 %v9148, %v9216
    %v9283 = vadd.f32 %v9149, %v9217
    %v9284 = vadd.f32 %v9150, %v9218
    %v9285 = vadd.f32 %v9151, %v9219
    %v9286 = vadd.f32 %v9152, %v9220
    %v9287 = vadd.f32 %v9153, %v9221
    %v9288 = vadd.f32 %v9154, %v9222
    %v9289 = vadd.f32 %v9155, %v9223
    %v9290 = vadd.f32 %v9156, %v9224
    %v9291 = vadd.f32 %v9157, %v9225
    %v9292 = vadd.f32 %v9158, %v9226
    %v9293 = vadd.f32 %v9159, %v9227
    %v9294 = vadd.f32 %v9160, %v9228
    %v9295 = vadd.f32 %v9161, %v9229
    %v9296 = vadd.f32 %v9162, %v9230
    %v9297 = vadd.f32 %v9163, %v9231
    %v9298 = vadd.f32 %v9164, %v9232
    %v9299 = vadd.f32 %v9165, %v9233
    %v9300 = vadd.f32 %v9166, %v9234
    %v9301 = vadd.f32 %v9167, %v9235
    %v9302 = vadd.f32 %v9168, %v9236
    %v9303 = vadd.f32 %v9169, %v9237
    %v9304 = vadd.f32 %v9170, %v9238
    %v9305 = vadd.f32 %v9171, %v9239
    %v9306 = vadd.f32 %v9172, %v9240
    %v9307 = vadd.f32 %v9173, %v9241
    %v9308 = vadd.f32 %v9174, %v9242
    %v9309 = vadd.f32 %v9175, %v9243
    %v9310 = vadd.f32 %v9176, %v9244
    %v9311 = vadd.f32 %v9177, %v9245
    %v9312 = vadd.f32 %v9178, %v9246
    %v9313 = vadd.f32 %v9179, %v9247
    %v9314 = vadd.f32 %v9180, %v9248
    %v9315 = vadd.f32 %v9181, %v9249
    %v9316 = vadd.f32 %v9182, %v9250
    %v9317 = vadd.f32 %v9183, %v9251
    %v9318 = vadd.f32 %v9184, %v9252
    %v9319 = vadd.f32 %v9185, %v9253
    %v9320 = vadd.f32 %v9186, %v9254
    %v9321 = vadd.f32 %v9187, %v9255
    %v9322 = vadd.f32 %v9188, %v9256
    %v9323 = vadd.f32 %v9189, %v9257
    %v9324 = vadd.f32 %v9190, %v9258
    %v9325 = vadd.f32 %v9191, %v9259
    %v9326 = vadd.f32 %v9192, %v9260
    %v9327 = vadd.f32 %v9193, %v9261
    %v9328 = vadd.f32 %v9194, %v9262
    %v9329 = vadd.f32 %v9195, %v9263
    %v9330 = vadd.f32 %v9196, %v9264
    %s9331 = sld [smem:[#allocation2 + $0x106]]
    %v9332 = vstv %s9331
    %v9333 = vmul.f32 %v9063, %v9332
    %v9334 = vmul.f32 %v9064, %v9332
    %v9335 = vmul.f32 %v9065, %v9332
    %v9336 = vmul.f32 %v9066, %v9332
    %v9337 = vmul.f32 %v9067, %v9332
    %v9338 = vmul.f32 %v9068, %v9332
    %v9339 = vmul.f32 %v9069, %v9332
    %v9340 = vmul.f32 %v9070, %v9332
    %v9341 = vmul.f32 %v9071, %v9332
    %v9342 = vmul.f32 %v9072, %v9332
    %v9343 = vmul.f32 %v9073, %v9332
    %v9344 = vmul.f32 %v9074, %v9332
    %v9345 = vmul.f32 %v9075, %v9332
    %v9346 = vmul.f32 %v9076, %v9332
    %v9347 = vmul.f32 %v9077, %v9332
    %v9348 = vmul.f32 %v9078, %v9332
    %v9349 = vmul.f32 %v9079, %v9332
    %v9350 = vmul.f32 %v9080, %v9332
    %v9351 = vmul.f32 %v9081, %v9332
    %v9352 = vmul.f32 %v9082, %v9332
    %v9353 = vmul.f32 %v9083, %v9332
    %v9354 = vmul.f32 %v9084, %v9332
    %v9355 = vmul.f32 %v9085, %v9332
    %v9356 = vmul.f32 %v9086, %v9332
    %v9357 = vmul.f32 %v9087, %v9332
    %v9358 = vmul.f32 %v9088, %v9332
    %v9359 = vmul.f32 %v9089, %v9332
    %v9360 = vmul.f32 %v9090, %v9332
    %v9361 = vmul.f32 %v9091, %v9332
    %v9362 = vmul.f32 %v9092, %v9332
    %v9363 = vmul.f32 %v9093, %v9332
    %v9364 = vmul.f32 %v9094, %v9332
    %v9365 = vmul.f32 %v9095, %v9332
    %v9366 = vmul.f32 %v9096, %v9332
    %v9367 = vmul.f32 %v9097, %v9332
    %v9368 = vmul.f32 %v9098, %v9332
    %v9369 = vmul.f32 %v9099, %v9332
    %v9370 = vmul.f32 %v9100, %v9332
    %v9371 = vmul.f32 %v9101, %v9332
    %v9372 = vmul.f32 %v9102, %v9332
    %v9373 = vmul.f32 %v9103, %v9332
    %v9374 = vmul.f32 %v9104, %v9332
    %v9375 = vmul.f32 %v9105, %v9332
    %v9376 = vmul.f32 %v9106, %v9332
    %v9377 = vmul.f32 %v9107, %v9332
    %v9378 = vmul.f32 %v9108, %v9332
    %v9379 = vmul.f32 %v9109, %v9332
    %v9380 = vmul.f32 %v9110, %v9332
    %v9381 = vmul.f32 %v9111, %v9332
    %v9382 = vmul.f32 %v9112, %v9332
    %v9383 = vmul.f32 %v9113, %v9332
    %v9384 = vmul.f32 %v9114, %v9332
    %v9385 = vmul.f32 %v9115, %v9332
    %v9386 = vmul.f32 %v9116, %v9332
    %v9387 = vmul.f32 %v9117, %v9332
    %v9388 = vmul.f32 %v9118, %v9332
    %v9389 = vmul.f32 %v9119, %v9332
    %v9390 = vmul.f32 %v9120, %v9332
    %v9391 = vmul.f32 %v9121, %v9332
    %v9392 = vmul.f32 %v9122, %v9332
    %v9393 = vmul.f32 %v9123, %v9332
    %v9394 = vmul.f32 %v9124, %v9332
    %v9395 = vmul.f32 %v9125, %v9332
    %v9396 = vmul.f32 %v9126, %v9332
    %v9397 = vmul.f32 %v9127, %v9332
    %v9398 = vmul.f32 %v9128, %v9332
    %v9399 = vadd.f32 %v9265, %v9333
    %v9400 = vadd.f32 %v9266, %v9334
    %v9401 = vadd.f32 %v9267, %v9335
    %v9402 = vadd.f32 %v9268, %v9336
    %v9403 = vadd.f32 %v9269, %v9337
    %v9404 = vadd.f32 %v9270, %v9338
    %v9405 = vadd.f32 %v9271, %v9339
    %v9406 = vadd.f32 %v9272, %v9340
    %v9407 = vadd.f32 %v9273, %v9341
    %v9408 = vadd.f32 %v9274, %v9342
    %v9409 = vadd.f32 %v9275, %v9343
    %v9410 = vadd.f32 %v9276, %v9344
    %v9411 = vadd.f32 %v9277, %v9345
    %v9412 = vadd.f32 %v9278, %v9346
    %v9413 = vadd.f32 %v9279, %v9347
    %v9414 = vadd.f32 %v9280, %v9348
    %v9415 = vadd.f32 %v9281, %v9349
    %v9416 = vadd.f32 %v9282, %v9350
    %v9417 = vadd.f32 %v9283, %v9351
    %v9418 = vadd.f32 %v9284, %v9352
    %v9419 = vadd.f32 %v9285, %v9353
    %v9420 = vadd.f32 %v9286, %v9354
    %v9421 = vadd.f32 %v9287, %v9355
    %v9422 = vadd.f32 %v9288, %v9356
    %v9423 = vadd.f32 %v9289, %v9357
    %v9424 = vadd.f32 %v9290, %v9358
    %v9425 = vadd.f32 %v9291, %v9359
    %v9426 = vadd.f32 %v9292, %v9360
    %v9427 = vadd.f32 %v9293, %v9361
    %v9428 = vadd.f32 %v9294, %v9362
    %v9429 = vadd.f32 %v9295, %v9363
    %v9430 = vadd.f32 %v9296, %v9364
    %v9431 = vadd.f32 %v9297, %v9365
    %v9432 = vadd.f32 %v9298, %v9366
    %v9433 = vadd.f32 %v9299, %v9367
    %v9434 = vadd.f32 %v9300, %v9368
    %v9435 = vadd.f32 %v9301, %v9369
    %v9436 = vadd.f32 %v9302, %v9370
    %v9437 = vadd.f32 %v9303, %v9371
    %v9438 = vadd.f32 %v9304, %v9372
    %v9439 = vadd.f32 %v9305, %v9373
    %v9440 = vadd.f32 %v9306, %v9374
    %v9441 = vadd.f32 %v9307, %v9375
    %v9442 = vadd.f32 %v9308, %v9376
    %v9443 = vadd.f32 %v9309, %v9377
    %v9444 = vadd.f32 %v9310, %v9378
    %v9445 = vadd.f32 %v9311, %v9379
    %v9446 = vadd.f32 %v9312, %v9380
    %v9447 = vadd.f32 %v9313, %v9381
    %v9448 = vadd.f32 %v9314, %v9382
    %v9449 = vadd.f32 %v9315, %v9383
    %v9450 = vadd.f32 %v9316, %v9384
    %v9451 = vadd.f32 %v9317, %v9385
    %v9452 = vadd.f32 %v9318, %v9386
    %v9453 = vadd.f32 %v9319, %v9387
    %v9454 = vadd.f32 %v9320, %v9388
    %v9455 = vadd.f32 %v9321, %v9389
    %v9456 = vadd.f32 %v9322, %v9390
    %v9457 = vadd.f32 %v9323, %v9391
    %v9458 = vadd.f32 %v9324, %v9392
    %v9459 = vadd.f32 %v9325, %v9393
    %v9460 = vadd.f32 %v9326, %v9394
    %v9461 = vadd.f32 %v9327, %v9395
    %v9462 = vadd.f32 %v9328, %v9396
    %v9463 = vadd.f32 %v9329, %v9397
    %v9464 = vadd.f32 %v9330, %v9398
    %s9465 = sld [smem:[#allocation2 + $0x101]]
    %v9466 = vstv %s9465
    %v9467 = vmul.f32 %v9057, %v9466
    %v9468 = vmul.f32 %v9058, %v9466
    %v9469 = vmul.f32 %v9059, %v9466
    %v9470 = vmul.f32 %v9060, %v9466
    %v9471 = vmul.f32 %v9061, %v9466
    %v9472 = vmul.f32 %v9062, %v9466
    %v9473 = vmul.f32 %v9063, %v9466
    %v9474 = vmul.f32 %v9064, %v9466
    %v9475 = vmul.f32 %v9065, %v9466
    %v9476 = vmul.f32 %v9066, %v9466
    %v9477 = vmul.f32 %v9067, %v9466
    %v9478 = vmul.f32 %v9068, %v9466
    %v9479 = vmul.f32 %v9069, %v9466
    %v9480 = vmul.f32 %v9070, %v9466
    %v9481 = vmul.f32 %v9071, %v9466
    %v9482 = vmul.f32 %v9072, %v9466
    %v9483 = vmul.f32 %v9073, %v9466
    %v9484 = vmul.f32 %v9074, %v9466
    %v9485 = vmul.f32 %v9075, %v9466
    %v9486 = vmul.f32 %v9076, %v9466
    %v9487 = vmul.f32 %v9077, %v9466
    %v9488 = vmul.f32 %v9078, %v9466
    %v9489 = vmul.f32 %v9079, %v9466
    %v9490 = vmul.f32 %v9080, %v9466
    %v9491 = vmul.f32 %v9081, %v9466
    %v9492 = vmul.f32 %v9082, %v9466
    %v9493 = vmul.f32 %v9083, %v9466
    %v9494 = vmul.f32 %v9084, %v9466
    %v9495 = vmul.f32 %v9085, %v9466
    %v9496 = vmul.f32 %v9086, %v9466
    %v9497 = vmul.f32 %v9087, %v9466
    %v9498 = vmul.f32 %v9088, %v9466
    %v9499 = vmul.f32 %v9089, %v9466
    %v9500 = vmul.f32 %v9090, %v9466
    %v9501 = vmul.f32 %v9091, %v9466
    %v9502 = vmul.f32 %v9092, %v9466
    %v9503 = vmul.f32 %v9093, %v9466
    %v9504 = vmul.f32 %v9094, %v9466
    %v9505 = vmul.f32 %v9095, %v9466
    %v9506 = vmul.f32 %v9096, %v9466
    %v9507 = vmul.f32 %v9097, %v9466
    %v9508 = vmul.f32 %v9098, %v9466
    %v9509 = vmul.f32 %v9099, %v9466
    %v9510 = vmul.f32 %v9100, %v9466
    %v9511 = vmul.f32 %v9101, %v9466
    %v9512 = vmul.f32 %v9102, %v9466
    %v9513 = vmul.f32 %v9103, %v9466
    %v9514 = vmul.f32 %v9104, %v9466
    %v9515 = vmul.f32 %v9105, %v9466
    %v9516 = vmul.f32 %v9106, %v9466
    %v9517 = vmul.f32 %v9107, %v9466
    %v9518 = vmul.f32 %v9108, %v9466
    %v9519 = vmul.f32 %v9109, %v9466
    %v9520 = vmul.f32 %v9110, %v9466
    %v9521 = vmul.f32 %v9111, %v9466
    %v9522 = vmul.f32 %v9112, %v9466
    %v9523 = vmul.f32 %v9113, %v9466
    %v9524 = vmul.f32 %v9114, %v9466
    %v9525 = vmul.f32 %v9115, %v9466
    %v9526 = vmul.f32 %v9116, %v9466
    %v9527 = vmul.f32 %v9117, %v9466
    %v9528 = vmul.f32 %v9118, %v9466
    %v9529 = vmul.f32 %v9119, %v9466
    %v9530 = vmul.f32 %v9120, %v9466
    %v9531 = vmul.f32 %v9121, %v9466
    %v9532 = vmul.f32 %v9122, %v9466
    %v9599 = vrot.slane %v9467, 1
    %v9600 = vrot.slane %v9468, 1
    %v9601 = vsel %vm1012, %v9599, %v9600
    %v9602 = vrot.slane %v9469, 1
    %v9603 = vsel %vm1012, %v9600, %v9602
    %v9604 = vrot.slane %v9470, 1
    %v9605 = vrot.slane %v9471, 1
    %v9606 = vsel %vm1012, %v9604, %v9605
    %v9607 = vrot.slane %v9472, 1
    %v9608 = vsel %vm1012, %v9605, %v9607
    %v9609 = vrot.slane %v9473, 1
    %v9610 = vrot.slane %v9474, 1
    %v9611 = vsel %vm1012, %v9609, %v9610
    %v9612 = vrot.slane %v9475, 1
    %v9613 = vsel %vm1012, %v9610, %v9612
    %v9614 = vrot.slane %v9476, 1
    %v9615 = vrot.slane %v9477, 1
    %v9616 = vsel %vm1012, %v9614, %v9615
    %v9617 = vrot.slane %v9478, 1
    %v9618 = vsel %vm1012, %v9615, %v9617
    %v9619 = vrot.slane %v9479, 1
    %v9620 = vrot.slane %v9480, 1
    %v9621 = vsel %vm1012, %v9619, %v9620
    %v9622 = vrot.slane %v9481, 1
    %v9623 = vsel %vm1012, %v9620, %v9622
    %v9624 = vrot.slane %v9482, 1
    %v9625 = vrot.slane %v9483, 1
    %v9626 = vsel %vm1012, %v9624, %v9625
    %v9627 = vrot.slane %v9484, 1
    %v9628 = vsel %vm1012, %v9625, %v9627
    %v9629 = vrot.slane %v9485, 1
    %v9630 = vrot.slane %v9486, 1
    %v9631 = vsel %vm1012, %v9629, %v9630
    %v9632 = vrot.slane %v9487, 1
    %v9633 = vsel %vm1012, %v9630, %v9632
    %v9634 = vrot.slane %v9488, 1
    %v9635 = vrot.slane %v9489, 1
    %v9636 = vsel %vm1012, %v9634, %v9635
    %v9637 = vrot.slane %v9490, 1
    %v9638 = vsel %vm1012, %v9635, %v9637
    %v9639 = vrot.slane %v9491, 1
    %v9640 = vrot.slane %v9492, 1
    %v9641 = vsel %vm1012, %v9639, %v9640
    %v9642 = vrot.slane %v9493, 1
    %v9643 = vsel %vm1012, %v9640, %v9642
    %v9644 = vrot.slane %v9494, 1
    %v9645 = vrot.slane %v9495, 1
    %v9646 = vsel %vm1012, %v9644, %v9645
    %v9647 = vrot.slane %v9496, 1
    %v9648 = vsel %vm1012, %v9645, %v9647
    %v9649 = vrot.slane %v9497, 1
    %v9650 = vrot.slane %v9498, 1
    %v9651 = vsel %vm1012, %v9649, %v9650
    %v9652 = vrot.slane %v9499, 1
    %v9653 = vsel %vm1012, %v9650, %v9652
    %v9654 = vrot.slane %v9500, 1
    %v9655 = vrot.slane %v9501, 1
    %v9656 = vsel %vm1012, %v9654, %v9655
    %v9657 = vrot.slane %v9502, 1
    %v9658 = vsel %vm1012, %v9655, %v9657
    %v9659 = vrot.slane %v9503, 1
    %v9660 = vrot.slane %v9504, 1
    %v9661 = vsel %vm1012, %v9659, %v9660
    %v9662 = vrot.slane %v9505, 1
    %v9663 = vsel %vm1012, %v9660, %v9662
    %v9664 = vrot.slane %v9506, 1
    %v9665 = vrot.slane %v9507, 1
    %v9666 = vsel %vm1012, %v9664, %v9665
    %v9667 = vrot.slane %v9508, 1
    %v9668 = vsel %vm1012, %v9665, %v9667
    %v9669 = vrot.slane %v9509, 1
    %v9670 = vrot.slane %v9510, 1
    %v9671 = vsel %vm1012, %v9669, %v9670
    %v9672 = vrot.slane %v9511, 1
    %v9673 = vsel %vm1012, %v9670, %v9672
    %v9674 = vrot.slane %v9512, 1
    %v9675 = vrot.slane %v9513, 1
    %v9676 = vsel %vm1012, %v9674, %v9675
    %v9677 = vrot.slane %v9514, 1
    %v9678 = vsel %vm1012, %v9675, %v9677
    %v9679 = vrot.slane %v9515, 1
    %v9680 = vrot.slane %v9516, 1
    %v9681 = vsel %vm1012, %v9679, %v9680
    %v9682 = vrot.slane %v9517, 1
    %v9683 = vsel %vm1012, %v9680, %v9682
    %v9684 = vrot.slane %v9518, 1
    %v9685 = vrot.slane %v9519, 1
    %v9686 = vsel %vm1012, %v9684, %v9685
    %v9687 = vrot.slane %v9520, 1
    %v9688 = vsel %vm1012, %v9685, %v9687
    %v9689 = vrot.slane %v9521, 1
    %v9690 = vrot.slane %v9522, 1
    %v9691 = vsel %vm1012, %v9689, %v9690
    %v9692 = vrot.slane %v9523, 1
    %v9693 = vsel %vm1012, %v9690, %v9692
    %v9694 = vrot.slane %v9524, 1
    %v9695 = vrot.slane %v9525, 1
    %v9696 = vsel %vm1012, %v9694, %v9695
    %v9697 = vrot.slane %v9526, 1
    %v9698 = vsel %vm1012, %v9695, %v9697
    %v9699 = vrot.slane %v9527, 1
    %v9700 = vrot.slane %v9528, 1
    %v9701 = vsel %vm1012, %v9699, %v9700
    %v9702 = vrot.slane %v9529, 1
    %v9703 = vsel %vm1012, %v9700, %v9702
    %v9704 = vrot.slane %v9530, 1
    %v9705 = vrot.slane %v9531, 1
    %v9706 = vsel %vm1012, %v9704, %v9705
    %v9707 = vrot.slane %v9532, 1
    %v9708 = vsel %vm1012, %v9705, %v9707
    %v9775 = vadd.f32 %v9399, %v9601
    %v9776 = vadd.f32 %v9400, %v9603
    %v9777 = vadd.f32 %v9401, %v9602
    %v9778 = vadd.f32 %v9402, %v9606
    %v9779 = vadd.f32 %v9403, %v9608
    %v9780 = vadd.f32 %v9404, %v9607
    %v9781 = vadd.f32 %v9405, %v9611
    %v9782 = vadd.f32 %v9406, %v9613
    %v9783 = vadd.f32 %v9407, %v9612
    %v9784 = vadd.f32 %v9408, %v9616
    %v9785 = vadd.f32 %v9409, %v9618
    %v9786 = vadd.f32 %v9410, %v9617
    %v9787 = vadd.f32 %v9411, %v9621
    %v9788 = vadd.f32 %v9412, %v9623
    %v9789 = vadd.f32 %v9413, %v9622
    %v9790 = vadd.f32 %v9414, %v9626
    %v9791 = vadd.f32 %v9415, %v9628
    %v9792 = vadd.f32 %v9416, %v9627
    %v9793 = vadd.f32 %v9417, %v9631
    %v9794 = vadd.f32 %v9418, %v9633
    %v9795 = vadd.f32 %v9419, %v9632
    %v9796 = vadd.f32 %v9420, %v9636
    %v9797 = vadd.f32 %v9421, %v9638
    %v9798 = vadd.f32 %v9422, %v9637
    %v9799 = vadd.f32 %v9423, %v9641
    %v9800 = vadd.f32 %v9424, %v9643
    %v9801 = vadd.f32 %v9425, %v9642
    %v9802 = vadd.f32 %v9426, %v9646
    %v9803 = vadd.f32 %v9427, %v9648
    %v9804 = vadd.f32 %v9428, %v9647
    %v9805 = vadd.f32 %v9429, %v9651
    %v9806 = vadd.f32 %v9430, %v9653
    %v9807 = vadd.f32 %v9431, %v9652
    %v9808 = vadd.f32 %v9432, %v9656
    %v9809 = vadd.f32 %v9433, %v9658
    %v9810 = vadd.f32 %v9434, %v9657
    %v9811 = vadd.f32 %v9435, %v9661
    %v9812 = vadd.f32 %v9436, %v9663
    %v9813 = vadd.f32 %v9437, %v9662
    %v9814 = vadd.f32 %v9438, %v9666
    %v9815 = vadd.f32 %v9439, %v9668
    %v9816 = vadd.f32 %v9440, %v9667
    %v9817 = vadd.f32 %v9441, %v9671
    %v9818 = vadd.f32 %v9442, %v9673
    %v9819 = vadd.f32 %v9443, %v9672
    %v9820 = vadd.f32 %v9444, %v9676
    %v9821 = vadd.f32 %v9445, %v9678
    %v9822 = vadd.f32 %v9446, %v9677
    %v9823 = vadd.f32 %v9447, %v9681
    %v9824 = vadd.f32 %v9448, %v9683
    %v9825 = vadd.f32 %v9449, %v9682
    %v9826 = vadd.f32 %v9450, %v9686
    %v9827 = vadd.f32 %v9451, %v9688
    %v9828 = vadd.f32 %v9452, %v9687
    %v9829 = vadd.f32 %v9453, %v9691
    %v9830 = vadd.f32 %v9454, %v9693
    %v9831 = vadd.f32 %v9455, %v9692
    %v9832 = vadd.f32 %v9456, %v9696
    %v9833 = vadd.f32 %v9457, %v9698
    %v9834 = vadd.f32 %v9458, %v9697
    %v9835 = vadd.f32 %v9459, %v9701
    %v9836 = vadd.f32 %v9460, %v9703
    %v9837 = vadd.f32 %v9461, %v9702
    %v9838 = vadd.f32 %v9462, %v9706
    %v9839 = vadd.f32 %v9463, %v9708
    %v9840 = vadd.f32 %v9464, %v9707
    %s9841 = sld [smem:[#allocation2 + $0x104]]
    %v9842 = vstv %s9841
    %v9843 = vmul.f32 %v9060, %v9842
    %v9844 = vmul.f32 %v9061, %v9842
    %v9845 = vmul.f32 %v9062, %v9842
    %v9846 = vmul.f32 %v9063, %v9842
    %v9847 = vmul.f32 %v9064, %v9842
    %v9848 = vmul.f32 %v9065, %v9842
    %v9849 = vmul.f32 %v9066, %v9842
    %v9850 = vmul.f32 %v9067, %v9842
    %v9851 = vmul.f32 %v9068, %v9842
    %v9852 = vmul.f32 %v9069, %v9842
    %v9853 = vmul.f32 %v9070, %v9842
    %v9854 = vmul.f32 %v9071, %v9842
    %v9855 = vmul.f32 %v9072, %v9842
    %v9856 = vmul.f32 %v9073, %v9842
    %v9857 = vmul.f32 %v9074, %v9842
    %v9858 = vmul.f32 %v9075, %v9842
    %v9859 = vmul.f32 %v9076, %v9842
    %v9860 = vmul.f32 %v9077, %v9842
    %v9861 = vmul.f32 %v9078, %v9842
    %v9862 = vmul.f32 %v9079, %v9842
    %v9863 = vmul.f32 %v9080, %v9842
    %v9864 = vmul.f32 %v9081, %v9842
    %v9865 = vmul.f32 %v9082, %v9842
    %v9866 = vmul.f32 %v9083, %v9842
    %v9867 = vmul.f32 %v9084, %v9842
    %v9868 = vmul.f32 %v9085, %v9842
    %v9869 = vmul.f32 %v9086, %v9842
    %v9870 = vmul.f32 %v9087, %v9842
    %v9871 = vmul.f32 %v9088, %v9842
    %v9872 = vmul.f32 %v9089, %v9842
    %v9873 = vmul.f32 %v9090, %v9842
    %v9874 = vmul.f32 %v9091, %v9842
    %v9875 = vmul.f32 %v9092, %v9842
    %v9876 = vmul.f32 %v9093, %v9842
    %v9877 = vmul.f32 %v9094, %v9842
    %v9878 = vmul.f32 %v9095, %v9842
    %v9879 = vmul.f32 %v9096, %v9842
    %v9880 = vmul.f32 %v9097, %v9842
    %v9881 = vmul.f32 %v9098, %v9842
    %v9882 = vmul.f32 %v9099, %v9842
    %v9883 = vmul.f32 %v9100, %v9842
    %v9884 = vmul.f32 %v9101, %v9842
    %v9885 = vmul.f32 %v9102, %v9842
    %v9886 = vmul.f32 %v9103, %v9842
    %v9887 = vmul.f32 %v9104, %v9842
    %v9888 = vmul.f32 %v9105, %v9842
    %v9889 = vmul.f32 %v9106, %v9842
    %v9890 = vmul.f32 %v9107, %v9842
    %v9891 = vmul.f32 %v9108, %v9842
    %v9892 = vmul.f32 %v9109, %v9842
    %v9893 = vmul.f32 %v9110, %v9842
    %v9894 = vmul.f32 %v9111, %v9842
    %v9895 = vmul.f32 %v9112, %v9842
    %v9896 = vmul.f32 %v9113, %v9842
    %v9897 = vmul.f32 %v9114, %v9842
    %v9898 = vmul.f32 %v9115, %v9842
    %v9899 = vmul.f32 %v9116, %v9842
    %v9900 = vmul.f32 %v9117, %v9842
    %v9901 = vmul.f32 %v9118, %v9842
    %v9902 = vmul.f32 %v9119, %v9842
    %v9903 = vmul.f32 %v9120, %v9842
    %v9904 = vmul.f32 %v9121, %v9842
    %v9905 = vmul.f32 %v9122, %v9842
    %v9906 = vmul.f32 %v9123, %v9842
    %v9907 = vmul.f32 %v9124, %v9842
    %v9908 = vmul.f32 %v9125, %v9842
    %v9975 = vrot.slane %v9843, 1
    %v9976 = vrot.slane %v9844, 1
    %v9977 = vsel %vm1012, %v9975, %v9976
    %v9978 = vrot.slane %v9845, 1
    %v9979 = vsel %vm1012, %v9976, %v9978
    %v9980 = vrot.slane %v9846, 1
    %v9981 = vrot.slane %v9847, 1
    %v9982 = vsel %vm1012, %v9980, %v9981
    %v9983 = vrot.slane %v9848, 1
    %v9984 = vsel %vm1012, %v9981, %v9983
    %v9985 = vrot.slane %v9849, 1
    %v9986 = vrot.slane %v9850, 1
    %v9987 = vsel %vm1012, %v9985, %v9986
    %v9988 = vrot.slane %v9851, 1
    %v9989 = vsel %vm1012, %v9986, %v9988
    %v9990 = vrot.slane %v9852, 1
    %v9991 = vrot.slane %v9853, 1
    %v9992 = vsel %vm1012, %v9990, %v9991
    %v9993 = vrot.slane %v9854, 1
    %v9994 = vsel %vm1012, %v9991, %v9993
    %v9995 = vrot.slane %v9855, 1
    %v9996 = vrot.slane %v9856, 1
    %v9997 = vsel %vm1012, %v9995, %v9996
    %v9998 = vrot.slane %v9857, 1
    %v9999 = vsel %vm1012, %v9996, %v9998
    %v10000 = vrot.slane %v9858, 1
    %v10001 = vrot.slane %v9859, 1
    %v10002 = vsel %vm1012, %v10000, %v10001
    %v10003 = vrot.slane %v9860, 1
    %v10004 = vsel %vm1012, %v10001, %v10003
    %v10005 = vrot.slane %v9861, 1
    %v10006 = vrot.slane %v9862, 1
    %v10007 = vsel %vm1012, %v10005, %v10006
    %v10008 = vrot.slane %v9863, 1
    %v10009 = vsel %vm1012, %v10006, %v10008
    %v10010 = vrot.slane %v9864, 1
    %v10011 = vrot.slane %v9865, 1
    %v10012 = vsel %vm1012, %v10010, %v10011
    %v10013 = vrot.slane %v9866, 1
    %v10014 = vsel %vm1012, %v10011, %v10013
    %v10015 = vrot.slane %v9867, 1
    %v10016 = vrot.slane %v9868, 1
    %v10017 = vsel %vm1012, %v10015, %v10016
    %v10018 = vrot.slane %v9869, 1
    %v10019 = vsel %vm1012, %v10016, %v10018
    %v10020 = vrot.slane %v9870, 1
    %v10021 = vrot.slane %v9871, 1
    %v10022 = vsel %vm1012, %v10020, %v10021
    %v10023 = vrot.slane %v9872, 1
    %v10024 = vsel %vm1012, %v10021, %v10023
    %v10025 = vrot.slane %v9873, 1
    %v10026 = vrot.slane %v9874, 1
    %v10027 = vsel %vm1012, %v10025, %v10026
    %v10028 = vrot.slane %v9875, 1
    %v10029 = vsel %vm1012, %v10026, %v10028
    %v10030 = vrot.slane %v9876, 1
    %v10031 = vrot.slane %v9877, 1
    %v10032 = vsel %vm1012, %v10030, %v10031
    %v10033 = vrot.slane %v9878, 1
    %v10034 = vsel %vm1012, %v10031, %v10033
    %v10035 = vrot.slane %v9879, 1
    %v10036 = vrot.slane %v9880, 1
    %v10037 = vsel %vm1012, %v10035, %v10036
    %v10038 = vrot.slane %v9881, 1
    %v10039 = vsel %vm1012, %v10036, %v10038
    %v10040 = vrot.slane %v9882, 1
    %v10041 = vrot.slane %v9883, 1
    %v10042 = vsel %vm1012, %v10040, %v10041
    %v10043 = vrot.slane %v9884, 1
    %v10044 = vsel %vm1012, %v10041, %v10043
    %v10045 = vrot.slane %v9885, 1
    %v10046 = vrot.slane %v9886, 1
    %v10047 = vsel %vm1012, %v10045, %v10046
    %v10048 = vrot.slane %v9887, 1
    %v10049 = vsel %vm1012, %v10046, %v10048
    %v10050 = vrot.slane %v9888, 1
    %v10051 = vrot.slane %v9889, 1
    %v10052 = vsel %vm1012, %v10050, %v10051
    %v10053 = vrot.slane %v9890, 1
    %v10054 = vsel %vm1012, %v10051, %v10053
    %v10055 = vrot.slane %v9891, 1
    %v10056 = vrot.slane %v9892, 1
    %v10057 = vsel %vm1012, %v10055, %v10056
    %v10058 = vrot.slane %v9893, 1
    %v10059 = vsel %vm1012, %v10056, %v10058
    %v10060 = vrot.slane %v9894, 1
    %v10061 = vrot.slane %v9895, 1
    %v10062 = vsel %vm1012, %v10060, %v10061
    %v10063 = vrot.slane %v9896, 1
    %v10064 = vsel %vm1012, %v10061, %v10063
    %v10065 = vrot.slane %v9897, 1
    %v10066 = vrot.slane %v9898, 1
    %v10067 = vsel %vm1012, %v10065, %v10066
    %v10068 = vrot.slane %v9899, 1
    %v10069 = vsel %vm1012, %v10066, %v10068
    %v10070 = vrot.slane %v9900, 1
    %v10071 = vrot.slane %v9901, 1
    %v10072 = vsel %vm1012, %v10070, %v10071
    %v10073 = vrot.slane %v9902, 1
    %v10074 = vsel %vm1012, %v10071, %v10073
    %v10075 = vrot.slane %v9903, 1
    %v10076 = vrot.slane %v9904, 1
    %v10077 = vsel %vm1012, %v10075, %v10076
    %v10078 = vrot.slane %v9905, 1
    %v10079 = vsel %vm1012, %v10076, %v10078
    %v10080 = vrot.slane %v9906, 1
    %v10081 = vrot.slane %v9907, 1
    %v10082 = vsel %vm1012, %v10080, %v10081
    %v10083 = vrot.slane %v9908, 1
    %v10084 = vsel %vm1012, %v10081, %v10083
    %v10151 = vadd.f32 %v9775, %v9977
    %v10152 = vadd.f32 %v9776, %v9979
    %v10153 = vadd.f32 %v9777, %v9978
    %v10154 = vadd.f32 %v9778, %v9982
    %v10155 = vadd.f32 %v9779, %v9984
    %v10156 = vadd.f32 %v9780, %v9983
    %v10157 = vadd.f32 %v9781, %v9987
    %v10158 = vadd.f32 %v9782, %v9989
    %v10159 = vadd.f32 %v9783, %v9988
    %v10160 = vadd.f32 %v9784, %v9992
    %v10161 = vadd.f32 %v9785, %v9994
    %v10162 = vadd.f32 %v9786, %v9993
    %v10163 = vadd.f32 %v9787, %v9997
    %v10164 = vadd.f32 %v9788, %v9999
    %v10165 = vadd.f32 %v9789, %v9998
    %v10166 = vadd.f32 %v9790, %v10002
    %v10167 = vadd.f32 %v9791, %v10004
    %v10168 = vadd.f32 %v9792, %v10003
    %v10169 = vadd.f32 %v9793, %v10007
    %v10170 = vadd.f32 %v9794, %v10009
    %v10171 = vadd.f32 %v9795, %v10008
    %v10172 = vadd.f32 %v9796, %v10012
    %v10173 = vadd.f32 %v9797, %v10014
    %v10174 = vadd.f32 %v9798, %v10013
    %v10175 = vadd.f32 %v9799, %v10017
    %v10176 = vadd.f32 %v9800, %v10019
    %v10177 = vadd.f32 %v9801, %v10018
    %v10178 = vadd.f32 %v9802, %v10022
    %v10179 = vadd.f32 %v9803, %v10024
    %v10180 = vadd.f32 %v9804, %v10023
    %v10181 = vadd.f32 %v9805, %v10027
    %v10182 = vadd.f32 %v9806, %v10029
    %v10183 = vadd.f32 %v9807, %v10028
    %v10184 = vadd.f32 %v9808, %v10032
    %v10185 = vadd.f32 %v9809, %v10034
    %v10186 = vadd.f32 %v9810, %v10033
    %v10187 = vadd.f32 %v9811, %v10037
    %v10188 = vadd.f32 %v9812, %v10039
    %v10189 = vadd.f32 %v9813, %v10038
    %v10190 = vadd.f32 %v9814, %v10042
    %v10191 = vadd.f32 %v9815, %v10044
    %v10192 = vadd.f32 %v9816, %v10043
    %v10193 = vadd.f32 %v9817, %v10047
    %v10194 = vadd.f32 %v9818, %v10049
    %v10195 = vadd.f32 %v9819, %v10048
    %v10196 = vadd.f32 %v9820, %v10052
    %v10197 = vadd.f32 %v9821, %v10054
    %v10198 = vadd.f32 %v9822, %v10053
    %v10199 = vadd.f32 %v9823, %v10057
    %v10200 = vadd.f32 %v9824, %v10059
    %v10201 = vadd.f32 %v9825, %v10058
    %v10202 = vadd.f32 %v9826, %v10062
    %v10203 = vadd.f32 %v9827, %v10064
    %v10204 = vadd.f32 %v9828, %v10063
    %v10205 = vadd.f32 %v9829, %v10067
    %v10206 = vadd.f32 %v9830, %v10069
    %v10207 = vadd.f32 %v9831, %v10068
    %v10208 = vadd.f32 %v9832, %v10072
    %v10209 = vadd.f32 %v9833, %v10074
    %v10210 = vadd.f32 %v9834, %v10073
    %v10211 = vadd.f32 %v9835, %v10077
    %v10212 = vadd.f32 %v9836, %v10079
    %v10213 = vadd.f32 %v9837, %v10078
    %v10214 = vadd.f32 %v9838, %v10082
    %v10215 = vadd.f32 %v9839, %v10084
    %v10216 = vadd.f32 %v9840, %v10083
    %s10217 = sld [smem:[#allocation2 + $0x107]]
    %v10218 = vstv %s10217
    %v10219 = vmul.f32 %v9063, %v10218
    %v10220 = vmul.f32 %v9064, %v10218
    %v10221 = vmul.f32 %v9065, %v10218
    %v10222 = vmul.f32 %v9066, %v10218
    %v10223 = vmul.f32 %v9067, %v10218
    %v10224 = vmul.f32 %v9068, %v10218
    %v10225 = vmul.f32 %v9069, %v10218
    %v10226 = vmul.f32 %v9070, %v10218
    %v10227 = vmul.f32 %v9071, %v10218
    %v10228 = vmul.f32 %v9072, %v10218
    %v10229 = vmul.f32 %v9073, %v10218
    %v10230 = vmul.f32 %v9074, %v10218
    %v10231 = vmul.f32 %v9075, %v10218
    %v10232 = vmul.f32 %v9076, %v10218
    %v10233 = vmul.f32 %v9077, %v10218
    %v10234 = vmul.f32 %v9078, %v10218
    %v10235 = vmul.f32 %v9079, %v10218
    %v10236 = vmul.f32 %v9080, %v10218
    %v10237 = vmul.f32 %v9081, %v10218
    %v10238 = vmul.f32 %v9082, %v10218
    %v10239 = vmul.f32 %v9083, %v10218
    %v10240 = vmul.f32 %v9084, %v10218
    %v10241 = vmul.f32 %v9085, %v10218
    %v10242 = vmul.f32 %v9086, %v10218
    %v10243 = vmul.f32 %v9087, %v10218
    %v10244 = vmul.f32 %v9088, %v10218
    %v10245 = vmul.f32 %v9089, %v10218
    %v10246 = vmul.f32 %v9090, %v10218
    %v10247 = vmul.f32 %v9091, %v10218
    %v10248 = vmul.f32 %v9092, %v10218
    %v10249 = vmul.f32 %v9093, %v10218
    %v10250 = vmul.f32 %v9094, %v10218
    %v10251 = vmul.f32 %v9095, %v10218
    %v10252 = vmul.f32 %v9096, %v10218
    %v10253 = vmul.f32 %v9097, %v10218
    %v10254 = vmul.f32 %v9098, %v10218
    %v10255 = vmul.f32 %v9099, %v10218
    %v10256 = vmul.f32 %v9100, %v10218
    %v10257 = vmul.f32 %v9101, %v10218
    %v10258 = vmul.f32 %v9102, %v10218
    %v10259 = vmul.f32 %v9103, %v10218
    %v10260 = vmul.f32 %v9104, %v10218
    %v10261 = vmul.f32 %v9105, %v10218
    %v10262 = vmul.f32 %v9106, %v10218
    %v10263 = vmul.f32 %v9107, %v10218
    %v10264 = vmul.f32 %v9108, %v10218
    %v10265 = vmul.f32 %v9109, %v10218
    %v10266 = vmul.f32 %v9110, %v10218
    %v10267 = vmul.f32 %v9111, %v10218
    %v10268 = vmul.f32 %v9112, %v10218
    %v10269 = vmul.f32 %v9113, %v10218
    %v10270 = vmul.f32 %v9114, %v10218
    %v10271 = vmul.f32 %v9115, %v10218
    %v10272 = vmul.f32 %v9116, %v10218
    %v10273 = vmul.f32 %v9117, %v10218
    %v10274 = vmul.f32 %v9118, %v10218
    %v10275 = vmul.f32 %v9119, %v10218
    %v10276 = vmul.f32 %v9120, %v10218
    %v10277 = vmul.f32 %v9121, %v10218
    %v10278 = vmul.f32 %v9122, %v10218
    %v10279 = vmul.f32 %v9123, %v10218
    %v10280 = vmul.f32 %v9124, %v10218
    %v10281 = vmul.f32 %v9125, %v10218
    %v10282 = vmul.f32 %v9126, %v10218
    %v10283 = vmul.f32 %v9127, %v10218
    %v10284 = vmul.f32 %v9128, %v10218
    %v10351 = vrot.slane %v10219, 1
    %v10352 = vrot.slane %v10220, 1
    %v10353 = vsel %vm1012, %v10351, %v10352
    %v10354 = vrot.slane %v10221, 1
    %v10355 = vsel %vm1012, %v10352, %v10354
    %v10356 = vrot.slane %v10222, 1
    %v10357 = vrot.slane %v10223, 1
    %v10358 = vsel %vm1012, %v10356, %v10357
    %v10359 = vrot.slane %v10224, 1
    %v10360 = vsel %vm1012, %v10357, %v10359
    %v10361 = vrot.slane %v10225, 1
    %v10362 = vrot.slane %v10226, 1
    %v10363 = vsel %vm1012, %v10361, %v10362
    %v10364 = vrot.slane %v10227, 1
    %v10365 = vsel %vm1012, %v10362, %v10364
    %v10366 = vrot.slane %v10228, 1
    %v10367 = vrot.slane %v10229, 1
    %v10368 = vsel %vm1012, %v10366, %v10367
    %v10369 = vrot.slane %v10230, 1
    %v10370 = vsel %vm1012, %v10367, %v10369
    %v10371 = vrot.slane %v10231, 1
    %v10372 = vrot.slane %v10232, 1
    %v10373 = vsel %vm1012, %v10371, %v10372
    %v10374 = vrot.slane %v10233, 1
    %v10375 = vsel %vm1012, %v10372, %v10374
    %v10376 = vrot.slane %v10234, 1
    %v10377 = vrot.slane %v10235, 1
    %v10378 = vsel %vm1012, %v10376, %v10377
    %v10379 = vrot.slane %v10236, 1
    %v10380 = vsel %vm1012, %v10377, %v10379
    %v10381 = vrot.slane %v10237, 1
    %v10382 = vrot.slane %v10238, 1
    %v10383 = vsel %vm1012, %v10381, %v10382
    %v10384 = vrot.slane %v10239, 1
    %v10385 = vsel %vm1012, %v10382, %v10384
    %v10386 = vrot.slane %v10240, 1
    %v10387 = vrot.slane %v10241, 1
    %v10388 = vsel %vm1012, %v10386, %v10387
    %v10389 = vrot.slane %v10242, 1
    %v10390 = vsel %vm1012, %v10387, %v10389
    %v10391 = vrot.slane %v10243, 1
    %v10392 = vrot.slane %v10244, 1
    %v10393 = vsel %vm1012, %v10391, %v10392
    %v10394 = vrot.slane %v10245, 1
    %v10395 = vsel %vm1012, %v10392, %v10394
    %v10396 = vrot.slane %v10246, 1
    %v10397 = vrot.slane %v10247, 1
    %v10398 = vsel %vm1012, %v10396, %v10397
    %v10399 = vrot.slane %v10248, 1
    %v10400 = vsel %vm1012, %v10397, %v10399
    %v10401 = vrot.slane %v10249, 1
    %v10402 = vrot.slane %v10250, 1
    %v10403 = vsel %vm1012, %v10401, %v10402
    %v10404 = vrot.slane %v10251, 1
    %v10405 = vsel %vm1012, %v10402, %v10404
    %v10406 = vrot.slane %v10252, 1
    %v10407 = vrot.slane %v10253, 1
    %v10408 = vsel %vm1012, %v10406, %v10407
    %v10409 = vrot.slane %v10254, 1
    %v10410 = vsel %vm1012, %v10407, %v10409
    %v10411 = vrot.slane %v10255, 1
    %v10412 = vrot.slane %v10256, 1
    %v10413 = vsel %vm1012, %v10411, %v10412
    %v10414 = vrot.slane %v10257, 1
    %v10415 = vsel %vm1012, %v10412, %v10414
    %v10416 = vrot.slane %v10258, 1
    %v10417 = vrot.slane %v10259, 1
    %v10418 = vsel %vm1012, %v10416, %v10417
    %v10419 = vrot.slane %v10260, 1
    %v10420 = vsel %vm1012, %v10417, %v10419
    %v10421 = vrot.slane %v10261, 1
    %v10422 = vrot.slane %v10262, 1
    %v10423 = vsel %vm1012, %v10421, %v10422
    %v10424 = vrot.slane %v10263, 1
    %v10425 = vsel %vm1012, %v10422, %v10424
    %v10426 = vrot.slane %v10264, 1
    %v10427 = vrot.slane %v10265, 1
    %v10428 = vsel %vm1012, %v10426, %v10427
    %v10429 = vrot.slane %v10266, 1
    %v10430 = vsel %vm1012, %v10427, %v10429
    %v10431 = vrot.slane %v10267, 1
    %v10432 = vrot.slane %v10268, 1
    %v10433 = vsel %vm1012, %v10431, %v10432
    %v10434 = vrot.slane %v10269, 1
    %v10435 = vsel %vm1012, %v10432, %v10434
    %v10436 = vrot.slane %v10270, 1
    %v10437 = vrot.slane %v10271, 1
    %v10438 = vsel %vm1012, %v10436, %v10437
    %v10439 = vrot.slane %v10272, 1
    %v10440 = vsel %vm1012, %v10437, %v10439
    %v10441 = vrot.slane %v10273, 1
    %v10442 = vrot.slane %v10274, 1
    %v10443 = vsel %vm1012, %v10441, %v10442
    %v10444 = vrot.slane %v10275, 1
    %v10445 = vsel %vm1012, %v10442, %v10444
    %v10446 = vrot.slane %v10276, 1
    %v10447 = vrot.slane %v10277, 1
    %v10448 = vsel %vm1012, %v10446, %v10447
    %v10449 = vrot.slane %v10278, 1
    %v10450 = vsel %vm1012, %v10447, %v10449
    %v10451 = vrot.slane %v10279, 1
    %v10452 = vrot.slane %v10280, 1
    %v10453 = vsel %vm1012, %v10451, %v10452
    %v10454 = vrot.slane %v10281, 1
    %v10455 = vsel %vm1012, %v10452, %v10454
    %v10456 = vrot.slane %v10282, 1
    %v10457 = vrot.slane %v10283, 1
    %v10458 = vsel %vm1012, %v10456, %v10457
    %v10459 = vrot.slane %v10284, 1
    %v10460 = vsel %vm1012, %v10457, %v10459
    %v10527 = vadd.f32 %v10151, %v10353
    %v10528 = vadd.f32 %v10152, %v10355
    %v10529 = vadd.f32 %v10153, %v10354
    %v10530 = vadd.f32 %v10154, %v10358
    %v10531 = vadd.f32 %v10155, %v10360
    %v10532 = vadd.f32 %v10156, %v10359
    %v10533 = vadd.f32 %v10157, %v10363
    %v10534 = vadd.f32 %v10158, %v10365
    %v10535 = vadd.f32 %v10159, %v10364
    %v10536 = vadd.f32 %v10160, %v10368
    %v10537 = vadd.f32 %v10161, %v10370
    %v10538 = vadd.f32 %v10162, %v10369
    %v10539 = vadd.f32 %v10163, %v10373
    %v10540 = vadd.f32 %v10164, %v10375
    %v10541 = vadd.f32 %v10165, %v10374
    %v10542 = vadd.f32 %v10166, %v10378
    %v10543 = vadd.f32 %v10167, %v10380
    %v10544 = vadd.f32 %v10168, %v10379
    %v10545 = vadd.f32 %v10169, %v10383
    %v10546 = vadd.f32 %v10170, %v10385
    %v10547 = vadd.f32 %v10171, %v10384
    %v10548 = vadd.f32 %v10172, %v10388
    %v10549 = vadd.f32 %v10173, %v10390
    %v10550 = vadd.f32 %v10174, %v10389
    %v10551 = vadd.f32 %v10175, %v10393
    %v10552 = vadd.f32 %v10176, %v10395
    %v10553 = vadd.f32 %v10177, %v10394
    %v10554 = vadd.f32 %v10178, %v10398
    %v10555 = vadd.f32 %v10179, %v10400
    %v10556 = vadd.f32 %v10180, %v10399
    %v10557 = vadd.f32 %v10181, %v10403
    %v10558 = vadd.f32 %v10182, %v10405
    %v10559 = vadd.f32 %v10183, %v10404
    %v10560 = vadd.f32 %v10184, %v10408
    %v10561 = vadd.f32 %v10185, %v10410
    %v10562 = vadd.f32 %v10186, %v10409
    %v10563 = vadd.f32 %v10187, %v10413
    %v10564 = vadd.f32 %v10188, %v10415
    %v10565 = vadd.f32 %v10189, %v10414
    %v10566 = vadd.f32 %v10190, %v10418
    %v10567 = vadd.f32 %v10191, %v10420
    %v10568 = vadd.f32 %v10192, %v10419
    %v10569 = vadd.f32 %v10193, %v10423
    %v10570 = vadd.f32 %v10194, %v10425
    %v10571 = vadd.f32 %v10195, %v10424
    %v10572 = vadd.f32 %v10196, %v10428
    %v10573 = vadd.f32 %v10197, %v10430
    %v10574 = vadd.f32 %v10198, %v10429
    %v10575 = vadd.f32 %v10199, %v10433
    %v10576 = vadd.f32 %v10200, %v10435
    %v10577 = vadd.f32 %v10201, %v10434
    %v10578 = vadd.f32 %v10202, %v10438
    %v10579 = vadd.f32 %v10203, %v10440
    %v10580 = vadd.f32 %v10204, %v10439
    %v10581 = vadd.f32 %v10205, %v10443
    %v10582 = vadd.f32 %v10206, %v10445
    %v10583 = vadd.f32 %v10207, %v10444
    %v10584 = vadd.f32 %v10208, %v10448
    %v10585 = vadd.f32 %v10209, %v10450
    %v10586 = vadd.f32 %v10210, %v10449
    %v10587 = vadd.f32 %v10211, %v10453
    %v10588 = vadd.f32 %v10212, %v10455
    %v10589 = vadd.f32 %v10213, %v10454
    %v10590 = vadd.f32 %v10214, %v10458
    %v10591 = vadd.f32 %v10215, %v10460
    %v10592 = vadd.f32 %v10216, %v10459
    %s10593 = sld [smem:[#allocation2 + $0x102]]
    %v10594 = vstv %s10593
    %v10595 = vmul.f32 %v9057, %v10594
    %v10596 = vmul.f32 %v9058, %v10594
    %v10597 = vmul.f32 %v9059, %v10594
    %v10598 = vmul.f32 %v9060, %v10594
    %v10599 = vmul.f32 %v9061, %v10594
    %v10600 = vmul.f32 %v9062, %v10594
    %v10601 = vmul.f32 %v9063, %v10594
    %v10602 = vmul.f32 %v9064, %v10594
    %v10603 = vmul.f32 %v9065, %v10594
    %v10604 = vmul.f32 %v9066, %v10594
    %v10605 = vmul.f32 %v9067, %v10594
    %v10606 = vmul.f32 %v9068, %v10594
    %v10607 = vmul.f32 %v9069, %v10594
    %v10608 = vmul.f32 %v9070, %v10594
    %v10609 = vmul.f32 %v9071, %v10594
    %v10610 = vmul.f32 %v9072, %v10594
    %v10611 = vmul.f32 %v9073, %v10594
    %v10612 = vmul.f32 %v9074, %v10594
    %v10613 = vmul.f32 %v9075, %v10594
    %v10614 = vmul.f32 %v9076, %v10594
    %v10615 = vmul.f32 %v9077, %v10594
    %v10616 = vmul.f32 %v9078, %v10594
    %v10617 = vmul.f32 %v9079, %v10594
    %v10618 = vmul.f32 %v9080, %v10594
    %v10619 = vmul.f32 %v9081, %v10594
    %v10620 = vmul.f32 %v9082, %v10594
    %v10621 = vmul.f32 %v9083, %v10594
    %v10622 = vmul.f32 %v9084, %v10594
    %v10623 = vmul.f32 %v9085, %v10594
    %v10624 = vmul.f32 %v9086, %v10594
    %v10625 = vmul.f32 %v9087, %v10594
    %v10626 = vmul.f32 %v9088, %v10594
    %v10627 = vmul.f32 %v9089, %v10594
    %v10628 = vmul.f32 %v9090, %v10594
    %v10629 = vmul.f32 %v9091, %v10594
    %v10630 = vmul.f32 %v9092, %v10594
    %v10631 = vmul.f32 %v9093, %v10594
    %v10632 = vmul.f32 %v9094, %v10594
    %v10633 = vmul.f32 %v9095, %v10594
    %v10634 = vmul.f32 %v9096, %v10594
    %v10635 = vmul.f32 %v9097, %v10594
    %v10636 = vmul.f32 %v9098, %v10594
    %v10637 = vmul.f32 %v9099, %v10594
    %v10638 = vmul.f32 %v9100, %v10594
    %v10639 = vmul.f32 %v9101, %v10594
    %v10640 = vmul.f32 %v9102, %v10594
    %v10641 = vmul.f32 %v9103, %v10594
    %v10642 = vmul.f32 %v9104, %v10594
    %v10643 = vmul.f32 %v9105, %v10594
    %v10644 = vmul.f32 %v9106, %v10594
    %v10645 = vmul.f32 %v9107, %v10594
    %v10646 = vmul.f32 %v9108, %v10594
    %v10647 = vmul.f32 %v9109, %v10594
    %v10648 = vmul.f32 %v9110, %v10594
    %v10649 = vmul.f32 %v9111, %v10594
    %v10650 = vmul.f32 %v9112, %v10594
    %v10651 = vmul.f32 %v9113, %v10594
    %v10652 = vmul.f32 %v9114, %v10594
    %v10653 = vmul.f32 %v9115, %v10594
    %v10654 = vmul.f32 %v9116, %v10594
    %v10655 = vmul.f32 %v9117, %v10594
    %v10656 = vmul.f32 %v9118, %v10594
    %v10657 = vmul.f32 %v9119, %v10594
    %v10658 = vmul.f32 %v9120, %v10594
    %v10659 = vmul.f32 %v9121, %v10594
    %v10660 = vmul.f32 %v9122, %v10594
    %v10727 = vrot.slane %v10595, 2
    %v10728 = vrot.slane %v10596, 2
    %v10729 = vsel %vm2813, %v10727, %v10728
    %v10730 = vrot.slane %v10597, 2
    %v10731 = vsel %vm2813, %v10728, %v10730
    %v10732 = vrot.slane %v10598, 2
    %v10733 = vrot.slane %v10599, 2
    %v10734 = vsel %vm2813, %v10732, %v10733
    %v10735 = vrot.slane %v10600, 2
    %v10736 = vsel %vm2813, %v10733, %v10735
    %v10737 = vrot.slane %v10601, 2
    %v10738 = vrot.slane %v10602, 2
    %v10739 = vsel %vm2813, %v10737, %v10738
    %v10740 = vrot.slane %v10603, 2
    %v10741 = vsel %vm2813, %v10738, %v10740
    %v10742 = vrot.slane %v10604, 2
    %v10743 = vrot.slane %v10605, 2
    %v10744 = vsel %vm2813, %v10742, %v10743
    %v10745 = vrot.slane %v10606, 2
    %v10746 = vsel %vm2813, %v10743, %v10745
    %v10747 = vrot.slane %v10607, 2
    %v10748 = vrot.slane %v10608, 2
    %v10749 = vsel %vm2813, %v10747, %v10748
    %v10750 = vrot.slane %v10609, 2
    %v10751 = vsel %vm2813, %v10748, %v10750
    %v10752 = vrot.slane %v10610, 2
    %v10753 = vrot.slane %v10611, 2
    %v10754 = vsel %vm2813, %v10752, %v10753
    %v10755 = vrot.slane %v10612, 2
    %v10756 = vsel %vm2813, %v10753, %v10755
    %v10757 = vrot.slane %v10613, 2
    %v10758 = vrot.slane %v10614, 2
    %v10759 = vsel %vm2813, %v10757, %v10758
    %v10760 = vrot.slane %v10615, 2
    %v10761 = vsel %vm2813, %v10758, %v10760
    %v10762 = vrot.slane %v10616, 2
    %v10763 = vrot.slane %v10617, 2
    %v10764 = vsel %vm2813, %v10762, %v10763
    %v10765 = vrot.slane %v10618, 2
    %v10766 = vsel %vm2813, %v10763, %v10765
    %v10767 = vrot.slane %v10619, 2
    %v10768 = vrot.slane %v10620, 2
    %v10769 = vsel %vm2813, %v10767, %v10768
    %v10770 = vrot.slane %v10621, 2
    %v10771 = vsel %vm2813, %v10768, %v10770
    %v10772 = vrot.slane %v10622, 2
    %v10773 = vrot.slane %v10623, 2
    %v10774 = vsel %vm2813, %v10772, %v10773
    %v10775 = vrot.slane %v10624, 2
    %v10776 = vsel %vm2813, %v10773, %v10775
    %v10777 = vrot.slane %v10625, 2
    %v10778 = vrot.slane %v10626, 2
    %v10779 = vsel %vm2813, %v10777, %v10778
    %v10780 = vrot.slane %v10627, 2
    %v10781 = vsel %vm2813, %v10778, %v10780
    %v10782 = vrot.slane %v10628, 2
    %v10783 = vrot.slane %v10629, 2
    %v10784 = vsel %vm2813, %v10782, %v10783
    %v10785 = vrot.slane %v10630, 2
    %v10786 = vsel %vm2813, %v10783, %v10785
    %v10787 = vrot.slane %v10631, 2
    %v10788 = vrot.slane %v10632, 2
    %v10789 = vsel %vm2813, %v10787, %v10788
    %v10790 = vrot.slane %v10633, 2
    %v10791 = vsel %vm2813, %v10788, %v10790
    %v10792 = vrot.slane %v10634, 2
    %v10793 = vrot.slane %v10635, 2
    %v10794 = vsel %vm2813, %v10792, %v10793
    %v10795 = vrot.slane %v10636, 2
    %v10796 = vsel %vm2813, %v10793, %v10795
    %v10797 = vrot.slane %v10637, 2
    %v10798 = vrot.slane %v10638, 2
    %v10799 = vsel %vm2813, %v10797, %v10798
    %v10800 = vrot.slane %v10639, 2
    %v10801 = vsel %vm2813, %v10798, %v10800
    %v10802 = vrot.slane %v10640, 2
    %v10803 = vrot.slane %v10641, 2
    %v10804 = vsel %vm2813, %v10802, %v10803
    %v10805 = vrot.slane %v10642, 2
    %v10806 = vsel %vm2813, %v10803, %v10805
    %v10807 = vrot.slane %v10643, 2
    %v10808 = vrot.slane %v10644, 2
    %v10809 = vsel %vm2813, %v10807, %v10808
    %v10810 = vrot.slane %v10645, 2
    %v10811 = vsel %vm2813, %v10808, %v10810
    %v10812 = vrot.slane %v10646, 2
    %v10813 = vrot.slane %v10647, 2
    %v10814 = vsel %vm2813, %v10812, %v10813
    %v10815 = vrot.slane %v10648, 2
    %v10816 = vsel %vm2813, %v10813, %v10815
    %v10817 = vrot.slane %v10649, 2
    %v10818 = vrot.slane %v10650, 2
    %v10819 = vsel %vm2813, %v10817, %v10818
    %v10820 = vrot.slane %v10651, 2
    %v10821 = vsel %vm2813, %v10818, %v10820
    %v10822 = vrot.slane %v10652, 2
    %v10823 = vrot.slane %v10653, 2
    %v10824 = vsel %vm2813, %v10822, %v10823
    %v10825 = vrot.slane %v10654, 2
    %v10826 = vsel %vm2813, %v10823, %v10825
    %v10827 = vrot.slane %v10655, 2
    %v10828 = vrot.slane %v10656, 2
    %v10829 = vsel %vm2813, %v10827, %v10828
    %v10830 = vrot.slane %v10657, 2
    %v10831 = vsel %vm2813, %v10828, %v10830
    %v10832 = vrot.slane %v10658, 2
    %v10833 = vrot.slane %v10659, 2
    %v10834 = vsel %vm2813, %v10832, %v10833
    %v10835 = vrot.slane %v10660, 2
    %v10836 = vsel %vm2813, %v10833, %v10835
    %v10903 = vadd.f32 %v10527, %v10729
    %v10904 = vadd.f32 %v10528, %v10731
    %v10905 = vadd.f32 %v10529, %v10730
    %v10906 = vadd.f32 %v10530, %v10734
    %v10907 = vadd.f32 %v10531, %v10736
    %v10908 = vadd.f32 %v10532, %v10735
    %v10909 = vadd.f32 %v10533, %v10739
    %v10910 = vadd.f32 %v10534, %v10741
    %v10911 = vadd.f32 %v10535, %v10740
    %v10912 = vadd.f32 %v10536, %v10744
    %v10913 = vadd.f32 %v10537, %v10746
    %v10914 = vadd.f32 %v10538, %v10745
    %v10915 = vadd.f32 %v10539, %v10749
    %v10916 = vadd.f32 %v10540, %v10751
    %v10917 = vadd.f32 %v10541, %v10750
    %v10918 = vadd.f32 %v10542, %v10754
    %v10919 = vadd.f32 %v10543, %v10756
    %v10920 = vadd.f32 %v10544, %v10755
    %v10921 = vadd.f32 %v10545, %v10759
    %v10922 = vadd.f32 %v10546, %v10761
    %v10923 = vadd.f32 %v10547, %v10760
    %v10924 = vadd.f32 %v10548, %v10764
    %v10925 = vadd.f32 %v10549, %v10766
    %v10926 = vadd.f32 %v10550, %v10765
    %v10927 = vadd.f32 %v10551, %v10769
    %v10928 = vadd.f32 %v10552, %v10771
    %v10929 = vadd.f32 %v10553, %v10770
    %v10930 = vadd.f32 %v10554, %v10774
    %v10931 = vadd.f32 %v10555, %v10776
    %v10932 = vadd.f32 %v10556, %v10775
    %v10933 = vadd.f32 %v10557, %v10779
    %v10934 = vadd.f32 %v10558, %v10781
    %v10935 = vadd.f32 %v10559, %v10780
    %v10936 = vadd.f32 %v10560, %v10784
    %v10937 = vadd.f32 %v10561, %v10786
    %v10938 = vadd.f32 %v10562, %v10785
    %v10939 = vadd.f32 %v10563, %v10789
    %v10940 = vadd.f32 %v10564, %v10791
    %v10941 = vadd.f32 %v10565, %v10790
    %v10942 = vadd.f32 %v10566, %v10794
    %v10943 = vadd.f32 %v10567, %v10796
    %v10944 = vadd.f32 %v10568, %v10795
    %v10945 = vadd.f32 %v10569, %v10799
    %v10946 = vadd.f32 %v10570, %v10801
    %v10947 = vadd.f32 %v10571, %v10800
    %v10948 = vadd.f32 %v10572, %v10804
    %v10949 = vadd.f32 %v10573, %v10806
    %v10950 = vadd.f32 %v10574, %v10805
    %v10951 = vadd.f32 %v10575, %v10809
    %v10952 = vadd.f32 %v10576, %v10811
    %v10953 = vadd.f32 %v10577, %v10810
    %v10954 = vadd.f32 %v10578, %v10814
    %v10955 = vadd.f32 %v10579, %v10816
    %v10956 = vadd.f32 %v10580, %v10815
    %v10957 = vadd.f32 %v10581, %v10819
    %v10958 = vadd.f32 %v10582, %v10821
    %v10959 = vadd.f32 %v10583, %v10820
    %v10960 = vadd.f32 %v10584, %v10824
    %v10961 = vadd.f32 %v10585, %v10826
    %v10962 = vadd.f32 %v10586, %v10825
    %v10963 = vadd.f32 %v10587, %v10829
    %v10964 = vadd.f32 %v10588, %v10831
    %v10965 = vadd.f32 %v10589, %v10830
    %v10966 = vadd.f32 %v10590, %v10834
    %v10967 = vadd.f32 %v10591, %v10836
    %v10968 = vadd.f32 %v10592, %v10835
    %s10969 = sld [smem:[#allocation2 + $0x105]]
    %v10970 = vstv %s10969
    %v10971 = vmul.f32 %v9060, %v10970
    %v10972 = vmul.f32 %v9061, %v10970
    %v10973 = vmul.f32 %v9062, %v10970
    %v10974 = vmul.f32 %v9063, %v10970
    %v10975 = vmul.f32 %v9064, %v10970
    %v10976 = vmul.f32 %v9065, %v10970
    %v10977 = vmul.f32 %v9066, %v10970
    %v10978 = vmul.f32 %v9067, %v10970
    %v10979 = vmul.f32 %v9068, %v10970
    %v10980 = vmul.f32 %v9069, %v10970
    %v10981 = vmul.f32 %v9070, %v10970
    %v10982 = vmul.f32 %v9071, %v10970
    %v10983 = vmul.f32 %v9072, %v10970
    %v10984 = vmul.f32 %v9073, %v10970
    %v10985 = vmul.f32 %v9074, %v10970
    %v10986 = vmul.f32 %v9075, %v10970
    %v10987 = vmul.f32 %v9076, %v10970
    %v10988 = vmul.f32 %v9077, %v10970
    %v10989 = vmul.f32 %v9078, %v10970
    %v10990 = vmul.f32 %v9079, %v10970
    %v10991 = vmul.f32 %v9080, %v10970
    %v10992 = vmul.f32 %v9081, %v10970
    %v10993 = vmul.f32 %v9082, %v10970
    %v10994 = vmul.f32 %v9083, %v10970
    %v10995 = vmul.f32 %v9084, %v10970
    %v10996 = vmul.f32 %v9085, %v10970
    %v10997 = vmul.f32 %v9086, %v10970
    %v10998 = vmul.f32 %v9087, %v10970
    %v10999 = vmul.f32 %v9088, %v10970
    %v11000 = vmul.f32 %v9089, %v10970
    %v11001 = vmul.f32 %v9090, %v10970
    %v11002 = vmul.f32 %v9091, %v10970
    %v11003 = vmul.f32 %v9092, %v10970
    %v11004 = vmul.f32 %v9093, %v10970
    %v11005 = vmul.f32 %v9094, %v10970
    %v11006 = vmul.f32 %v9095, %v10970
    %v11007 = vmul.f32 %v9096, %v10970
    %v11008 = vmul.f32 %v9097, %v10970
    %v11009 = vmul.f32 %v9098, %v10970
    %v11010 = vmul.f32 %v9099, %v10970
    %v11011 = vmul.f32 %v9100, %v10970
    %v11012 = vmul.f32 %v9101, %v10970
    %v11013 = vmul.f32 %v9102, %v10970
    %v11014 = vmul.f32 %v9103, %v10970
    %v11015 = vmul.f32 %v9104, %v10970
    %v11016 = vmul.f32 %v9105, %v10970
    %v11017 = vmul.f32 %v9106, %v10970
    %v11018 = vmul.f32 %v9107, %v10970
    %v11019 = vmul.f32 %v9108, %v10970
    %v11020 = vmul.f32 %v9109, %v10970
    %v11021 = vmul.f32 %v9110, %v10970
    %v11022 = vmul.f32 %v9111, %v10970
    %v11023 = vmul.f32 %v9112, %v10970
    %v11024 = vmul.f32 %v9113, %v10970
    %v11025 = vmul.f32 %v9114, %v10970
    %v11026 = vmul.f32 %v9115, %v10970
    %v11027 = vmul.f32 %v9116, %v10970
    %v11028 = vmul.f32 %v9117, %v10970
    %v11029 = vmul.f32 %v9118, %v10970
    %v11030 = vmul.f32 %v9119, %v10970
    %v11031 = vmul.f32 %v9120, %v10970
    %v11032 = vmul.f32 %v9121, %v10970
    %v11033 = vmul.f32 %v9122, %v10970
    %v11034 = vmul.f32 %v9123, %v10970
    %v11035 = vmul.f32 %v9124, %v10970
    %v11036 = vmul.f32 %v9125, %v10970
    %v11103 = vrot.slane %v10971, 2
    %v11104 = vrot.slane %v10972, 2
    %v11105 = vsel %vm2813, %v11103, %v11104
    %v11106 = vrot.slane %v10973, 2
    %v11107 = vsel %vm2813, %v11104, %v11106
    %v11108 = vrot.slane %v10974, 2
    %v11109 = vrot.slane %v10975, 2
    %v11110 = vsel %vm2813, %v11108, %v11109
    %v11111 = vrot.slane %v10976, 2
    %v11112 = vsel %vm2813, %v11109, %v11111
    %v11113 = vrot.slane %v10977, 2
    %v11114 = vrot.slane %v10978, 2
    %v11115 = vsel %vm2813, %v11113, %v11114
    %v11116 = vrot.slane %v10979, 2
    %v11117 = vsel %vm2813, %v11114, %v11116
    %v11118 = vrot.slane %v10980, 2
    %v11119 = vrot.slane %v10981, 2
    %v11120 = vsel %vm2813, %v11118, %v11119
    %v11121 = vrot.slane %v10982, 2
    %v11122 = vsel %vm2813, %v11119, %v11121
    %v11123 = vrot.slane %v10983, 2
    %v11124 = vrot.slane %v10984, 2
    %v11125 = vsel %vm2813, %v11123, %v11124
    %v11126 = vrot.slane %v10985, 2
    %v11127 = vsel %vm2813, %v11124, %v11126
    %v11128 = vrot.slane %v10986, 2
    %v11129 = vrot.slane %v10987, 2
    %v11130 = vsel %vm2813, %v11128, %v11129
    %v11131 = vrot.slane %v10988, 2
    %v11132 = vsel %vm2813, %v11129, %v11131
    %v11133 = vrot.slane %v10989, 2
    %v11134 = vrot.slane %v10990, 2
    %v11135 = vsel %vm2813, %v11133, %v11134
    %v11136 = vrot.slane %v10991, 2
    %v11137 = vsel %vm2813, %v11134, %v11136
    %v11138 = vrot.slane %v10992, 2
    %v11139 = vrot.slane %v10993, 2
    %v11140 = vsel %vm2813, %v11138, %v11139
    %v11141 = vrot.slane %v10994, 2
    %v11142 = vsel %vm2813, %v11139, %v11141
    %v11143 = vrot.slane %v10995, 2
    %v11144 = vrot.slane %v10996, 2
    %v11145 = vsel %vm2813, %v11143, %v11144
    %v11146 = vrot.slane %v10997, 2
    %v11147 = vsel %vm2813, %v11144, %v11146
    %v11148 = vrot.slane %v10998, 2
    %v11149 = vrot.slane %v10999, 2
    %v11150 = vsel %vm2813, %v11148, %v11149
    %v11151 = vrot.slane %v11000, 2
    %v11152 = vsel %vm2813, %v11149, %v11151
    %v11153 = vrot.slane %v11001, 2
    %v11154 = vrot.slane %v11002, 2
    %v11155 = vsel %vm2813, %v11153, %v11154
    %v11156 = vrot.slane %v11003, 2
    %v11157 = vsel %vm2813, %v11154, %v11156
    %v11158 = vrot.slane %v11004, 2
    %v11159 = vrot.slane %v11005, 2
    %v11160 = vsel %vm2813, %v11158, %v11159
    %v11161 = vrot.slane %v11006, 2
    %v11162 = vsel %vm2813, %v11159, %v11161
    %v11163 = vrot.slane %v11007, 2
    %v11164 = vrot.slane %v11008, 2
    %v11165 = vsel %vm2813, %v11163, %v11164
    %v11166 = vrot.slane %v11009, 2
    %v11167 = vsel %vm2813, %v11164, %v11166
    %v11168 = vrot.slane %v11010, 2
    %v11169 = vrot.slane %v11011, 2
    %v11170 = vsel %vm2813, %v11168, %v11169
    %v11171 = vrot.slane %v11012, 2
    %v11172 = vsel %vm2813, %v11169, %v11171
    %v11173 = vrot.slane %v11013, 2
    %v11174 = vrot.slane %v11014, 2
    %v11175 = vsel %vm2813, %v11173, %v11174
    %v11176 = vrot.slane %v11015, 2
    %v11177 = vsel %vm2813, %v11174, %v11176
    %v11178 = vrot.slane %v11016, 2
    %v11179 = vrot.slane %v11017, 2
    %v11180 = vsel %vm2813, %v11178, %v11179
    %v11181 = vrot.slane %v11018, 2
    %v11182 = vsel %vm2813, %v11179, %v11181
    %v11183 = vrot.slane %v11019, 2
    %v11184 = vrot.slane %v11020, 2
    %v11185 = vsel %vm2813, %v11183, %v11184
    %v11186 = vrot.slane %v11021, 2
    %v11187 = vsel %vm2813, %v11184, %v11186
    %v11188 = vrot.slane %v11022, 2
    %v11189 = vrot.slane %v11023, 2
    %v11190 = vsel %vm2813, %v11188, %v11189
    %v11191 = vrot.slane %v11024, 2
    %v11192 = vsel %vm2813, %v11189, %v11191
    %v11193 = vrot.slane %v11025, 2
    %v11194 = vrot.slane %v11026, 2
    %v11195 = vsel %vm2813, %v11193, %v11194
    %v11196 = vrot.slane %v11027, 2
    %v11197 = vsel %vm2813, %v11194, %v11196
    %v11198 = vrot.slane %v11028, 2
    %v11199 = vrot.slane %v11029, 2
    %v11200 = vsel %vm2813, %v11198, %v11199
    %v11201 = vrot.slane %v11030, 2
    %v11202 = vsel %vm2813, %v11199, %v11201
    %v11203 = vrot.slane %v11031, 2
    %v11204 = vrot.slane %v11032, 2
    %v11205 = vsel %vm2813, %v11203, %v11204
    %v11206 = vrot.slane %v11033, 2
    %v11207 = vsel %vm2813, %v11204, %v11206
    %v11208 = vrot.slane %v11034, 2
    %v11209 = vrot.slane %v11035, 2
    %v11210 = vsel %vm2813, %v11208, %v11209
    %v11211 = vrot.slane %v11036, 2
    %v11212 = vsel %vm2813, %v11209, %v11211
    %v11279 = vadd.f32 %v10903, %v11105
    %v11280 = vadd.f32 %v10904, %v11107
    %v11281 = vadd.f32 %v10905, %v11106
    %v11282 = vadd.f32 %v10906, %v11110
    %v11283 = vadd.f32 %v10907, %v11112
    %v11284 = vadd.f32 %v10908, %v11111
    %v11285 = vadd.f32 %v10909, %v11115
    %v11286 = vadd.f32 %v10910, %v11117
    %v11287 = vadd.f32 %v10911, %v11116
    %v11288 = vadd.f32 %v10912, %v11120
    %v11289 = vadd.f32 %v10913, %v11122
    %v11290 = vadd.f32 %v10914, %v11121
    %v11291 = vadd.f32 %v10915, %v11125
    %v11292 = vadd.f32 %v10916, %v11127
    %v11293 = vadd.f32 %v10917, %v11126
    %v11294 = vadd.f32 %v10918, %v11130
    %v11295 = vadd.f32 %v10919, %v11132
    %v11296 = vadd.f32 %v10920, %v11131
    %v11297 = vadd.f32 %v10921, %v11135
    %v11298 = vadd.f32 %v10922, %v11137
    %v11299 = vadd.f32 %v10923, %v11136
    %v11300 = vadd.f32 %v10924, %v11140
    %v11301 = vadd.f32 %v10925, %v11142
    %v11302 = vadd.f32 %v10926, %v11141
    %v11303 = vadd.f32 %v10927, %v11145
    %v11304 = vadd.f32 %v10928, %v11147
    %v11305 = vadd.f32 %v10929, %v11146
    %v11306 = vadd.f32 %v10930, %v11150
    %v11307 = vadd.f32 %v10931, %v11152
    %v11308 = vadd.f32 %v10932, %v11151
    %v11309 = vadd.f32 %v10933, %v11155
    %v11310 = vadd.f32 %v10934, %v11157
    %v11311 = vadd.f32 %v10935, %v11156
    %v11312 = vadd.f32 %v10936, %v11160
    %v11313 = vadd.f32 %v10937, %v11162
    %v11314 = vadd.f32 %v10938, %v11161
    %v11315 = vadd.f32 %v10939, %v11165
    %v11316 = vadd.f32 %v10940, %v11167
    %v11317 = vadd.f32 %v10941, %v11166
    %v11318 = vadd.f32 %v10942, %v11170
    %v11319 = vadd.f32 %v10943, %v11172
    %v11320 = vadd.f32 %v10944, %v11171
    %v11321 = vadd.f32 %v10945, %v11175
    %v11322 = vadd.f32 %v10946, %v11177
    %v11323 = vadd.f32 %v10947, %v11176
    %v11324 = vadd.f32 %v10948, %v11180
    %v11325 = vadd.f32 %v10949, %v11182
    %v11326 = vadd.f32 %v10950, %v11181
    %v11327 = vadd.f32 %v10951, %v11185
    %v11328 = vadd.f32 %v10952, %v11187
    %v11329 = vadd.f32 %v10953, %v11186
    %v11330 = vadd.f32 %v10954, %v11190
    %v11331 = vadd.f32 %v10955, %v11192
    %v11332 = vadd.f32 %v10956, %v11191
    %v11333 = vadd.f32 %v10957, %v11195
    %v11334 = vadd.f32 %v10958, %v11197
    %v11335 = vadd.f32 %v10959, %v11196
    %v11336 = vadd.f32 %v10960, %v11200
    %v11337 = vadd.f32 %v10961, %v11202
    %v11338 = vadd.f32 %v10962, %v11201
    %v11339 = vadd.f32 %v10963, %v11205
    %v11340 = vadd.f32 %v10964, %v11207
    %v11341 = vadd.f32 %v10965, %v11206
    %v11342 = vadd.f32 %v10966, %v11210
    %v11343 = vadd.f32 %v10967, %v11212
    %v11344 = vadd.f32 %v10968, %v11211
    %s11345 = sld [smem:[#allocation2 + $0x108]]
    %v11346 = vstv %s11345
    %v11347 = vmul.f32 %v9063, %v11346
    %v11348 = vmul.f32 %v9064, %v11346
    %v11349 = vmul.f32 %v9065, %v11346
    %v11350 = vmul.f32 %v9066, %v11346
    %v11351 = vmul.f32 %v9067, %v11346
    %v11352 = vmul.f32 %v9068, %v11346
    %v11353 = vmul.f32 %v9069, %v11346
    %v11354 = vmul.f32 %v9070, %v11346
    %v11355 = vmul.f32 %v9071, %v11346
    %v11356 = vmul.f32 %v9072, %v11346
    %v11357 = vmul.f32 %v9073, %v11346
    %v11358 = vmul.f32 %v9074, %v11346
    %v11359 = vmul.f32 %v9075, %v11346
    %v11360 = vmul.f32 %v9076, %v11346
    %v11361 = vmul.f32 %v9077, %v11346
    %v11362 = vmul.f32 %v9078, %v11346
    %v11363 = vmul.f32 %v9079, %v11346
    %v11364 = vmul.f32 %v9080, %v11346
    %v11365 = vmul.f32 %v9081, %v11346
    %v11366 = vmul.f32 %v9082, %v11346
    %v11367 = vmul.f32 %v9083, %v11346
    %v11368 = vmul.f32 %v9084, %v11346
    %v11369 = vmul.f32 %v9085, %v11346
    %v11370 = vmul.f32 %v9086, %v11346
    %v11371 = vmul.f32 %v9087, %v11346
    %v11372 = vmul.f32 %v9088, %v11346
    %v11373 = vmul.f32 %v9089, %v11346
    %v11374 = vmul.f32 %v9090, %v11346
    %v11375 = vmul.f32 %v9091, %v11346
    %v11376 = vmul.f32 %v9092, %v11346
    %v11377 = vmul.f32 %v9093, %v11346
    %v11378 = vmul.f32 %v9094, %v11346
    %v11379 = vmul.f32 %v9095, %v11346
    %v11380 = vmul.f32 %v9096, %v11346
    %v11381 = vmul.f32 %v9097, %v11346
    %v11382 = vmul.f32 %v9098, %v11346
    %v11383 = vmul.f32 %v9099, %v11346
    %v11384 = vmul.f32 %v9100, %v11346
    %v11385 = vmul.f32 %v9101, %v11346
    %v11386 = vmul.f32 %v9102, %v11346
    %v11387 = vmul.f32 %v9103, %v11346
    %v11388 = vmul.f32 %v9104, %v11346
    %v11389 = vmul.f32 %v9105, %v11346
    %v11390 = vmul.f32 %v9106, %v11346
    %v11391 = vmul.f32 %v9107, %v11346
    %v11392 = vmul.f32 %v9108, %v11346
    %v11393 = vmul.f32 %v9109, %v11346
    %v11394 = vmul.f32 %v9110, %v11346
    %v11395 = vmul.f32 %v9111, %v11346
    %v11396 = vmul.f32 %v9112, %v11346
    %v11397 = vmul.f32 %v9113, %v11346
    %v11398 = vmul.f32 %v9114, %v11346
    %v11399 = vmul.f32 %v9115, %v11346
    %v11400 = vmul.f32 %v9116, %v11346
    %v11401 = vmul.f32 %v9117, %v11346
    %v11402 = vmul.f32 %v9118, %v11346
    %v11403 = vmul.f32 %v9119, %v11346
    %v11404 = vmul.f32 %v9120, %v11346
    %v11405 = vmul.f32 %v9121, %v11346
    %v11406 = vmul.f32 %v9122, %v11346
    %v11407 = vmul.f32 %v9123, %v11346
    %v11408 = vmul.f32 %v9124, %v11346
    %v11409 = vmul.f32 %v9125, %v11346
    %v11410 = vmul.f32 %v9126, %v11346
    %v11411 = vmul.f32 %v9127, %v11346
    %v11412 = vmul.f32 %v9128, %v11346
    %v11479 = vrot.slane %v11347, 2
    %v11480 = vrot.slane %v11348, 2
    %v11481 = vsel %vm2813, %v11479, %v11480
    %v11482 = vrot.slane %v11349, 2
    %v11483 = vsel %vm2813, %v11480, %v11482
    %v11484 = vrot.slane %v11350, 2
    %v11485 = vrot.slane %v11351, 2
    %v11486 = vsel %vm2813, %v11484, %v11485
    %v11487 = vrot.slane %v11352, 2
    %v11488 = vsel %vm2813, %v11485, %v11487
    %v11489 = vrot.slane %v11353, 2
    %v11490 = vrot.slane %v11354, 2
    %v11491 = vsel %vm2813, %v11489, %v11490
    %v11492 = vrot.slane %v11355, 2
    %v11493 = vsel %vm2813, %v11490, %v11492
    %v11494 = vrot.slane %v11356, 2
    %v11495 = vrot.slane %v11357, 2
    %v11496 = vsel %vm2813, %v11494, %v11495
    %v11497 = vrot.slane %v11358, 2
    %v11498 = vsel %vm2813, %v11495, %v11497
    %v11499 = vrot.slane %v11359, 2
    %v11500 = vrot.slane %v11360, 2
    %v11501 = vsel %vm2813, %v11499, %v11500
    %v11502 = vrot.slane %v11361, 2
    %v11503 = vsel %vm2813, %v11500, %v11502
    %v11504 = vrot.slane %v11362, 2
    %v11505 = vrot.slane %v11363, 2
    %v11506 = vsel %vm2813, %v11504, %v11505
    %v11507 = vrot.slane %v11364, 2
    %v11508 = vsel %vm2813, %v11505, %v11507
    %v11509 = vrot.slane %v11365, 2
    %v11510 = vrot.slane %v11366, 2
    %v11511 = vsel %vm2813, %v11509, %v11510
    %v11512 = vrot.slane %v11367, 2
    %v11513 = vsel %vm2813, %v11510, %v11512
    %v11514 = vrot.slane %v11368, 2
    %v11515 = vrot.slane %v11369, 2
    %v11516 = vsel %vm2813, %v11514, %v11515
    %v11517 = vrot.slane %v11370, 2
    %v11518 = vsel %vm2813, %v11515, %v11517
    %v11519 = vrot.slane %v11371, 2
    %v11520 = vrot.slane %v11372, 2
    %v11521 = vsel %vm2813, %v11519, %v11520
    %v11522 = vrot.slane %v11373, 2
    %v11523 = vsel %vm2813, %v11520, %v11522
    %v11524 = vrot.slane %v11374, 2
    %v11525 = vrot.slane %v11375, 2
    %v11526 = vsel %vm2813, %v11524, %v11525
    %v11527 = vrot.slane %v11376, 2
    %v11528 = vsel %vm2813, %v11525, %v11527
    %v11529 = vrot.slane %v11377, 2
    %v11530 = vrot.slane %v11378, 2
    %v11531 = vsel %vm2813, %v11529, %v11530
    %v11532 = vrot.slane %v11379, 2
    %v11533 = vsel %vm2813, %v11530, %v11532
    %v11534 = vrot.slane %v11380, 2
    %v11535 = vrot.slane %v11381, 2
    %v11536 = vsel %vm2813, %v11534, %v11535
    %v11537 = vrot.slane %v11382, 2
    %v11538 = vsel %vm2813, %v11535, %v11537
    %v11539 = vrot.slane %v11383, 2
    %v11540 = vrot.slane %v11384, 2
    %v11541 = vsel %vm2813, %v11539, %v11540
    %v11542 = vrot.slane %v11385, 2
    %v11543 = vsel %vm2813, %v11540, %v11542
    %v11544 = vrot.slane %v11386, 2
    %v11545 = vrot.slane %v11387, 2
    %v11546 = vsel %vm2813, %v11544, %v11545
    %v11547 = vrot.slane %v11388, 2
    %v11548 = vsel %vm2813, %v11545, %v11547
    %v11549 = vrot.slane %v11389, 2
    %v11550 = vrot.slane %v11390, 2
    %v11551 = vsel %vm2813, %v11549, %v11550
    %v11552 = vrot.slane %v11391, 2
    %v11553 = vsel %vm2813, %v11550, %v11552
    %v11554 = vrot.slane %v11392, 2
    %v11555 = vrot.slane %v11393, 2
    %v11556 = vsel %vm2813, %v11554, %v11555
    %v11557 = vrot.slane %v11394, 2
    %v11558 = vsel %vm2813, %v11555, %v11557
    %v11559 = vrot.slane %v11395, 2
    %v11560 = vrot.slane %v11396, 2
    %v11561 = vsel %vm2813, %v11559, %v11560
    %v11562 = vrot.slane %v11397, 2
    %v11563 = vsel %vm2813, %v11560, %v11562
    %v11564 = vrot.slane %v11398, 2
    %v11565 = vrot.slane %v11399, 2
    %v11566 = vsel %vm2813, %v11564, %v11565
    %v11567 = vrot.slane %v11400, 2
    %v11568 = vsel %vm2813, %v11565, %v11567
    %v11569 = vrot.slane %v11401, 2
    %v11570 = vrot.slane %v11402, 2
    %v11571 = vsel %vm2813, %v11569, %v11570
    %v11572 = vrot.slane %v11403, 2
    %v11573 = vsel %vm2813, %v11570, %v11572
    %v11574 = vrot.slane %v11404, 2
    %v11575 = vrot.slane %v11405, 2
    %v11576 = vsel %vm2813, %v11574, %v11575
    %v11577 = vrot.slane %v11406, 2
    %v11578 = vsel %vm2813, %v11575, %v11577
    %v11579 = vrot.slane %v11407, 2
    %v11580 = vrot.slane %v11408, 2
    %v11581 = vsel %vm2813, %v11579, %v11580
    %v11582 = vrot.slane %v11409, 2
    %v11583 = vsel %vm2813, %v11580, %v11582
    %v11584 = vrot.slane %v11410, 2
    %v11585 = vrot.slane %v11411, 2
    %v11586 = vsel %vm2813, %v11584, %v11585
    %v11587 = vrot.slane %v11412, 2
    %v11588 = vsel %vm2813, %v11585, %v11587
    %v11655 = vadd.f32 %v11279, %v11481
    %v11656 = vadd.f32 %v11280, %v11483
    %v11657 = vadd.f32 %v11281, %v11482
    %v11658 = vadd.f32 %v11282, %v11486
    %v11659 = vadd.f32 %v11283, %v11488
    %v11660 = vadd.f32 %v11284, %v11487
    %v11661 = vadd.f32 %v11285, %v11491
    %v11662 = vadd.f32 %v11286, %v11493
    %v11663 = vadd.f32 %v11287, %v11492
    %v11664 = vadd.f32 %v11288, %v11496
    %v11665 = vadd.f32 %v11289, %v11498
    %v11666 = vadd.f32 %v11290, %v11497
    %v11667 = vadd.f32 %v11291, %v11501
    %v11668 = vadd.f32 %v11292, %v11503
    %v11669 = vadd.f32 %v11293, %v11502
    %v11670 = vadd.f32 %v11294, %v11506
    %v11671 = vadd.f32 %v11295, %v11508
    %v11672 = vadd.f32 %v11296, %v11507
    %v11673 = vadd.f32 %v11297, %v11511
    %v11674 = vadd.f32 %v11298, %v11513
    %v11675 = vadd.f32 %v11299, %v11512
    %v11676 = vadd.f32 %v11300, %v11516
    %v11677 = vadd.f32 %v11301, %v11518
    %v11678 = vadd.f32 %v11302, %v11517
    %v11679 = vadd.f32 %v11303, %v11521
    %v11680 = vadd.f32 %v11304, %v11523
    %v11681 = vadd.f32 %v11305, %v11522
    %v11682 = vadd.f32 %v11306, %v11526
    %v11683 = vadd.f32 %v11307, %v11528
    %v11684 = vadd.f32 %v11308, %v11527
    %v11685 = vadd.f32 %v11309, %v11531
    %v11686 = vadd.f32 %v11310, %v11533
    %v11687 = vadd.f32 %v11311, %v11532
    %v11688 = vadd.f32 %v11312, %v11536
    %v11689 = vadd.f32 %v11313, %v11538
    %v11690 = vadd.f32 %v11314, %v11537
    %v11691 = vadd.f32 %v11315, %v11541
    %v11692 = vadd.f32 %v11316, %v11543
    %v11693 = vadd.f32 %v11317, %v11542
    %v11694 = vadd.f32 %v11318, %v11546
    %v11695 = vadd.f32 %v11319, %v11548
    %v11696 = vadd.f32 %v11320, %v11547
    %v11697 = vadd.f32 %v11321, %v11551
    %v11698 = vadd.f32 %v11322, %v11553
    %v11699 = vadd.f32 %v11323, %v11552
    %v11700 = vadd.f32 %v11324, %v11556
    %v11701 = vadd.f32 %v11325, %v11558
    %v11702 = vadd.f32 %v11326, %v11557
    %v11703 = vadd.f32 %v11327, %v11561
    %v11704 = vadd.f32 %v11328, %v11563
    %v11705 = vadd.f32 %v11329, %v11562
    %v11706 = vadd.f32 %v11330, %v11566
    %v11707 = vadd.f32 %v11331, %v11568
    %v11708 = vadd.f32 %v11332, %v11567
    %v11709 = vadd.f32 %v11333, %v11571
    %v11710 = vadd.f32 %v11334, %v11573
    %v11711 = vadd.f32 %v11335, %v11572
    %v11712 = vadd.f32 %v11336, %v11576
    %v11713 = vadd.f32 %v11337, %v11578
    %v11714 = vadd.f32 %v11338, %v11577
    %v11715 = vadd.f32 %v11339, %v11581
    %v11716 = vadd.f32 %v11340, %v11583
    %v11717 = vadd.f32 %v11341, %v11582
    %v11718 = vadd.f32 %v11342, %v11586
    %v11719 = vadd.f32 %v11343, %v11588
    %v11720 = vadd.f32 %v11344, %v11587
    %s11721 = sld [smem:[#allocation4 + $0x2]]
    %v11722 = vstv %s11721
    %v11723 = vadd.f32 %v11655, %v11722
    %v11724 = vadd.f32 %v11656, %v11722
    %v11725 = vadd.f32 %v11657, %v11722
    %v11726 = vadd.f32 %v11658, %v11722
    %v11727 = vadd.f32 %v11659, %v11722
    %v11728 = vadd.f32 %v11660, %v11722
    %v11729 = vadd.f32 %v11661, %v11722
    %v11730 = vadd.f32 %v11662, %v11722
    %v11731 = vadd.f32 %v11663, %v11722
    %v11732 = vadd.f32 %v11664, %v11722
    %v11733 = vadd.f32 %v11665, %v11722
    %v11734 = vadd.f32 %v11666, %v11722
    %v11735 = vadd.f32 %v11667, %v11722
    %v11736 = vadd.f32 %v11668, %v11722
    %v11737 = vadd.f32 %v11669, %v11722
    %v11738 = vadd.f32 %v11670, %v11722
    %v11739 = vadd.f32 %v11671, %v11722
    %v11740 = vadd.f32 %v11672, %v11722
    %v11741 = vadd.f32 %v11673, %v11722
    %v11742 = vadd.f32 %v11674, %v11722
    %v11743 = vadd.f32 %v11675, %v11722
    %v11744 = vadd.f32 %v11676, %v11722
    %v11745 = vadd.f32 %v11677, %v11722
    %v11746 = vadd.f32 %v11678, %v11722
    %v11747 = vadd.f32 %v11679, %v11722
    %v11748 = vadd.f32 %v11680, %v11722
    %v11749 = vadd.f32 %v11681, %v11722
    %v11750 = vadd.f32 %v11682, %v11722
    %v11751 = vadd.f32 %v11683, %v11722
    %v11752 = vadd.f32 %v11684, %v11722
    %v11753 = vadd.f32 %v11685, %v11722
    %v11754 = vadd.f32 %v11686, %v11722
    %v11755 = vadd.f32 %v11687, %v11722
    %v11756 = vadd.f32 %v11688, %v11722
    %v11757 = vadd.f32 %v11689, %v11722
    %v11758 = vadd.f32 %v11690, %v11722
    %v11759 = vadd.f32 %v11691, %v11722
    %v11760 = vadd.f32 %v11692, %v11722
    %v11761 = vadd.f32 %v11693, %v11722
    %v11762 = vadd.f32 %v11694, %v11722
    %v11763 = vadd.f32 %v11695, %v11722
    %v11764 = vadd.f32 %v11696, %v11722
    %v11765 = vadd.f32 %v11697, %v11722
    %v11766 = vadd.f32 %v11698, %v11722
    %v11767 = vadd.f32 %v11699, %v11722
    %v11768 = vadd.f32 %v11700, %v11722
    %v11769 = vadd.f32 %v11701, %v11722
    %v11770 = vadd.f32 %v11702, %v11722
    %v11771 = vadd.f32 %v11703, %v11722
    %v11772 = vadd.f32 %v11704, %v11722
    %v11773 = vadd.f32 %v11705, %v11722
    %v11774 = vadd.f32 %v11706, %v11722
    %v11775 = vadd.f32 %v11707, %v11722
    %v11776 = vadd.f32 %v11708, %v11722
    %v11777 = vadd.f32 %v11709, %v11722
    %v11778 = vadd.f32 %v11710, %v11722
    %v11779 = vadd.f32 %v11711, %v11722
    %v11780 = vadd.f32 %v11712, %v11722
    %v11781 = vadd.f32 %v11713, %v11722
    %v11782 = vadd.f32 %v11714, %v11722
    %v11783 = vadd.f32 %v11715, %v11722
    %v11784 = vadd.f32 %v11716, %v11722
    %v11785 = vadd.f32 %v11717, %v11722
    %v11786 = vadd.f32 %v11718, %v11722
    %v11787 = vadd.f32 %v11719, %v11722
    %v11788 = vadd.f32 %v11720, %v11722
    %v11789 = vmax.f32 %v11723, 0.0
    %v11790 = vmax.f32 %v11724, 0.0
    %v11791 = vmax.f32 %v11725, 0.0
    %v11792 = vmax.f32 %v11726, 0.0
    %v11793 = vmax.f32 %v11727, 0.0
    %v11794 = vmax.f32 %v11728, 0.0
    %v11795 = vmax.f32 %v11729, 0.0
    %v11796 = vmax.f32 %v11730, 0.0
    %v11797 = vmax.f32 %v11731, 0.0
    %v11798 = vmax.f32 %v11732, 0.0
    %v11799 = vmax.f32 %v11733, 0.0
    %v11800 = vmax.f32 %v11734, 0.0
    %v11801 = vmax.f32 %v11735, 0.0
    %v11802 = vmax.f32 %v11736, 0.0
    %v11803 = vmax.f32 %v11737, 0.0
    %v11804 = vmax.f32 %v11738, 0.0
    %v11805 = vmax.f32 %v11739, 0.0
    %v11806 = vmax.f32 %v11740, 0.0
    %v11807 = vmax.f32 %v11741, 0.0
    %v11808 = vmax.f32 %v11742, 0.0
    %v11809 = vmax.f32 %v11743, 0.0
    %v11810 = vmax.f32 %v11744, 0.0
    %v11811 = vmax.f32 %v11745, 0.0
    %v11812 = vmax.f32 %v11746, 0.0
    %v11813 = vmax.f32 %v11747, 0.0
    %v11814 = vmax.f32 %v11748, 0.0
    %v11815 = vmax.f32 %v11749, 0.0
    %v11816 = vmax.f32 %v11750, 0.0
    %v11817 = vmax.f32 %v11751, 0.0
    %v11818 = vmax.f32 %v11752, 0.0
    %v11819 = vmax.f32 %v11753, 0.0
    %v11820 = vmax.f32 %v11754, 0.0
    %v11821 = vmax.f32 %v11755, 0.0
    %v11822 = vmax.f32 %v11756, 0.0
    %v11823 = vmax.f32 %v11757, 0.0
    %v11824 = vmax.f32 %v11758, 0.0
    %v11825 = vmax.f32 %v11759, 0.0
    %v11826 = vmax.f32 %v11760, 0.0
    %v11827 = vmax.f32 %v11761, 0.0
    %v11828 = vmax.f32 %v11762, 0.0
    %v11829 = vmax.f32 %v11763, 0.0
    %v11830 = vmax.f32 %v11764, 0.0
    %v11831 = vmax.f32 %v11765, 0.0
    %v11832 = vmax.f32 %v11766, 0.0
    %v11833 = vmax.f32 %v11767, 0.0
    %v11834 = vmax.f32 %v11768, 0.0
    %v11835 = vmax.f32 %v11769, 0.0
    %v11836 = vmax.f32 %v11770, 0.0
    %v11837 = vmax.f32 %v11771, 0.0
    %v11838 = vmax.f32 %v11772, 0.0
    %v11839 = vmax.f32 %v11773, 0.0
    %v11840 = vmax.f32 %v11774, 0.0
    %v11841 = vmax.f32 %v11775, 0.0
    %v11842 = vmax.f32 %v11776, 0.0
    %v11843 = vmax.f32 %v11777, 0.0
    %v11844 = vmax.f32 %v11778, 0.0
    %v11845 = vmax.f32 %v11779, 0.0
    %v11846 = vmax.f32 %v11780, 0.0
    %v11847 = vmax.f32 %v11781, 0.0
    %v11848 = vmax.f32 %v11782, 0.0
    %v11849 = vmax.f32 %v11783, 0.0
    %v11850 = vmax.f32 %v11784, 0.0
    %v11851 = vmax.f32 %v11785, 0.0
    %v11852 = vmax.f32 %v11786, 0.0
    %v11853 = vmax.f32 %v11787, 0.0
    %v11854 = vmax.f32 %v11788, 0.0
    %v11855 = vadd.f32 %v11789, %v11792
    %v11856 = vadd.f32 %v11855, %v11795
    %v11857 = vadd.f32 %v11856, %v11798
    %v11858 = vadd.f32 %v11857, %v11801
    %v11859 = vadd.f32 %v11858, %v11804
    %v11860 = vadd.f32 %v11859, %v11807
    %v11861 = vadd.f32 %v11860, %v11810
    %v11862 = vadd.f32 %v11861, %v11813
    %v11863 = vadd.f32 %v11862, %v11816
    %v11864 = vadd.f32 %v11863, %v11819
    %v11865 = vadd.f32 %v11864, %v11822
    %v11866 = vadd.f32 %v11865, %v11825
    %v11867 = vadd.f32 %v11866, %v11828
    %v11868 = vadd.f32 %v11867, %v11831
    %v11869 = vadd.f32 %v11868, %v11834
    %v11870 = vadd.f32 %v11869, %v11837
    %v11871 = vadd.f32 %v11870, %v11840
    %v11872 = vadd.f32 %v11871, %v11843
    %v11873 = vadd.f32 %v11872, %v11846
    %v11874 = vadd.f32 %v11873, %v11849
    %v11875 = vadd.f32 %v11874, %v11852
    %v11876 = vadd.f32 %v11790, %v11793
    %v11877 = vadd.f32 %v11876, %v11796
    %v11878 = vadd.f32 %v11877, %v11799
    %v11879 = vadd.f32 %v11878, %v11802
    %v11880 = vadd.f32 %v11879, %v11805
    %v11881 = vadd.f32 %v11880, %v11808
    %v11882 = vadd.f32 %v11881, %v11811
    %v11883 = vadd.f32 %v11882, %v11814
    %v11884 = vadd.f32 %v11883, %v11817
    %v11885 = vadd.f32 %v11884, %v11820
    %v11886 = vadd.f32 %v11885, %v11823
    %v11887 = vadd.f32 %v11886, %v11826
    %v11888 = vadd.f32 %v11887, %v11829
    %v11889 = vadd.f32 %v11888, %v11832
    %v11890 = vadd.f32 %v11889, %v11835
    %v11891 = vadd.f32 %v11890, %v11838
    %v11892 = vadd.f32 %v11891, %v11841
    %v11893 = vadd.f32 %v11892, %v11844
    %v11894 = vadd.f32 %v11893, %v11847
    %v11895 = vadd.f32 %v11894, %v11850
    %v11896 = vadd.f32 %v11895, %v11853
    %v11897 = vsel %vm2813, %v11791, 0.0
    %v11898 = vsel %vm2813, %v11794, 0.0
    %v11899 = vadd.f32 %v11897, %v11898
    %v11900 = vsel %vm2813, %v11797, 0.0
    %v11901 = vadd.f32 %v11899, %v11900
    %v11902 = vsel %vm2813, %v11800, 0.0
    %v11903 = vadd.f32 %v11901, %v11902
    %v11904 = vsel %vm2813, %v11803, 0.0
    %v11905 = vadd.f32 %v11903, %v11904
    %v11906 = vsel %vm2813, %v11806, 0.0
    %v11907 = vadd.f32 %v11905, %v11906
    %v11908 = vsel %vm2813, %v11809, 0.0
    %v11909 = vadd.f32 %v11907, %v11908
    %v11910 = vsel %vm2813, %v11812, 0.0
    %v11911 = vadd.f32 %v11909, %v11910
    %v11912 = vsel %vm2813, %v11815, 0.0
    %v11913 = vadd.f32 %v11911, %v11912
    %v11914 = vsel %vm2813, %v11818, 0.0
    %v11915 = vadd.f32 %v11913, %v11914
    %v11916 = vsel %vm2813, %v11821, 0.0
    %v11917 = vadd.f32 %v11915, %v11916
    %v11918 = vsel %vm2813, %v11824, 0.0
    %v11919 = vadd.f32 %v11917, %v11918
    %v11920 = vsel %vm2813, %v11827, 0.0
    %v11921 = vadd.f32 %v11919, %v11920
    %v11922 = vsel %vm2813, %v11830, 0.0
    %v11923 = vadd.f32 %v11921, %v11922
    %v11924 = vsel %vm2813, %v11833, 0.0
    %v11925 = vadd.f32 %v11923, %v11924
    %v11926 = vsel %vm2813, %v11836, 0.0
    %v11927 = vadd.f32 %v11925, %v11926
    %v11928 = vsel %vm2813, %v11839, 0.0
    %v11929 = vadd.f32 %v11927, %v11928
    %v11930 = vsel %vm2813, %v11842, 0.0
    %v11931 = vadd.f32 %v11929, %v11930
    %v11932 = vsel %vm2813, %v11845, 0.0
    %v11933 = vadd.f32 %v11931, %v11932
    %v11934 = vsel %vm2813, %v11848, 0.0
    %v11935 = vadd.f32 %v11933, %v11934
    %v11936 = vsel %vm2813, %v11851, 0.0
    %v11937 = vadd.f32 %v11935, %v11936
    %v11938 = vsel %vm2813, %v11854, 0.0
    %v11939 = vadd.f32 %v11937, %v11938
    %v11940 = vadd.f32 %v11875, %v11896
    %v11941 = vsel %vm2813, %v11939, 0.0
    %v11942 = vadd.f32 %v11940, %v11941
    %v11943 = vrot.slane %v11942, 4
    %v11944 = vadd.f32 %v11942, %v11943
    %v11945 = vrot.slane %v11944, 2
    %v11946 = vadd.f32 %v11944, %v11945
    %v11947 = vrot.slane %v11946, 1
    %v11948 = vadd.f32 %v11946, %v11947
    %v11949 = vmul.f32 %v11789, %v11789
    %v11950 = vmul.f32 %v11790, %v11790
    %v11951 = vmul.f32 %v11791, %v11791
    %v11952 = vmul.f32 %v11792, %v11792
    %v11953 = vmul.f32 %v11793, %v11793
    %v11954 = vmul.f32 %v11794, %v11794
    %v11955 = vmul.f32 %v11795, %v11795
    %v11956 = vmul.f32 %v11796, %v11796
    %v11957 = vmul.f32 %v11797, %v11797
    %v11958 = vmul.f32 %v11798, %v11798
    %v11959 = vmul.f32 %v11799, %v11799
    %v11960 = vmul.f32 %v11800, %v11800
    %v11961 = vmul.f32 %v11801, %v11801
    %v11962 = vmul.f32 %v11802, %v11802
    %v11963 = vmul.f32 %v11803, %v11803
    %v11964 = vmul.f32 %v11804, %v11804
    %v11965 = vmul.f32 %v11805, %v11805
    %v11966 = vmul.f32 %v11806, %v11806
    %v11967 = vmul.f32 %v11807, %v11807
    %v11968 = vmul.f32 %v11808, %v11808
    %v11969 = vmul.f32 %v11809, %v11809
    %v11970 = vmul.f32 %v11810, %v11810
    %v11971 = vmul.f32 %v11811, %v11811
    %v11972 = vmul.f32 %v11812, %v11812
    %v11973 = vmul.f32 %v11813, %v11813
    %v11974 = vmul.f32 %v11814, %v11814
    %v11975 = vmul.f32 %v11815, %v11815
    %v11976 = vmul.f32 %v11816, %v11816
    %v11977 = vmul.f32 %v11817, %v11817
    %v11978 = vmul.f32 %v11818, %v11818
    %v11979 = vmul.f32 %v11819, %v11819
    %v11980 = vmul.f32 %v11820, %v11820
    %v11981 = vmul.f32 %v11821, %v11821
    %v11982 = vmul.f32 %v11822, %v11822
    %v11983 = vmul.f32 %v11823, %v11823
    %v11984 = vmul.f32 %v11824, %v11824
    %v11985 = vmul.f32 %v11825, %v11825
    %v11986 = vmul.f32 %v11826, %v11826
    %v11987 = vmul.f32 %v11827, %v11827
    %v11988 = vmul.f32 %v11828, %v11828
    %v11989 = vmul.f32 %v11829, %v11829
    %v11990 = vmul.f32 %v11830, %v11830
    %v11991 = vmul.f32 %v11831, %v11831
    %v11992 = vmul.f32 %v11832, %v11832
    %v11993 = vmul.f32 %v11833, %v11833
    %v11994 = vmul.f32 %v11834, %v11834
    %v11995 = vmul.f32 %v11835, %v11835
    %v11996 = vmul.f32 %v11836, %v11836
    %v11997 = vmul.f32 %v11837, %v11837
    %v11998 = vmul.f32 %v11838, %v11838
    %v11999 = vmul.f32 %v11839, %v11839
    %v12000 = vmul.f32 %v11840, %v11840
    %v12001 = vmul.f32 %v11841, %v11841
    %v12002 = vmul.f32 %v11842, %v11842
    %v12003 = vmul.f32 %v11843, %v11843
    %v12004 = vmul.f32 %v11844, %v11844
    %v12005 = vmul.f32 %v11845, %v11845
    %v12006 = vmul.f32 %v11846, %v11846
    %v12007 = vmul.f32 %v11847, %v11847
    %v12008 = vmul.f32 %v11848, %v11848
    %v12009 = vmul.f32 %v11849, %v11849
    %v12010 = vmul.f32 %v11850, %v11850
    %v12011 = vmul.f32 %v11851, %v11851
    %v12012 = vmul.f32 %v11852, %v11852
    %v12013 = vmul.f32 %v11853, %v11853
    %v12014 = vmul.f32 %v11854, %v11854
    %v12015 = vadd.f32 %v11949, %v11952
    %v12016 = vadd.f32 %v12015, %v11955
    %v12017 = vadd.f32 %v12016, %v11958
    %v12018 = vadd.f32 %v12017, %v11961
    %v12019 = vadd.f32 %v12018, %v11964
    %v12020 = vadd.f32 %v12019, %v11967
    %v12021 = vadd.f32 %v12020, %v11970
    %v12022 = vadd.f32 %v12021, %v11973
    %v12023 = vadd.f32 %v12022, %v11976
    %v12024 = vadd.f32 %v12023, %v11979
    %v12025 = vadd.f32 %v12024, %v11982
    %v12026 = vadd.f32 %v12025, %v11985
    %v12027 = vadd.f32 %v12026, %v11988
    %v12028 = vadd.f32 %v12027, %v11991
    %v12029 = vadd.f32 %v12028, %v11994
    %v12030 = vadd.f32 %v12029, %v11997
    %v12031 = vadd.f32 %v12030, %v12000
    %v12032 = vadd.f32 %v12031, %v12003
    %v12033 = vadd.f32 %v12032, %v12006
    %v12034 = vadd.f32 %v12033, %v12009
    %v12035 = vadd.f32 %v12034, %v12012
    %v12036 = vadd.f32 %v11950, %v11953
    %v12037 = vadd.f32 %v12036, %v11956
    %v12038 = vadd.f32 %v12037, %v11959
    %v12039 = vadd.f32 %v12038, %v11962
    %v12040 = vadd.f32 %v12039, %v11965
    %v12041 = vadd.f32 %v12040, %v11968
    %v12042 = vadd.f32 %v12041, %v11971
    %v12043 = vadd.f32 %v12042, %v11974
    %v12044 = vadd.f32 %v12043, %v11977
    %v12045 = vadd.f32 %v12044, %v11980
    %v12046 = vadd.f32 %v12045, %v11983
    %v12047 = vadd.f32 %v12046, %v11986
    %v12048 = vadd.f32 %v12047, %v11989
    %v12049 = vadd.f32 %v12048, %v11992
    %v12050 = vadd.f32 %v12049, %v11995
    %v12051 = vadd.f32 %v12050, %v11998
    %v12052 = vadd.f32 %v12051, %v12001
    %v12053 = vadd.f32 %v12052, %v12004
    %v12054 = vadd.f32 %v12053, %v12007
    %v12055 = vadd.f32 %v12054, %v12010
    %v12056 = vadd.f32 %v12055, %v12013
    %v12057 = vsel %vm2813, %v11951, 0.0
    %v12058 = vsel %vm2813, %v11954, 0.0
    %v12059 = vadd.f32 %v12057, %v12058
    %v12060 = vsel %vm2813, %v11957, 0.0
    %v12061 = vadd.f32 %v12059, %v12060
    %v12062 = vsel %vm2813, %v11960, 0.0
    %v12063 = vadd.f32 %v12061, %v12062
    %v12064 = vsel %vm2813, %v11963, 0.0
    %v12065 = vadd.f32 %v12063, %v12064
    %v12066 = vsel %vm2813, %v11966, 0.0
    %v12067 = vadd.f32 %v12065, %v12066
    %v12068 = vsel %vm2813, %v11969, 0.0
    %v12069 = vadd.f32 %v12067, %v12068
    %v12070 = vsel %vm2813, %v11972, 0.0
    %v12071 = vadd.f32 %v12069, %v12070
    %v12072 = vsel %vm2813, %v11975, 0.0
    %v12073 = vadd.f32 %v12071, %v12072
    %v12074 = vsel %vm2813, %v11978, 0.0
    %v12075 = vadd.f32 %v12073, %v12074
    %v12076 = vsel %vm2813, %v11981, 0.0
    %v12077 = vadd.f32 %v12075, %v12076
    %v12078 = vsel %vm2813, %v11984, 0.0
    %v12079 = vadd.f32 %v12077, %v12078
    %v12080 = vsel %vm2813, %v11987, 0.0
    %v12081 = vadd.f32 %v12079, %v12080
    %v12082 = vsel %vm2813, %v11990, 0.0
    %v12083 = vadd.f32 %v12081, %v12082
    %v12084 = vsel %vm2813, %v11993, 0.0
    %v12085 = vadd.f32 %v12083, %v12084
    %v12086 = vsel %vm2813, %v11996, 0.0
    %v12087 = vadd.f32 %v12085, %v12086
    %v12088 = vsel %vm2813, %v11999, 0.0
    %v12089 = vadd.f32 %v12087, %v12088
    %v12090 = vsel %vm2813, %v12002, 0.0
    %v12091 = vadd.f32 %v12089, %v12090
    %v12092 = vsel %vm2813, %v12005, 0.0
    %v12093 = vadd.f32 %v12091, %v12092
    %v12094 = vsel %vm2813, %v12008, 0.0
    %v12095 = vadd.f32 %v12093, %v12094
    %v12096 = vsel %vm2813, %v12011, 0.0
    %v12097 = vadd.f32 %v12095, %v12096
    %v12098 = vsel %vm2813, %v12014, 0.0
    %v12099 = vadd.f32 %v12097, %v12098
    %v12100 = vadd.f32 %v12035, %v12056
    %v12101 = vsel %vm2813, %v12099, 0.0
    %v12102 = vadd.f32 %v12100, %v12101
    %v12103 = vrot.slane %v12102, 4
    %v12104 = vadd.f32 %v12102, %v12103
    %v12105 = vrot.slane %v12104, 2
    %v12106 = vadd.f32 %v12104, %v12105
    %v12107 = vrot.slane %v12106, 1
    %v12108 = vadd.f32 %v12106, %v12107
    %v12109 = vmul.f32 %v11948, 0.0020661156
    %v12110 = vmul.f32 %v12108, 0.0020661156
    %v12111 = vmul.f32 %v12109, %v12109
    %v12112 = vsub.f32 %v12110, %v12111
    %v12113 = vsub.f32 %v11789, %v12109
    %v12114 = vsub.f32 %v11790, %v12109
    %v12115 = vsub.f32 %v11791, %v12109
    %v12116 = vsub.f32 %v11792, %v12109
    %v12117 = vsub.f32 %v11793, %v12109
    %v12118 = vsub.f32 %v11794, %v12109
    %v12119 = vsub.f32 %v11795, %v12109
    %v12120 = vsub.f32 %v11796, %v12109
    %v12121 = vsub.f32 %v11797, %v12109
    %v12122 = vsub.f32 %v11798, %v12109
    %v12123 = vsub.f32 %v11799, %v12109
    %v12124 = vsub.f32 %v11800, %v12109
    %v12125 = vsub.f32 %v11801, %v12109
    %v12126 = vsub.f32 %v11802, %v12109
    %v12127 = vsub.f32 %v11803, %v12109
    %v12128 = vsub.f32 %v11804, %v12109
    %v12129 = vsub.f32 %v11805, %v12109
    %v12130 = vsub.f32 %v11806, %v12109
    %v12131 = vsub.f32 %v11807, %v12109
    %v12132 = vsub.f32 %v11808, %v12109
    %v12133 = vsub.f32 %v11809, %v12109
    %v12134 = vsub.f32 %v11810, %v12109
    %v12135 = vsub.f32 %v11811, %v12109
    %v12136 = vsub.f32 %v11812, %v12109
    %v12137 = vsub.f32 %v11813, %v12109
    %v12138 = vsub.f32 %v11814, %v12109
    %v12139 = vsub.f32 %v11815, %v12109
    %v12140 = vsub.f32 %v11816, %v12109
    %v12141 = vsub.f32 %v11817, %v12109
    %v12142 = vsub.f32 %v11818, %v12109
    %v12143 = vsub.f32 %v11819, %v12109
    %v12144 = vsub.f32 %v11820, %v12109
    %v12145 = vsub.f32 %v11821, %v12109
    %v12146 = vsub.f32 %v11822, %v12109
    %v12147 = vsub.f32 %v11823, %v12109
    %v12148 = vsub.f32 %v11824, %v12109
    %v12149 = vsub.f32 %v11825, %v12109
    %v12150 = vsub.f32 %v11826, %v12109
    %v12151 = vsub.f32 %v11827, %v12109
    %v12152 = vsub.f32 %v11828, %v12109
    %v12153 = vsub.f32 %v11829, %v12109
    %v12154 = vsub.f32 %v11830, %v12109
    %v12155 = vsub.f32 %v11831, %v12109
    %v12156 = vsub.f32 %v11832, %v12109
    %v12157 = vsub.f32 %v11833, %v12109
    %v12158 = vsub.f32 %v11834, %v12109
    %v12159 = vsub.f32 %v11835, %v12109
    %v12160 = vsub.f32 %v11836, %v12109
    %v12161 = vsub.f32 %v11837, %v12109
    %v12162 = vsub.f32 %v11838, %v12109
    %v12163 = vsub.f32 %v11839, %v12109
    %v12164 = vsub.f32 %v11840, %v12109
    %v12165 = vsub.f32 %v11841, %v12109
    %v12166 = vsub.f32 %v11842, %v12109
    %v12167 = vsub.f32 %v11843, %v12109
    %v12168 = vsub.f32 %v11844, %v12109
    %v12169 = vsub.f32 %v11845, %v12109
    %v12170 = vsub.f32 %v11846, %v12109
    %v12171 = vsub.f32 %v11847, %v12109
    %v12172 = vsub.f32 %v11848, %v12109
    %v12173 = vsub.f32 %v11849, %v12109
    %v12174 = vsub.f32 %v11850, %v12109
    %v12175 = vsub.f32 %v11851, %v12109
    %v12176 = vsub.f32 %v11852, %v12109
    %v12177 = vsub.f32 %v11853, %v12109
    %v12178 = vsub.f32 %v11854, %v12109
    %v12179 = vadd.f32 %v12112, 1e-05
    %v12180 = vrsqrt.pop %v12179
    %v12181 = vmul.f32 %v12113, %v12180
    %v12182 = vmul.f32 %v12114, %v12180
    %v12183 = vmul.f32 %v12115, %v12180
    %v12184 = vmul.f32 %v12116, %v12180
    %v12185 = vmul.f32 %v12117, %v12180
    %v12186 = vmul.f32 %v12118, %v12180
    %v12187 = vmul.f32 %v12119, %v12180
    %v12188 = vmul.f32 %v12120, %v12180
    %v12189 = vmul.f32 %v12121, %v12180
    %v12190 = vmul.f32 %v12122, %v12180
    %v12191 = vmul.f32 %v12123, %v12180
    %v12192 = vmul.f32 %v12124, %v12180
    %v12193 = vmul.f32 %v12125, %v12180
    %v12194 = vmul.f32 %v12126, %v12180
    %v12195 = vmul.f32 %v12127, %v12180
    %v12196 = vmul.f32 %v12128, %v12180
    %v12197 = vmul.f32 %v12129, %v12180
    %v12198 = vmul.f32 %v12130, %v12180
    %v12199 = vmul.f32 %v12131, %v12180
    %v12200 = vmul.f32 %v12132, %v12180
    %v12201 = vmul.f32 %v12133, %v12180
    %v12202 = vmul.f32 %v12134, %v12180
    %v12203 = vmul.f32 %v12135, %v12180
    %v12204 = vmul.f32 %v12136, %v12180
    %v12205 = vmul.f32 %v12137, %v12180
    %v12206 = vmul.f32 %v12138, %v12180
    %v12207 = vmul.f32 %v12139, %v12180
    %v12208 = vmul.f32 %v12140, %v12180
    %v12209 = vmul.f32 %v12141, %v12180
    %v12210 = vmul.f32 %v12142, %v12180
    %v12211 = vmul.f32 %v12143, %v12180
    %v12212 = vmul.f32 %v12144, %v12180
    %v12213 = vmul.f32 %v12145, %v12180
    %v12214 = vmul.f32 %v12146, %v12180
    %v12215 = vmul.f32 %v12147, %v12180
    %v12216 = vmul.f32 %v12148, %v12180
    %v12217 = vmul.f32 %v12149, %v12180
    %v12218 = vmul.f32 %v12150, %v12180
    %v12219 = vmul.f32 %v12151, %v12180
    %v12220 = vmul.f32 %v12152, %v12180
    %v12221 = vmul.f32 %v12153, %v12180
    %v12222 = vmul.f32 %v12154, %v12180
    %v12223 = vmul.f32 %v12155, %v12180
    %v12224 = vmul.f32 %v12156, %v12180
    %v12225 = vmul.f32 %v12157, %v12180
    %v12226 = vmul.f32 %v12158, %v12180
    %v12227 = vmul.f32 %v12159, %v12180
    %v12228 = vmul.f32 %v12160, %v12180
    %v12229 = vmul.f32 %v12161, %v12180
    %v12230 = vmul.f32 %v12162, %v12180
    %v12231 = vmul.f32 %v12163, %v12180
    %v12232 = vmul.f32 %v12164, %v12180
    %v12233 = vmul.f32 %v12165, %v12180
    %v12234 = vmul.f32 %v12166, %v12180
    %v12235 = vmul.f32 %v12167, %v12180
    %v12236 = vmul.f32 %v12168, %v12180
    %v12237 = vmul.f32 %v12169, %v12180
    %v12238 = vmul.f32 %v12170, %v12180
    %v12239 = vmul.f32 %v12171, %v12180
    %v12240 = vmul.f32 %v12172, %v12180
    %v12241 = vmul.f32 %v12173, %v12180
    %v12242 = vmul.f32 %v12174, %v12180
    %v12243 = vmul.f32 %v12175, %v12180
    %v12244 = vmul.f32 %v12176, %v12180
    %v12245 = vmul.f32 %v12177, %v12180
    %v12246 = vmul.f32 %v12178, %v12180
    %v12247 = vmax.f32 %v12181, %v12184
    %v12248 = vmax.f32 %v12182, %v12185
    %v12249 = vmax.f32 %v12183, %v12186
    %v12250 = vmax.f32 %v12187, %v12190
    %v12251 = vmax.f32 %v12188, %v12191
    %v12252 = vmax.f32 %v12189, %v12192
    %v12253 = vmax.f32 %v12193, %v12196
    %v12254 = vmax.f32 %v12194, %v12197
    %v12255 = vmax.f32 %v12195, %v12198
    %v12256 = vmax.f32 %v12199, %v12202
    %v12257 = vmax.f32 %v12200, %v12203
    %v12258 = vmax.f32 %v12201, %v12204
    %v12259 = vmax.f32 %v12205, %v12208
    %v12260 = vmax.f32 %v12206, %v12209
    %v12261 = vmax.f32 %v12207, %v12210
    %v12262 = vmax.f32 %v12211, %v12214
    %v12263 = vmax.f32 %v12212, %v12215
    %v12264 = vmax.f32 %v12213, %v12216
    %v12265 = vmax.f32 %v12217, %v12220
    %v12266 = vmax.f32 %v12218, %v12221
    %v12267 = vmax.f32 %v12219, %v12222
    %v12268 = vmax.f32 %v12223, %v12226
    %v12269 = vmax.f32 %v12224, %v12227
    %v12270 = vmax.f32 %v12225, %v12228
    %v12271 = vmax.f32 %v12229, %v12232
    %v12272 = vmax.f32 %v12230, %v12233
    %v12273 = vmax.f32 %v12231, %v12234
    %v12274 = vmax.f32 %v12235, %v12238
    %v12275 = vmax.f32 %v12236, %v12239
    %v12276 = vmax.f32 %v12237, %v12240
    %v12277 = vmax.f32 %v12241, %v12244
    %v12278 = vmax.f32 %v12242, %v12245
    %v12279 = vmax.f32 %v12243, %v12246
    %v12313 = vrot.slane %v12247, 1
    %v12314 = vrot.slane %v12248, 1
    %v12315 = vsel %vm1012, %v12313, %v12314
    %v12316 = vrot.slane %v12249, 1
    %v12317 = vsel %vm1012, %v12314, %v12316
    %v12318 = vrot.slane %v12250, 1
    %v12319 = vrot.slane %v12251, 1
    %v12320 = vsel %vm1012, %v12318, %v12319
    %v12321 = vrot.slane %v12252, 1
    %v12322 = vsel %vm1012, %v12319, %v12321
    %v12323 = vrot.slane %v12253, 1
    %v12324 = vrot.slane %v12254, 1
    %v12325 = vsel %vm1012, %v12323, %v12324
    %v12326 = vrot.slane %v12255, 1
    %v12327 = vsel %vm1012, %v12324, %v12326
    %v12328 = vrot.slane %v12256, 1
    %v12329 = vrot.slane %v12257, 1
    %v12330 = vsel %vm1012, %v12328, %v12329
    %v12331 = vrot.slane %v12258, 1
    %v12332 = vsel %vm1012, %v12329, %v12331
    %v12333 = vrot.slane %v12259, 1
    %v12334 = vrot.slane %v12260, 1
    %v12335 = vsel %vm1012, %v12333, %v12334
    %v12336 = vrot.slane %v12261, 1
    %v12337 = vsel %vm1012, %v12334, %v12336
    %v12338 = vrot.slane %v12262, 1
    %v12339 = vrot.slane %v12263, 1
    %v12340 = vsel %vm1012, %v12338, %v12339
    %v12341 = vrot.slane %v12264, 1
    %v12342 = vsel %vm1012, %v12339, %v12341
    %v12343 = vrot.slane %v12265, 1
    %v12344 = vrot.slane %v12266, 1
    %v12345 = vsel %vm1012, %v12343, %v12344
    %v12346 = vrot.slane %v12267, 1
    %v12347 = vsel %vm1012, %v12344, %v12346
    %v12348 = vrot.slane %v12268, 1
    %v12349 = vrot.slane %v12269, 1
    %v12350 = vsel %vm1012, %v12348, %v12349
    %v12351 = vrot.slane %v12270, 1
    %v12352 = vsel %vm1012, %v12349, %v12351
    %v12353 = vrot.slane %v12271, 1
    %v12354 = vrot.slane %v12272, 1
    %v12355 = vsel %vm1012, %v12353, %v12354
    %v12356 = vrot.slane %v12273, 1
    %v12357 = vsel %vm1012, %v12354, %v12356
    %v12358 = vrot.slane %v12274, 1
    %v12359 = vrot.slane %v12275, 1
    %v12360 = vsel %vm1012, %v12358, %v12359
    %v12361 = vrot.slane %v12276, 1
    %v12362 = vsel %vm1012, %v12359, %v12361
    %v12363 = vrot.slane %v12277, 1
    %v12364 = vrot.slane %v12278, 1
    %v12365 = vsel %vm1012, %v12363, %v12364
    %v12366 = vrot.slane %v12279, 1
    %v12367 = vsel %vm1012, %v12364, %v12366
    %v12401 = vmax.f32 %v12247, %v12315
    %v12402 = vmax.f32 %v12248, %v12317
    %v12403 = vmax.f32 %v12249, %v12316
    %v12404 = vmax.f32 %v12250, %v12320
    %v12405 = vmax.f32 %v12251, %v12322
    %v12406 = vmax.f32 %v12252, %v12321
    %v12407 = vmax.f32 %v12253, %v12325
    %v12408 = vmax.f32 %v12254, %v12327
    %v12409 = vmax.f32 %v12255, %v12326
    %v12410 = vmax.f32 %v12256, %v12330
    %v12411 = vmax.f32 %v12257, %v12332
    %v12412 = vmax.f32 %v12258, %v12331
    %v12413 = vmax.f32 %v12259, %v12335
    %v12414 = vmax.f32 %v12260, %v12337
    %v12415 = vmax.f32 %v12261, %v12336
    %v12416 = vmax.f32 %v12262, %v12340
    %v12417 = vmax.f32 %v12263, %v12342
    %v12418 = vmax.f32 %v12264, %v12341
    %v12419 = vmax.f32 %v12265, %v12345
    %v12420 = vmax.f32 %v12266, %v12347
    %v12421 = vmax.f32 %v12267, %v12346
    %v12422 = vmax.f32 %v12268, %v12350
    %v12423 = vmax.f32 %v12269, %v12352
    %v12424 = vmax.f32 %v12270, %v12351
    %v12425 = vmax.f32 %v12271, %v12355
    %v12426 = vmax.f32 %v12272, %v12357
    %v12427 = vmax.f32 %v12273, %v12356
    %v12428 = vmax.f32 %v12274, %v12360
    %v12429 = vmax.f32 %v12275, %v12362
    %v12430 = vmax.f32 %v12276, %v12361
    %v12431 = vmax.f32 %v12277, %v12365
    %v12432 = vmax.f32 %v12278, %v12367
    %v12433 = vmax.f32 %v12279, %v12366
    %vm12434 = vcmask 1044480
    %v12435 = vsel %vm12434, %v12403, 0.0
    %v12436 = vsel %vm12434, %v12406, 0.0
    %v12437 = vsel %vm12434, %v12409, 0.0
    %v12438 = vsel %vm12434, %v12412, 0.0
    %v12439 = vsel %vm12434, %v12415, 0.0
    %v12440 = vsel %vm12434, %v12418, 0.0
    %v12441 = vsel %vm12434, %v12421, 0.0
    %v12442 = vsel %vm12434, %v12424, 0.0
    %v12443 = vsel %vm12434, %v12427, 0.0
    %v12444 = vsel %vm12434, %v12430, 0.0
    %v12445 = vsel %vm12434, %v12433, 0.0
    %v12446 = vpack.c.bf16 %v12402, %v12401
    %v12447 = vpack.c.bf16 %v12404, %v12435
    %v12448 = vpack.c.bf16 %v12436, %v12405
    %v12449 = vpack.c.bf16 %v12408, %v12407
    %v12450 = vpack.c.bf16 %v12410, %v12437
    %v12451 = vpack.c.bf16 %v12438, %v12411
    %v12452 = vpack.c.bf16 %v12414, %v12413
    %v12453 = vpack.c.bf16 %v12416, %v12439
    %v12454 = vpack.c.bf16 %v12440, %v12417
    %v12455 = vpack.c.bf16 %v12420, %v12419
    %v12456 = vpack.c.bf16 %v12422, %v12441
    %v12457 = vpack.c.bf16 %v12442, %v12423
    %v12458 = vpack.c.bf16 %v12426, %v12425
    %v12459 = vpack.c.bf16 %v12428, %v12443
    %v12460 = vpack.c.bf16 %v12444, %v12429
    %v12461 = vpack.c.bf16 %v12432, %v12431
    %v12462 = vpack.c.bf16 %v12445, %v12445
    %v12463 = vld [vmem:[%s3] sm:$0xff]
    %v12464 = vld [vmem:[%s3 + $0x8] sm:$0xf]
    %v12465 = vld [vmem:[%s3 + $0xc] sm:$0xff]
    %v12466 = vld [vmem:[%s3 + $0x14] sm:$0xf]
    %v12467 = vld [vmem:[%s3 + $0x18] sm:$0xff]
    %v12468 = vld [vmem:[%s3 + $0x20] sm:$0xf]
    %v12469 = vld [vmem:[%s3 + $0x24] sm:$0xff]
    %v12470 = vld [vmem:[%s3 + $0x2c] sm:$0xf]
    %v12471 = vld [vmem:[%s3 + $0x30] sm:$0xff]
    %v12472 = vld [vmem:[%s3 + $0x38] sm:$0xf]
    %v12473 = vld [vmem:[%s3 + $0x3c] sm:$0xff]
    %v12474 = vld [vmem:[%s3 + $0x44] sm:$0xf]
    %v12475 = vld [vmem:[%s3 + $0x48] sm:$0xff]
    %v12476 = vld [vmem:[%s3 + $0x50] sm:$0xf]
    %v12477 = vld [vmem:[%s3 + $0x54] sm:$0xff]
    %v12478 = vld [vmem:[%s3 + $0x5c] sm:$0xf]
    %v12479 = vld [vmem:[%s3 + $0x60] sm:$0xff]
    %v12480 = vld [vmem:[%s3 + $0x68] sm:$0xf]
    %v12481 = vld [vmem:[%s3 + $0x6c] sm:$0xff]
    %v12482 = vld [vmem:[%s3 + $0x74] sm:$0xf]
    %v12483 = vld [vmem:[%s3 + $0x78] sm:$0xff]
    %v12484 = vld [vmem:[%s3 + $0x80] sm:$0xf]
    %v12485 = vld [vmem:[%s3 + $0x84] sm:$0xff]
    %v12486 = vld [vmem:[%s3 + $0x8c] sm:$0xf]
    %v12487 = vld [vmem:[%s3 + $0x90] sm:$0xff]
    %v12488 = vld [vmem:[%s3 + $0x98] sm:$0xf]
    %v12489 = vld [vmem:[%s3 + $0x9c] sm:$0xff]
    %v12490 = vld [vmem:[%s3 + $0xa4] sm:$0xf]
    %v12491 = vld [vmem:[%s3 + $0xa8] sm:$0xff]
    %v12492 = vld [vmem:[%s3 + $0xb0] sm:$0xf]
    %v12493 = vld [vmem:[%s3 + $0xb4] sm:$0xff]
    %v12494 = vld [vmem:[%s3 + $0xbc] sm:$0xf]
    %v12495 = vld [vmem:[%s3 + $0xc0] sm:$0xff]
    %v12496 = vld [vmem:[%s3 + $0xc8] sm:$0xf]
    %v12497 = vld [vmem:[%s3 + $0xcc] sm:$0xff]
    %v12498 = vld [vmem:[%s3 + $0xd4] sm:$0xf]
    %v12499 = vld [vmem:[%s3 + $0xd8] sm:$0xff]
    %v12500 = vld [vmem:[%s3 + $0xe0] sm:$0xf]
    %v12501 = vld [vmem:[%s3 + $0xe4] sm:$0xff]
    %v12502 = vld [vmem:[%s3 + $0xec] sm:$0xf]
    %v12503 = vld [vmem:[%s3 + $0xf0] sm:$0xff]
    %v12504 = vld [vmem:[%s3 + $0xf8] sm:$0xf]
    %v12505 = vld [vmem:[%s3 + $0xfc] sm:$0xff]
    %v12506 = vld [vmem:[%s3 + $0x104] sm:$0xf]
    %v12507 = vld [vmem:[%s3 + $0x108] sm:$0xff]
    %v12508 = vld [vmem:[%s3 + $0x110] sm:$0xf]
    %v12509 = vld [vmem:[%s3 + $0x114] sm:$0xff]
    %v12510 = vld [vmem:[%s3 + $0x11c] sm:$0xf]
    %v12511 = vld [vmem:[%s3 + $0x120] sm:$0xff]
    %v12512 = vld [vmem:[%s3 + $0x128] sm:$0xf]
    %v12513 = vld [vmem:[%s3 + $0x12c] sm:$0xff]
    %v12514 = vld [vmem:[%s3 + $0x134] sm:$0xf]
    %v12515 = vld [vmem:[%s3 + $0x138] sm:$0xff]
    %v12516 = vld [vmem:[%s3 + $0x140] sm:$0xf]
    %v12517 = vld [vmem:[%s3 + $0x144] sm:$0xff]
    %v12518 = vld [vmem:[%s3 + $0x14c] sm:$0xf]
    %v12519 = vld [vmem:[%s3 + $0x150] sm:$0xff]
    %v12520 = vld [vmem:[%s3 + $0x158] sm:$0xf]
    %v12521 = vld [vmem:[%s3 + $0x15c] sm:$0xff]
    %v12522 = vld [vmem:[%s3 + $0x164] sm:$0xf]
    %v12523 = vld [vmem:[%s3 + $0x168] sm:$0xff]
    %v12524 = vld [vmem:[%s3 + $0x170] sm:$0xf]
    %v12525 = vld [vmem:[%s3 + $0x174] sm:$0xff]
    %v12526 = vld [vmem:[%s3 + $0x17c] sm:$0xf]
    %v12527 = vld [vmem:[%s3 + $0x180] sm:$0xff]
    %v12528 = vld [vmem:[%s3 + $0x188] sm:$0xf]
    %v12529 = vld [vmem:[%s3 + $0x18c] sm:$0xff]
    %v12530 = vld [vmem:[%s3 + $0x194] sm:$0xf]
    %v12531 = vld [vmem:[%s3 + $0x198] sm:$0xff]
    %v12532 = vld [vmem:[%s3 + $0x1a0] sm:$0xf]
    %v12533 = vld [vmem:[%s3 + $0x1a4] sm:$0xff]
    %v12534 = vld [vmem:[%s3 + $0x1ac] sm:$0xf]
    %v12535 = vld [vmem:[%s3 + $0x1b0] sm:$0xff]
    %v12536 = vld [vmem:[%s3 + $0x1b8] sm:$0xf]
    %v12537 = vld [vmem:[%s3 + $0x1bc] sm:$0xff]
    %v12538 = vld [vmem:[%s3 + $0x1c4] sm:$0xf]
    %v12539 = vld [vmem:[%s3 + $0x1c8] sm:$0xff]
    %v12540 = vld [vmem:[%s3 + $0x1d0] sm:$0xf]
    %v12541 = vld [vmem:[%s3 + $0x1d4] sm:$0xff]
    %v12542 = vld [vmem:[%s3 + $0x1dc] sm:$0xf]
    %v12543 = vld [vmem:[%s3 + $0x1e0] sm:$0xff]
    %v12544 = vld [vmem:[%s3 + $0x1e8] sm:$0xf]
    %v12545 = vld [vmem:[%s3 + $0x1ec] sm:$0xff]
    %v12546 = vld [vmem:[%s3 + $0x1f4] sm:$0xf]
    %v12547 = vld [vmem:[%s3 + $0x1f8] sm:$0xff]
    %v12548 = vld [vmem:[%s3 + $0x200] sm:$0xf]
    %v12549 = vld [vmem:[%s3 + $0x204] sm:$0xff]
    %v12550 = vld [vmem:[%s3 + $0x20c] sm:$0xf]
    %v12551 = vld [vmem:[%s3 + $0x210] sm:$0xff]
    %v12552 = vld [vmem:[%s3 + $0x218] sm:$0xf]
    %v12553 = vld [vmem:[%s3 + $0x21c] sm:$0xff]
    %v12554 = vld [vmem:[%s3 + $0x224] sm:$0xf]
    %v12555 = vld [vmem:[%s3 + $0x228] sm:$0xff]
    %v12556 = vld [vmem:[%s3 + $0x230] sm:$0xf]
    %v12557 = vld [vmem:[%s3 + $0x234] sm:$0xff]
    %v12558 = vld [vmem:[%s3 + $0x23c] sm:$0xf]
    %v12559 = vld [vmem:[%s3 + $0x240] sm:$0xff]
    %v12560 = vld [vmem:[%s3 + $0x248] sm:$0xf]
    %v12561 = vld [vmem:[%s3 + $0x24c] sm:$0xff]
    %v12562 = vld [vmem:[%s3 + $0x254] sm:$0xf]
    %v12563 = vld [vmem:[%s3 + $0x258] sm:$0xff]
    %v12564 = vld [vmem:[%s3 + $0x260] sm:$0xf]
    %v12565 = vld [vmem:[%s3 + $0x264] sm:$0xff]
    %v12566 = vld [vmem:[%s3 + $0x26c] sm:$0xf]
    %v12567 = vld [vmem:[%s3 + $0x270] sm:$0xff]
    %v12568 = vld [vmem:[%s3 + $0x278] sm:$0xf]
    %v12569 = vld [vmem:[%s3 + $0x27c] sm:$0xff]
    %v12570 = vld [vmem:[%s3 + $0x284] sm:$0xf]
    %v12571 = vld [vmem:[%s3 + $0x288] sm:$0xff]
    %v12572 = vld [vmem:[%s3 + $0x290] sm:$0xf]
    %v12573 = vld [vmem:[%s3 + $0x294] sm:$0xff]
    %v12574 = vld [vmem:[%s3 + $0x29c] sm:$0xf]
    %v12575 = vld [vmem:[%s3 + $0x2a0] sm:$0xff]
    %v12576 = vld [vmem:[%s3 + $0x2a8] sm:$0xf]
    %v12577 = vld [vmem:[%s3 + $0x2ac] sm:$0xff]
    %v12578 = vld [vmem:[%s3 + $0x2b4] sm:$0xf]
    %v12579 = vld [vmem:[%s3 + $0x2b8] sm:$0xff]
    %v12580 = vld [vmem:[%s3 + $0x2c0] sm:$0xf]
    %v12581 = vld [vmem:[%s3 + $0x2c4] sm:$0xff]
    %v12582 = vld [vmem:[%s3 + $0x2cc] sm:$0xf]
    %v12583 = vld [vmem:[%s3 + $0x2d0] sm:$0xff]
    %v12584 = vld [vmem:[%s3 + $0x2d8] sm:$0xf]
    %v12585 = vld [vmem:[%s3 + $0x2dc] sm:$0xff]
    %v12586 = vld [vmem:[%s3 + $0x2e4] sm:$0xf]
    %v12587 = vld [vmem:[%s3 + $0x2e8] sm:$0xff]
    %v12588 = vld [vmem:[%s3 + $0x2f0] sm:$0xf]
    %v12589 = vld [vmem:[%s3 + $0x2f4] sm:$0xff]
    %v12590 = vld [vmem:[%s3 + $0x2fc] sm:$0xf]
    %v12591 = vld [vmem:[%s3 + $0x300] sm:$0xff]
    %v12592 = vld [vmem:[%s3 + $0x308] sm:$0xf]
    %v12593 = vld [vmem:[%s3 + $0x30c] sm:$0xff]
    %v12594 = vld [vmem:[%s3 + $0x314] sm:$0xf]
    %v12595 = vld [vmem:[%s3 + $0x318] sm:$0xff]
    %v12596 = vld [vmem:[%s3 + $0x320] sm:$0xf]
    %v12597 = vld [vmem:[%s3 + $0x324] sm:$0xff]
    %v12598 = vld [vmem:[%s3 + $0x32c] sm:$0xf]
    %v12599 = vld [vmem:[%s3 + $0x330] sm:$0xff]
    %v12600 = vld [vmem:[%s3 + $0x338] sm:$0xf]
    %v12601 = vld [vmem:[%s3 + $0x33c] sm:$0xff]
    %v12602 = vld [vmem:[%s3 + $0x344] sm:$0xf]
    %v12603 = vld [vmem:[%s3 + $0x348] sm:$0xff]
    %v12604 = vld [vmem:[%s3 + $0x350] sm:$0xf]
    %v12605 = vld [vmem:[%s3 + $0x354] sm:$0xff]
    %v12606 = vld [vmem:[%s3 + $0x35c] sm:$0xf]
    %v12607 = vld [vmem:[%s4] sm:$0xff]
    %v12608 = vld [vmem:[%s4 + $0x8] sm:$0xff]
    %v12609 = vld [vmem:[%s4 + $0x10] sm:$0xff]
    %v12610 = vld [vmem:[%s4 + $0x18] sm:$0xff]
    %v12611 = vld [vmem:[%s4 + $0x20] sm:$0xff]
    %v12612 = vld [vmem:[%s4 + $0x28] sm:$0xff]
    %v12613 = vld [vmem:[%s4 + $0x30] sm:$0xff]
    %v12614 = vld [vmem:[%s4 + $0x38] sm:$0xff]
    %v12615 = vld [vmem:[%s4 + $0x40] sm:$0xff]
    %v12616 = vld [vmem:[%s4 + $0x48] sm:$0xff]
    %v12617 = vld [vmem:[%s4 + $0x50] sm:$0xff]
    %v12618 = vld [vmem:[%s4 + $0x58] sm:$0xff]
    %v12619 = vld [vmem:[%s4 + $0x60] sm:$0xff]
    %v12620 = vld [vmem:[%s4 + $0x68] sm:$0xff]
    %v12621 = vld [vmem:[%s4 + $0x70] sm:$0xff]
    %v12622 = vld [vmem:[%s4 + $0x78] sm:$0xff]
    %v12623 = vld [vmem:[%s4 + $0x80] sm:$0xff]
    %v12624 = vld [vmem:[%s4 + $0x88] sm:$0xff]
    %v12625 = vld [vmem:[%s4 + $0x90] sm:$0xff]
    %v12626 = vld [vmem:[%s4 + $0x98] sm:$0xff]
    %v12627 = vld [vmem:[%s4 + $0xa0] sm:$0xff]
    %v12628 = vld [vmem:[%s4 + $0xa8] sm:$0xff]
    %v12629 = vld [vmem:[%s4 + $0xb0] sm:$0xff]
    %v12630 = vld [vmem:[%s4 + $0xb8] sm:$0xff]
    %v12631 = vld [vmem:[%s4 + $0xc0] sm:$0xff]
    %v12632 = vld [vmem:[%s4 + $0xc8] sm:$0xff]
    %v12633 = vld [vmem:[%s4 + $0xd0] sm:$0xff]
    %v12634 = vld [vmem:[%s4 + $0xd8] sm:$0xff]
    %v12635 = vld [vmem:[%s4 + $0xe0] sm:$0xff]
    %v12636 = vld [vmem:[%s4 + $0xe8] sm:$0xff]
    %v12637 = vld [vmem:[%s4 + $0xf0] sm:$0xff]
    %v12638 = vld [vmem:[%s4 + $0xf8] sm:$0xff]
    %v12639 = vld [vmem:[%s4 + $0x100] sm:$0xff]
    %v12640 = vld [vmem:[%s4 + $0x108] sm:$0xff]
    %v12641 = vld [vmem:[%s4 + $0x110] sm:$0xff]
    %v12642 = vld [vmem:[%s4 + $0x118] sm:$0xff]
    %v12643 = vld [vmem:[%s4 + $0x120] sm:$0xff]
    %v12644 = vld [vmem:[%s4 + $0x128] sm:$0xff]
    %v12645 = vld [vmem:[%s4 + $0x130] sm:$0xff]
    %v12646 = vld [vmem:[%s4 + $0x138] sm:$0xff]
    %v12647 = vld [vmem:[%s4 + $0x140] sm:$0xff]
    %v12648 = vld [vmem:[%s4 + $0x148] sm:$0xff]
    %v12649 = vld [vmem:[%s4 + $0x150] sm:$0xff]
    %v12650 = vld [vmem:[%s4 + $0x158] sm:$0xff]
    %v12651 = vld [vmem:[%s4 + $0x160] sm:$0xff]
    %v12652 = vld [vmem:[%s4 + $0x168] sm:$0xff]
    %v12653 = vld [vmem:[%s4 + $0x170] sm:$0xff]
    %v12654 = vld [vmem:[%s4 + $0x178] sm:$0xff]
    %v12655 = vld [vmem:[%s4 + $0x180] sm:$0xff]
    %v12656 = vld [vmem:[%s4 + $0x188] sm:$0xff]
    %v12657 = vld [vmem:[%s4 + $0x190] sm:$0xff]
    %v12658 = vld [vmem:[%s4 + $0x198] sm:$0xff]
    %v12659 = vld [vmem:[%s4 + $0x1a0] sm:$0xff]
    %v12660 = vld [vmem:[%s4 + $0x1a8] sm:$0xff]
    %v12661 = vld [vmem:[%s4 + $0x1b0] sm:$0xff]
    %v12662 = vld [vmem:[%s4 + $0x1b8] sm:$0xff]
    %v12663 = vld [vmem:[%s4 + $0x1c0] sm:$0xff]
    %v12664 = vld [vmem:[%s4 + $0x1c8] sm:$0xff]
    %v12665 = vld [vmem:[%s4 + $0x1d0] sm:$0xff]
    %v12666 = vld [vmem:[%s4 + $0x1d8] sm:$0xff]
    %v12667 = vld [vmem:[%s4 + $0x1e0] sm:$0xff]
    %v12668 = vld [vmem:[%s4 + $0x1e8] sm:$0xff]
    %v12669 = vld [vmem:[%s4 + $0x1f0] sm:$0xff]
    %v12670 = vld [vmem:[%s4 + $0x1f8] sm:$0xff]
    %v12671 = vld [vmem:[%s4 + $0x200] sm:$0xff]
    %v12672 = vld [vmem:[%s4 + $0x208] sm:$0xff]
    %v12673 = vld [vmem:[%s4 + $0x210] sm:$0xff]
    %v12674 = vld [vmem:[%s4 + $0x218] sm:$0xff]
    %v12675 = vld [vmem:[%s4 + $0x220] sm:$0xff]
    %v12676 = vld [vmem:[%s4 + $0x228] sm:$0xff]
    %v12677 = vld [vmem:[%s4 + $0x230] sm:$0xff]
    %v12678 = vld [vmem:[%s4 + $0x238] sm:$0xff]
    %12680 = vset.pattern.permute.xlu0 0
    %12681 = vperm.xlu0 %12680, %v12607
    %v12682 = vpop.permute.xlu0 %12681
    %12685 = vset.pattern.permute.xlu0 0
    %12686 = vperm.xlu0 %12685, %v12608
    %v12687 = vpop.permute.xlu0 %12686
    %12690 = vset.pattern.permute.xlu0 0
    %12691 = vperm.xlu0 %12690, %v12609
    %v12692 = vpop.permute.xlu0 %12691
    %12695 = vset.pattern.permute.xlu0 0
    %12696 = vperm.xlu0 %12695, %v12610
    %v12697 = vpop.permute.xlu0 %12696
    %12700 = vset.pattern.permute.xlu0 0
    %12701 = vperm.xlu0 %12700, %v12611
    %v12702 = vpop.permute.xlu0 %12701
    %12705 = vset.pattern.permute.xlu0 0
    %12706 = vperm.xlu0 %12705, %v12612
    %v12707 = vpop.permute.xlu0 %12706
    %12710 = vset.pattern.permute.xlu0 0
    %12711 = vperm.xlu0 %12710, %v12613
    %v12712 = vpop.permute.xlu0 %12711
    %12715 = vset.pattern.permute.xlu0 0
    %12716 = vperm.xlu0 %12715, %v12614
    %v12717 = vpop.permute.xlu0 %12716
    %12720 = vset.pattern.permute.xlu0 0
    %12721 = vperm.xlu0 %12720, %v12615
    %v12722 = vpop.permute.xlu0 %12721
    %12725 = vset.pattern.permute.xlu0 0
    %12726 = vperm.xlu0 %12725, %v12616
    %v12727 = vpop.permute.xlu0 %12726
    %12730 = vset.pattern.permute.xlu0 0
    %12731 = vperm.xlu0 %12730, %v12617
    %v12732 = vpop.permute.xlu0 %12731
    %12735 = vset.pattern.permute.xlu0 0
    %12736 = vperm.xlu0 %12735, %v12618
    %v12737 = vpop.permute.xlu0 %12736
    %12740 = vset.pattern.permute.xlu0 0
    %12741 = vperm.xlu0 %12740, %v12619
    %v12742 = vpop.permute.xlu0 %12741
    %12745 = vset.pattern.permute.xlu0 0
    %12746 = vperm.xlu0 %12745, %v12620
    %v12747 = vpop.permute.xlu0 %12746
    %12750 = vset.pattern.permute.xlu0 0
    %12751 = vperm.xlu0 %12750, %v12621
    %v12752 = vpop.permute.xlu0 %12751
    %12755 = vset.pattern.permute.xlu0 0
    %12756 = vperm.xlu0 %12755, %v12622
    %v12757 = vpop.permute.xlu0 %12756
    %12760 = vset.pattern.permute.xlu0 0
    %12761 = vperm.xlu0 %12760, %v12623
    %v12762 = vpop.permute.xlu0 %12761
    %12765 = vset.pattern.permute.xlu0 0
    %12766 = vperm.xlu0 %12765, %v12624
    %v12767 = vpop.permute.xlu0 %12766
    %12770 = vset.pattern.permute.xlu0 0
    %12771 = vperm.xlu0 %12770, %v12625
    %v12772 = vpop.permute.xlu0 %12771
    %12775 = vset.pattern.permute.xlu0 0
    %12776 = vperm.xlu0 %12775, %v12626
    %v12777 = vpop.permute.xlu0 %12776
    %12780 = vset.pattern.permute.xlu0 0
    %12781 = vperm.xlu0 %12780, %v12627
    %v12782 = vpop.permute.xlu0 %12781
    %12785 = vset.pattern.permute.xlu0 0
    %12786 = vperm.xlu0 %12785, %v12628
    %v12787 = vpop.permute.xlu0 %12786
    %12790 = vset.pattern.permute.xlu0 0
    %12791 = vperm.xlu0 %12790, %v12629
    %v12792 = vpop.permute.xlu0 %12791
    %12795 = vset.pattern.permute.xlu0 0
    %12796 = vperm.xlu0 %12795, %v12630
    %v12797 = vpop.permute.xlu0 %12796
    %12800 = vset.pattern.permute.xlu0 0
    %12801 = vperm.xlu0 %12800, %v12631
    %v12802 = vpop.permute.xlu0 %12801
    %12805 = vset.pattern.permute.xlu0 0
    %12806 = vperm.xlu0 %12805, %v12632
    %v12807 = vpop.permute.xlu0 %12806
    %12810 = vset.pattern.permute.xlu0 0
    %12811 = vperm.xlu0 %12810, %v12633
    %v12812 = vpop.permute.xlu0 %12811
    %12815 = vset.pattern.permute.xlu0 0
    %12816 = vperm.xlu0 %12815, %v12634
    %v12817 = vpop.permute.xlu0 %12816
    %12820 = vset.pattern.permute.xlu0 0
    %12821 = vperm.xlu0 %12820, %v12635
    %v12822 = vpop.permute.xlu0 %12821
    %12825 = vset.pattern.permute.xlu0 0
    %12826 = vperm.xlu0 %12825, %v12636
    %v12827 = vpop.permute.xlu0 %12826
    %12830 = vset.pattern.permute.xlu0 0
    %12831 = vperm.xlu0 %12830, %v12637
    %v12832 = vpop.permute.xlu0 %12831
    %12835 = vset.pattern.permute.xlu0 0
    %12836 = vperm.xlu0 %12835, %v12638
    %v12837 = vpop.permute.xlu0 %12836
    %12840 = vset.pattern.permute.xlu0 0
    %12841 = vperm.xlu0 %12840, %v12639
    %v12842 = vpop.permute.xlu0 %12841
    %12845 = vset.pattern.permute.xlu0 0
    %12846 = vperm.xlu0 %12845, %v12640
    %v12847 = vpop.permute.xlu0 %12846
    %12850 = vset.pattern.permute.xlu0 0
    %12851 = vperm.xlu0 %12850, %v12641
    %v12852 = vpop.permute.xlu0 %12851
    %12855 = vset.pattern.permute.xlu0 0
    %12856 = vperm.xlu0 %12855, %v12642
    %v12857 = vpop.permute.xlu0 %12856
    %12860 = vset.pattern.permute.xlu0 0
    %12861 = vperm.xlu0 %12860, %v12643
    %v12862 = vpop.permute.xlu0 %12861
    %12865 = vset.pattern.permute.xlu0 0
    %12866 = vperm.xlu0 %12865, %v12644
    %v12867 = vpop.permute.xlu0 %12866
    %12870 = vset.pattern.permute.xlu0 0
    %12871 = vperm.xlu0 %12870, %v12645
    %v12872 = vpop.permute.xlu0 %12871
    %12875 = vset.pattern.permute.xlu0 0
    %12876 = vperm.xlu0 %12875, %v12646
    %v12877 = vpop.permute.xlu0 %12876
    %12880 = vset.pattern.permute.xlu0 0
    %12881 = vperm.xlu0 %12880, %v12647
    %v12882 = vpop.permute.xlu0 %12881
    %12885 = vset.pattern.permute.xlu0 0
    %12886 = vperm.xlu0 %12885, %v12648
    %v12887 = vpop.permute.xlu0 %12886
    %12890 = vset.pattern.permute.xlu0 0
    %12891 = vperm.xlu0 %12890, %v12649
    %v12892 = vpop.permute.xlu0 %12891
    %12895 = vset.pattern.permute.xlu0 0
    %12896 = vperm.xlu0 %12895, %v12650
    %v12897 = vpop.permute.xlu0 %12896
    %12900 = vset.pattern.permute.xlu0 0
    %12901 = vperm.xlu0 %12900, %v12651
    %v12902 = vpop.permute.xlu0 %12901
    %12905 = vset.pattern.permute.xlu0 0
    %12906 = vperm.xlu0 %12905, %v12652
    %v12907 = vpop.permute.xlu0 %12906
    %12910 = vset.pattern.permute.xlu0 0
    %12911 = vperm.xlu0 %12910, %v12653
    %v12912 = vpop.permute.xlu0 %12911
    %12915 = vset.pattern.permute.xlu0 0
    %12916 = vperm.xlu0 %12915, %v12654
    %v12917 = vpop.permute.xlu0 %12916
    %12920 = vset.pattern.permute.xlu0 0
    %12921 = vperm.xlu0 %12920, %v12655
    %v12922 = vpop.permute.xlu0 %12921
    %12925 = vset.pattern.permute.xlu0 0
    %12926 = vperm.xlu0 %12925, %v12656
    %v12927 = vpop.permute.xlu0 %12926
    %12930 = vset.pattern.permute.xlu0 0
    %12931 = vperm.xlu0 %12930, %v12657
    %v12932 = vpop.permute.xlu0 %12931
    %12935 = vset.pattern.permute.xlu0 0
    %12936 = vperm.xlu0 %12935, %v12658
    %v12937 = vpop.permute.xlu0 %12936
    %12940 = vset.pattern.permute.xlu0 0
    %12941 = vperm.xlu0 %12940, %v12659
    %v12942 = vpop.permute.xlu0 %12941
    %12945 = vset.pattern.permute.xlu0 0
    %12946 = vperm.xlu0 %12945, %v12660
    %v12947 = vpop.permute.xlu0 %12946
    %12950 = vset.pattern.permute.xlu0 0
    %12951 = vperm.xlu0 %12950, %v12661
    %v12952 = vpop.permute.xlu0 %12951
    %12955 = vset.pattern.permute.xlu0 0
    %12956 = vperm.xlu0 %12955, %v12662
    %v12957 = vpop.permute.xlu0 %12956
    %12960 = vset.pattern.permute.xlu0 0
    %12961 = vperm.xlu0 %12960, %v12663
    %v12962 = vpop.permute.xlu0 %12961
    %12965 = vset.pattern.permute.xlu0 0
    %12966 = vperm.xlu0 %12965, %v12664
    %v12967 = vpop.permute.xlu0 %12966
    %12970 = vset.pattern.permute.xlu0 0
    %12971 = vperm.xlu0 %12970, %v12665
    %v12972 = vpop.permute.xlu0 %12971
    %12975 = vset.pattern.permute.xlu0 0
    %12976 = vperm.xlu0 %12975, %v12666
    %v12977 = vpop.permute.xlu0 %12976
    %12980 = vset.pattern.permute.xlu0 0
    %12981 = vperm.xlu0 %12980, %v12667
    %v12982 = vpop.permute.xlu0 %12981
    %12985 = vset.pattern.permute.xlu0 0
    %12986 = vperm.xlu0 %12985, %v12668
    %v12987 = vpop.permute.xlu0 %12986
    %12990 = vset.pattern.permute.xlu0 0
    %12991 = vperm.xlu0 %12990, %v12669
    %v12992 = vpop.permute.xlu0 %12991
    %12995 = vset.pattern.permute.xlu0 0
    %12996 = vperm.xlu0 %12995, %v12670
    %v12997 = vpop.permute.xlu0 %12996
    %13000 = vset.pattern.permute.xlu0 0
    %13001 = vperm.xlu0 %13000, %v12671
    %v13002 = vpop.permute.xlu0 %13001
    %13005 = vset.pattern.permute.xlu0 0
    %13006 = vperm.xlu0 %13005, %v12672
    %v13007 = vpop.permute.xlu0 %13006
    %13010 = vset.pattern.permute.xlu0 0
    %13011 = vperm.xlu0 %13010, %v12673
    %v13012 = vpop.permute.xlu0 %13011
    %13015 = vset.pattern.permute.xlu0 0
    %13016 = vperm.xlu0 %13015, %v12674
    %v13017 = vpop.permute.xlu0 %13016
    %13020 = vset.pattern.permute.xlu0 0
    %13021 = vperm.xlu0 %13020, %v12675
    %v13022 = vpop.permute.xlu0 %13021
    %13025 = vset.pattern.permute.xlu0 0
    %13026 = vperm.xlu0 %13025, %v12676
    %v13027 = vpop.permute.xlu0 %13026
    %13030 = vset.pattern.permute.xlu0 0
    %13031 = vperm.xlu0 %13030, %v12677
    %v13032 = vpop.permute.xlu0 %13031
    %13035 = vset.pattern.permute.xlu0 0
    %13036 = vperm.xlu0 %13035, %v12678
    %v13037 = vpop.permute.xlu0 %13036
    %v13183 = vunpack.c.l.b16 %v12463
    %v13184 = vunpack.c.h.b16 %v12463
    %v13185 = vunpack.c.l.b16 %v12464
    %v13186 = vunpack.c.l.b16 %v12465
    %v13187 = vunpack.c.h.b16 %v12465
    %v13188 = vunpack.c.l.b16 %v12466
    %v13189 = vunpack.c.l.b16 %v12467
    %v13190 = vunpack.c.h.b16 %v12467
    %v13191 = vunpack.c.l.b16 %v12468
    %v13192 = vunpack.c.l.b16 %v12469
    %v13193 = vunpack.c.h.b16 %v12469
    %v13194 = vunpack.c.l.b16 %v12470
    %v13195 = vunpack.c.l.b16 %v12471
    %v13196 = vunpack.c.h.b16 %v12471
    %v13197 = vunpack.c.l.b16 %v12472
    %v13198 = vunpack.c.l.b16 %v12473
    %v13199 = vunpack.c.h.b16 %v12473
    %v13200 = vunpack.c.l.b16 %v12474
    %v13201 = vunpack.c.l.b16 %v12475
    %v13202 = vunpack.c.h.b16 %v12475
    %v13203 = vunpack.c.l.b16 %v12476
    %v13204 = vunpack.c.l.b16 %v12477
    %v13205 = vunpack.c.h.b16 %v12477
    %v13206 = vunpack.c.l.b16 %v12478
    %v13207 = vunpack.c.l.b16 %v12479
    %v13208 = vunpack.c.h.b16 %v12479
    %v13209 = vunpack.c.l.b16 %v12480
    %v13210 = vunpack.c.l.b16 %v12481
    %v13211 = vunpack.c.h.b16 %v12481
    %v13212 = vunpack.c.l.b16 %v12482
    %v13213 = vunpack.c.l.b16 %v12483
    %v13214 = vunpack.c.h.b16 %v12483
    %v13215 = vunpack.c.l.b16 %v12484
    %v13216 = vunpack.c.l.b16 %v12485
    %v13217 = vunpack.c.h.b16 %v12485
    %v13218 = vunpack.c.l.b16 %v12486
    %v13219 = vunpack.c.l.b16 %v12487
    %v13220 = vunpack.c.h.b16 %v12487
    %v13221 = vunpack.c.l.b16 %v12488
    %v13222 = vunpack.c.l.b16 %v12489
    %v13223 = vunpack.c.h.b16 %v12489
    %v13224 = vunpack.c.l.b16 %v12490
    %v13225 = vunpack.c.l.b16 %v12491
    %v13226 = vunpack.c.h.b16 %v12491
    %v13227 = vunpack.c.l.b16 %v12492
    %v13228 = vunpack.c.l.b16 %v12493
    %v13229 = vunpack.c.h.b16 %v12493
    %v13230 = vunpack.c.l.b16 %v12494
    %v13231 = vunpack.c.l.b16 %v12495
    %v13232 = vunpack.c.h.b16 %v12495
    %v13233 = vunpack.c.l.b16 %v12496
    %v13234 = vunpack.c.l.b16 %v12497
    %v13235 = vunpack.c.h.b16 %v12497
    %v13236 = vunpack.c.l.b16 %v12498
    %v13237 = vunpack.c.l.b16 %v12499
    %v13238 = vunpack.c.h.b16 %v12499
    %v13239 = vunpack.c.l.b16 %v12500
    %v13240 = vunpack.c.l.b16 %v12501
    %v13241 = vunpack.c.h.b16 %v12501
    %v13242 = vunpack.c.l.b16 %v12502
    %v13243 = vunpack.c.l.b16 %v12503
    %v13244 = vunpack.c.h.b16 %v12503
    %v13245 = vunpack.c.l.b16 %v12504
    %v13246 = vunpack.c.l.b16 %v12505
    %v13247 = vunpack.c.h.b16 %v12505
    %v13248 = vunpack.c.l.b16 %v12506
    %v13249 = vunpack.c.l.b16 %v12507
    %v13250 = vunpack.c.h.b16 %v12507
    %v13251 = vunpack.c.l.b16 %v12508
    %v13252 = vunpack.c.l.b16 %v12509
    %v13253 = vunpack.c.h.b16 %v12509
    %v13254 = vunpack.c.l.b16 %v12510
    %v13255 = vunpack.c.l.b16 %v12511
    %v13256 = vunpack.c.h.b16 %v12511
    %v13257 = vunpack.c.l.b16 %v12512
    %v13258 = vunpack.c.l.b16 %v12513
    %v13259 = vunpack.c.h.b16 %v12513
    %v13260 = vunpack.c.l.b16 %v12514
    %v13261 = vunpack.c.l.b16 %v12515
    %v13262 = vunpack.c.h.b16 %v12515
    %v13263 = vunpack.c.l.b16 %v12516
    %v13264 = vunpack.c.l.b16 %v12517
    %v13265 = vunpack.c.h.b16 %v12517
    %v13266 = vunpack.c.l.b16 %v12518
    %v13267 = vunpack.c.l.b16 %v12519
    %v13268 = vunpack.c.h.b16 %v12519
    %v13269 = vunpack.c.l.b16 %v12520
    %v13270 = vunpack.c.l.b16 %v12521
    %v13271 = vunpack.c.h.b16 %v12521
    %v13272 = vunpack.c.l.b16 %v12522
    %v13273 = vunpack.c.l.b16 %v12523
    %v13274 = vunpack.c.h.b16 %v12523
    %v13275 = vunpack.c.l.b16 %v12524
    %v13276 = vunpack.c.l.b16 %v12525
    %v13277 = vunpack.c.h.b16 %v12525
    %v13278 = vunpack.c.l.b16 %v12526
    %v13279 = vunpack.c.l.b16 %v12527
    %v13280 = vunpack.c.h.b16 %v12527
    %v13281 = vunpack.c.l.b16 %v12528
    %v13282 = vunpack.c.l.b16 %v12529
    %v13283 = vunpack.c.h.b16 %v12529
    %v13284 = vunpack.c.l.b16 %v12530
    %v13285 = vunpack.c.l.b16 %v12531
    %v13286 = vunpack.c.h.b16 %v12531
    %v13287 = vunpack.c.l.b16 %v12532
    %v13288 = vunpack.c.l.b16 %v12533
    %v13289 = vunpack.c.h.b16 %v12533
    %v13290 = vunpack.c.l.b16 %v12534
    %v13291 = vunpack.c.l.b16 %v12535
    %v13292 = vunpack.c.h.b16 %v12535
    %v13293 = vunpack.c.l.b16 %v12536
    %v13294 = vunpack.c.l.b16 %v12537
    %v13295 = vunpack.c.h.b16 %v12537
    %v13296 = vunpack.c.l.b16 %v12538
    %v13297 = vunpack.c.l.b16 %v12539
    %v13298 = vunpack.c.h.b16 %v12539
    %v13299 = vunpack.c.l.b16 %v12540
    %v13300 = vunpack.c.l.b16 %v12541
    %v13301 = vunpack.c.h.b16 %v12541
    %v13302 = vunpack.c.l.b16 %v12542
    %v13303 = vunpack.c.l.b16 %v12543
    %v13304 = vunpack.c.h.b16 %v12543
    %v13305 = vunpack.c.l.b16 %v12544
    %v13306 = vunpack.c.l.b16 %v12545
    %v13307 = vunpack.c.h.b16 %v12545
    %v13308 = vunpack.c.l.b16 %v12546
    %v13309 = vunpack.c.l.b16 %v12547
    %v13310 = vunpack.c.h.b16 %v12547
    %v13311 = vunpack.c.l.b16 %v12548
    %v13312 = vunpack.c.l.b16 %v12549
    %v13313 = vunpack.c.h.b16 %v12549
    %v13314 = vunpack.c.l.b16 %v12550
    %v13315 = vunpack.c.l.b16 %v12551
    %v13316 = vunpack.c.h.b16 %v12551
    %v13317 = vunpack.c.l.b16 %v12552
    %v13318 = vunpack.c.l.b16 %v12553
    %v13319 = vunpack.c.h.b16 %v12553
    %v13320 = vunpack.c.l.b16 %v12554
    %v13321 = vunpack.c.l.b16 %v12555
    %v13322 = vunpack.c.h.b16 %v12555
    %v13323 = vunpack.c.l.b16 %v12556
    %v13324 = vunpack.c.l.b16 %v12557
    %v13325 = vunpack.c.h.b16 %v12557
    %v13326 = vunpack.c.l.b16 %v12558
    %v13327 = vunpack.c.l.b16 %v12559
    %v13328 = vunpack.c.h.b16 %v12559
    %v13329 = vunpack.c.l.b16 %v12560
    %v13330 = vunpack.c.l.b16 %v12561
    %v13331 = vunpack.c.h.b16 %v12561
    %v13332 = vunpack.c.l.b16 %v12562
    %v13333 = vunpack.c.l.b16 %v12563
    %v13334 = vunpack.c.h.b16 %v12563
    %v13335 = vunpack.c.l.b16 %v12564
    %v13336 = vunpack.c.l.b16 %v12565
    %v13337 = vunpack.c.h.b16 %v12565
    %v13338 = vunpack.c.l.b16 %v12566
    %v13339 = vunpack.c.l.b16 %v12567
    %v13340 = vunpack.c.h.b16 %v12567
    %v13341 = vunpack.c.l.b16 %v12568
    %v13342 = vunpack.c.l.b16 %v12569
    %v13343 = vunpack.c.h.b16 %v12569
    %v13344 = vunpack.c.l.b16 %v12570
    %v13345 = vunpack.c.l.b16 %v12571
    %v13346 = vunpack.c.h.b16 %v12571
    %v13347 = vunpack.c.l.b16 %v12572
    %v13348 = vunpack.c.l.b16 %v12573
    %v13349 = vunpack.c.h.b16 %v12573
    %v13350 = vunpack.c.l.b16 %v12574
    %v13351 = vunpack.c.l.b16 %v12575
    %v13352 = vunpack.c.h.b16 %v12575
    %v13353 = vunpack.c.l.b16 %v12576
    %v13354 = vunpack.c.l.b16 %v12577
    %v13355 = vunpack.c.h.b16 %v12577
    %v13356 = vunpack.c.l.b16 %v12578
    %v13357 = vunpack.c.l.b16 %v12579
    %v13358 = vunpack.c.h.b16 %v12579
    %v13359 = vunpack.c.l.b16 %v12580
    %v13360 = vunpack.c.l.b16 %v12581
    %v13361 = vunpack.c.h.b16 %v12581
    %v13362 = vunpack.c.l.b16 %v12582
    %v13363 = vunpack.c.l.b16 %v12583
    %v13364 = vunpack.c.h.b16 %v12583
    %v13365 = vunpack.c.l.b16 %v12584
    %v13366 = vunpack.c.l.b16 %v12585
    %v13367 = vunpack.c.h.b16 %v12585
    %v13368 = vunpack.c.l.b16 %v12586
    %v13369 = vunpack.c.l.b16 %v12587
    %v13370 = vunpack.c.h.b16 %v12587
    %v13371 = vunpack.c.l.b16 %v12588
    %v13372 = vunpack.c.l.b16 %v12589
    %v13373 = vunpack.c.h.b16 %v12589
    %v13374 = vunpack.c.l.b16 %v12590
    %v13375 = vunpack.c.l.b16 %v12591
    %v13376 = vunpack.c.h.b16 %v12591
    %v13377 = vunpack.c.l.b16 %v12592
    %v13378 = vunpack.c.l.b16 %v12593
    %v13379 = vunpack.c.h.b16 %v12593
    %v13380 = vunpack.c.l.b16 %v12594
    %v13381 = vunpack.c.l.b16 %v12595
    %v13382 = vunpack.c.h.b16 %v12595
    %v13383 = vunpack.c.l.b16 %v12596
    %v13384 = vunpack.c.l.b16 %v12597
    %v13385 = vunpack.c.h.b16 %v12597
    %v13386 = vunpack.c.l.b16 %v12598
    %v13387 = vunpack.c.l.b16 %v12599
    %v13388 = vunpack.c.h.b16 %v12599
    %v13389 = vunpack.c.l.b16 %v12600
    %v13390 = vunpack.c.l.b16 %v12601
    %v13391 = vunpack.c.h.b16 %v12601
    %v13392 = vunpack.c.l.b16 %v12602
    %v13393 = vunpack.c.l.b16 %v12603
    %v13394 = vunpack.c.h.b16 %v12603
    %v13395 = vunpack.c.l.b16 %v12604
    %v13396 = vunpack.c.l.b16 %v12605
    %v13397 = vunpack.c.h.b16 %v12605
    %v13398 = vunpack.c.l.b16 %v12606
    %v13399 = vpack.c.b16 %v13186, %v13183
    %v13400 = vpack.c.b16 %v13187, %v13184
    %v13401 = vpack.c.b16 %v13188, %v13185
    %v13402 = vpack.c.b16 %v13192, %v13189
    %v13403 = vpack.c.b16 %v13193, %v13190
    %v13404 = vpack.c.b16 %v13194, %v13191
    %v13405 = vpack.c.b16 %v13198, %v13195
    %v13406 = vpack.c.b16 %v13199, %v13196
    %v13407 = vpack.c.b16 %v13200, %v13197
    %v13408 = vpack.c.b16 %v13204, %v13201
    %v13409 = vpack.c.b16 %v13205, %v13202
    %v13410 = vpack.c.b16 %v13206, %v13203
    %v13411 = vpack.c.b16 %v13210, %v13207
    %v13412 = vpack.c.b16 %v13211, %v13208
    %v13413 = vpack.c.b16 %v13212, %v13209
    %v13414 = vpack.c.b16 %v13216, %v13213
    %v13415 = vpack.c.b16 %v13217, %v13214
    %v13416 = vpack.c.b16 %v13218, %v13215
    %v13417 = vpack.c.b16 %v13222, %v13219
    %v13418 = vpack.c.b16 %v13223, %v13220
    %v13419 = vpack.c.b16 %v13224, %v13221
    %v13420 = vpack.c.b16 %v13228, %v13225
    %v13421 = vpack.c.b16 %v13229, %v13226
    %v13422 = vpack.c.b16 %v13230, %v13227
    %v13423 = vpack.c.b16 %v13234, %v13231
    %v13424 = vpack.c.b16 %v13235, %v13232
    %v13425 = vpack.c.b16 %v13236, %v13233
    %v13426 = vpack.c.b16 %v13240, %v13237
    %v13427 = vpack.c.b16 %v13241, %v13238
    %v13428 = vpack.c.b16 %v13242, %v13239
    %v13429 = vpack.c.b16 %v13246, %v13243
    %v13430 = vpack.c.b16 %v13247, %v13244
    %v13431 = vpack.c.b16 %v13248, %v13245
    %v13432 = vpack.c.b16 %v13252, %v13249
    %v13433 = vpack.c.b16 %v13253, %v13250
    %v13434 = vpack.c.b16 %v13254, %v13251
    %v13435 = vpack.c.b16 %v13258, %v13255
    %v13436 = vpack.c.b16 %v13259, %v13256
    %v13437 = vpack.c.b16 %v13260, %v13257
    %v13438 = vpack.c.b16 %v13264, %v13261
    %v13439 = vpack.c.b16 %v13265, %v13262
    %v13440 = vpack.c.b16 %v13266, %v13263
    %v13441 = vpack.c.b16 %v13270, %v13267
    %v13442 = vpack.c.b16 %v13271, %v13268
    %v13443 = vpack.c.b16 %v13272, %v13269
    %v13444 = vpack.c.b16 %v13276, %v13273
    %v13445 = vpack.c.b16 %v13277, %v13274
    %v13446 = vpack.c.b16 %v13278, %v13275
    %v13447 = vpack.c.b16 %v13282, %v13279
    %v13448 = vpack.c.b16 %v13283, %v13280
    %v13449 = vpack.c.b16 %v13284, %v13281
    %v13450 = vpack.c.b16 %v13288, %v13285
    %v13451 = vpack.c.b16 %v13289, %v13286
    %v13452 = vpack.c.b16 %v13290, %v13287
    %v13453 = vpack.c.b16 %v13294, %v13291
    %v13454 = vpack.c.b16 %v13295, %v13292
    %v13455 = vpack.c.b16 %v13296, %v13293
    %v13456 = vpack.c.b16 %v13300, %v13297
    %v13457 = vpack.c.b16 %v13301, %v13298
    %v13458 = vpack.c.b16 %v13302, %v13299
    %v13459 = vpack.c.b16 %v13306, %v13303
    %v13460 = vpack.c.b16 %v13307, %v13304
    %v13461 = vpack.c.b16 %v13308, %v13305
    %v13462 = vpack.c.b16 %v13312, %v13309
    %v13463 = vpack.c.b16 %v13313, %v13310
    %v13464 = vpack.c.b16 %v13314, %v13311
    %v13465 = vpack.c.b16 %v13318, %v13315
    %v13466 = vpack.c.b16 %v13319, %v13316
    %v13467 = vpack.c.b16 %v13320, %v13317
    %v13468 = vpack.c.b16 %v13324, %v13321
    %v13469 = vpack.c.b16 %v13325, %v13322
    %v13470 = vpack.c.b16 %v13326, %v13323
    %v13471 = vpack.c.b16 %v13330, %v13327
    %v13472 = vpack.c.b16 %v13331, %v13328
    %v13473 = vpack.c.b16 %v13332, %v13329
    %v13474 = vpack.c.b16 %v13336, %v13333
    %v13475 = vpack.c.b16 %v13337, %v13334
    %v13476 = vpack.c.b16 %v13338, %v13335
    %v13477 = vpack.c.b16 %v13342, %v13339
    %v13478 = vpack.c.b16 %v13343, %v13340
    %v13479 = vpack.c.b16 %v13344, %v13341
    %v13480 = vpack.c.b16 %v13348, %v13345
    %v13481 = vpack.c.b16 %v13349, %v13346
    %v13482 = vpack.c.b16 %v13350, %v13347
    %v13483 = vpack.c.b16 %v13354, %v13351
    %v13484 = vpack.c.b16 %v13355, %v13352
    %v13485 = vpack.c.b16 %v13356, %v13353
    %v13486 = vpack.c.b16 %v13360, %v13357
    %v13487 = vpack.c.b16 %v13361, %v13358
    %v13488 = vpack.c.b16 %v13362, %v13359
    %v13489 = vpack.c.b16 %v13366, %v13363
    %v13490 = vpack.c.b16 %v13367, %v13364
    %v13491 = vpack.c.b16 %v13368, %v13365
    %v13492 = vpack.c.b16 %v13372, %v13369
    %v13493 = vpack.c.b16 %v13373, %v13370
    %v13494 = vpack.c.b16 %v13374, %v13371
    %v13495 = vpack.c.b16 %v13378, %v13375
    %v13496 = vpack.c.b16 %v13379, %v13376
    %v13497 = vpack.c.b16 %v13380, %v13377
    %v13498 = vpack.c.b16 %v13384, %v13381
    %v13499 = vpack.c.b16 %v13385, %v13382
    %v13500 = vpack.c.b16 %v13386, %v13383
    %v13501 = vpack.c.b16 %v13390, %v13387
    %v13502 = vpack.c.b16 %v13391, %v13388
    %v13503 = vpack.c.b16 %v13392, %v13389
    %v13504 = vpack.c.b16 %v13396, %v13393
    %v13505 = vpack.c.b16 %v13397, %v13394
    %v13506 = vpack.c.b16 %v13398, %v13395
    %vm13579 = vcmask 64512
    %v13581 = vsel %vm13579, %v13401, 0
    %v13584 = vsel %vm13579, %v13404, 0
    %v13587 = vsel %vm13579, %v13407, 0
    %v13590 = vsel %vm13579, %v13410, 0
    %v13593 = vsel %vm13579, %v13413, 0
    %v13596 = vsel %vm13579, %v13416, 0
    %v13599 = vsel %vm13579, %v13419, 0
    %v13602 = vsel %vm13579, %v13422, 0
    %v13605 = vsel %vm13579, %v13425, 0
    %v13608 = vsel %vm13579, %v13428, 0
    %v13611 = vsel %vm13579, %v13431, 0
    %v13614 = vsel %vm13579, %v13434, 0
    %v13617 = vsel %vm13579, %v13437, 0
    %v13620 = vsel %vm13579, %v13440, 0
    %v13623 = vsel %vm13579, %v13443, 0
    %v13626 = vsel %vm13579, %v13446, 0
    %v13629 = vsel %vm13579, %v13449, 0
    %v13632 = vsel %vm13579, %v13452, 0
    %v13635 = vsel %vm13579, %v13455, 0
    %v13638 = vsel %vm13579, %v13458, 0
    %v13641 = vsel %vm13579, %v13461, 0
    %v13644 = vsel %vm13579, %v13464, 0
    %v13647 = vsel %vm13579, %v13467, 0
    %v13650 = vsel %vm13579, %v13470, 0
    %v13653 = vsel %vm13579, %v13473, 0
    %v13656 = vsel %vm13579, %v13476, 0
    %v13659 = vsel %vm13579, %v13479, 0
    %v13662 = vsel %vm13579, %v13482, 0
    %v13665 = vsel %vm13579, %v13485, 0
    %v13668 = vsel %vm13579, %v13488, 0
    %v13671 = vsel %vm13579, %v13491, 0
    %v13674 = vsel %vm13579, %v13494, 0
    %v13677 = vsel %vm13579, %v13497, 0
    %v13680 = vsel %vm13579, %v13500, 0
    %v13683 = vsel %vm13579, %v13503, 0
    %v13686 = vsel %vm13579, %v13506, 0
    %vm13688 = vcmask 1043456
    %v13690 = vsel %vm13688, %v12462, 0
    %13692 = vmatprep.subr.bf16.mxu0 0
    %13693 = vmatpush1.bf16.msra.mxu0 %v12453
    %13694 = vmatprep.subr.bf16.mxu0 0
    %13695 = vmatpush1.bf16.msra.mxu0 %v12452
    %13696 = vmatprep.subr.bf16.mxu0 0
    %13697 = vmatpush1.bf16.msra.mxu0 %v12451
    %13698 = vmatprep.subr.bf16.mxu0 0
    %13699 = vmatpush1.bf16.msra.mxu0 %v12450
    %13700 = vmatprep.subr.bf16.mxu0 0
    %13701 = vmatpush1.bf16.msra.mxu0 %v12449
    %13702 = vmatprep.subr.bf16.mxu0 0
    %13703 = vmatpush1.bf16.msra.mxu0 %v12448
    %13704 = vmatprep.subr.bf16.mxu0 0
    %13705 = vmatpush1.bf16.msra.mxu0 %v12447
    %13706 = vmatprep.subr.bf16.mxu0 0
    %13707 = vmatpush1.bf16.msra.mxu0 %v12446
    %13708 = vmatprep.subr.bf16.mxu0 0
    %13709 = vmatpush2.bf16.msra.mxu0 %v12461
    %13710 = vmatprep.subr.bf16.mxu0 0
    %13711 = vmatpush2.bf16.msra.mxu0 %v12460
    %13712 = vmatprep.subr.bf16.mxu0 0
    %13713 = vmatpush2.bf16.msra.mxu0 %v12459
    %13714 = vmatprep.subr.bf16.mxu0 0
    %13715 = vmatpush2.bf16.msra.mxu0 %v12458
    %13716 = vmatprep.subr.bf16.mxu0 0
    %13717 = vmatpush2.bf16.msra.mxu0 %v12457
    %13718 = vmatprep.subr.bf16.mxu0 0
    %13719 = vmatpush2.bf16.msra.mxu0 %v12456
    %13720 = vmatprep.subr.bf16.mxu0 0
    %13721 = vmatpush2.bf16.msra.mxu0 %v12455
    %13722 = vmatprep.subr.bf16.mxu0 0
    %13723 = vmatpush2.bf16.msra.mxu0 %v12454
    %13724 = vmatprep.mubr.bf16.mxu0 %v13400
    %13725 = vmatmul.mubr.bf16.gmra.mxu0 %v13399
    %v13726 = vpop.f32.mrf.mxu0
    %v13727 = vadd.f32 %v12682, %v13726
    %v13728 = vpop.f32.mrf.mxu0
    %v13729 = vpop.f32.mrf.mxu0
    %v13730 = vadd.f32 %v12687, %v13729
    %v13731 = vpop.f32.mrf.mxu0
    %13732 = vmatprep.mubr.bf16.mxu0 %v13403
    %13733 = vmatmul.mubr.bf16.gmra.mxu0 %v13402
    %v13734 = vpop.f32.mrf.mxu0
    %v13735 = vadd.f32 %v12692, %v13734
    %v13736 = vpop.f32.mrf.mxu0
    %v13737 = vpop.f32.mrf.mxu0
    %v13738 = vadd.f32 %v12697, %v13737
    %v13739 = vpop.f32.mrf.mxu0
    %13740 = vmatprep.mubr.bf16.mxu0 %v13406
    %13741 = vmatmul.mubr.bf16.gmra.mxu0 %v13405
    %v13742 = vpop.f32.mrf.mxu0
    %v13743 = vadd.f32 %v12702, %v13742
    %v13744 = vpop.f32.mrf.mxu0
    %v13745 = vpop.f32.mrf.mxu0
    %v13746 = vadd.f32 %v12707, %v13745
    %v13747 = vpop.f32.mrf.mxu0
    %13748 = vmatprep.mubr.bf16.mxu0 %v13409
    %13749 = vmatmul.mubr.bf16.gmra.mxu0 %v13408
    %v13750 = vpop.f32.mrf.mxu0
    %v13751 = vadd.f32 %v12712, %v13750
    %v13752 = vpop.f32.mrf.mxu0
    %v13753 = vpop.f32.mrf.mxu0
    %v13754 = vadd.f32 %v12717, %v13753
    %v13755 = vpop.f32.mrf.mxu0
    %13756 = vmatprep.mubr.bf16.mxu0 %v13412
    %13757 = vmatmul.mubr.bf16.gmra.mxu0 %v13411
    %v13758 = vpop.f32.mrf.mxu0
    %v13759 = vadd.f32 %v12722, %v13758
    %v13760 = vpop.f32.mrf.mxu0
    %v13761 = vpop.f32.mrf.mxu0
    %v13762 = vadd.f32 %v12727, %v13761
    %v13763 = vpop.f32.mrf.mxu0
    %13764 = vmatprep.mubr.bf16.mxu0 %v13415
    %13765 = vmatmul.mubr.bf16.gmra.mxu0 %v13414
    %v13766 = vpop.f32.mrf.mxu0
    %v13767 = vadd.f32 %v12732, %v13766
    %v13768 = vpop.f32.mrf.mxu0
    %v13769 = vpop.f32.mrf.mxu0
    %v13770 = vadd.f32 %v12737, %v13769
    %v13771 = vpop.f32.mrf.mxu0
    %13772 = vmatprep.mubr.bf16.mxu0 %v13418
    %13773 = vmatmul.mubr.bf16.gmra.mxu0 %v13417
    %v13774 = vpop.f32.mrf.mxu0
    %v13775 = vadd.f32 %v12742, %v13774
    %v13776 = vpop.f32.mrf.mxu0
    %v13777 = vpop.f32.mrf.mxu0
    %v13778 = vadd.f32 %v12747, %v13777
    %v13779 = vpop.f32.mrf.mxu0
    %13780 = vmatprep.mubr.bf16.mxu0 %v13421
    %13781 = vmatmul.mubr.bf16.gmra.mxu0 %v13420
    %v13782 = vpop.f32.mrf.mxu0
    %v13783 = vadd.f32 %v12752, %v13782
    %v13784 = vpop.f32.mrf.mxu0
    %v13785 = vpop.f32.mrf.mxu0
    %v13786 = vadd.f32 %v12757, %v13785
    %v13787 = vpop.f32.mrf.mxu0
    %13788 = vmatprep.mubr.bf16.mxu0 %v13424
    %13789 = vmatmul.mubr.bf16.gmra.mxu0 %v13423
    %v13790 = vpop.f32.mrf.mxu0
    %v13791 = vadd.f32 %v12762, %v13790
    %v13792 = vpop.f32.mrf.mxu0
    %v13793 = vpop.f32.mrf.mxu0
    %v13794 = vadd.f32 %v12767, %v13793
    %v13795 = vpop.f32.mrf.mxu0
    %13796 = vmatprep.mubr.bf16.mxu0 %v13427
    %13797 = vmatmul.mubr.bf16.gmra.mxu0 %v13426
    %v13798 = vpop.f32.mrf.mxu0
    %v13799 = vadd.f32 %v12772, %v13798
    %v13800 = vpop.f32.mrf.mxu0
    %v13801 = vpop.f32.mrf.mxu0
    %v13802 = vadd.f32 %v12777, %v13801
    %v13803 = vpop.f32.mrf.mxu0
    %13804 = vmatprep.mubr.bf16.mxu0 %v13430
    %13805 = vmatmul.mubr.bf16.gmra.mxu0 %v13429
    %v13806 = vpop.f32.mrf.mxu0
    %v13807 = vadd.f32 %v12782, %v13806
    %v13808 = vpop.f32.mrf.mxu0
    %v13809 = vpop.f32.mrf.mxu0
    %v13810 = vadd.f32 %v12787, %v13809
    %v13811 = vpop.f32.mrf.mxu0
    %13812 = vmatprep.mubr.bf16.mxu0 %v13433
    %13813 = vmatmul.mubr.bf16.gmra.mxu0 %v13432
    %v13814 = vpop.f32.mrf.mxu0
    %v13815 = vadd.f32 %v12792, %v13814
    %v13816 = vpop.f32.mrf.mxu0
    %v13817 = vpop.f32.mrf.mxu0
    %v13818 = vadd.f32 %v12797, %v13817
    %v13819 = vpop.f32.mrf.mxu0
    %13820 = vmatprep.mubr.bf16.mxu0 %v13436
    %13821 = vmatmul.mubr.bf16.gmra.mxu0 %v13435
    %v13822 = vpop.f32.mrf.mxu0
    %v13823 = vadd.f32 %v12802, %v13822
    %v13824 = vpop.f32.mrf.mxu0
    %v13825 = vpop.f32.mrf.mxu0
    %v13826 = vadd.f32 %v12807, %v13825
    %v13827 = vpop.f32.mrf.mxu0
    %13828 = vmatprep.mubr.bf16.mxu0 %v13439
    %13829 = vmatmul.mubr.bf16.gmra.mxu0 %v13438
    %v13830 = vpop.f32.mrf.mxu0
    %v13831 = vadd.f32 %v12812, %v13830
    %v13832 = vpop.f32.mrf.mxu0
    %v13833 = vpop.f32.mrf.mxu0
    %v13834 = vadd.f32 %v12817, %v13833
    %v13835 = vpop.f32.mrf.mxu0
    %13836 = vmatprep.mubr.bf16.mxu0 %v13442
    %13837 = vmatmul.mubr.bf16.gmra.mxu0 %v13441
    %v13838 = vpop.f32.mrf.mxu0
    %v13839 = vadd.f32 %v12822, %v13838
    %v13840 = vpop.f32.mrf.mxu0
    %v13841 = vpop.f32.mrf.mxu0
    %v13842 = vadd.f32 %v12827, %v13841
    %v13843 = vpop.f32.mrf.mxu0
    %13844 = vmatprep.mubr.bf16.mxu0 %v13445
    %13845 = vmatmul.mubr.bf16.gmra.mxu0 %v13444
    %v13846 = vpop.f32.mrf.mxu0
    %v13847 = vadd.f32 %v12832, %v13846
    %v13848 = vpop.f32.mrf.mxu0
    %v13849 = vpop.f32.mrf.mxu0
    %v13850 = vadd.f32 %v12837, %v13849
    %v13851 = vpop.f32.mrf.mxu0
    %13852 = vmatprep.mubr.bf16.mxu0 %v13448
    %13853 = vmatmul.mubr.bf16.gmra.mxu0 %v13447
    %v13854 = vpop.f32.mrf.mxu0
    %v13855 = vadd.f32 %v12842, %v13854
    %v13856 = vpop.f32.mrf.mxu0
    %v13857 = vpop.f32.mrf.mxu0
    %v13858 = vadd.f32 %v12847, %v13857
    %v13859 = vpop.f32.mrf.mxu0
    %13860 = vmatprep.mubr.bf16.mxu0 %v13451
    %13861 = vmatmul.mubr.bf16.gmra.mxu0 %v13450
    %v13862 = vpop.f32.mrf.mxu0
    %v13863 = vadd.f32 %v12852, %v13862
    %v13864 = vpop.f32.mrf.mxu0
    %v13865 = vpop.f32.mrf.mxu0
    %v13866 = vadd.f32 %v12857, %v13865
    %v13867 = vpop.f32.mrf.mxu0
    %13868 = vmatprep.mubr.bf16.mxu0 %v13454
    %13869 = vmatmul.mubr.bf16.gmra.mxu0 %v13453
    %v13870 = vpop.f32.mrf.mxu0
    %v13871 = vadd.f32 %v12862, %v13870
    %v13872 = vpop.f32.mrf.mxu0
    %v13873 = vpop.f32.mrf.mxu0
    %v13874 = vadd.f32 %v12867, %v13873
    %v13875 = vpop.f32.mrf.mxu0
    %13876 = vmatprep.mubr.bf16.mxu0 %v13457
    %13877 = vmatmul.mubr.bf16.gmra.mxu0 %v13456
    %v13878 = vpop.f32.mrf.mxu0
    %v13879 = vadd.f32 %v12872, %v13878
    %v13880 = vpop.f32.mrf.mxu0
    %v13881 = vpop.f32.mrf.mxu0
    %v13882 = vadd.f32 %v12877, %v13881
    %v13883 = vpop.f32.mrf.mxu0
    %13884 = vmatprep.mubr.bf16.mxu0 %v13460
    %13885 = vmatmul.mubr.bf16.gmra.mxu0 %v13459
    %v13886 = vpop.f32.mrf.mxu0
    %v13887 = vadd.f32 %v12882, %v13886
    %v13888 = vpop.f32.mrf.mxu0
    %v13889 = vpop.f32.mrf.mxu0
    %v13890 = vadd.f32 %v12887, %v13889
    %v13891 = vpop.f32.mrf.mxu0
    %13892 = vmatprep.mubr.bf16.mxu0 %v13463
    %13893 = vmatmul.mubr.bf16.gmra.mxu0 %v13462
    %v13894 = vpop.f32.mrf.mxu0
    %v13895 = vadd.f32 %v12892, %v13894
    %v13896 = vpop.f32.mrf.mxu0
    %v13897 = vpop.f32.mrf.mxu0
    %v13898 = vadd.f32 %v12897, %v13897
    %v13899 = vpop.f32.mrf.mxu0
    %13900 = vmatprep.mubr.bf16.mxu0 %v13466
    %13901 = vmatmul.mubr.bf16.gmra.mxu0 %v13465
    %v13902 = vpop.f32.mrf.mxu0
    %v13903 = vadd.f32 %v12902, %v13902
    %v13904 = vpop.f32.mrf.mxu0
    %v13905 = vpop.f32.mrf.mxu0
    %v13906 = vadd.f32 %v12907, %v13905
    %v13907 = vpop.f32.mrf.mxu0
    %13908 = vmatprep.mubr.bf16.mxu0 %v13469
    %13909 = vmatmul.mubr.bf16.gmra.mxu0 %v13468
    %v13910 = vpop.f32.mrf.mxu0
    %v13911 = vadd.f32 %v12912, %v13910
    %v13912 = vpop.f32.mrf.mxu0
    %v13913 = vpop.f32.mrf.mxu0
    %v13914 = vadd.f32 %v12917, %v13913
    %v13915 = vpop.f32.mrf.mxu0
    %13916 = vmatprep.mubr.bf16.mxu0 %v13472
    %13917 = vmatmul.mubr.bf16.gmra.mxu0 %v13471
    %v13918 = vpop.f32.mrf.mxu0
    %v13919 = vadd.f32 %v12922, %v13918
    %v13920 = vpop.f32.mrf.mxu0
    %v13921 = vpop.f32.mrf.mxu0
    %v13922 = vadd.f32 %v12927, %v13921
    %v13923 = vpop.f32.mrf.mxu0
    %13924 = vmatprep.mubr.bf16.mxu0 %v13475
    %13925 = vmatmul.mubr.bf16.gmra.mxu0 %v13474
    %v13926 = vpop.f32.mrf.mxu0
    %v13927 = vadd.f32 %v12932, %v13926
    %v13928 = vpop.f32.mrf.mxu0
    %v13929 = vpop.f32.mrf.mxu0
    %v13930 = vadd.f32 %v12937, %v13929
    %v13931 = vpop.f32.mrf.mxu0
    %13932 = vmatprep.mubr.bf16.mxu0 %v13478
    %13933 = vmatmul.mubr.bf16.gmra.mxu0 %v13477
    %v13934 = vpop.f32.mrf.mxu0
    %v13935 = vadd.f32 %v12942, %v13934
    %v13936 = vpop.f32.mrf.mxu0
    %v13937 = vpop.f32.mrf.mxu0
    %v13938 = vadd.f32 %v12947, %v13937
    %v13939 = vpop.f32.mrf.mxu0
    %13940 = vmatprep.mubr.bf16.mxu0 %v13481
    %13941 = vmatmul.mubr.bf16.gmra.mxu0 %v13480
    %v13942 = vpop.f32.mrf.mxu0
    %v13943 = vadd.f32 %v12952, %v13942
    %v13944 = vpop.f32.mrf.mxu0
    %v13945 = vpop.f32.mrf.mxu0
    %v13946 = vadd.f32 %v12957, %v13945
    %v13947 = vpop.f32.mrf.mxu0
    %13948 = vmatprep.mubr.bf16.mxu0 %v13484
    %13949 = vmatmul.mubr.bf16.gmra.mxu0 %v13483
    %v13950 = vpop.f32.mrf.mxu0
    %v13951 = vadd.f32 %v12962, %v13950
    %v13952 = vpop.f32.mrf.mxu0
    %v13953 = vpop.f32.mrf.mxu0
    %v13954 = vadd.f32 %v12967, %v13953
    %v13955 = vpop.f32.mrf.mxu0
    %13956 = vmatprep.mubr.bf16.mxu0 %v13487
    %13957 = vmatmul.mubr.bf16.gmra.mxu0 %v13486
    %v13958 = vpop.f32.mrf.mxu0
    %v13959 = vadd.f32 %v12972, %v13958
    %v13960 = vpop.f32.mrf.mxu0
    %v13961 = vpop.f32.mrf.mxu0
    %v13962 = vadd.f32 %v12977, %v13961
    %v13963 = vpop.f32.mrf.mxu0
    %13964 = vmatprep.mubr.bf16.mxu0 %v13490
    %13965 = vmatmul.mubr.bf16.gmra.mxu0 %v13489
    %v13966 = vpop.f32.mrf.mxu0
    %v13967 = vadd.f32 %v12982, %v13966
    %v13968 = vpop.f32.mrf.mxu0
    %v13969 = vpop.f32.mrf.mxu0
    %v13970 = vadd.f32 %v12987, %v13969
    %v13971 = vpop.f32.mrf.mxu0
    %13972 = vmatprep.mubr.bf16.mxu0 %v13493
    %13973 = vmatmul.mubr.bf16.gmra.mxu0 %v13492
    %v13974 = vpop.f32.mrf.mxu0
    %v13975 = vadd.f32 %v12992, %v13974
    %v13976 = vpop.f32.mrf.mxu0
    %v13977 = vpop.f32.mrf.mxu0
    %v13978 = vadd.f32 %v12997, %v13977
    %v13979 = vpop.f32.mrf.mxu0
    %13980 = vmatprep.mubr.bf16.mxu0 %v13496
    %13981 = vmatmul.mubr.bf16.gmra.mxu0 %v13495
    %v13982 = vpop.f32.mrf.mxu0
    %v13983 = vadd.f32 %v13002, %v13982
    %v13984 = vpop.f32.mrf.mxu0
    %v13985 = vpop.f32.mrf.mxu0
    %v13986 = vadd.f32 %v13007, %v13985
    %v13987 = vpop.f32.mrf.mxu0
    %13988 = vmatprep.mubr.bf16.mxu0 %v13499
    %13989 = vmatmul.mubr.bf16.gmra.mxu0 %v13498
    %v13990 = vpop.f32.mrf.mxu0
    %v13991 = vadd.f32 %v13012, %v13990
    %v13992 = vpop.f32.mrf.mxu0
    %v13993 = vpop.f32.mrf.mxu0
    %v13994 = vadd.f32 %v13017, %v13993
    %v13995 = vpop.f32.mrf.mxu0
    %13996 = vmatprep.mubr.bf16.mxu0 %v13502
    %13997 = vmatmul.mubr.bf16.gmra.mxu0 %v13501
    %v13998 = vpop.f32.mrf.mxu0
    %v13999 = vadd.f32 %v13022, %v13998
    %v14000 = vpop.f32.mrf.mxu0
    %v14001 = vpop.f32.mrf.mxu0
    %v14002 = vadd.f32 %v13027, %v14001
    %v14003 = vpop.f32.mrf.mxu0
    %14004 = vmatprep.mubr.bf16.mxu0 %v13505
    %14005 = vmatmul.mubr.bf16.gmra.mxu0 %v13504
    %v14006 = vpop.f32.mrf.mxu0
    %v14007 = vadd.f32 %v13032, %v14006
    %v14008 = vpop.f32.mrf.mxu0
    %v14009 = vpop.f32.mrf.mxu0
    %v14010 = vadd.f32 %v13037, %v14009
    %v14011 = vpop.f32.mrf.mxu0
    %14012 = vdwg.mxu0
    %14013 = vmatprep.subr.bf16.mxu0 0
    %14014 = vmatpush1.bf16.msra.mxu0 0
    %14015 = vmatprep.subr.bf16.mxu0 0
    %14016 = vmatpush1.bf16.msra.mxu0 0
    %14017 = vmatprep.subr.bf16.mxu0 0
    %14018 = vmatpush1.bf16.msra.mxu0 0
    %14019 = vmatprep.subr.bf16.mxu0 0
    %14020 = vmatpush1.bf16.msra.mxu0 0
    %14021 = vmatprep.subr.bf16.mxu0 0
    %14022 = vmatpush1.bf16.msra.mxu0 0
    %14023 = vmatprep.subr.bf16.mxu0 0
    %14024 = vmatpush1.bf16.msra.mxu0 0
    %14025 = vmatprep.subr.bf16.mxu0 0
    %14026 = vmatpush1.bf16.msra.mxu0 0
    %14027 = vmatprep.subr.bf16.mxu0 0
    %14028 = vmatpush1.bf16.msra.mxu0 %v13690
    %14029 = vmatprep.subr.bf16.mxu0 0
    %14030 = vmatpush2.bf16.msra.mxu0 0
    %14031 = vmatprep.subr.bf16.mxu0 0
    %14032 = vmatpush2.bf16.msra.mxu0 0
    %14033 = vmatprep.subr.bf16.mxu0 0
    %14034 = vmatpush2.bf16.msra.mxu0 0
    %14035 = vmatprep.subr.bf16.mxu0 0
    %14036 = vmatpush2.bf16.msra.mxu0 0
    %14037 = vmatprep.subr.bf16.mxu0 0
    %14038 = vmatpush2.bf16.msra.mxu0 0
    %14039 = vmatprep.subr.bf16.mxu0 0
    %14040 = vmatpush2.bf16.msra.mxu0 0
    %14041 = vmatprep.subr.bf16.mxu0 0
    %14042 = vmatpush2.bf16.msra.mxu0 0
    %14043 = vmatprep.subr.bf16.mxu0 0
    %14044 = vmatpush2.bf16.msra.mxu0 0
    %14045 = vmatprep.mubr.bf16.mxu0 0
    %14046 = vmatmul.mubr.bf16.gmra.mxu0 %v13581
    %v14047 = vpop.f32.mrf.mxu0
    %v14048 = vadd.f32 %v13727, %v14047
    %v14049 = vpop.f32.mrf.mxu0
    %v14050 = vpop.f32.mrf.mxu0
    %v14051 = vadd.f32 %v13730, %v14050
    %v14052 = vpop.f32.mrf.mxu0
    %14053 = vmatprep.mubr.bf16.mxu0 0
    %14054 = vmatmul.mubr.bf16.gmra.mxu0 %v13584
    %v14055 = vpop.f32.mrf.mxu0
    %v14056 = vadd.f32 %v13735, %v14055
    %v14057 = vpop.f32.mrf.mxu0
    %v14058 = vpop.f32.mrf.mxu0
    %v14059 = vadd.f32 %v13738, %v14058
    %v14060 = vpop.f32.mrf.mxu0
    %14061 = vmatprep.mubr.bf16.mxu0 0
    %14062 = vmatmul.mubr.bf16.gmra.mxu0 %v13587
    %v14063 = vpop.f32.mrf.mxu0
    %v14064 = vadd.f32 %v13743, %v14063
    %v14065 = vpop.f32.mrf.mxu0
    %v14066 = vpop.f32.mrf.mxu0
    %v14067 = vadd.f32 %v13746, %v14066
    %v14068 = vpop.f32.mrf.mxu0
    %14069 = vmatprep.mubr.bf16.mxu0 0
    %14070 = vmatmul.mubr.bf16.gmra.mxu0 %v13590
    %v14071 = vpop.f32.mrf.mxu0
    %v14072 = vadd.f32 %v13751, %v14071
    %v14073 = vpop.f32.mrf.mxu0
    %v14074 = vpop.f32.mrf.mxu0
    %v14075 = vadd.f32 %v13754, %v14074
    %v14076 = vpop.f32.mrf.mxu0
    %14077 = vmatprep.mubr.bf16.mxu0 0
    %14078 = vmatmul.mubr.bf16.gmra.mxu0 %v13593
    %v14079 = vpop.f32.mrf.mxu0
    %v14080 = vadd.f32 %v13759, %v14079
    %v14081 = vpop.f32.mrf.mxu0
    %v14082 = vpop.f32.mrf.mxu0
    %v14083 = vadd.f32 %v13762, %v14082
    %v14084 = vpop.f32.mrf.mxu0
    %14085 = vmatprep.mubr.bf16.mxu0 0
    %14086 = vmatmul.mubr.bf16.gmra.mxu0 %v13596
    %v14087 = vpop.f32.mrf.mxu0
    %v14088 = vadd.f32 %v13767, %v14087
    %v14089 = vpop.f32.mrf.mxu0
    %v14090 = vpop.f32.mrf.mxu0
    %v14091 = vadd.f32 %v13770, %v14090
    %v14092 = vpop.f32.mrf.mxu0
    %14093 = vmatprep.mubr.bf16.mxu0 0
    %14094 = vmatmul.mubr.bf16.gmra.mxu0 %v13599
    %v14095 = vpop.f32.mrf.mxu0
    %v14096 = vadd.f32 %v13775, %v14095
    %v14097 = vpop.f32.mrf.mxu0
    %v14098 = vpop.f32.mrf.mxu0
    %v14099 = vadd.f32 %v13778, %v14098
    %v14100 = vpop.f32.mrf.mxu0
    %14101 = vmatprep.mubr.bf16.mxu0 0
    %14102 = vmatmul.mubr.bf16.gmra.mxu0 %v13602
    %v14103 = vpop.f32.mrf.mxu0
    %v14104 = vadd.f32 %v13783, %v14103
    %v14105 = vpop.f32.mrf.mxu0
    %v14106 = vpop.f32.mrf.mxu0
    %v14107 = vadd.f32 %v13786, %v14106
    %v14108 = vpop.f32.mrf.mxu0
    %14109 = vmatprep.mubr.bf16.mxu0 0
    %14110 = vmatmul.mubr.bf16.gmra.mxu0 %v13605
    %v14111 = vpop.f32.mrf.mxu0
    %v14112 = vadd.f32 %v13791, %v14111
    %v14113 = vpop.f32.mrf.mxu0
    %v14114 = vpop.f32.mrf.mxu0
    %v14115 = vadd.f32 %v13794, %v14114
    %v14116 = vpop.f32.mrf.mxu0
    %14117 = vmatprep.mubr.bf16.mxu0 0
    %14118 = vmatmul.mubr.bf16.gmra.mxu0 %v13608
    %v14119 = vpop.f32.mrf.mxu0
    %v14120 = vadd.f32 %v13799, %v14119
    %v14121 = vpop.f32.mrf.mxu0
    %v14122 = vpop.f32.mrf.mxu0
    %v14123 = vadd.f32 %v13802, %v14122
    %v14124 = vpop.f32.mrf.mxu0
    %14125 = vmatprep.mubr.bf16.mxu0 0
    %14126 = vmatmul.mubr.bf16.gmra.mxu0 %v13611
    %v14127 = vpop.f32.mrf.mxu0
    %v14128 = vadd.f32 %v13807, %v14127
    %v14129 = vpop.f32.mrf.mxu0
    %v14130 = vpop.f32.mrf.mxu0
    %v14131 = vadd.f32 %v13810, %v14130
    %v14132 = vpop.f32.mrf.mxu0
    %14133 = vmatprep.mubr.bf16.mxu0 0
    %14134 = vmatmul.mubr.bf16.gmra.mxu0 %v13614
    %v14135 = vpop.f32.mrf.mxu0
    %v14136 = vadd.f32 %v13815, %v14135
    %v14137 = vpop.f32.mrf.mxu0
    %v14138 = vpop.f32.mrf.mxu0
    %v14139 = vadd.f32 %v13818, %v14138
    %v14140 = vpop.f32.mrf.mxu0
    %14141 = vmatprep.mubr.bf16.mxu0 0
    %14142 = vmatmul.mubr.bf16.gmra.mxu0 %v13617
    %v14143 = vpop.f32.mrf.mxu0
    %v14144 = vadd.f32 %v13823, %v14143
    %v14145 = vpop.f32.mrf.mxu0
    %v14146 = vpop.f32.mrf.mxu0
    %v14147 = vadd.f32 %v13826, %v14146
    %v14148 = vpop.f32.mrf.mxu0
    %14149 = vmatprep.mubr.bf16.mxu0 0
    %14150 = vmatmul.mubr.bf16.gmra.mxu0 %v13620
    %v14151 = vpop.f32.mrf.mxu0
    %v14152 = vadd.f32 %v13831, %v14151
    %v14153 = vpop.f32.mrf.mxu0
    %v14154 = vpop.f32.mrf.mxu0
    %v14155 = vadd.f32 %v13834, %v14154
    %v14156 = vpop.f32.mrf.mxu0
    %14157 = vmatprep.mubr.bf16.mxu0 0
    %14158 = vmatmul.mubr.bf16.gmra.mxu0 %v13623
    %v14159 = vpop.f32.mrf.mxu0
    %v14160 = vadd.f32 %v13839, %v14159
    %v14161 = vpop.f32.mrf.mxu0
    %v14162 = vpop.f32.mrf.mxu0
    %v14163 = vadd.f32 %v13842, %v14162
    %v14164 = vpop.f32.mrf.mxu0
    %14165 = vmatprep.mubr.bf16.mxu0 0
    %14166 = vmatmul.mubr.bf16.gmra.mxu0 %v13626
    %v14167 = vpop.f32.mrf.mxu0
    %v14168 = vadd.f32 %v13847, %v14167
    %v14169 = vpop.f32.mrf.mxu0
    %v14170 = vpop.f32.mrf.mxu0
    %v14171 = vadd.f32 %v13850, %v14170
    %v14172 = vpop.f32.mrf.mxu0
    %14173 = vmatprep.mubr.bf16.mxu0 0
    %14174 = vmatmul.mubr.bf16.gmra.mxu0 %v13629
    %v14175 = vpop.f32.mrf.mxu0
    %v14176 = vadd.f32 %v13855, %v14175
    %v14177 = vpop.f32.mrf.mxu0
    %v14178 = vpop.f32.mrf.mxu0
    %v14179 = vadd.f32 %v13858, %v14178
    %v14180 = vpop.f32.mrf.mxu0
    %14181 = vmatprep.mubr.bf16.mxu0 0
    %14182 = vmatmul.mubr.bf16.gmra.mxu0 %v13632
    %v14183 = vpop.f32.mrf.mxu0
    %v14184 = vadd.f32 %v13863, %v14183
    %v14185 = vpop.f32.mrf.mxu0
    %v14186 = vpop.f32.mrf.mxu0
    %v14187 = vadd.f32 %v13866, %v14186
    %v14188 = vpop.f32.mrf.mxu0
    %14189 = vmatprep.mubr.bf16.mxu0 0
    %14190 = vmatmul.mubr.bf16.gmra.mxu0 %v13635
    %v14191 = vpop.f32.mrf.mxu0
    %v14192 = vadd.f32 %v13871, %v14191
    %v14193 = vpop.f32.mrf.mxu0
    %v14194 = vpop.f32.mrf.mxu0
    %v14195 = vadd.f32 %v13874, %v14194
    %v14196 = vpop.f32.mrf.mxu0
    %14197 = vmatprep.mubr.bf16.mxu0 0
    %14198 = vmatmul.mubr.bf16.gmra.mxu0 %v13638
    %v14199 = vpop.f32.mrf.mxu0
    %v14200 = vadd.f32 %v13879, %v14199
    %v14201 = vpop.f32.mrf.mxu0
    %v14202 = vpop.f32.mrf.mxu0
    %v14203 = vadd.f32 %v13882, %v14202
    %v14204 = vpop.f32.mrf.mxu0
    %14205 = vmatprep.mubr.bf16.mxu0 0
    %14206 = vmatmul.mubr.bf16.gmra.mxu0 %v13641
    %v14207 = vpop.f32.mrf.mxu0
    %v14208 = vadd.f32 %v13887, %v14207
    %v14209 = vpop.f32.mrf.mxu0
    %v14210 = vpop.f32.mrf.mxu0
    %v14211 = vadd.f32 %v13890, %v14210
    %v14212 = vpop.f32.mrf.mxu0
    %14213 = vmatprep.mubr.bf16.mxu0 0
    %14214 = vmatmul.mubr.bf16.gmra.mxu0 %v13644
    %v14215 = vpop.f32.mrf.mxu0
    %v14216 = vadd.f32 %v13895, %v14215
    %v14217 = vpop.f32.mrf.mxu0
    %v14218 = vpop.f32.mrf.mxu0
    %v14219 = vadd.f32 %v13898, %v14218
    %v14220 = vpop.f32.mrf.mxu0
    %14221 = vmatprep.mubr.bf16.mxu0 0
    %14222 = vmatmul.mubr.bf16.gmra.mxu0 %v13647
    %v14223 = vpop.f32.mrf.mxu0
    %v14224 = vadd.f32 %v13903, %v14223
    %v14225 = vpop.f32.mrf.mxu0
    %v14226 = vpop.f32.mrf.mxu0
    %v14227 = vadd.f32 %v13906, %v14226
    %v14228 = vpop.f32.mrf.mxu0
    %14229 = vmatprep.mubr.bf16.mxu0 0
    %14230 = vmatmul.mubr.bf16.gmra.mxu0 %v13650
    %v14231 = vpop.f32.mrf.mxu0
    %v14232 = vadd.f32 %v13911, %v14231
    %v14233 = vpop.f32.mrf.mxu0
    %v14234 = vpop.f32.mrf.mxu0
    %v14235 = vadd.f32 %v13914, %v14234
    %v14236 = vpop.f32.mrf.mxu0
    %14237 = vmatprep.mubr.bf16.mxu0 0
    %14238 = vmatmul.mubr.bf16.gmra.mxu0 %v13653
    %v14239 = vpop.f32.mrf.mxu0
    %v14240 = vadd.f32 %v13919, %v14239
    %v14241 = vpop.f32.mrf.mxu0
    %v14242 = vpop.f32.mrf.mxu0
    %v14243 = vadd.f32 %v13922, %v14242
    %v14244 = vpop.f32.mrf.mxu0
    %14245 = vmatprep.mubr.bf16.mxu0 0
    %14246 = vmatmul.mubr.bf16.gmra.mxu0 %v13656
    %v14247 = vpop.f32.mrf.mxu0
    %v14248 = vadd.f32 %v13927, %v14247
    %v14249 = vpop.f32.mrf.mxu0
    %v14250 = vpop.f32.mrf.mxu0
    %v14251 = vadd.f32 %v13930, %v14250
    %v14252 = vpop.f32.mrf.mxu0
    %14253 = vmatprep.mubr.bf16.mxu0 0
    %14254 = vmatmul.mubr.bf16.gmra.mxu0 %v13659
    %v14255 = vpop.f32.mrf.mxu0
    %v14256 = vadd.f32 %v13935, %v14255
    %v14257 = vpop.f32.mrf.mxu0
    %v14258 = vpop.f32.mrf.mxu0
    %v14259 = vadd.f32 %v13938, %v14258
    %v14260 = vpop.f32.mrf.mxu0
    %14261 = vmatprep.mubr.bf16.mxu0 0
    %14262 = vmatmul.mubr.bf16.gmra.mxu0 %v13662
    %v14263 = vpop.f32.mrf.mxu0
    %v14264 = vadd.f32 %v13943, %v14263
    %v14265 = vpop.f32.mrf.mxu0
    %v14266 = vpop.f32.mrf.mxu0
    %v14267 = vadd.f32 %v13946, %v14266
    %v14268 = vpop.f32.mrf.mxu0
    %14269 = vmatprep.mubr.bf16.mxu0 0
    %14270 = vmatmul.mubr.bf16.gmra.mxu0 %v13665
    %v14271 = vpop.f32.mrf.mxu0
    %v14272 = vadd.f32 %v13951, %v14271
    %v14273 = vpop.f32.mrf.mxu0
    %v14274 = vpop.f32.mrf.mxu0
    %v14275 = vadd.f32 %v13954, %v14274
    %v14276 = vpop.f32.mrf.mxu0
    %14277 = vmatprep.mubr.bf16.mxu0 0
    %14278 = vmatmul.mubr.bf16.gmra.mxu0 %v13668
    %v14279 = vpop.f32.mrf.mxu0
    %v14280 = vadd.f32 %v13959, %v14279
    %v14281 = vpop.f32.mrf.mxu0
    %v14282 = vpop.f32.mrf.mxu0
    %v14283 = vadd.f32 %v13962, %v14282
    %v14284 = vpop.f32.mrf.mxu0
    %14285 = vmatprep.mubr.bf16.mxu0 0
    %14286 = vmatmul.mubr.bf16.gmra.mxu0 %v13671
    %v14287 = vpop.f32.mrf.mxu0
    %v14288 = vadd.f32 %v13967, %v14287
    %v14289 = vpop.f32.mrf.mxu0
    %v14290 = vpop.f32.mrf.mxu0
    %v14291 = vadd.f32 %v13970, %v14290
    %v14292 = vpop.f32.mrf.mxu0
    %14293 = vmatprep.mubr.bf16.mxu0 0
    %14294 = vmatmul.mubr.bf16.gmra.mxu0 %v13674
    %v14295 = vpop.f32.mrf.mxu0
    %v14296 = vadd.f32 %v13975, %v14295
    %v14297 = vpop.f32.mrf.mxu0
    %v14298 = vpop.f32.mrf.mxu0
    %v14299 = vadd.f32 %v13978, %v14298
    %v14300 = vpop.f32.mrf.mxu0
    %14301 = vmatprep.mubr.bf16.mxu0 0
    %14302 = vmatmul.mubr.bf16.gmra.mxu0 %v13677
    %v14303 = vpop.f32.mrf.mxu0
    %v14304 = vadd.f32 %v13983, %v14303
    %v14305 = vpop.f32.mrf.mxu0
    %v14306 = vpop.f32.mrf.mxu0
    %v14307 = vadd.f32 %v13986, %v14306
    %v14308 = vpop.f32.mrf.mxu0
    %14309 = vmatprep.mubr.bf16.mxu0 0
    %14310 = vmatmul.mubr.bf16.gmra.mxu0 %v13680
    %v14311 = vpop.f32.mrf.mxu0
    %v14312 = vadd.f32 %v13991, %v14311
    %v14313 = vpop.f32.mrf.mxu0
    %v14314 = vpop.f32.mrf.mxu0
    %v14315 = vadd.f32 %v13994, %v14314
    %v14316 = vpop.f32.mrf.mxu0
    %14317 = vmatprep.mubr.bf16.mxu0 0
    %14318 = vmatmul.mubr.bf16.gmra.mxu0 %v13683
    %v14319 = vpop.f32.mrf.mxu0
    %v14320 = vadd.f32 %v13999, %v14319
    %v14321 = vpop.f32.mrf.mxu0
    %v14322 = vpop.f32.mrf.mxu0
    %v14323 = vadd.f32 %v14002, %v14322
    %v14324 = vpop.f32.mrf.mxu0
    %14325 = vmatprep.mubr.bf16.mxu0 0
    %14326 = vmatmul.mubr.bf16.gmra.mxu0 %v13686
    %v14327 = vpop.f32.mrf.mxu0
    %v14328 = vadd.f32 %v14007, %v14327
    %v14329 = vpop.f32.mrf.mxu0
    %v14330 = vpop.f32.mrf.mxu0
    %v14331 = vadd.f32 %v14010, %v14330
    %v14332 = vpop.f32.mrf.mxu0
    %14333 = vdwg.mxu0
    %v14334 = vmax.f32 %v14048, 0.0
    %v14335 = vmax.f32 %v14051, 0.0
    %v14336 = vmax.f32 %v14056, 0.0
    %v14337 = vmax.f32 %v14059, 0.0
    %v14338 = vmax.f32 %v14064, 0.0
    %v14339 = vmax.f32 %v14067, 0.0
    %v14340 = vmax.f32 %v14072, 0.0
    %v14341 = vmax.f32 %v14075, 0.0
    %v14342 = vmax.f32 %v14080, 0.0
    %v14343 = vmax.f32 %v14083, 0.0
    %v14344 = vmax.f32 %v14088, 0.0
    %v14345 = vmax.f32 %v14091, 0.0
    %v14346 = vmax.f32 %v14096, 0.0
    %v14347 = vmax.f32 %v14099, 0.0
    %v14348 = vmax.f32 %v14104, 0.0
    %v14349 = vmax.f32 %v14107, 0.0
    %v14350 = vmax.f32 %v14112, 0.0
    %v14351 = vmax.f32 %v14115, 0.0
    %v14352 = vmax.f32 %v14120, 0.0
    %v14353 = vmax.f32 %v14123, 0.0
    %v14354 = vmax.f32 %v14128, 0.0
    %v14355 = vmax.f32 %v14131, 0.0
    %v14356 = vmax.f32 %v14136, 0.0
    %v14357 = vmax.f32 %v14139, 0.0
    %v14358 = vmax.f32 %v14144, 0.0
    %v14359 = vmax.f32 %v14147, 0.0
    %v14360 = vmax.f32 %v14152, 0.0
    %v14361 = vmax.f32 %v14155, 0.0
    %v14362 = vmax.f32 %v14160, 0.0
    %v14363 = vmax.f32 %v14163, 0.0
    %v14364 = vmax.f32 %v14168, 0.0
    %v14365 = vmax.f32 %v14171, 0.0
    %v14366 = vmax.f32 %v14176, 0.0
    %v14367 = vmax.f32 %v14179, 0.0
    %v14368 = vmax.f32 %v14184, 0.0
    %v14369 = vmax.f32 %v14187, 0.0
    %v14370 = vmax.f32 %v14192, 0.0
    %v14371 = vmax.f32 %v14195, 0.0
    %v14372 = vmax.f32 %v14200, 0.0
    %v14373 = vmax.f32 %v14203, 0.0
    %v14374 = vmax.f32 %v14208, 0.0
    %v14375 = vmax.f32 %v14211, 0.0
    %v14376 = vmax.f32 %v14216, 0.0
    %v14377 = vmax.f32 %v14219, 0.0
    %v14378 = vmax.f32 %v14224, 0.0
    %v14379 = vmax.f32 %v14227, 0.0
    %v14380 = vmax.f32 %v14232, 0.0
    %v14381 = vmax.f32 %v14235, 0.0
    %v14382 = vmax.f32 %v14240, 0.0
    %v14383 = vmax.f32 %v14243, 0.0
    %v14384 = vmax.f32 %v14248, 0.0
    %v14385 = vmax.f32 %v14251, 0.0
    %v14386 = vmax.f32 %v14256, 0.0
    %v14387 = vmax.f32 %v14259, 0.0
    %v14388 = vmax.f32 %v14264, 0.0
    %v14389 = vmax.f32 %v14267, 0.0
    %v14390 = vmax.f32 %v14272, 0.0
    %v14391 = vmax.f32 %v14275, 0.0
    %v14392 = vmax.f32 %v14280, 0.0
    %v14393 = vmax.f32 %v14283, 0.0
    %v14394 = vmax.f32 %v14288, 0.0
    %v14395 = vmax.f32 %v14291, 0.0
    %v14396 = vmax.f32 %v14296, 0.0
    %v14397 = vmax.f32 %v14299, 0.0
    %v14398 = vmax.f32 %v14304, 0.0
    %v14399 = vmax.f32 %v14307, 0.0
    %v14400 = vmax.f32 %v14312, 0.0
    %v14401 = vmax.f32 %v14315, 0.0
    %v14402 = vmax.f32 %v14320, 0.0
    %v14403 = vmax.f32 %v14323, 0.0
    %v14404 = vmax.f32 %v14328, 0.0
    %v14405 = vmax.f32 %v14331, 0.0
    %v14406 = vld [vmem:[%s5] sm:$0xff]
    %v14407 = vld [vmem:[%s5 + $0x8] sm:$0xff]
    %v14408 = vld [vmem:[%s5 + $0x10] sm:$0xf]
    %v14409 = vld [vmem:[%s5 + $0x14] sm:$0x11]
    %v14410 = vld [vmem:[%s5 + $0x1c] sm:$0x11]
    %v14411 = vld [vmem:[%s5 + $0x24] sm:$0x1]
    %v14412 = vpack.c.bf16 %v14335, %v14334
    %v14413 = vpack.c.bf16 %v14337, %v14336
    %v14414 = vpack.c.bf16 %v14339, %v14338
    %v14415 = vpack.c.bf16 %v14341, %v14340
    %v14416 = vpack.c.bf16 %v14343, %v14342
    %v14417 = vpack.c.bf16 %v14345, %v14344
    %v14418 = vpack.c.bf16 %v14347, %v14346
    %v14419 = vpack.c.bf16 %v14349, %v14348
    %v14420 = vpack.c.bf16 %v14351, %v14350
    %v14421 = vpack.c.bf16 %v14353, %v14352
    %v14422 = vpack.c.bf16 %v14355, %v14354
    %v14423 = vpack.c.bf16 %v14357, %v14356
    %v14424 = vpack.c.bf16 %v14359, %v14358
    %v14425 = vpack.c.bf16 %v14361, %v14360
    %v14426 = vpack.c.bf16 %v14363, %v14362
    %v14427 = vpack.c.bf16 %v14365, %v14364
    %v14428 = vpack.c.bf16 %v14367, %v14366
    %v14429 = vpack.c.bf16 %v14369, %v14368
    %v14430 = vpack.c.bf16 %v14371, %v14370
    %v14431 = vpack.c.bf16 %v14373, %v14372
    %v14432 = vpack.c.bf16 %v14375, %v14374
    %v14433 = vpack.c.bf16 %v14377, %v14376
    %v14434 = vpack.c.bf16 %v14379, %v14378
    %v14435 = vpack.c.bf16 %v14381, %v14380
    %v14436 = vpack.c.bf16 %v14383, %v14382
    %v14437 = vpack.c.bf16 %v14385, %v14384
    %v14438 = vpack.c.bf16 %v14387, %v14386
    %v14439 = vpack.c.bf16 %v14389, %v14388
    %v14440 = vpack.c.bf16 %v14391, %v14390
    %v14441 = vpack.c.bf16 %v14393, %v14392
    %v14442 = vpack.c.bf16 %v14395, %v14394
    %v14443 = vpack.c.bf16 %v14397, %v14396
    %v14444 = vpack.c.bf16 %v14399, %v14398
    %v14445 = vpack.c.bf16 %v14401, %v14400
    %v14446 = vpack.c.bf16 %v14403, %v14402
    %v14447 = vpack.c.bf16 %v14405, %v14404
    %v14448 = vld [vmem:[%s6] sm:$0xff]
    %v14449 = vld [vmem:[%s6 + $0x8] sm:$0x3]
    %14451 = vset.pattern.permute.xlu0 0
    %14452 = vperm.xlu0 %14451, %v14448
    %v14453 = vpop.permute.xlu0 %14452
    %14456 = vset.pattern.permute.xlu0 0
    %14457 = vperm.xlu0 %14456, %v14449
    %v14458 = vpop.permute.xlu0 %14457
    %v14466 = vunpack.c.l.b16 %v14406
    %v14467 = vunpack.c.h.b16 %v14406
    %v14468 = vunpack.c.l.b16 %v14407
    %v14469 = vunpack.c.h.b16 %v14407
    %v14470 = vunpack.c.l.b16 %v14408
    %v14471 = vunpack.c.l.b16 %v14409
    %v14472 = vunpack.c.h.b16 %v14409
    %v14473 = vunpack.c.l.b16 %v14410
    %v14474 = vunpack.c.h.b16 %v14410
    %v14475 = vunpack.c.l.b16 %v14411
    %v14476 = vpack.c.b16 %v14471, %v14466
    %v14477 = vpack.c.b16 %v14472, %v14467
    %v14478 = vpack.c.b16 %v14473, %v14468
    %v14479 = vpack.c.b16 %v14474, %v14469
    %v14480 = vpack.c.b16 %v14475, %v14470
    %vm14485 = vcmask 523264
    %v14487 = vsel %vm14485, %v14480, 0
    %14489 = vmatprep.subr.bf16.mxu0 0
    %14490 = vmatpush1.bf16.msra.mxu0 %v14419
    %14491 = vmatprep.subr.bf16.mxu0 0
    %14492 = vmatpush1.bf16.msra.mxu0 %v14418
    %14493 = vmatprep.subr.bf16.mxu0 0
    %14494 = vmatpush1.bf16.msra.mxu0 %v14417
    %14495 = vmatprep.subr.bf16.mxu0 0
    %14496 = vmatpush1.bf16.msra.mxu0 %v14416
    %14497 = vmatprep.subr.bf16.mxu0 0
    %14498 = vmatpush1.bf16.msra.mxu0 %v14415
    %14499 = vmatprep.subr.bf16.mxu0 0
    %14500 = vmatpush1.bf16.msra.mxu0 %v14414
    %14501 = vmatprep.subr.bf16.mxu0 0
    %14502 = vmatpush1.bf16.msra.mxu0 %v14413
    %14503 = vmatprep.subr.bf16.mxu0 0
    %14504 = vmatpush1.bf16.msra.mxu0 %v14412
    %14505 = vmatprep.subr.bf16.mxu0 0
    %14506 = vmatpush2.bf16.msra.mxu0 %v14427
    %14507 = vmatprep.subr.bf16.mxu0 0
    %14508 = vmatpush2.bf16.msra.mxu0 %v14426
    %14509 = vmatprep.subr.bf16.mxu0 0
    %14510 = vmatpush2.bf16.msra.mxu0 %v14425
    %14511 = vmatprep.subr.bf16.mxu0 0
    %14512 = vmatpush2.bf16.msra.mxu0 %v14424
    %14513 = vmatprep.subr.bf16.mxu0 0
    %14514 = vmatpush2.bf16.msra.mxu0 %v14423
    %14515 = vmatprep.subr.bf16.mxu0 0
    %14516 = vmatpush2.bf16.msra.mxu0 %v14422
    %14517 = vmatprep.subr.bf16.mxu0 0
    %14518 = vmatpush2.bf16.msra.mxu0 %v14421
    %14519 = vmatprep.subr.bf16.mxu0 0
    %14520 = vmatpush2.bf16.msra.mxu0 %v14420
    %14521 = vmatprep.mubr.bf16.mxu0 %v14477
    %14522 = vmatmul.mubr.bf16.gmra.mxu0 %v14476
    %v14523 = vpop.f32.mrf.mxu0
    %v14524 = vadd.f32 %v14453, %v14523
    %v14525 = vpop.f32.mrf.mxu0
    %v14526 = vpop.f32.mrf.mxu0
    %v14527 = vadd.f32 %v14458, %v14526
    %v14528 = vpop.f32.mrf.mxu0
    %14529 = vdwg.mxu0
    %14530 = vmatprep.subr.bf16.mxu0 0
    %14531 = vmatpush1.bf16.msra.mxu0 %v14435
    %14532 = vmatprep.subr.bf16.mxu0 0
    %14533 = vmatpush1.bf16.msra.mxu0 %v14434
    %14534 = vmatprep.subr.bf16.mxu0 0
    %14535 = vmatpush1.bf16.msra.mxu0 %v14433
    %14536 = vmatprep.subr.bf16.mxu0 0
    %14537 = vmatpush1.bf16.msra.mxu0 %v14432
    %14538 = vmatprep.subr.bf16.mxu0 0
    %14539 = vmatpush1.bf16.msra.mxu0 %v14431
    %14540 = vmatprep.subr.bf16.mxu0 0
    %14541 = vmatpush1.bf16.msra.mxu0 %v14430
    %14542 = vmatprep.subr.bf16.mxu0 0
    %14543 = vmatpush1.bf16.msra.mxu0 %v14429
    %14544 = vmatprep.subr.bf16.mxu0 0
    %14545 = vmatpush1.bf16.msra.mxu0 %v14428
    %14546 = vmatprep.subr.bf16.mxu0 0
    %14547 = vmatpush2.bf16.msra.mxu0 %v14443
    %14548 = vmatprep.subr.bf16.mxu0 0
    %14549 = vmatpush2.bf16.msra.mxu0 %v14442
    %14550 = vmatprep.subr.bf16.mxu0 0
    %14551 = vmatpush2.bf16.msra.mxu0 %v14441
    %14552 = vmatprep.subr.bf16.mxu0 0
    %14553 = vmatpush2.bf16.msra.mxu0 %v14440
    %14554 = vmatprep.subr.bf16.mxu0 0
    %14555 = vmatpush2.bf16.msra.mxu0 %v14439
    %14556 = vmatprep.subr.bf16.mxu0 0
    %14557 = vmatpush2.bf16.msra.mxu0 %v14438
    %14558 = vmatprep.subr.bf16.mxu0 0
    %14559 = vmatpush2.bf16.msra.mxu0 %v14437
    %14560 = vmatprep.subr.bf16.mxu0 0
    %14561 = vmatpush2.bf16.msra.mxu0 %v14436
    %14562 = vmatprep.mubr.bf16.mxu0 %v14479
    %14563 = vmatmul.mubr.bf16.gmra.mxu0 %v14478
    %v14564 = vpop.f32.mrf.mxu0
    %v14565 = vadd.f32 %v14524, %v14564
    %v14566 = vpop.f32.mrf.mxu0
    %v14567 = vpop.f32.mrf.mxu0
    %v14568 = vadd.f32 %v14527, %v14567
    %v14569 = vpop.f32.mrf.mxu0
    %14570 = vdwg.mxu0
    %14571 = vmatprep.subr.bf16.mxu0 0
    %14572 = vmatpush1.bf16.msra.mxu0 0
    %14573 = vmatprep.subr.bf16.mxu0 0
    %14574 = vmatpush1.bf16.msra.mxu0 0
    %14575 = vmatprep.subr.bf16.mxu0 0
    %14576 = vmatpush1.bf16.msra.mxu0 0
    %14577 = vmatprep.subr.bf16.mxu0 0
    %14578 = vmatpush1.bf16.msra.mxu0 0
    %14579 = vmatprep.subr.bf16.mxu0 0
    %14580 = vmatpush1.bf16.msra.mxu0 %v14447
    %14581 = vmatprep.subr.bf16.mxu0 0
    %14582 = vmatpush1.bf16.msra.mxu0 %v14446
    %14583 = vmatprep.subr.bf16.mxu0 0
    %14584 = vmatpush1.bf16.msra.mxu0 %v14445
    %14585 = vmatprep.subr.bf16.mxu0 0
    %14586 = vmatpush1.bf16.msra.mxu0 %v14444
    %14587 = vmatprep.subr.bf16.mxu0 0
    %14588 = vmatpush2.bf16.msra.mxu0 0
    %14589 = vmatprep.subr.bf16.mxu0 0
    %14590 = vmatpush2.bf16.msra.mxu0 0
    %14591 = vmatprep.subr.bf16.mxu0 0
    %14592 = vmatpush2.bf16.msra.mxu0 0
    %14593 = vmatprep.subr.bf16.mxu0 0
    %14594 = vmatpush2.bf16.msra.mxu0 0
    %14595 = vmatprep.subr.bf16.mxu0 0
    %14596 = vmatpush2.bf16.msra.mxu0 0
    %14597 = vmatprep.subr.bf16.mxu0 0
    %14598 = vmatpush2.bf16.msra.mxu0 0
    %14599 = vmatprep.subr.bf16.mxu0 0
    %14600 = vmatpush2.bf16.msra.mxu0 0
    %14601 = vmatprep.subr.bf16.mxu0 0
    %14602 = vmatpush2.bf16.msra.mxu0 0
    %14603 = vmatprep.mubr.bf16.mxu0 0
    %14604 = vmatmul.mubr.bf16.gmra.mxu0 %v14487
    %v14605 = vpop.f32.mrf.mxu0
    %v14606 = vadd.f32 %v14565, %v14605
    %v14607 = vpop.f32.mrf.mxu0
    %v14608 = vpop.f32.mrf.mxu0
    %v14609 = vadd.f32 %v14568, %v14608
    %v14610 = vpop.f32.mrf.mxu0
    %14611 = vdwg.mxu0
    %v14612 = vsel %vm4689, %v14609, -inf
    %v14613 = vmax.f32 %v14606, %v14612
    %v14614 = vrot.slane %v14613, 4
    %v14615 = vmax.f32 %v14613, %v14614
    %v14616 = vrot.slane %v14615, 2
    %v14617 = vmax.f32 %v14615, %v14616
    %v14618 = vrot.slane %v14617, 1
    %v14619 = vmax.f32 %v14617, %v14618
    %v14620 = vsub.f32 %v14606, %v14619
    %v14621 = vsub.f32 %v14609, %v14619
    %v14622 = vmul.f32 %v14620, 1.442695
    %v14623 = vpow.pop %v14622
    %v14624 = vmul.f32 %v14621, 1.442695
    %v14625 = vpow.pop %v14624
    %v14626 = vsel %vm4689, %v14625, 0.0
    %v14627 = vadd.f32 %v14623, %v14626
    %v14628 = vrot.slane %v14627, 4
    %v14629 = vadd.f32 %v14627, %v14628
    %v14630 = vrot.slane %v14629, 2
    %v14631 = vadd.f32 %v14629, %v14630
    %v14632 = vrot.slane %v14631, 1
    %v14633 = vadd.f32 %v14631, %v14632
    %v14634 = vrcp.pop %v14633
    %v14635 = vmul.f32 %v14623, %v14634
    %v14636 = vmul.f32 %v14625, %v14634
    %14637 = vst [vmem:[%s7] sm:$0xff] %v14635
    %14638 = vst [vmem:[%s7 + $0x8] sm:$0x3] %v14636
    // Predicated region
    $region38: #{mnist_forward.1} parent=1 // pred_check
      _
    $region39: #{mnist_forward.1} parent=1 // pred_check_branch
      %14640 = sbr.rel (0) target = $region41
    $region40: #{mnist_forward.1} parent=1 // pred_region
      _
    $region41: #{mnist_forward.1} parent=1 // pred_fallthru
      _
    // Predicated region
    $region42: #{mnist_forward.1} parent=1 // pred_check
      _
    $region43: #{mnist_forward.1} parent=1 // pred_check_branch
      %14642 = sbr.rel (0) target = $region45
    $region44: #{mnist_forward.1} parent=1 // pred_region
      _
    $region45: #{mnist_forward.1} parent=1 // pred_fallthru
      _
    %14643 = vsyncpa [#allocation3], 1
    %14644 = vsyncpa [#allocation5], 1

</llo_original>
